<compile_context>
chip_gen: v6e
topology: v6e:2x2x1
jax: 0.10.0
libtpu: 0.0.40
codegen_flags: <defaults>
</compile_context>

<pallas_src>
import jax
import jax.numpy as jnp
from jax.experimental import pallas as pl
from jax.experimental.pallas import tpu as pltpu


def _mlp_kernel(x_ref, w1_ref, b1_ref, w2_ref, b2_ref, o_ref):
    """Fused Linear -> ReLU -> Linear forward pass for one batch tile.

    x:  (TM, D_in)   bf16 VMEM (streamed per grid step)
    w1: (D_in, H)    bf16 VMEM (resident)
    b1: (1, H)       f32  VMEM (resident)
    w2: (H, D_out)   bf16 VMEM (resident)
    b2: (1, D_out)   f32  VMEM (resident)
    o:  (TM, D_out)  bf16 VMEM (streamed per grid step)
    """
    # MXU: bf16 inputs, f32 accumulation.
    h = jnp.dot(x_ref[...], w1_ref[...], preferred_element_type=jnp.float32)
    # Epilogue (bias + ReLU) stays in f32: VPU-native everywhere incl. v5e.
    h = jnp.maximum(h + b1_ref[...], 0.0)
    y = jnp.dot(h.astype(jnp.bfloat16), w2_ref[...],
                preferred_element_type=jnp.float32)
    o_ref[...] = (y + b2_ref[...]).astype(o_ref.dtype)


def module_forward(x, w1, b1, w2, b2, *, tm=512, out_dtype=jnp.bfloat16,
                   single_buffer_weights=True):
    """Batch-tiled pallas_call: activations streamed (bf16), weights resident."""
    B, D_in = x.shape
    H = w1.shape[1]
    D_out = w2.shape[1]

    # Lane / sublane alignment so all loads/stores are unmasked & full-width.
    # 128 is the floor (v5e); prefer 256-multiples for v6e/v7x MXU fill.
    assert B % tm == 0 and tm % 16 == 0
    assert D_in % 128 == 0 and H % 128 == 0 and D_out % 128 == 0

    grid = (B // tm,)

    # Stream activations in bf16 (HBM-side cast; halves per-step HBM traffic).
    x_bf16 = x.astype(jnp.bfloat16)
    w1 = w1.astype(jnp.bfloat16)
    w2 = w2.astype(jnp.bfloat16)
    b1 = b1.astype(jnp.float32)
    b2 = b2.astype(jnp.float32)

    act_bytes = 2  # bf16 activations in and out
    flops = 2 * B * (D_in * H + H * D_out)
    bytes_accessed = (
        B * D_in * act_bytes        # x (bf16 in)
        + D_in * H * 2              # w1 (bf16)
        + H * 4                     # b1 (f32)
        + H * D_out * 2             # w2 (bf16)
        + D_out * 4                 # b2 (f32)
        + B * D_out * act_bytes     # out (bf16)
    )

    # Explicit VMEM budget: double-buffered activation tiles + resident
    # weights (x2 if the single-buffer request is unsupported) + slack.
    weight_bytes = (D_in * H + H * D_out) * 2 + (H + D_out) * 4
    needed = (2 * tm * D_in * act_bytes        # x tile, double-buffered
              + 2 * tm * D_out * act_bytes     # out tile, double-buffered
              + 2 * weight_bytes)              # worst case: double-buffered
    vmem_limit = max(needed + (4 << 20), 32 << 20)   # headroom floor
    vmem_limit = min(vmem_limit, 48 << 20)           # legal on v7x (64 MiB phys)

    def _run(weight_buffer_count):
        if weight_buffer_count is None:
            def resident(shape):
                return pl.BlockSpec(shape, lambda i: (0, 0))
        else:
            def resident(shape):
                return pl.BlockSpec(shape, lambda i: (0, 0),
                                    pipeline_mode=pl.Buffered(weight_buffer_count))
        in_specs = [
            pl.BlockSpec((tm, D_in), lambda i: (i, 0)),   # x: streamed
            resident((D_in, H)),                          # w1: resident
            resident((1, H)),                             # b1: resident
            resident((H, D_out)),                         # w2: resident
            resident((1, D_out)),                         # b2: resident
        ]
        out_specs = pl.BlockSpec((tm, D_out), lambda i: (i, 0))
        return pl.pallas_call(
            _mlp_kernel,
            out_shape=jax.ShapeDtypeStruct((B, D_out), out_dtype),
            grid=grid,
            in_specs=in_specs,
            out_specs=out_specs,
            compiler_params=pltpu.CompilerParams(
                dimension_semantics=("parallel",),
                vmem_limit_bytes=int(vmem_limit),
            ),
            cost_estimate=pl.CostEstimate(
                flops=flops, bytes_accessed=bytes_accessed, transcendentals=0,
            ),
        )(x_bf16, w1, b1, w2, b2)

    if single_buffer_weights:
        try:
            # Constant (0,0) block index => single buffer is enough; reclaims
            # the duplicate weight footprint (matters most on v7x's 64 MiB VMEM).
            return _run(1)
        except Exception:
            # pipeline_mode=pl.Buffered(1) not supported by this jax version /
            # backend path; fall back to default double-buffered residents.
            pass
    return _run(None)


if __name__ == "__main__":
    # 256-aligned dims (fills the 2x256x256 MXU on v6e/v7x); B/TM = 8 grid
    # steps so each of v7x's 2 TensorCores gets 4 pipelined iterations.
    B, D_in, H, D_out = 4096, 256, 512, 256
    TM = 512

    key = jax.random.PRNGKey(0)
    k_x, k_w1, k_b1, k_w2, k_b2 = jax.random.split(key, 5)

    x = jax.random.normal(k_x, (B, D_in), dtype=jnp.float32)

    # Deterministic parameter init (synthetic; no checkpoint load).
    w1 = (jax.random.normal(k_w1, (D_in, H), dtype=jnp.float32)
          * (1.0 / D_in**0.5)).astype(jnp.bfloat16)
    b1 = jax.random.normal(k_b1, (1, H), dtype=jnp.float32) * 0.01
    w2 = (jax.random.normal(k_w2, (H, D_out), dtype=jnp.float32)
          * (1.0 / H**0.5)).astype(jnp.bfloat16)
    b2 = jax.random.normal(k_b2, (1, D_out), dtype=jnp.float32) * 0.01

    out = module_forward(x, w1, b1, w2, b2, tm=TM)
    jax.block_until_ready(out)

    # Pure-JAX reference in the same mixed precision (bf16 MXU, f32 accum).
    # NOTE: bf16 activation I/O means results differ from a pure-f32 PyTorch
    # Linear stack by ~1e-2 relative; tolerance below accounts for this.
    x_bf16 = x.astype(jnp.bfloat16)
    ref_h = jnp.maximum(
        jnp.dot(x_bf16, w1, preferred_element_type=jnp.float32) + b1, 0.0)
    ref = jnp.dot(ref_h.astype(jnp.bfloat16), w2,
                  preferred_element_type=jnp.float32) + b2

    out_f32 = out.astype(jnp.float32)
    assert out.shape == (B, D_out)
    assert jnp.allclose(out_f32, ref, atol=3e-2, rtol=3e-2), float(
        jnp.max(jnp.abs(out_f32 - ref)))

    print("KERNEL_OK")
</pallas_src>

<mosaic_0001>
module attributes {stable_mosaic.version = 11 : i64} {
  func.func @_mlp_kernel(%arg0: i32, %arg1: memref<512x256xbf16, #tpu.memory_space<vmem>>, %arg2: memref<256x512xbf16, #tpu.memory_space<vmem>>, %arg3: memref<1x512xf32, #tpu.memory_space<vmem>>, %arg4: memref<512x256xbf16, #tpu.memory_space<vmem>>, %arg5: memref<1x256xf32, #tpu.memory_space<vmem>>, %arg6: memref<512x256xbf16, #tpu.memory_space<vmem>>) attributes {dimension_semantics = [#tpu.dimension_semantics<parallel>], iteration_bounds = array<i64: 8>, scalar_prefetch = 0 : i64, scratch_operands = 0 : i64, tpu.core_type = #tpu.core_type<tc>, window_params = [{transform_indices = @transform_0, window_bounds = array<i64: 512, 256>}, {pipeline_mode = #tpu.pipeline_mode<synchronous>, transform_indices = @transform_1, window_bounds = array<i64: 256, 512>}, {pipeline_mode = #tpu.pipeline_mode<synchronous>, transform_indices = @transform_2, window_bounds = array<i64: 1, 512>}, {pipeline_mode = #tpu.pipeline_mode<synchronous>, transform_indices = @transform_3, window_bounds = array<i64: 512, 256>}, {pipeline_mode = #tpu.pipeline_mode<synchronous>, transform_indices = @transform_4, window_bounds = array<i64: 1, 256>}, {transform_indices = @transform_5, window_bounds = array<i64: 512, 256>}]} {
    %c0 = arith.constant 0 : index
    %c0_0 = arith.constant 0 : index
    %0 = vector.load %arg1[%c0, %c0_0] : memref<512x256xbf16, #tpu.memory_space<vmem>>, vector<512x256xbf16>
    %c0_1 = arith.constant 0 : index
    %c0_2 = arith.constant 0 : index
    %1 = vector.load %arg2[%c0_1, %c0_2] : memref<256x512xbf16, #tpu.memory_space<vmem>>, vector<256x512xbf16>
    %cst = arith.constant dense<0.000000e+00> : vector<512x512xf32>
    %2 = tpu.matmul %0, %1, %cst {dimension_numbers = #tpu.dot_dimension_numbers<[1], [0], [0], [1], [0, 0, 1, 1], [], []>} : vector<512x256xbf16>, vector<256x512xbf16>, vector<512x512xf32> -> vector<512x512xf32>
    %c0_3 = arith.constant 0 : index
    %c0_4 = arith.constant 0 : index
    %3 = vector.load %arg3[%c0_3, %c0_4] : memref<1x512xf32, #tpu.memory_space<vmem>>, vector<1x512xf32>
    %4 = vector.broadcast %3 : vector<1x512xf32> to vector<512x512xf32>
    %5 = arith.addf %2, %4 : vector<512x512xf32>
    %cst_5 = arith.constant 0.000000e+00 : f32
    %6 = vector.broadcast %cst_5 : f32 to vector<512x512xf32>
    %7 = arith.maximumf %5, %6 : vector<512x512xf32>
    %8 = arith.truncf %7 : vector<512x512xf32> to vector<512x512xbf16>
    %c0_6 = arith.constant 0 : index
    %c0_7 = arith.constant 0 : index
    %9 = vector.load %arg4[%c0_6, %c0_7] : memref<512x256xbf16, #tpu.memory_space<vmem>>, vector<512x256xbf16>
    %cst_8 = arith.constant dense<0.000000e+00> : vector<512x256xf32>
    %10 = tpu.matmul %8, %9, %cst_8 {dimension_numbers = #tpu.dot_dimension_numbers<[1], [0], [0], [1], [0, 0, 1, 1], [], []>} : vector<512x512xbf16>, vector<512x256xbf16>, vector<512x256xf32> -> vector<512x256xf32>
    %c0_9 = arith.constant 0 : index
    %c0_10 = arith.constant 0 : index
    %11 = vector.load %arg5[%c0_9, %c0_10] : memref<1x256xf32, #tpu.memory_space<vmem>>, vector<1x256xf32>
    %12 = vector.broadcast %11 : vector<1x256xf32> to vector<512x256xf32>
    %13 = arith.addf %10, %12 : vector<512x256xf32>
    %14 = arith.truncf %13 : vector<512x256xf32> to vector<512x256xbf16>
    %c0_11 = arith.constant 0 : index
    %c0_12 = arith.constant 0 : index
    %15 = vector.load %arg6[%c0_11, %c0_12] : memref<512x256xbf16, #tpu.memory_space<vmem>>, vector<512x256xbf16>
    tpu.vector_store %arg6[%c0_11, %c0_12], %14 {strides = array<i32>} : memref<512x256xbf16, #tpu.memory_space<vmem>>, vector<512x256xbf16>,
    return
  }
  func.func @transform_0(%arg0: i32) -> (i32, i32) {
    %c0_i32 = arith.constant 0 : i32
    %c0_i32_0 = arith.constant 0 : i32
    return %arg0, %c0_i32 : i32, i32
  }
  func.func @transform_1(%arg0: i32) -> (i32, i32) {
    %c0_i32 = arith.constant 0 : i32
    %c0_i32_0 = arith.constant 0 : i32
    %c0_i32_1 = arith.constant 0 : i32
    return %c0_i32, %c0_i32_0 : i32, i32
  }
  func.func @transform_2(%arg0: i32) -> (i32, i32) {
    %c0_i32 = arith.constant 0 : i32
    %c0_i32_0 = arith.constant 0 : i32
    %c0_i32_1 = arith.constant 0 : i32
    return %c0_i32, %c0_i32_0 : i32, i32
  }
  func.func @transform_3(%arg0: i32) -> (i32, i32) {
    %c0_i32 = arith.constant 0 : i32
    %c0_i32_0 = arith.constant 0 : i32
    %c0_i32_1 = arith.constant 0 : i32
    return %c0_i32, %c0_i32_0 : i32, i32
  }
  func.func @transform_4(%arg0: i32) -> (i32, i32) {
    %c0_i32 = arith.constant 0 : i32
    %c0_i32_0 = arith.constant 0 : i32
    %c0_i32_1 = arith.constant 0 : i32
    return %c0_i32, %c0_i32_0 : i32, i32
  }
  func.func @transform_5(%arg0: i32) -> (i32, i32) {
    %c0_i32 = arith.constant 0 : i32
    %c0_i32_0 = arith.constant 0 : i32
    return %arg0, %c0_i32 : i32, i32
  }
}

module attributes {stable_mosaic.version = 11 : i64} {
  func.func @_mlp_kernel(%arg0: i32, %arg1: memref<512x256xbf16, #tpu.memory_space<vmem>>, %arg2: memref<256x512xbf16, #tpu.memory_space<vmem>>, %arg3: memref<1x512xf32, #tpu.memory_space<vmem>>, %arg4: memref<512x256xbf16, #tpu.memory_space<vmem>>, %arg5: memref<1x256xf32, #tpu.memory_space<vmem>>, %arg6: memref<512x256xbf16, #tpu.memory_space<vmem>>) attributes {dimension_semantics = [#tpu.dimension_semantics<parallel>], iteration_bounds = array<i64: 8>, scalar_prefetch = 0 : i64, scratch_operands = 0 : i64, tpu.core_type = #tpu.core_type<tc>, window_params = [{transform_indices = @transform_0, window_bounds = array<i64: 512, 256>}, {pipeline_mode = #tpu.pipeline_mode<synchronous>, transform_indices = @transform_1, window_bounds = array<i64: 256, 512>}, {pipeline_mode = #tpu.pipeline_mode<synchronous>, transform_indices = @transform_2, window_bounds = array<i64: 1, 512>}, {pipeline_mode = #tpu.pipeline_mode<synchronous>, transform_indices = @transform_3, window_bounds = array<i64: 512, 256>}, {pipeline_mode = #tpu.pipeline_mode<synchronous>, transform_indices = @transform_4, window_bounds = array<i64: 1, 256>}, {transform_indices = @transform_5, window_bounds = array<i64: 512, 256>}]} {
    %c0 = arith.constant 0 : index
    %c0_0 = arith.constant 0 : index
    %0 = vector.load %arg1[%c0, %c0_0] : memref<512x256xbf16, #tpu.memory_space<vmem>>, vector<512x256xbf16>
    %c0_1 = arith.constant 0 : index
    %c0_2 = arith.constant 0 : index
    %1 = vector.load %arg2[%c0_1, %c0_2] : memref<256x512xbf16, #tpu.memory_space<vmem>>, vector<256x512xbf16>
    %cst = arith.constant dense<0.000000e+00> : vector<512x512xf32>
    %2 = tpu.matmul %0, %1, %cst {dimension_numbers = #tpu.dot_dimension_numbers<[1], [0], [0], [1], [0, 0, 1, 1], [], []>} : vector<512x256xbf16>, vector<256x512xbf16>, vector<512x512xf32> -> vector<512x512xf32>
    %c0_3 = arith.constant 0 : index
    %c0_4 = arith.constant 0 : index
    %3 = vector.load %arg3[%c0_3, %c0_4] : memref<1x512xf32, #tpu.memory_space<vmem>>, vector<1x512xf32>
    %4 = vector.broadcast %3 : vector<1x512xf32> to vector<512x512xf32>
    %5 = arith.addf %2, %4 : vector<512x512xf32>
    %cst_5 = arith.constant 0.000000e+00 : f32
    %6 = vector.broadcast %cst_5 : f32 to vector<512x512xf32>
    %7 = arith.maximumf %5, %6 : vector<512x512xf32>
    %8 = arith.truncf %7 : vector<512x512xf32> to vector<512x512xbf16>
    %c0_6 = arith.constant 0 : index
    %c0_7 = arith.constant 0 : index
    %9 = vector.load %arg4[%c0_6, %c0_7] : memref<512x256xbf16, #tpu.memory_space<vmem>>, vector<512x256xbf16>
    %cst_8 = arith.constant dense<0.000000e+00> : vector<512x256xf32>
    %10 = tpu.matmul %8, %9, %cst_8 {dimension_numbers = #tpu.dot_dimension_numbers<[1], [0], [0], [1], [0, 0, 1, 1], [], []>} : vector<512x512xbf16>, vector<512x256xbf16>, vector<512x256xf32> -> vector<512x256xf32>
    %c0_9 = arith.constant 0 : index
    %c0_10 = arith.constant 0 : index
    %11 = vector.load %arg5[%c0_9, %c0_10] : memref<1x256xf32, #tpu.memory_space<vmem>>, vector<1x256xf32>
    %12 = vector.broadcast %11 : vector<1x256xf32> to vector<512x256xf32>
    %13 = arith.addf %10, %12 : vector<512x256xf32>
    %14 = arith.truncf %13 : vector<512x256xf32> to vector<512x256xbf16>
    %c0_11 = arith.constant 0 : index
    %c0_12 = arith.constant 0 : index
    %15 = vector.load %arg6[%c0_11, %c0_12] : memref<512x256xbf16, #tpu.memory_space<vmem>>, vector<512x256xbf16>
    tpu.vector_store %arg6[%c0_11, %c0_12], %14 {strides = array<i32>} : memref<512x256xbf16, #tpu.memory_space<vmem>>, vector<512x256xbf16>,
    return
  }
  func.func @transform_0(%arg0: i32) -> (i32, i32) {
    %c0_i32 = arith.constant 0 : i32
    %c0_i32_0 = arith.constant 0 : i32
    return %arg0, %c0_i32 : i32, i32
  }
  func.func @transform_1(%arg0: i32) -> (i32, i32) {
    %c0_i32 = arith.constant 0 : i32
    %c0_i32_0 = arith.constant 0 : i32
    %c0_i32_1 = arith.constant 0 : i32
    return %c0_i32, %c0_i32_0 : i32, i32
  }
  func.func @transform_2(%arg0: i32) -> (i32, i32) {
    %c0_i32 = arith.constant 0 : i32
    %c0_i32_0 = arith.constant 0 : i32
    %c0_i32_1 = arith.constant 0 : i32
    return %c0_i32, %c0_i32_0 : i32, i32
  }
  func.func @transform_3(%arg0: i32) -> (i32, i32) {
    %c0_i32 = arith.constant 0 : i32
    %c0_i32_0 = arith.constant 0 : i32
    %c0_i32_1 = arith.constant 0 : i32
    return %c0_i32, %c0_i32_0 : i32, i32
  }
  func.func @transform_4(%arg0: i32) -> (i32, i32) {
    %c0_i32 = arith.constant 0 : i32
    %c0_i32_0 = arith.constant 0 : i32
    %c0_i32_1 = arith.constant 0 : i32
    return %c0_i32, %c0_i32_0 : i32, i32
  }
  func.func @transform_5(%arg0: i32) -> (i32, i32) {
    %c0_i32 = arith.constant 0 : i32
    %c0_i32_0 = arith.constant 0 : i32
    return %arg0, %c0_i32 : i32, i32
  }
}

</mosaic_0001>

<llo_original>
// kernel: tpu_custom_call.1
$region0: #{tpu_custom_call.1}
  #allocation0 [shape = 'u32[]', space=smem, size = 0x4, offset = 0x4, fixed_abs, tag = 'smem constant byte address 0x4 - core index']
  #allocation1 [shape = 'u32[144,128]{1,0:T(1,128)}', space=vmem, size = 0x12000, scoped, tag = 'internal scratch']
  %s0 = inlined_call_operand.hbm [shape: bf16[4096,256], index: 0, kind: input, shape index: {}]
  %s1 = inlined_call_operand.hbm [shape: bf16[256,512], index: 1, kind: input, shape index: {}]
  %s2 = inlined_call_operand.hbm [shape: f32[1,512], index: 2, kind: input, shape index: {}]
  %s3 = inlined_call_operand.hbm [shape: bf16[512,256], index: 3, kind: input, shape index: {}]
  %s4 = inlined_call_operand.hbm [shape: f32[1,256], index: 4, kind: input, shape index: {}]
  %s5 = inlined_call_operand.hbm [shape: bf16[4096,256], index: 5, kind: output, shape index: {}]
  %s6 = sld [smem:[#allocation0]]
  $region73: #{tpu_custom_call.1} parent=0
    _
  %s8 = ssub.s32 1, %s6
  %s9 = scalar_select 0, %s8, %s6
  $region1: #{tpu_custom_call.1} parent=0
    #allocation2 [shape = 'u8[524288]{0}', space=vmem, size = 0x80000, scoped, tag = 'input window, operand 0']
    #allocation3 [shape = 's32[2]{0}', space=sflag, size = 0x8, scoped, tag = 'scoped memory for tpu_custom_call.1']
    #allocation4 [shape = 's32[2]{0}', space=sflag, size = 0x8, scoped, tag = 'scoped memory for tpu_custom_call.1']
    #allocation5 [shape = 'u8[262144]{0}', space=vmem, size = 0x40000, scoped, tag = 'input window, operand 1, single buffered']
    #allocation6 [shape = 's32[1]{0}', space=sflag, size = 0x4, scoped, tag = 'scoped memory for tpu_custom_call.1']
    #allocation7 [shape = 'u8[2048]{0}', space=vmem, size = 0x800, scoped, tag = 'input window, operand 2, single buffered']
    #allocation8 [shape = 'u8[262144]{0}', space=vmem, size = 0x40000, scoped, tag = 'input window, operand 3, single buffered']
    #allocation9 [shape = 's32[1]{0}', space=sflag, size = 0x4, scoped, tag = 'scoped memory for tpu_custom_call.1']
    #allocation10 [shape = 'u8[1024]{0}', space=vmem, size = 0x400, scoped, tag = 'input window, operand 4, single buffered']
    #allocation11 [shape = 'u8[524288]{0}', space=vmem, size = 0x80000, scoped, tag = 'output window, operand 0']
    %10 = vsyncpa [#allocation3], 0
    %s11 = scalar_lea.sflag [#allocation3], 1
    %12 = vsyncpa %s11, 0
    %13 = vsyncpa [#allocation6], 0
    %14 = vsyncpa [#allocation9], 0
    %15 = vsyncpa [#allocation4], 0
    %s16 = scalar_lea.sflag [#allocation4], 1
    %17 = vsyncpa %s16, 0
    loop: start=0, step=1, limit=10
    $region2: #{tpu_custom_call.1} parent=1 // loop_pre_header
      _
    $region3: #{tpu_custom_call.1} parent=1 // loop_header
      %s19 = sphi 0, %s23
      %p20 = scmp.ge.s32.totalorder %s19, 10
      %s29 = sphi 0, %s31
      %s32 = sphi 0, %s29
      %s33 = sphi 0, %s32
      %s49 = sphi 0, %s33
      %s53 = sphi 0, %s53
      %s55 = sphi 0, %s53
      %s56 = sphi 0, %s55
      %s70 = sphi 0, %s56
      %s74 = sphi 0, %s74
      %s76 = sphi 0, %s74
      %s77 = sphi 0, %s76
      %s91 = sphi 0, %s77
      %s95 = sphi 0, %s95
      %s97 = sphi 0, %s95
      %s98 = sphi 0, %s97
      %s112 = sphi 0, %s98
      %s116 = sphi 0, %s116
      %s118 = sphi 0, %s116
      %s119 = sphi 0, %s118
      %s133 = sphi 0, %s119
      %s139 = sphi 0, %s141
      %s142 = sphi 0, %s139
      %s143 = sphi 0, %s142
      %s159 = sphi 0, %s143
    $region4: #{tpu_custom_call.1} parent=1 // loop_header_branch
      %22 = sbr.rel (%p20) target = $region8
    $region5: #{tpu_custom_call.1} parent=1 // loop_body
      %s24 = ssub.s32 %s19, 1
      %s25 = ssub.s32 %s19, 2
      %s26 = sadd.s32 %s19, 1
      %s27 = ssub.s32 %s19, %s26
      %p28 = scmp.eq.s32.totalorder %s27, 0
      %s30 = sadd.s32 %s29, 1
      %s31 = scalar_select %p28, %s29, %s30
      %p34 = pneg %p28
      %p35 = scmp.eq.s32.totalorder %s19, 7
      %p36 = por %p34, %p35
      %p37 = scmp.ne.s32.totalorder %s29, %s32
      %p38 = scmp.eq.s32.totalorder %s19, 0
      %p39 = por %p37, %p38
      %p40 = scmp.ne.s32.totalorder %s29, %s32
      %p41 = scmp.eq.s32.totalorder %s24, 7
      %p42 = por %p40, %p41
      %p43 = scmp.ne.s32.totalorder %s32, %s33
      %p44 = scmp.eq.s32.totalorder %s24, 0
      %p45 = por %p43, %p44
      %p46 = scmp.ne.s32.totalorder %s32, %s33
      %p47 = scmp.eq.s32.totalorder %s25, 7
      %p48 = por %p46, %p47
      %p50 = scmp.ne.s32.totalorder %s33, %s49
      %p51 = scmp.eq.s32.totalorder %s25, 0
      %p52 = por %p50, %p51
      %s54 = sadd.s32 %s53, 1
      %p57 = scmp.eq.s32.totalorder %s19, 7
      %p58 = scmp.ne.s32.totalorder %s53, %s55
      %p59 = scmp.eq.s32.totalorder %s19, 0
      %p60 = por %p58, %p59
      %p61 = scmp.ne.s32.totalorder %s53, %s55
      %p62 = scmp.eq.s32.totalorder %s24, 7
      %p63 = por %p61, %p62
      %p64 = scmp.ne.s32.totalorder %s55, %s56
      %p65 = scmp.eq.s32.totalorder %s24, 0
      %p66 = por %p64, %p65
      %p67 = scmp.ne.s32.totalorder %s55, %s56
      %p68 = scmp.eq.s32.totalorder %s25, 7
      %p69 = por %p67, %p68
      %p71 = scmp.ne.s32.totalorder %s56, %s70
      %p72 = scmp.eq.s32.totalorder %s25, 0
      %p73 = por %p71, %p72
      %s75 = sadd.s32 %s74, 1
      %p78 = scmp.eq.s32.totalorder %s19, 7
      %p79 = scmp.ne.s32.totalorder %s74, %s76
      %p80 = scmp.eq.s32.totalorder %s19, 0
      %p81 = por %p79, %p80
      %p82 = scmp.ne.s32.totalorder %s74, %s76
      %p83 = scmp.eq.s32.totalorder %s24, 7
      %p84 = por %p82, %p83
      %p85 = scmp.ne.s32.totalorder %s76, %s77
      %p86 = scmp.eq.s32.totalorder %s24, 0
      %p87 = por %p85, %p86
      %p88 = scmp.ne.s32.totalorder %s76, %s77
      %p89 = scmp.eq.s32.totalorder %s25, 7
      %p90 = por %p88, %p89
      %p92 = scmp.ne.s32.totalorder %s77, %s91
      %p93 = scmp.eq.s32.totalorder %s25, 0
      %p94 = por %p92, %p93
      %s96 = sadd.s32 %s95, 1
      %p99 = scmp.eq.s32.totalorder %s19, 7
      %p100 = scmp.ne.s32.totalorder %s95, %s97
      %p101 = scmp.eq.s32.totalorder %s19, 0
      %p102 = por %p100, %p101
      %p103 = scmp.ne.s32.totalorder %s95, %s97
      %p104 = scmp.eq.s32.totalorder %s24, 7
      %p105 = por %p103, %p104
      %p106 = scmp.ne.s32.totalorder %s97, %s98
      %p107 = scmp.eq.s32.totalorder %s24, 0
      %p108 = por %p106, %p107
      %p109 = scmp.ne.s32.totalorder %s97, %s98
      %p110 = scmp.eq.s32.totalorder %s25, 7
      %p111 = por %p109, %p110
      %p113 = scmp.ne.s32.totalorder %s98, %s112
      %p114 = scmp.eq.s32.totalorder %s25, 0
      %p115 = por %p113, %p114
      %s117 = sadd.s32 %s116, 1
      %p120 = scmp.eq.s32.totalorder %s19, 7
      %p121 = scmp.ne.s32.totalorder %s116, %s118
      %p122 = scmp.eq.s32.totalorder %s19, 0
      %p123 = por %p121, %p122
      %p124 = scmp.ne.s32.totalorder %s116, %s118
      %p125 = scmp.eq.s32.totalorder %s24, 7
      %p126 = por %p124, %p125
      %p127 = scmp.ne.s32.totalorder %s118, %s119
      %p128 = scmp.eq.s32.totalorder %s24, 0
      %p129 = por %p127, %p128
      %p130 = scmp.ne.s32.totalorder %s118, %s119
      %p131 = scmp.eq.s32.totalorder %s25, 7
      %p132 = por %p130, %p131
      %p134 = scmp.ne.s32.totalorder %s119, %s133
      %p135 = scmp.eq.s32.totalorder %s25, 0
      %p136 = por %p134, %p135
      %s137 = ssub.s32 %s19, %s26
      %p138 = scmp.eq.s32.totalorder %s137, 0
      %s140 = sadd.s32 %s139, 1
      %s141 = scalar_select %p138, %s139, %s140
      %p144 = pneg %p138
      %p145 = scmp.eq.s32.totalorder %s19, 7
      %p146 = por %p144, %p145
      %p147 = scmp.ne.s32.totalorder %s139, %s142
      %p148 = scmp.eq.s32.totalorder %s19, 0
      %p149 = por %p147, %p148
      %p150 = scmp.ne.s32.totalorder %s139, %s142
      %p151 = scmp.eq.s32.totalorder %s24, 7
      %p152 = por %p150, %p151
      %p153 = scmp.ne.s32.totalorder %s142, %s143
      %p154 = scmp.eq.s32.totalorder %s24, 0
      %p155 = por %p153, %p154
      %p156 = scmp.ne.s32.totalorder %s142, %s143
      %p157 = scmp.eq.s32.totalorder %s25, 7
      %p158 = por %p156, %p157
      %p160 = scmp.ne.s32.totalorder %s143, %s159
      %p161 = scmp.eq.s32.totalorder %s25, 0
      %p162 = por %p160, %p161
      %p163 = scmp.le.s32.totalorder 1, %s19
      %p164 = scmp.lt.s32.totalorder %s19, 9
      %p165 = pnand %p163, %p164
      %p166 = pneg %p165
      // Predicated region
      $region9: #{tpu_custom_call.1} parent=5 // pred_check
        _
      $region10: #{tpu_custom_call.1} parent=5 // pred_check_branch
        %168 = sbr.rel (%p165) target = $region12
      $region11: #{tpu_custom_call.1} parent=5 // pred_region
        %s169 = ssub.s32 %s19, 1
        // Predicated region
        $region13: #{tpu_custom_call.1} parent=11 // pred_check
          %p170 = pneg %p66
        $region14: #{tpu_custom_call.1} parent=11 // pred_check_branch
          %172 = sbr.rel (%p170) target = $region16
        $region15: #{tpu_custom_call.1} parent=11 // pred_region
          %s174 = ssub.s32 8192, 8192
          %175 = vsyncadd [#allocation6], %s174
          %s176 = sshll.u32 [#allocation5], 4
          %s177 = int_to_ptr.vmem [resolvable:$true] %s176
          %182 = dma.hbm_to_vmem [thread:$0]  %s1, 8192, %s177, [#allocation6], 256, 256, 16
        $region16: #{tpu_custom_call.1} parent=11 // pred_fallthru
          _
        // Predicated region
        $region17: #{tpu_custom_call.1} parent=11 // pred_check
          %p183 = pneg %p87
        $region18: #{tpu_custom_call.1} parent=11 // pred_check_branch
          %185 = sbr.rel (%p183) target = $region20
        $region19: #{tpu_custom_call.1} parent=11 // pred_region
          %s187 = ssub.s32 64, 64
          %188 = vsyncadd [#allocation6], %s187
          %s190 = sshll.u32 [#allocation7], 4
          %s191 = int_to_ptr.vmem [resolvable:$true] %s190
          %193 = dma.hbm_to_vmem [thread:$0]  %s2, 64, %s191, [#allocation6]
        $region20: #{tpu_custom_call.1} parent=11 // pred_fallthru
          _
        // Predicated region
        $region21: #{tpu_custom_call.1} parent=11 // pred_check
          %p194 = pneg %p108
        $region22: #{tpu_custom_call.1} parent=11 // pred_check_branch
          %196 = sbr.rel (%p194) target = $region24
        $region23: #{tpu_custom_call.1} parent=11 // pred_region
          %s198 = ssub.s32 8192, 8192
          %199 = vsyncadd [#allocation9], %s198
          %s200 = sshll.u32 [#allocation8], 4
          %s201 = int_to_ptr.vmem [resolvable:$true] %s200
          %206 = dma.hbm_to_vmem [thread:$0]  %s3, 8192, %s201, [#allocation9], 128, 128, 8
        $region24: #{tpu_custom_call.1} parent=11 // pred_fallthru
          _
        // Predicated region
        $region25: #{tpu_custom_call.1} parent=11 // pred_check
          %p207 = pneg %p129
        $region26: #{tpu_custom_call.1} parent=11 // pred_check_branch
          %209 = sbr.rel (%p207) target = $region28
        $region27: #{tpu_custom_call.1} parent=11 // pred_region
          %s211 = ssub.s32 32, 32
          %212 = vsyncadd [#allocation9], %s211
          %s214 = sshll.u32 [#allocation10], 4
          %s215 = int_to_ptr.vmem [resolvable:$true] %s214
          %217 = dma.hbm_to_vmem [thread:$0]  %s4, 32, %s215, [#allocation9]
        $region28: #{tpu_custom_call.1} parent=11 // pred_fallthru
          _
      $region12: #{tpu_custom_call.1} parent=5 // pred_fallthru
        _
      %p218 = scmp.lt.s32.totalorder %s19, 8
      // Predicated region
      $region29: #{tpu_custom_call.1} parent=5 // pred_check
        %p219 = pneg %p218
      $region30: #{tpu_custom_call.1} parent=5 // pred_check_branch
        %221 = sbr.rel (%p219) target = $region32
      $region31: #{tpu_custom_call.1} parent=5 // pred_region
        // Predicated region
        $region33: #{tpu_custom_call.1} parent=31 // pred_check
          %p222 = pneg %p39
        $region34: #{tpu_custom_call.1} parent=31 // pred_check_branch
          %224 = sbr.rel (%p222) target = $region36
        $region35: #{tpu_custom_call.1} parent=31 // pred_region
          %s225 = sand.u32 %s29, 1
          %s226 = scalar_lea.sflag [#allocation3], %s225
          %s227 = sand.u32 %s29, 1
          %s228 = smul.addr %s227, 512
          %s229 = scalar_lea.vmem [#allocation2], %s228
          %s230 = smul.u32 64, %s19
          %s232 = ssub.s32 8192, 8192
          %233 = vsyncadd %s226, %s232
          %s234 = smul.addr %s230, 2
          %s235 = smul.addr %s234, 64
          %s236 = scalar_lea.hbm %s0, %s235
          %s237 = sshll.u32 %s229, 4
          %s238 = int_to_ptr.vmem [resolvable:$true] %s237
          %243 = dma.hbm_to_vmem [thread:$0]  %s236, 8192, %s238, %s226, 128, 128, 8
        $region36: #{tpu_custom_call.1} parent=31 // pred_fallthru
          _
      $region32: #{tpu_custom_call.1} parent=5 // pred_fallthru
        _
      %p244 = scmp.le.s32.totalorder 1, %s19
      %p245 = scmp.lt.s32.totalorder %s19, 9
      %p246 = pnand %p244, %p245
      %p247 = pneg %p246
      // Predicated region
      $region37: #{tpu_custom_call.1} parent=5 // pred_check
        _
      $region38: #{tpu_custom_call.1} parent=5 // pred_check_branch
        %249 = sbr.rel (%p246) target = $region40
      $region39: #{tpu_custom_call.1} parent=5 // pred_region
        %s250 = ssub.s32 %s19, 1
        %s251 = sand.u32 %s32, 1
        %s252 = scalar_lea.sflag [#allocation3], %s251
        %s253 = sand.u32 %s32, 1
        %s254 = smul.addr %s253, 512
        %s255 = scalar_lea.vmem [#allocation2], %s254
        // Predicated region
        $region41: #{tpu_custom_call.1} parent=39 // pred_check
          %p256 = pneg %p45
        $region42: #{tpu_custom_call.1} parent=39 // pred_check_branch
          %258 = sbr.rel (%p256) target = $region44
        $region43: #{tpu_custom_call.1} parent=39 // pred_region
          %259 = dma.done %s252, 8192
        $region44: #{tpu_custom_call.1} parent=39 // pred_fallthru
          _
        // Predicated region
        $region45: #{tpu_custom_call.1} parent=39 // pred_check
          %p260 = pneg %p66
        $region46: #{tpu_custom_call.1} parent=39 // pred_check_branch
          %262 = sbr.rel (%p260) target = $region48
        $region47: #{tpu_custom_call.1} parent=39 // pred_region
          %263 = dma.done [#allocation6], 8192
        $region48: #{tpu_custom_call.1} parent=39 // pred_fallthru
          _
        // Predicated region
        $region49: #{tpu_custom_call.1} parent=39 // pred_check
          %p264 = pneg %p87
        $region50: #{tpu_custom_call.1} parent=39 // pred_check_branch
          %266 = sbr.rel (%p264) target = $region52
        $region51: #{tpu_custom_call.1} parent=39 // pred_region
          %267 = dma.done [#allocation6], 64
        $region52: #{tpu_custom_call.1} parent=39 // pred_fallthru
          _
        // Predicated region
        $region53: #{tpu_custom_call.1} parent=39 // pred_check
          %p268 = pneg %p108
        $region54: #{tpu_custom_call.1} parent=39 // pred_check_branch
          %270 = sbr.rel (%p268) target = $region56
        $region55: #{tpu_custom_call.1} parent=39 // pred_region
          %271 = dma.done [#allocation9], 8192
        $region56: #{tpu_custom_call.1} parent=39 // pred_fallthru
          _
        // Predicated region
        $region57: #{tpu_custom_call.1} parent=39 // pred_check
          %p272 = pneg %p129
        $region58: #{tpu_custom_call.1} parent=39 // pred_check_branch
          %274 = sbr.rel (%p272) target = $region60
        $region59: #{tpu_custom_call.1} parent=39 // pred_region
          %275 = dma.done [#allocation9], 32
        $region60: #{tpu_custom_call.1} parent=39 // pred_fallthru
          _
        %s276 = sand.u32 %s32, 1
        %s277 = scalar_lea.sflag [#allocation3], %s276
        %s278 = sand.u32 %s32, 1
        %s279 = smul.addr %s278, 512
        %s280 = scalar_lea.vmem [#allocation2], %s279
        %p281 = pneg %p45
        %p282 = pneg %p42
        %p283 = pneg %p66
        %p284 = pneg %p63
        %p285 = pneg %p87
        %p286 = pneg %p84
        %p287 = pneg %p108
        %p288 = pneg %p105
        %p289 = pneg %p129
        %p290 = pneg %p126
        %p291 = pneg %p155
        %p292 = pneg %p152
        %s293 = sand.u32 %s142, 1
        %s294 = scalar_lea.sflag [#allocation4], %s293
        %s295 = sand.u32 %s142, 1
        %s296 = smul.addr %s295, 512
        %s297 = scalar_lea.vmem [#allocation11], %s296
        %s298 = smul.u32 64, %s24
        %s299 = smul.u32 64, %s24
        %v300 = vld [vmem:[%s255] sm:$0xff]
        %v301 = vld [vmem:[%s255 + $0x8] sm:$0xff]
        %v302 = vld [vmem:[%s255 + $0x10] sm:$0xff]
        %v303 = vld [vmem:[%s255 + $0x18] sm:$0xff]
        %v304 = vld [vmem:[%s255 + $0x20] sm:$0xff]
        %v305 = vld [vmem:[%s255 + $0x28] sm:$0xff]
        %v306 = vld [vmem:[%s255 + $0x30] sm:$0xff]
        %v307 = vld [vmem:[%s255 + $0x38] sm:$0xff]
        %v308 = vld [vmem:[%s255 + $0x40] sm:$0xff]
        %v309 = vld [vmem:[%s255 + $0x48] sm:$0xff]
        %v310 = vld [vmem:[%s255 + $0x50] sm:$0xff]
        %v311 = vld [vmem:[%s255 + $0x58] sm:$0xff]
        %v312 = vld [vmem:[%s255 + $0x60] sm:$0xff]
        %v313 = vld [vmem:[%s255 + $0x68] sm:$0xff]
        %v314 = vld [vmem:[%s255 + $0x70] sm:$0xff]
        %v315 = vld [vmem:[%s255 + $0x78] sm:$0xff]
        %v316 = vld [vmem:[%s255 + $0x80] sm:$0xff]
        %v317 = vld [vmem:[%s255 + $0x88] sm:$0xff]
        %v318 = vld [vmem:[%s255 + $0x90] sm:$0xff]
        %v319 = vld [vmem:[%s255 + $0x98] sm:$0xff]
        %v320 = vld [vmem:[%s255 + $0xa0] sm:$0xff]
        %v321 = vld [vmem:[%s255 + $0xa8] sm:$0xff]
        %v322 = vld [vmem:[%s255 + $0xb0] sm:$0xff]
        %v323 = vld [vmem:[%s255 + $0xb8] sm:$0xff]
        %v324 = vld [vmem:[%s255 + $0xc0] sm:$0xff]
        %v325 = vld [vmem:[%s255 + $0xc8] sm:$0xff]
        %v326 = vld [vmem:[%s255 + $0xd0] sm:$0xff]
        %v327 = vld [vmem:[%s255 + $0xd8] sm:$0xff]
        %v328 = vld [vmem:[%s255 + $0xe0] sm:$0xff]
        %v329 = vld [vmem:[%s255 + $0xe8] sm:$0xff]
        %v330 = vld [vmem:[%s255 + $0xf0] sm:$0xff]
        %v331 = vld [vmem:[%s255 + $0xf8] sm:$0xff]
        %v332 = vld [vmem:[%s255 + $0x100] sm:$0xff]
        %v333 = vld [vmem:[%s255 + $0x108] sm:$0xff]
        %v334 = vld [vmem:[%s255 + $0x110] sm:$0xff]
        %v335 = vld [vmem:[%s255 + $0x118] sm:$0xff]
        %v336 = vld [vmem:[%s255 + $0x120] sm:$0xff]
        %v337 = vld [vmem:[%s255 + $0x128] sm:$0xff]
        %v338 = vld [vmem:[%s255 + $0x130] sm:$0xff]
        %v339 = vld [vmem:[%s255 + $0x138] sm:$0xff]
        %v340 = vld [vmem:[%s255 + $0x140] sm:$0xff]
        %v341 = vld [vmem:[%s255 + $0x148] sm:$0xff]
        %v342 = vld [vmem:[%s255 + $0x150] sm:$0xff]
        %v343 = vld [vmem:[%s255 + $0x158] sm:$0xff]
        %v344 = vld [vmem:[%s255 + $0x160] sm:$0xff]
        %v345 = vld [vmem:[%s255 + $0x168] sm:$0xff]
        %v346 = vld [vmem:[%s255 + $0x170] sm:$0xff]
        %v347 = vld [vmem:[%s255 + $0x178] sm:$0xff]
        %v348 = vld [vmem:[%s255 + $0x180] sm:$0xff]
        %v349 = vld [vmem:[%s255 + $0x188] sm:$0xff]
        %v350 = vld [vmem:[%s255 + $0x190] sm:$0xff]
        %v351 = vld [vmem:[%s255 + $0x198] sm:$0xff]
        %v352 = vld [vmem:[%s255 + $0x1a0] sm:$0xff]
        %v353 = vld [vmem:[%s255 + $0x1a8] sm:$0xff]
        %v354 = vld [vmem:[%s255 + $0x1b0] sm:$0xff]
        %v355 = vld [vmem:[%s255 + $0x1b8] sm:$0xff]
        %v356 = vld [vmem:[%s255 + $0x1c0] sm:$0xff]
        %v357 = vld [vmem:[%s255 + $0x1c8] sm:$0xff]
        %v358 = vld [vmem:[%s255 + $0x1d0] sm:$0xff]
        %v359 = vld [vmem:[%s255 + $0x1d8] sm:$0xff]
        %v360 = vld [vmem:[%s255 + $0x1e0] sm:$0xff]
        %v361 = vld [vmem:[%s255 + $0x1e8] sm:$0xff]
        %v362 = vld [vmem:[%s255 + $0x1f0] sm:$0xff]
        %v363 = vld [vmem:[%s255 + $0x1f8] sm:$0xff]
        %v364 = vld [vmem:[#allocation5] sm:$0xff]
        %v365 = vld [vmem:[#allocation5 + $0x8] sm:$0xff]
        %v366 = vld [vmem:[#allocation5 + $0x10] sm:$0xff]
        %v367 = vld [vmem:[#allocation5 + $0x18] sm:$0xff]
        %v368 = vld [vmem:[#allocation5 + $0x20] sm:$0xff]
        %v369 = vld [vmem:[#allocation5 + $0x28] sm:$0xff]
        %v370 = vld [vmem:[#allocation5 + $0x30] sm:$0xff]
        %v371 = vld [vmem:[#allocation5 + $0x38] sm:$0xff]
        %v372 = vld [vmem:[#allocation5 + $0x40] sm:$0xff]
        %v373 = vld [vmem:[#allocation5 + $0x48] sm:$0xff]
        %v374 = vld [vmem:[#allocation5 + $0x50] sm:$0xff]
        %v375 = vld [vmem:[#allocation5 + $0x58] sm:$0xff]
        %v376 = vld [vmem:[#allocation5 + $0x60] sm:$0xff]
        %v377 = vld [vmem:[#allocation5 + $0x68] sm:$0xff]
        %v378 = vld [vmem:[#allocation5 + $0x70] sm:$0xff]
        %v379 = vld [vmem:[#allocation5 + $0x78] sm:$0xff]
        %v380 = vld [vmem:[#allocation5 + $0x80] sm:$0xff]
        %v381 = vld [vmem:[#allocation5 + $0x88] sm:$0xff]
        %v382 = vld [vmem:[#allocation5 + $0x90] sm:$0xff]
        %v383 = vld [vmem:[#allocation5 + $0x98] sm:$0xff]
        %v384 = vld [vmem:[#allocation5 + $0xa0] sm:$0xff]
        %v385 = vld [vmem:[#allocation5 + $0xa8] sm:$0xff]
        %v386 = vld [vmem:[#allocation5 + $0xb0] sm:$0xff]
        %v387 = vld [vmem:[#allocation5 + $0xb8] sm:$0xff]
        %v388 = vld [vmem:[#allocation5 + $0xc0] sm:$0xff]
        %v389 = vld [vmem:[#allocation5 + $0xc8] sm:$0xff]
        %v390 = vld [vmem:[#allocation5 + $0xd0] sm:$0xff]
        %v391 = vld [vmem:[#allocation5 + $0xd8] sm:$0xff]
        %v392 = vld [vmem:[#allocation5 + $0xe0] sm:$0xff]
        %v393 = vld [vmem:[#allocation5 + $0xe8] sm:$0xff]
        %v394 = vld [vmem:[#allocation5 + $0xf0] sm:$0xff]
        %v395 = vld [vmem:[#allocation5 + $0xf8] sm:$0xff]
        %v396 = vld [vmem:[#allocation5 + $0x100] sm:$0xff]
        %v397 = vld [vmem:[#allocation5 + $0x108] sm:$0xff]
        %v398 = vld [vmem:[#allocation5 + $0x110] sm:$0xff]
        %v399 = vld [vmem:[#allocation5 + $0x118] sm:$0xff]
        %v400 = vld [vmem:[#allocation5 + $0x120] sm:$0xff]
        %v401 = vld [vmem:[#allocation5 + $0x128] sm:$0xff]
        %v402 = vld [vmem:[#allocation5 + $0x130] sm:$0xff]
        %v403 = vld [vmem:[#allocation5 + $0x138] sm:$0xff]
        %v404 = vld [vmem:[#allocation5 + $0x140] sm:$0xff]
        %v405 = vld [vmem:[#allocation5 + $0x148] sm:$0xff]
        %v406 = vld [vmem:[#allocation5 + $0x150] sm:$0xff]
        %v407 = vld [vmem:[#allocation5 + $0x158] sm:$0xff]
        %v408 = vld [vmem:[#allocation5 + $0x160] sm:$0xff]
        %v409 = vld [vmem:[#allocation5 + $0x168] sm:$0xff]
        %v410 = vld [vmem:[#allocation5 + $0x170] sm:$0xff]
        %v411 = vld [vmem:[#allocation5 + $0x178] sm:$0xff]
        %v412 = vld [vmem:[#allocation5 + $0x180] sm:$0xff]
        %v413 = vld [vmem:[#allocation5 + $0x188] sm:$0xff]
        %v414 = vld [vmem:[#allocation5 + $0x190] sm:$0xff]
        %v415 = vld [vmem:[#allocation5 + $0x198] sm:$0xff]
        %v416 = vld [vmem:[#allocation5 + $0x1a0] sm:$0xff]
        %v417 = vld [vmem:[#allocation5 + $0x1a8] sm:$0xff]
        %v418 = vld [vmem:[#allocation5 + $0x1b0] sm:$0xff]
        %v419 = vld [vmem:[#allocation5 + $0x1b8] sm:$0xff]
        %v420 = vld [vmem:[#allocation5 + $0x1c0] sm:$0xff]
        %v421 = vld [vmem:[#allocation5 + $0x1c8] sm:$0xff]
        %v422 = vld [vmem:[#allocation5 + $0x1d0] sm:$0xff]
        %v423 = vld [vmem:[#allocation5 + $0x1d8] sm:$0xff]
        %v424 = vld [vmem:[#allocation5 + $0x1e0] sm:$0xff]
        %v425 = vld [vmem:[#allocation5 + $0x1e8] sm:$0xff]
        %v426 = vld [vmem:[#allocation5 + $0x1f0] sm:$0xff]
        %v427 = vld [vmem:[#allocation5 + $0x1f8] sm:$0xff]
        %v428 = vld [vmem:[#allocation7] sm:$0xf]
        %v430 = vlaneseq
        %v431 = vshrl.u32 %v430, 7
        %v432 = vsub.s32 0, %v431
        %v433 = vrot.slane %v428, %v432
        %v434 = vlaneseq
        %v435 = vshrl.u32 %v434, 7
        %v436 = vsub.s32 1, %v435
        %v437 = vrot.slane %v428, %v436
        %v438 = vlaneseq
        %v439 = vshrl.u32 %v438, 7
        %v440 = vsub.s32 2, %v439
        %v441 = vrot.slane %v428, %v440
        %v442 = vlaneseq
        %v443 = vshrl.u32 %v442, 7
        %v444 = vsub.s32 3, %v443
        %v445 = vrot.slane %v428, %v444
        %v514 = vunpack.c.l.b16 %v300
        %v515 = vunpack.c.h.b16 %v300
        %v516 = vunpack.c.l.b16 %v301
        %v517 = vunpack.c.h.b16 %v301
        %v518 = vunpack.c.l.b16 %v302
        %v519 = vunpack.c.h.b16 %v302
        %v520 = vunpack.c.l.b16 %v303
        %v521 = vunpack.c.h.b16 %v303
        %v522 = vunpack.c.l.b16 %v304
        %v523 = vunpack.c.h.b16 %v304
        %v524 = vunpack.c.l.b16 %v305
        %v525 = vunpack.c.h.b16 %v305
        %v526 = vunpack.c.l.b16 %v306
        %v527 = vunpack.c.h.b16 %v306
        %v528 = vunpack.c.l.b16 %v307
        %v529 = vunpack.c.h.b16 %v307
        %v530 = vunpack.c.l.b16 %v308
        %v531 = vunpack.c.h.b16 %v308
        %v532 = vunpack.c.l.b16 %v309
        %v533 = vunpack.c.h.b16 %v309
        %v534 = vunpack.c.l.b16 %v310
        %v535 = vunpack.c.h.b16 %v310
        %v536 = vunpack.c.l.b16 %v311
        %v537 = vunpack.c.h.b16 %v311
        %v538 = vunpack.c.l.b16 %v312
        %v539 = vunpack.c.h.b16 %v312
        %v540 = vunpack.c.l.b16 %v313
        %v541 = vunpack.c.h.b16 %v313
        %v542 = vunpack.c.l.b16 %v314
        %v543 = vunpack.c.h.b16 %v314
        %v544 = vunpack.c.l.b16 %v315
        %v545 = vunpack.c.h.b16 %v315
        %v546 = vunpack.c.l.b16 %v316
        %v547 = vunpack.c.h.b16 %v316
        %v548 = vunpack.c.l.b16 %v317
        %v549 = vunpack.c.h.b16 %v317
        %v550 = vunpack.c.l.b16 %v318
        %v551 = vunpack.c.h.b16 %v318
        %v552 = vunpack.c.l.b16 %v319
        %v553 = vunpack.c.h.b16 %v319
        %v554 = vunpack.c.l.b16 %v320
        %v555 = vunpack.c.h.b16 %v320
        %v556 = vunpack.c.l.b16 %v321
        %v557 = vunpack.c.h.b16 %v321
        %v558 = vunpack.c.l.b16 %v322
        %v559 = vunpack.c.h.b16 %v322
        %v560 = vunpack.c.l.b16 %v323
        %v561 = vunpack.c.h.b16 %v323
        %v562 = vunpack.c.l.b16 %v324
        %v563 = vunpack.c.h.b16 %v324
        %v564 = vunpack.c.l.b16 %v325
        %v565 = vunpack.c.h.b16 %v325
        %v566 = vunpack.c.l.b16 %v326
        %v567 = vunpack.c.h.b16 %v326
        %v568 = vunpack.c.l.b16 %v327
        %v569 = vunpack.c.h.b16 %v327
        %v570 = vunpack.c.l.b16 %v328
        %v571 = vunpack.c.h.b16 %v328
        %v572 = vunpack.c.l.b16 %v329
        %v573 = vunpack.c.h.b16 %v329
        %v574 = vunpack.c.l.b16 %v330
        %v575 = vunpack.c.h.b16 %v330
        %v576 = vunpack.c.l.b16 %v331
        %v577 = vunpack.c.h.b16 %v331
        %v578 = vunpack.c.l.b16 %v332
        %v579 = vunpack.c.h.b16 %v332
        %v580 = vunpack.c.l.b16 %v333
        %v581 = vunpack.c.h.b16 %v333
        %v582 = vunpack.c.l.b16 %v334
        %v583 = vunpack.c.h.b16 %v334
        %v584 = vunpack.c.l.b16 %v335
        %v585 = vunpack.c.h.b16 %v335
        %v586 = vunpack.c.l.b16 %v336
        %v587 = vunpack.c.h.b16 %v336
        %v588 = vunpack.c.l.b16 %v337
        %v589 = vunpack.c.h.b16 %v337
        %v590 = vunpack.c.l.b16 %v338
        %v591 = vunpack.c.h.b16 %v338
        %v592 = vunpack.c.l.b16 %v339
        %v593 = vunpack.c.h.b16 %v339
        %v594 = vunpack.c.l.b16 %v340
        %v595 = vunpack.c.h.b16 %v340
        %v596 = vunpack.c.l.b16 %v341
        %v597 = vunpack.c.h.b16 %v341
        %v598 = vunpack.c.l.b16 %v342
        %v599 = vunpack.c.h.b16 %v342
        %v600 = vunpack.c.l.b16 %v343
        %v601 = vunpack.c.h.b16 %v343
        %v602 = vunpack.c.l.b16 %v344
        %v603 = vunpack.c.h.b16 %v344
        %v604 = vunpack.c.l.b16 %v345
        %v605 = vunpack.c.h.b16 %v345
        %v606 = vunpack.c.l.b16 %v346
        %v607 = vunpack.c.h.b16 %v346
        %v608 = vunpack.c.l.b16 %v347
        %v609 = vunpack.c.h.b16 %v347
        %v610 = vunpack.c.l.b16 %v348
        %v611 = vunpack.c.h.b16 %v348
        %v612 = vunpack.c.l.b16 %v349
        %v613 = vunpack.c.h.b16 %v349
        %v614 = vunpack.c.l.b16 %v350
        %v615 = vunpack.c.h.b16 %v350
        %v616 = vunpack.c.l.b16 %v351
        %v617 = vunpack.c.h.b16 %v351
        %v618 = vunpack.c.l.b16 %v352
        %v619 = vunpack.c.h.b16 %v352
        %v620 = vunpack.c.l.b16 %v353
        %v621 = vunpack.c.h.b16 %v353
        %v622 = vunpack.c.l.b16 %v354
        %v623 = vunpack.c.h.b16 %v354
        %v624 = vunpack.c.l.b16 %v355
        %v625 = vunpack.c.h.b16 %v355
        %v626 = vunpack.c.l.b16 %v356
        %v627 = vunpack.c.h.b16 %v356
        %v628 = vunpack.c.l.b16 %v357
        %v629 = vunpack.c.h.b16 %v357
        %v630 = vunpack.c.l.b16 %v358
        %v631 = vunpack.c.h.b16 %v358
        %v632 = vunpack.c.l.b16 %v359
        %v633 = vunpack.c.h.b16 %v359
        %v634 = vunpack.c.l.b16 %v360
        %v635 = vunpack.c.h.b16 %v360
        %v636 = vunpack.c.l.b16 %v361
        %v637 = vunpack.c.h.b16 %v361
        %v638 = vunpack.c.l.b16 %v362
        %v639 = vunpack.c.h.b16 %v362
        %v640 = vunpack.c.l.b16 %v363
        %v641 = vunpack.c.h.b16 %v363
        %v642 = vpack.c.b16 %v516, %v514
        %v643 = vpack.c.b16 %v517, %v515
        %v644 = vpack.c.b16 %v520, %v518
        %v645 = vpack.c.b16 %v521, %v519
        %v646 = vpack.c.b16 %v524, %v522
        %v647 = vpack.c.b16 %v525, %v523
        %v648 = vpack.c.b16 %v528, %v526
        %v649 = vpack.c.b16 %v529, %v527
        %v650 = vpack.c.b16 %v532, %v530
        %v651 = vpack.c.b16 %v533, %v531
        %v652 = vpack.c.b16 %v536, %v534
        %v653 = vpack.c.b16 %v537, %v535
        %v654 = vpack.c.b16 %v540, %v538
        %v655 = vpack.c.b16 %v541, %v539
        %v656 = vpack.c.b16 %v544, %v542
        %v657 = vpack.c.b16 %v545, %v543
        %v658 = vpack.c.b16 %v548, %v546
        %v659 = vpack.c.b16 %v549, %v547
        %v660 = vpack.c.b16 %v552, %v550
        %v661 = vpack.c.b16 %v553, %v551
        %v662 = vpack.c.b16 %v556, %v554
        %v663 = vpack.c.b16 %v557, %v555
        %v664 = vpack.c.b16 %v560, %v558
        %v665 = vpack.c.b16 %v561, %v559
        %v666 = vpack.c.b16 %v564, %v562
        %v667 = vpack.c.b16 %v565, %v563
        %v668 = vpack.c.b16 %v568, %v566
        %v669 = vpack.c.b16 %v569, %v567
        %v670 = vpack.c.b16 %v572, %v570
        %v671 = vpack.c.b16 %v573, %v571
        %v672 = vpack.c.b16 %v576, %v574
        %v673 = vpack.c.b16 %v577, %v575
        %v674 = vpack.c.b16 %v580, %v578
        %v675 = vpack.c.b16 %v581, %v579
        %v676 = vpack.c.b16 %v584, %v582
        %v677 = vpack.c.b16 %v585, %v583
        %v678 = vpack.c.b16 %v588, %v586
        %v679 = vpack.c.b16 %v589, %v587
        %v680 = vpack.c.b16 %v592, %v590
        %v681 = vpack.c.b16 %v593, %v591
        %v682 = vpack.c.b16 %v596, %v594
        %v683 = vpack.c.b16 %v597, %v595
        %v684 = vpack.c.b16 %v600, %v598
        %v685 = vpack.c.b16 %v601, %v599
        %v686 = vpack.c.b16 %v604, %v602
        %v687 = vpack.c.b16 %v605, %v603
        %v688 = vpack.c.b16 %v608, %v606
        %v689 = vpack.c.b16 %v609, %v607
        %v690 = vpack.c.b16 %v612, %v610
        %v691 = vpack.c.b16 %v613, %v611
        %v692 = vpack.c.b16 %v616, %v614
        %v693 = vpack.c.b16 %v617, %v615
        %v694 = vpack.c.b16 %v620, %v618
        %v695 = vpack.c.b16 %v621, %v619
        %v696 = vpack.c.b16 %v624, %v622
        %v697 = vpack.c.b16 %v625, %v623
        %v698 = vpack.c.b16 %v628, %v626
        %v699 = vpack.c.b16 %v629, %v627
        %v700 = vpack.c.b16 %v632, %v630
        %v701 = vpack.c.b16 %v633, %v631
        %v702 = vpack.c.b16 %v636, %v634
        %v703 = vpack.c.b16 %v637, %v635
        %v704 = vpack.c.b16 %v640, %v638
        %v705 = vpack.c.b16 %v641, %v639
        %v834 = vunpack.c.l.b16 %v364
        %v835 = vunpack.c.h.b16 %v364
        %v836 = vunpack.c.l.b16 %v365
        %v837 = vunpack.c.h.b16 %v365
        %v838 = vunpack.c.l.b16 %v366
        %v839 = vunpack.c.h.b16 %v366
        %v840 = vunpack.c.l.b16 %v367
        %v841 = vunpack.c.h.b16 %v367
        %v842 = vunpack.c.l.b16 %v368
        %v843 = vunpack.c.h.b16 %v368
        %v844 = vunpack.c.l.b16 %v369
        %v845 = vunpack.c.h.b16 %v369
        %v846 = vunpack.c.l.b16 %v370
        %v847 = vunpack.c.h.b16 %v370
        %v848 = vunpack.c.l.b16 %v371
        %v849 = vunpack.c.h.b16 %v371
        %v850 = vunpack.c.l.b16 %v372
        %v851 = vunpack.c.h.b16 %v372
        %v852 = vunpack.c.l.b16 %v373
        %v853 = vunpack.c.h.b16 %v373
        %v854 = vunpack.c.l.b16 %v374
        %v855 = vunpack.c.h.b16 %v374
        %v856 = vunpack.c.l.b16 %v375
        %v857 = vunpack.c.h.b16 %v375
        %v858 = vunpack.c.l.b16 %v376
        %v859 = vunpack.c.h.b16 %v376
        %v860 = vunpack.c.l.b16 %v377
        %v861 = vunpack.c.h.b16 %v377
        %v862 = vunpack.c.l.b16 %v378
        %v863 = vunpack.c.h.b16 %v378
        %v864 = vunpack.c.l.b16 %v379
        %v865 = vunpack.c.h.b16 %v379
        %v866 = vunpack.c.l.b16 %v380
        %v867 = vunpack.c.h.b16 %v380
        %v868 = vunpack.c.l.b16 %v381
        %v869 = vunpack.c.h.b16 %v381
        %v870 = vunpack.c.l.b16 %v382
        %v871 = vunpack.c.h.b16 %v382
        %v872 = vunpack.c.l.b16 %v383
        %v873 = vunpack.c.h.b16 %v383
        %v874 = vunpack.c.l.b16 %v384
        %v875 = vunpack.c.h.b16 %v384
        %v876 = vunpack.c.l.b16 %v385
        %v877 = vunpack.c.h.b16 %v385
        %v878 = vunpack.c.l.b16 %v386
        %v879 = vunpack.c.h.b16 %v386
        %v880 = vunpack.c.l.b16 %v387
        %v881 = vunpack.c.h.b16 %v387
        %v882 = vunpack.c.l.b16 %v388
        %v883 = vunpack.c.h.b16 %v388
        %v884 = vunpack.c.l.b16 %v389
        %v885 = vunpack.c.h.b16 %v389
        %v886 = vunpack.c.l.b16 %v390
        %v887 = vunpack.c.h.b16 %v390
        %v888 = vunpack.c.l.b16 %v391
        %v889 = vunpack.c.h.b16 %v391
        %v890 = vunpack.c.l.b16 %v392
        %v891 = vunpack.c.h.b16 %v392
        %v892 = vunpack.c.l.b16 %v393
        %v893 = vunpack.c.h.b16 %v393
        %v894 = vunpack.c.l.b16 %v394
        %v895 = vunpack.c.h.b16 %v394
        %v896 = vunpack.c.l.b16 %v395
        %v897 = vunpack.c.h.b16 %v395
        %v898 = vunpack.c.l.b16 %v396
        %v899 = vunpack.c.h.b16 %v396
        %v900 = vunpack.c.l.b16 %v397
        %v901 = vunpack.c.h.b16 %v397
        %v902 = vunpack.c.l.b16 %v398
        %v903 = vunpack.c.h.b16 %v398
        %v904 = vunpack.c.l.b16 %v399
        %v905 = vunpack.c.h.b16 %v399
        %v906 = vunpack.c.l.b16 %v400
        %v907 = vunpack.c.h.b16 %v400
        %v908 = vunpack.c.l.b16 %v401
        %v909 = vunpack.c.h.b16 %v401
        %v910 = vunpack.c.l.b16 %v402
        %v911 = vunpack.c.h.b16 %v402
        %v912 = vunpack.c.l.b16 %v403
        %v913 = vunpack.c.h.b16 %v403
        %v914 = vunpack.c.l.b16 %v404
        %v915 = vunpack.c.h.b16 %v404
        %v916 = vunpack.c.l.b16 %v405
        %v917 = vunpack.c.h.b16 %v405
        %v918 = vunpack.c.l.b16 %v406
        %v919 = vunpack.c.h.b16 %v406
        %v920 = vunpack.c.l.b16 %v407
        %v921 = vunpack.c.h.b16 %v407
        %v922 = vunpack.c.l.b16 %v408
        %v923 = vunpack.c.h.b16 %v408
        %v924 = vunpack.c.l.b16 %v409
        %v925 = vunpack.c.h.b16 %v409
        %v926 = vunpack.c.l.b16 %v410
        %v927 = vunpack.c.h.b16 %v410
        %v928 = vunpack.c.l.b16 %v411
        %v929 = vunpack.c.h.b16 %v411
        %v930 = vunpack.c.l.b16 %v412
        %v931 = vunpack.c.h.b16 %v412
        %v932 = vunpack.c.l.b16 %v413
        %v933 = vunpack.c.h.b16 %v413
        %v934 = vunpack.c.l.b16 %v414
        %v935 = vunpack.c.h.b16 %v414
        %v936 = vunpack.c.l.b16 %v415
        %v937 = vunpack.c.h.b16 %v415
        %v938 = vunpack.c.l.b16 %v416
        %v939 = vunpack.c.h.b16 %v416
        %v940 = vunpack.c.l.b16 %v417
        %v941 = vunpack.c.h.b16 %v417
        %v942 = vunpack.c.l.b16 %v418
        %v943 = vunpack.c.h.b16 %v418
        %v944 = vunpack.c.l.b16 %v419
        %v945 = vunpack.c.h.b16 %v419
        %v946 = vunpack.c.l.b16 %v420
        %v947 = vunpack.c.h.b16 %v420
        %v948 = vunpack.c.l.b16 %v421
        %v949 = vunpack.c.h.b16 %v421
        %v950 = vunpack.c.l.b16 %v422
        %v951 = vunpack.c.h.b16 %v422
        %v952 = vunpack.c.l.b16 %v423
        %v953 = vunpack.c.h.b16 %v423
        %v954 = vunpack.c.l.b16 %v424
        %v955 = vunpack.c.h.b16 %v424
        %v956 = vunpack.c.l.b16 %v425
        %v957 = vunpack.c.h.b16 %v425
        %v958 = vunpack.c.l.b16 %v426
        %v959 = vunpack.c.h.b16 %v426
        %v960 = vunpack.c.l.b16 %v427
        %v961 = vunpack.c.h.b16 %v427
        %v962 = vpack.c.b16 %v838, %v834
        %v963 = vpack.c.b16 %v839, %v835
        %v964 = vpack.c.b16 %v840, %v836
        %v965 = vpack.c.b16 %v841, %v837
        %v966 = vpack.c.b16 %v846, %v842
        %v967 = vpack.c.b16 %v847, %v843
        %v968 = vpack.c.b16 %v848, %v844
        %v969 = vpack.c.b16 %v849, %v845
        %v970 = vpack.c.b16 %v854, %v850
        %v971 = vpack.c.b16 %v855, %v851
        %v972 = vpack.c.b16 %v856, %v852
        %v973 = vpack.c.b16 %v857, %v853
        %v974 = vpack.c.b16 %v862, %v858
        %v975 = vpack.c.b16 %v863, %v859
        %v976 = vpack.c.b16 %v864, %v860
        %v977 = vpack.c.b16 %v865, %v861
        %v978 = vpack.c.b16 %v870, %v866
        %v979 = vpack.c.b16 %v871, %v867
        %v980 = vpack.c.b16 %v872, %v868
        %v981 = vpack.c.b16 %v873, %v869
        %v982 = vpack.c.b16 %v878, %v874
        %v983 = vpack.c.b16 %v879, %v875
        %v984 = vpack.c.b16 %v880, %v876
        %v985 = vpack.c.b16 %v881, %v877
        %v986 = vpack.c.b16 %v886, %v882
        %v987 = vpack.c.b16 %v887, %v883
        %v988 = vpack.c.b16 %v888, %v884
        %v989 = vpack.c.b16 %v889, %v885
        %v990 = vpack.c.b16 %v894, %v890
        %v991 = vpack.c.b16 %v895, %v891
        %v992 = vpack.c.b16 %v896, %v892
        %v993 = vpack.c.b16 %v897, %v893
        %v994 = vpack.c.b16 %v902, %v898
        %v995 = vpack.c.b16 %v903, %v899
        %v996 = vpack.c.b16 %v904, %v900
        %v997 = vpack.c.b16 %v905, %v901
        %v998 = vpack.c.b16 %v910, %v906
        %v999 = vpack.c.b16 %v911, %v907
        %v1000 = vpack.c.b16 %v912, %v908
        %v1001 = vpack.c.b16 %v913, %v909
        %v1002 = vpack.c.b16 %v918, %v914
        %v1003 = vpack.c.b16 %v919, %v915
        %v1004 = vpack.c.b16 %v920, %v916
        %v1005 = vpack.c.b16 %v921, %v917
        %v1006 = vpack.c.b16 %v926, %v922
        %v1007 = vpack.c.b16 %v927, %v923
        %v1008 = vpack.c.b16 %v928, %v924
        %v1009 = vpack.c.b16 %v929, %v925
        %v1010 = vpack.c.b16 %v934, %v930
        %v1011 = vpack.c.b16 %v935, %v931
        %v1012 = vpack.c.b16 %v936, %v932
        %v1013 = vpack.c.b16 %v937, %v933
        %v1014 = vpack.c.b16 %v942, %v938
        %v1015 = vpack.c.b16 %v943, %v939
        %v1016 = vpack.c.b16 %v944, %v940
        %v1017 = vpack.c.b16 %v945, %v941
        %v1018 = vpack.c.b16 %v950, %v946
        %v1019 = vpack.c.b16 %v951, %v947
        %v1020 = vpack.c.b16 %v952, %v948
        %v1021 = vpack.c.b16 %v953, %v949
        %v1022 = vpack.c.b16 %v958, %v954
        %v1023 = vpack.c.b16 %v959, %v955
        %v1024 = vpack.c.b16 %v960, %v956
        %v1025 = vpack.c.b16 %v961, %v957
        %1090 = vmatprep.subr.bf16.mxu0 %v991
        %1091 = vmatpush1.bf16.msra.mxu0 %v990
        %1092 = vmatprep.subr.bf16.mxu0 %v987
        %1093 = vmatpush1.bf16.msra.mxu0 %v986
        %1094 = vmatprep.subr.bf16.mxu0 %v983
        %1095 = vmatpush1.bf16.msra.mxu0 %v982
        %1096 = vmatprep.subr.bf16.mxu0 %v979
        %1097 = vmatpush1.bf16.msra.mxu0 %v978
        %1098 = vmatprep.subr.bf16.mxu0 %v975
        %1099 = vmatpush1.bf16.msra.mxu0 %v974
        %1100 = vmatprep.subr.bf16.mxu0 %v971
        %1101 = vmatpush1.bf16.msra.mxu0 %v970
        %1102 = vmatprep.subr.bf16.mxu0 %v967
        %1103 = vmatpush1.bf16.msra.mxu0 %v966
        %1104 = vmatprep.subr.bf16.mxu0 %v963
        %1105 = vmatpush1.bf16.msra.mxu0 %v962
        %1106 = vmatprep.subr.bf16.mxu0 %v1023
        %1107 = vmatpush2.bf16.msra.mxu0 %v1022
        %1108 = vmatprep.subr.bf16.mxu0 %v1019
        %1109 = vmatpush2.bf16.msra.mxu0 %v1018
        %1110 = vmatprep.subr.bf16.mxu0 %v1015
        %1111 = vmatpush2.bf16.msra.mxu0 %v1014
        %1112 = vmatprep.subr.bf16.mxu0 %v1011
        %1113 = vmatpush2.bf16.msra.mxu0 %v1010
        %1114 = vmatprep.subr.bf16.mxu0 %v1007
        %1115 = vmatpush2.bf16.msra.mxu0 %v1006
        %1116 = vmatprep.subr.bf16.mxu0 %v1003
        %1117 = vmatpush2.bf16.msra.mxu0 %v1002
        %1118 = vmatprep.subr.bf16.mxu0 %v999
        %1119 = vmatpush2.bf16.msra.mxu0 %v998
        %1120 = vmatprep.subr.bf16.mxu0 %v995
        %1121 = vmatpush2.bf16.msra.mxu0 %v994
        %1122 = vmatprep.mubr.bf16.mxu0 %v643
        %1123 = vmatmul.mubr.bf16.gmra.mxu0 %v642
        %v1124 = vpop.f32.mrf.mxu0
        %v1125 = vadd.f32 %v433, %v1124
        %v1126 = vpop.f32.mrf.mxu0
        %v1127 = vadd.f32 %v437, %v1126
        %v1128 = vpop.f32.mrf.mxu0
        %v1129 = vadd.f32 %v433, %v1128
        %v1130 = vpop.f32.mrf.mxu0
        %v1131 = vadd.f32 %v437, %v1130
        %1132 = vmatprep.mubr.bf16.mxu0 %v645
        %1133 = vmatmul.mubr.bf16.gmra.mxu0 %v644
        %v1134 = vpop.f32.mrf.mxu0
        %v1135 = vadd.f32 %v433, %v1134
        %v1136 = vpop.f32.mrf.mxu0
        %v1137 = vadd.f32 %v437, %v1136
        %v1138 = vpop.f32.mrf.mxu0
        %v1139 = vadd.f32 %v433, %v1138
        %v1140 = vpop.f32.mrf.mxu0
        %v1141 = vadd.f32 %v437, %v1140
        %1142 = vmatprep.mubr.bf16.mxu0 %v647
        %1143 = vmatmul.mubr.bf16.gmra.mxu0 %v646
        %v1144 = vpop.f32.mrf.mxu0
        %v1145 = vadd.f32 %v433, %v1144
        %v1146 = vpop.f32.mrf.mxu0
        %v1147 = vadd.f32 %v437, %v1146
        %v1148 = vpop.f32.mrf.mxu0
        %v1149 = vadd.f32 %v433, %v1148
        %v1150 = vpop.f32.mrf.mxu0
        %v1151 = vadd.f32 %v437, %v1150
        %1152 = vmatprep.mubr.bf16.mxu0 %v649
        %1153 = vmatmul.mubr.bf16.gmra.mxu0 %v648
        %v1154 = vpop.f32.mrf.mxu0
        %v1155 = vadd.f32 %v433, %v1154
        %v1156 = vpop.f32.mrf.mxu0
        %v1157 = vadd.f32 %v437, %v1156
        %v1158 = vpop.f32.mrf.mxu0
        %v1159 = vadd.f32 %v433, %v1158
        %v1160 = vpop.f32.mrf.mxu0
        %v1161 = vadd.f32 %v437, %v1160
        %1162 = vmatprep.mubr.bf16.mxu0 %v651
        %1163 = vmatmul.mubr.bf16.gmra.mxu0 %v650
        %v1164 = vpop.f32.mrf.mxu0
        %v1165 = vadd.f32 %v433, %v1164
        %v1166 = vpop.f32.mrf.mxu0
        %v1167 = vadd.f32 %v437, %v1166
        %v1168 = vpop.f32.mrf.mxu0
        %v1169 = vadd.f32 %v433, %v1168
        %v1170 = vpop.f32.mrf.mxu0
        %v1171 = vadd.f32 %v437, %v1170
        %1172 = vmatprep.mubr.bf16.mxu0 %v653
        %1173 = vmatmul.mubr.bf16.gmra.mxu0 %v652
        %v1174 = vpop.f32.mrf.mxu0
        %v1175 = vadd.f32 %v433, %v1174
        %v1176 = vpop.f32.mrf.mxu0
        %v1177 = vadd.f32 %v437, %v1176
        %v1178 = vpop.f32.mrf.mxu0
        %v1179 = vadd.f32 %v433, %v1178
        %v1180 = vpop.f32.mrf.mxu0
        %v1181 = vadd.f32 %v437, %v1180
        %1182 = vmatprep.mubr.bf16.mxu0 %v655
        %1183 = vmatmul.mubr.bf16.gmra.mxu0 %v654
        %v1184 = vpop.f32.mrf.mxu0
        %v1185 = vadd.f32 %v433, %v1184
        %v1186 = vpop.f32.mrf.mxu0
        %v1187 = vadd.f32 %v437, %v1186
        %v1188 = vpop.f32.mrf.mxu0
        %v1189 = vadd.f32 %v433, %v1188
        %v1190 = vpop.f32.mrf.mxu0
        %v1191 = vadd.f32 %v437, %v1190
        %1192 = vmatprep.mubr.bf16.mxu0 %v657
        %1193 = vmatmul.mubr.bf16.gmra.mxu0 %v656
        %v1194 = vpop.f32.mrf.mxu0
        %v1195 = vadd.f32 %v433, %v1194
        %v1196 = vpop.f32.mrf.mxu0
        %v1197 = vadd.f32 %v437, %v1196
        %v1198 = vpop.f32.mrf.mxu0
        %v1199 = vadd.f32 %v433, %v1198
        %v1200 = vpop.f32.mrf.mxu0
        %v1201 = vadd.f32 %v437, %v1200
        %1202 = vmatprep.mubr.bf16.mxu0 %v659
        %1203 = vmatmul.mubr.bf16.gmra.mxu0 %v658
        %v1204 = vpop.f32.mrf.mxu0
        %v1205 = vadd.f32 %v433, %v1204
        %v1206 = vpop.f32.mrf.mxu0
        %v1207 = vadd.f32 %v437, %v1206
        %v1208 = vpop.f32.mrf.mxu0
        %v1209 = vadd.f32 %v433, %v1208
        %v1210 = vpop.f32.mrf.mxu0
        %v1211 = vadd.f32 %v437, %v1210
        %1212 = vmatprep.mubr.bf16.mxu0 %v661
        %1213 = vmatmul.mubr.bf16.gmra.mxu0 %v660
        %v1214 = vpop.f32.mrf.mxu0
        %v1215 = vadd.f32 %v433, %v1214
        %v1216 = vpop.f32.mrf.mxu0
        %v1217 = vadd.f32 %v437, %v1216
        %v1218 = vpop.f32.mrf.mxu0
        %v1219 = vadd.f32 %v433, %v1218
        %v1220 = vpop.f32.mrf.mxu0
        %v1221 = vadd.f32 %v437, %v1220
        %1222 = vmatprep.mubr.bf16.mxu0 %v663
        %1223 = vmatmul.mubr.bf16.gmra.mxu0 %v662
        %v1224 = vpop.f32.mrf.mxu0
        %v1225 = vadd.f32 %v433, %v1224
        %v1226 = vpop.f32.mrf.mxu0
        %v1227 = vadd.f32 %v437, %v1226
        %v1228 = vpop.f32.mrf.mxu0
        %v1229 = vadd.f32 %v433, %v1228
        %v1230 = vpop.f32.mrf.mxu0
        %v1231 = vadd.f32 %v437, %v1230
        %1232 = vmatprep.mubr.bf16.mxu0 %v665
        %1233 = vmatmul.mubr.bf16.gmra.mxu0 %v664
        %v1234 = vpop.f32.mrf.mxu0
        %v1235 = vadd.f32 %v433, %v1234
        %v1236 = vpop.f32.mrf.mxu0
        %v1237 = vadd.f32 %v437, %v1236
        %v1238 = vpop.f32.mrf.mxu0
        %v1239 = vadd.f32 %v433, %v1238
        %v1240 = vpop.f32.mrf.mxu0
        %v1241 = vadd.f32 %v437, %v1240
        %1242 = vmatprep.mubr.bf16.mxu0 %v667
        %1243 = vmatmul.mubr.bf16.gmra.mxu0 %v666
        %v1244 = vpop.f32.mrf.mxu0
        %v1245 = vadd.f32 %v433, %v1244
        %v1246 = vpop.f32.mrf.mxu0
        %v1247 = vadd.f32 %v437, %v1246
        %v1248 = vpop.f32.mrf.mxu0
        %v1249 = vadd.f32 %v433, %v1248
        %v1250 = vpop.f32.mrf.mxu0
        %v1251 = vadd.f32 %v437, %v1250
        %1252 = vmatprep.mubr.bf16.mxu0 %v669
        %1253 = vmatmul.mubr.bf16.gmra.mxu0 %v668
        %v1254 = vpop.f32.mrf.mxu0
        %v1255 = vadd.f32 %v433, %v1254
        %v1256 = vpop.f32.mrf.mxu0
        %v1257 = vadd.f32 %v437, %v1256
        %v1258 = vpop.f32.mrf.mxu0
        %v1259 = vadd.f32 %v433, %v1258
        %v1260 = vpop.f32.mrf.mxu0
        %v1261 = vadd.f32 %v437, %v1260
        %1262 = vmatprep.mubr.bf16.mxu0 %v671
        %1263 = vmatmul.mubr.bf16.gmra.mxu0 %v670
        %v1264 = vpop.f32.mrf.mxu0
        %v1265 = vadd.f32 %v433, %v1264
        %v1266 = vpop.f32.mrf.mxu0
        %v1267 = vadd.f32 %v437, %v1266
        %v1268 = vpop.f32.mrf.mxu0
        %v1269 = vadd.f32 %v433, %v1268
        %v1270 = vpop.f32.mrf.mxu0
        %v1271 = vadd.f32 %v437, %v1270
        %1272 = vmatprep.mubr.bf16.mxu0 %v673
        %1273 = vmatmul.mubr.bf16.gmra.mxu0 %v672
        %v1274 = vpop.f32.mrf.mxu0
        %v1275 = vadd.f32 %v433, %v1274
        %v1276 = vpop.f32.mrf.mxu0
        %v1277 = vadd.f32 %v437, %v1276
        %v1278 = vpop.f32.mrf.mxu0
        %v1279 = vadd.f32 %v433, %v1278
        %v1280 = vpop.f32.mrf.mxu0
        %v1281 = vadd.f32 %v437, %v1280
        %1282 = vmatprep.mubr.bf16.mxu0 %v675
        %1283 = vmatmul.mubr.bf16.gmra.mxu0 %v674
        %v1284 = vpop.f32.mrf.mxu0
        %v1285 = vadd.f32 %v433, %v1284
        %v1286 = vpop.f32.mrf.mxu0
        %v1287 = vadd.f32 %v437, %v1286
        %v1288 = vpop.f32.mrf.mxu0
        %v1289 = vadd.f32 %v433, %v1288
        %v1290 = vpop.f32.mrf.mxu0
        %v1291 = vadd.f32 %v437, %v1290
        %1292 = vmatprep.mubr.bf16.mxu0 %v677
        %1293 = vmatmul.mubr.bf16.gmra.mxu0 %v676
        %v1294 = vpop.f32.mrf.mxu0
        %v1295 = vadd.f32 %v433, %v1294
        %v1296 = vpop.f32.mrf.mxu0
        %v1297 = vadd.f32 %v437, %v1296
        %v1298 = vpop.f32.mrf.mxu0
        %v1299 = vadd.f32 %v433, %v1298
        %v1300 = vpop.f32.mrf.mxu0
        %v1301 = vadd.f32 %v437, %v1300
        %1302 = vmatprep.mubr.bf16.mxu0 %v679
        %1303 = vmatmul.mubr.bf16.gmra.mxu0 %v678
        %v1304 = vpop.f32.mrf.mxu0
        %v1305 = vadd.f32 %v433, %v1304
        %v1306 = vpop.f32.mrf.mxu0
        %v1307 = vadd.f32 %v437, %v1306
        %v1308 = vpop.f32.mrf.mxu0
        %v1309 = vadd.f32 %v433, %v1308
        %v1310 = vpop.f32.mrf.mxu0
        %v1311 = vadd.f32 %v437, %v1310
        %1312 = vmatprep.mubr.bf16.mxu0 %v681
        %1313 = vmatmul.mubr.bf16.gmra.mxu0 %v680
        %v1314 = vpop.f32.mrf.mxu0
        %v1315 = vadd.f32 %v433, %v1314
        %v1316 = vpop.f32.mrf.mxu0
        %v1317 = vadd.f32 %v437, %v1316
        %v1318 = vpop.f32.mrf.mxu0
        %v1319 = vadd.f32 %v433, %v1318
        %v1320 = vpop.f32.mrf.mxu0
        %v1321 = vadd.f32 %v437, %v1320
        %1322 = vmatprep.mubr.bf16.mxu0 %v683
        %1323 = vmatmul.mubr.bf16.gmra.mxu0 %v682
        %v1324 = vpop.f32.mrf.mxu0
        %v1325 = vadd.f32 %v433, %v1324
        %v1326 = vpop.f32.mrf.mxu0
        %v1327 = vadd.f32 %v437, %v1326
        %v1328 = vpop.f32.mrf.mxu0
        %v1329 = vadd.f32 %v433, %v1328
        %v1330 = vpop.f32.mrf.mxu0
        %v1331 = vadd.f32 %v437, %v1330
        %1332 = vmatprep.mubr.bf16.mxu0 %v685
        %1333 = vmatmul.mubr.bf16.gmra.mxu0 %v684
        %v1334 = vpop.f32.mrf.mxu0
        %v1335 = vadd.f32 %v433, %v1334
        %v1336 = vpop.f32.mrf.mxu0
        %v1337 = vadd.f32 %v437, %v1336
        %v1338 = vpop.f32.mrf.mxu0
        %v1339 = vadd.f32 %v433, %v1338
        %v1340 = vpop.f32.mrf.mxu0
        %v1341 = vadd.f32 %v437, %v1340
        %1342 = vmatprep.mubr.bf16.mxu0 %v687
        %1343 = vmatmul.mubr.bf16.gmra.mxu0 %v686
        %v1344 = vpop.f32.mrf.mxu0
        %v1345 = vadd.f32 %v433, %v1344
        %v1346 = vpop.f32.mrf.mxu0
        %v1347 = vadd.f32 %v437, %v1346
        %v1348 = vpop.f32.mrf.mxu0
        %v1349 = vadd.f32 %v433, %v1348
        %v1350 = vpop.f32.mrf.mxu0
        %v1351 = vadd.f32 %v437, %v1350
        %1352 = vmatprep.mubr.bf16.mxu0 %v689
        %1353 = vmatmul.mubr.bf16.gmra.mxu0 %v688
        %v1354 = vpop.f32.mrf.mxu0
        %v1355 = vadd.f32 %v433, %v1354
        %v1356 = vpop.f32.mrf.mxu0
        %v1357 = vadd.f32 %v437, %v1356
        %v1358 = vpop.f32.mrf.mxu0
        %v1359 = vadd.f32 %v433, %v1358
        %v1360 = vpop.f32.mrf.mxu0
        %v1361 = vadd.f32 %v437, %v1360
        %1362 = vmatprep.mubr.bf16.mxu0 %v691
        %1363 = vmatmul.mubr.bf16.gmra.mxu0 %v690
        %v1364 = vpop.f32.mrf.mxu0
        %v1365 = vadd.f32 %v433, %v1364
        %v1366 = vpop.f32.mrf.mxu0
        %v1367 = vadd.f32 %v437, %v1366
        %v1368 = vpop.f32.mrf.mxu0
        %v1369 = vadd.f32 %v433, %v1368
        %v1370 = vpop.f32.mrf.mxu0
        %v1371 = vadd.f32 %v437, %v1370
        %1372 = vmatprep.mubr.bf16.mxu0 %v693
        %1373 = vmatmul.mubr.bf16.gmra.mxu0 %v692
        %v1374 = vpop.f32.mrf.mxu0
        %v1375 = vadd.f32 %v433, %v1374
        %v1376 = vpop.f32.mrf.mxu0
        %v1377 = vadd.f32 %v437, %v1376
        %v1378 = vpop.f32.mrf.mxu0
        %v1379 = vadd.f32 %v433, %v1378
        %v1380 = vpop.f32.mrf.mxu0
        %v1381 = vadd.f32 %v437, %v1380
        %1382 = vmatprep.mubr.bf16.mxu0 %v695
        %1383 = vmatmul.mubr.bf16.gmra.mxu0 %v694
        %v1384 = vpop.f32.mrf.mxu0
        %v1385 = vadd.f32 %v433, %v1384
        %v1386 = vpop.f32.mrf.mxu0
        %v1387 = vadd.f32 %v437, %v1386
        %v1388 = vpop.f32.mrf.mxu0
        %v1389 = vadd.f32 %v433, %v1388
        %v1390 = vpop.f32.mrf.mxu0
        %v1391 = vadd.f32 %v437, %v1390
        %1392 = vmatprep.mubr.bf16.mxu0 %v697
        %1393 = vmatmul.mubr.bf16.gmra.mxu0 %v696
        %v1394 = vpop.f32.mrf.mxu0
        %v1395 = vadd.f32 %v433, %v1394
        %v1396 = vpop.f32.mrf.mxu0
        %v1397 = vadd.f32 %v437, %v1396
        %v1398 = vpop.f32.mrf.mxu0
        %v1399 = vadd.f32 %v433, %v1398
        %v1400 = vpop.f32.mrf.mxu0
        %v1401 = vadd.f32 %v437, %v1400
        %1402 = vmatprep.mubr.bf16.mxu0 %v699
        %1403 = vmatmul.mubr.bf16.gmra.mxu0 %v698
        %v1404 = vpop.f32.mrf.mxu0
        %v1405 = vadd.f32 %v433, %v1404
        %v1406 = vpop.f32.mrf.mxu0
        %v1407 = vadd.f32 %v437, %v1406
        %v1408 = vpop.f32.mrf.mxu0
        %v1409 = vadd.f32 %v433, %v1408
        %v1410 = vpop.f32.mrf.mxu0
        %v1411 = vadd.f32 %v437, %v1410
        %1412 = vmatprep.mubr.bf16.mxu0 %v701
        %1413 = vmatmul.mubr.bf16.gmra.mxu0 %v700
        %v1414 = vpop.f32.mrf.mxu0
        %v1415 = vadd.f32 %v433, %v1414
        %v1416 = vpop.f32.mrf.mxu0
        %v1417 = vadd.f32 %v437, %v1416
        %v1418 = vpop.f32.mrf.mxu0
        %v1419 = vadd.f32 %v433, %v1418
        %v1420 = vpop.f32.mrf.mxu0
        %v1421 = vadd.f32 %v437, %v1420
        %1422 = vmatprep.mubr.bf16.mxu0 %v703
        %1423 = vmatmul.mubr.bf16.gmra.mxu0 %v702
        %v1424 = vpop.f32.mrf.mxu0
        %v1425 = vadd.f32 %v433, %v1424
        %v1426 = vpop.f32.mrf.mxu0
        %v1427 = vadd.f32 %v437, %v1426
        %v1428 = vpop.f32.mrf.mxu0
        %v1429 = vadd.f32 %v433, %v1428
        %v1430 = vpop.f32.mrf.mxu0
        %v1431 = vadd.f32 %v437, %v1430
        %1432 = vmatprep.mubr.bf16.mxu0 %v705
        %1433 = vmatmul.mubr.bf16.gmra.mxu0 %v704
        %v1434 = vpop.f32.mrf.mxu0
        %v1435 = vadd.f32 %v433, %v1434
        %v1436 = vpop.f32.mrf.mxu0
        %v1437 = vadd.f32 %v437, %v1436
        %v1438 = vpop.f32.mrf.mxu0
        %v1439 = vadd.f32 %v433, %v1438
        %v1440 = vpop.f32.mrf.mxu0
        %v1441 = vadd.f32 %v437, %v1440
        %1442 = vdwg.mxu0
        %1443 = vmatprep.subr.bf16.mxu0 %v993
        %1444 = vmatpush1.bf16.msra.mxu0 %v992
        %1445 = vmatprep.subr.bf16.mxu0 %v989
        %1446 = vmatpush1.bf16.msra.mxu0 %v988
        %1447 = vmatprep.subr.bf16.mxu0 %v985
        %1448 = vmatpush1.bf16.msra.mxu0 %v984
        %1449 = vmatprep.subr.bf16.mxu0 %v981
        %1450 = vmatpush1.bf16.msra.mxu0 %v980
        %1451 = vmatprep.subr.bf16.mxu0 %v977
        %1452 = vmatpush1.bf16.msra.mxu0 %v976
        %1453 = vmatprep.subr.bf16.mxu0 %v973
        %1454 = vmatpush1.bf16.msra.mxu0 %v972
        %1455 = vmatprep.subr.bf16.mxu0 %v969
        %1456 = vmatpush1.bf16.msra.mxu0 %v968
        %1457 = vmatprep.subr.bf16.mxu0 %v965
        %1458 = vmatpush1.bf16.msra.mxu0 %v964
        %1459 = vmatprep.subr.bf16.mxu0 %v1025
        %1460 = vmatpush2.bf16.msra.mxu0 %v1024
        %1461 = vmatprep.subr.bf16.mxu0 %v1021
        %1462 = vmatpush2.bf16.msra.mxu0 %v1020
        %1463 = vmatprep.subr.bf16.mxu0 %v1017
        %1464 = vmatpush2.bf16.msra.mxu0 %v1016
        %1465 = vmatprep.subr.bf16.mxu0 %v1013
        %1466 = vmatpush2.bf16.msra.mxu0 %v1012
        %1467 = vmatprep.subr.bf16.mxu0 %v1009
        %1468 = vmatpush2.bf16.msra.mxu0 %v1008
        %1469 = vmatprep.subr.bf16.mxu0 %v1005
        %1470 = vmatpush2.bf16.msra.mxu0 %v1004
        %1471 = vmatprep.subr.bf16.mxu0 %v1001
        %1472 = vmatpush2.bf16.msra.mxu0 %v1000
        %1473 = vmatprep.subr.bf16.mxu0 %v997
        %1474 = vmatpush2.bf16.msra.mxu0 %v996
        %1475 = vmatprep.mubr.bf16.mxu0 %v643
        %1476 = vmatmul.mubr.bf16.gmra.mxu0 %v642
        %v1477 = vpop.f32.mrf.mxu0
        %v1478 = vadd.f32 %v441, %v1477
        %v1479 = vpop.f32.mrf.mxu0
        %v1480 = vadd.f32 %v445, %v1479
        %v1481 = vpop.f32.mrf.mxu0
        %v1482 = vadd.f32 %v441, %v1481
        %v1483 = vpop.f32.mrf.mxu0
        %v1484 = vadd.f32 %v445, %v1483
        %1485 = vmatprep.mubr.bf16.mxu0 %v645
        %1486 = vmatmul.mubr.bf16.gmra.mxu0 %v644
        %v1487 = vpop.f32.mrf.mxu0
        %v1488 = vadd.f32 %v441, %v1487
        %v1489 = vpop.f32.mrf.mxu0
        %v1490 = vadd.f32 %v445, %v1489
        %v1491 = vpop.f32.mrf.mxu0
        %v1492 = vadd.f32 %v441, %v1491
        %v1493 = vpop.f32.mrf.mxu0
        %v1494 = vadd.f32 %v445, %v1493
        %1495 = vmatprep.mubr.bf16.mxu0 %v647
        %1496 = vmatmul.mubr.bf16.gmra.mxu0 %v646
        %v1497 = vpop.f32.mrf.mxu0
        %v1498 = vadd.f32 %v441, %v1497
        %v1499 = vpop.f32.mrf.mxu0
        %v1500 = vadd.f32 %v445, %v1499
        %v1501 = vpop.f32.mrf.mxu0
        %v1502 = vadd.f32 %v441, %v1501
        %v1503 = vpop.f32.mrf.mxu0
        %v1504 = vadd.f32 %v445, %v1503
        %1505 = vmatprep.mubr.bf16.mxu0 %v649
        %1506 = vmatmul.mubr.bf16.gmra.mxu0 %v648
        %v1507 = vpop.f32.mrf.mxu0
        %v1508 = vadd.f32 %v441, %v1507
        %v1509 = vpop.f32.mrf.mxu0
        %v1510 = vadd.f32 %v445, %v1509
        %v1511 = vpop.f32.mrf.mxu0
        %v1512 = vadd.f32 %v441, %v1511
        %v1513 = vpop.f32.mrf.mxu0
        %v1514 = vadd.f32 %v445, %v1513
        %1515 = vmatprep.mubr.bf16.mxu0 %v651
        %1516 = vmatmul.mubr.bf16.gmra.mxu0 %v650
        %v1517 = vpop.f32.mrf.mxu0
        %v1518 = vadd.f32 %v441, %v1517
        %v1519 = vpop.f32.mrf.mxu0
        %v1520 = vadd.f32 %v445, %v1519
        %v1521 = vpop.f32.mrf.mxu0
        %v1522 = vadd.f32 %v441, %v1521
        %v1523 = vpop.f32.mrf.mxu0
        %v1524 = vadd.f32 %v445, %v1523
        %1525 = vmatprep.mubr.bf16.mxu0 %v653
        %1526 = vmatmul.mubr.bf16.gmra.mxu0 %v652
        %v1527 = vpop.f32.mrf.mxu0
        %v1528 = vadd.f32 %v441, %v1527
        %v1529 = vpop.f32.mrf.mxu0
        %v1530 = vadd.f32 %v445, %v1529
        %v1531 = vpop.f32.mrf.mxu0
        %v1532 = vadd.f32 %v441, %v1531
        %v1533 = vpop.f32.mrf.mxu0
        %v1534 = vadd.f32 %v445, %v1533
        %1535 = vmatprep.mubr.bf16.mxu0 %v655
        %1536 = vmatmul.mubr.bf16.gmra.mxu0 %v654
        %v1537 = vpop.f32.mrf.mxu0
        %v1538 = vadd.f32 %v441, %v1537
        %v1539 = vpop.f32.mrf.mxu0
        %v1540 = vadd.f32 %v445, %v1539
        %v1541 = vpop.f32.mrf.mxu0
        %v1542 = vadd.f32 %v441, %v1541
        %v1543 = vpop.f32.mrf.mxu0
        %v1544 = vadd.f32 %v445, %v1543
        %1545 = vmatprep.mubr.bf16.mxu0 %v657
        %1546 = vmatmul.mubr.bf16.gmra.mxu0 %v656
        %v1547 = vpop.f32.mrf.mxu0
        %v1548 = vadd.f32 %v441, %v1547
        %v1549 = vpop.f32.mrf.mxu0
        %v1550 = vadd.f32 %v445, %v1549
        %v1551 = vpop.f32.mrf.mxu0
        %v1552 = vadd.f32 %v441, %v1551
        %v1553 = vpop.f32.mrf.mxu0
        %v1554 = vadd.f32 %v445, %v1553
        %1555 = vmatprep.mubr.bf16.mxu0 %v659
        %1556 = vmatmul.mubr.bf16.gmra.mxu0 %v658
        %v1557 = vpop.f32.mrf.mxu0
        %v1558 = vadd.f32 %v441, %v1557
        %v1559 = vpop.f32.mrf.mxu0
        %v1560 = vadd.f32 %v445, %v1559
        %v1561 = vpop.f32.mrf.mxu0
        %v1562 = vadd.f32 %v441, %v1561
        %v1563 = vpop.f32.mrf.mxu0
        %v1564 = vadd.f32 %v445, %v1563
        %1565 = vmatprep.mubr.bf16.mxu0 %v661
        %1566 = vmatmul.mubr.bf16.gmra.mxu0 %v660
        %v1567 = vpop.f32.mrf.mxu0
        %v1568 = vadd.f32 %v441, %v1567
        %v1569 = vpop.f32.mrf.mxu0
        %v1570 = vadd.f32 %v445, %v1569
        %v1571 = vpop.f32.mrf.mxu0
        %v1572 = vadd.f32 %v441, %v1571
        %v1573 = vpop.f32.mrf.mxu0
        %v1574 = vadd.f32 %v445, %v1573
        %1575 = vmatprep.mubr.bf16.mxu0 %v663
        %1576 = vmatmul.mubr.bf16.gmra.mxu0 %v662
        %v1577 = vpop.f32.mrf.mxu0
        %v1578 = vadd.f32 %v441, %v1577
        %v1579 = vpop.f32.mrf.mxu0
        %v1580 = vadd.f32 %v445, %v1579
        %v1581 = vpop.f32.mrf.mxu0
        %v1582 = vadd.f32 %v441, %v1581
        %v1583 = vpop.f32.mrf.mxu0
        %v1584 = vadd.f32 %v445, %v1583
        %1585 = vmatprep.mubr.bf16.mxu0 %v665
        %1586 = vmatmul.mubr.bf16.gmra.mxu0 %v664
        %v1587 = vpop.f32.mrf.mxu0
        %v1588 = vadd.f32 %v441, %v1587
        %v1589 = vpop.f32.mrf.mxu0
        %v1590 = vadd.f32 %v445, %v1589
        %v1591 = vpop.f32.mrf.mxu0
        %v1592 = vadd.f32 %v441, %v1591
        %v1593 = vpop.f32.mrf.mxu0
        %v1594 = vadd.f32 %v445, %v1593
        %1595 = vmatprep.mubr.bf16.mxu0 %v667
        %1596 = vmatmul.mubr.bf16.gmra.mxu0 %v666
        %v1597 = vpop.f32.mrf.mxu0
        %v1598 = vadd.f32 %v441, %v1597
        %v1599 = vpop.f32.mrf.mxu0
        %v1600 = vadd.f32 %v445, %v1599
        %v1601 = vpop.f32.mrf.mxu0
        %v1602 = vadd.f32 %v441, %v1601
        %v1603 = vpop.f32.mrf.mxu0
        %v1604 = vadd.f32 %v445, %v1603
        %1605 = vmatprep.mubr.bf16.mxu0 %v669
        %1606 = vmatmul.mubr.bf16.gmra.mxu0 %v668
        %v1607 = vpop.f32.mrf.mxu0
        %v1608 = vadd.f32 %v441, %v1607
        %v1609 = vpop.f32.mrf.mxu0
        %v1610 = vadd.f32 %v445, %v1609
        %v1611 = vpop.f32.mrf.mxu0
        %v1612 = vadd.f32 %v441, %v1611
        %v1613 = vpop.f32.mrf.mxu0
        %v1614 = vadd.f32 %v445, %v1613
        %1615 = vmatprep.mubr.bf16.mxu0 %v671
        %1616 = vmatmul.mubr.bf16.gmra.mxu0 %v670
        %v1617 = vpop.f32.mrf.mxu0
        %v1618 = vadd.f32 %v441, %v1617
        %v1619 = vpop.f32.mrf.mxu0
        %v1620 = vadd.f32 %v445, %v1619
        %v1621 = vpop.f32.mrf.mxu0
        %v1622 = vadd.f32 %v441, %v1621
        %v1623 = vpop.f32.mrf.mxu0
        %v1624 = vadd.f32 %v445, %v1623
        %1625 = vmatprep.mubr.bf16.mxu0 %v673
        %1626 = vmatmul.mubr.bf16.gmra.mxu0 %v672
        %v1627 = vpop.f32.mrf.mxu0
        %v1628 = vadd.f32 %v441, %v1627
        %v1629 = vpop.f32.mrf.mxu0
        %v1630 = vadd.f32 %v445, %v1629
        %v1631 = vpop.f32.mrf.mxu0
        %v1632 = vadd.f32 %v441, %v1631
        %v1633 = vpop.f32.mrf.mxu0
        %v1634 = vadd.f32 %v445, %v1633
        %1635 = vmatprep.mubr.bf16.mxu0 %v675
        %1636 = vmatmul.mubr.bf16.gmra.mxu0 %v674
        %v1637 = vpop.f32.mrf.mxu0
        %v1638 = vadd.f32 %v441, %v1637
        %v1639 = vpop.f32.mrf.mxu0
        %v1640 = vadd.f32 %v445, %v1639
        %v1641 = vpop.f32.mrf.mxu0
        %v1642 = vadd.f32 %v441, %v1641
        %v1643 = vpop.f32.mrf.mxu0
        %v1644 = vadd.f32 %v445, %v1643
        %1645 = vmatprep.mubr.bf16.mxu0 %v677
        %1646 = vmatmul.mubr.bf16.gmra.mxu0 %v676
        %v1647 = vpop.f32.mrf.mxu0
        %v1648 = vadd.f32 %v441, %v1647
        %v1649 = vpop.f32.mrf.mxu0
        %v1650 = vadd.f32 %v445, %v1649
        %v1651 = vpop.f32.mrf.mxu0
        %v1652 = vadd.f32 %v441, %v1651
        %v1653 = vpop.f32.mrf.mxu0
        %v1654 = vadd.f32 %v445, %v1653
        %1655 = vmatprep.mubr.bf16.mxu0 %v679
        %1656 = vmatmul.mubr.bf16.gmra.mxu0 %v678
        %v1657 = vpop.f32.mrf.mxu0
        %v1658 = vadd.f32 %v441, %v1657
        %v1659 = vpop.f32.mrf.mxu0
        %v1660 = vadd.f32 %v445, %v1659
        %v1661 = vpop.f32.mrf.mxu0
        %v1662 = vadd.f32 %v441, %v1661
        %v1663 = vpop.f32.mrf.mxu0
        %v1664 = vadd.f32 %v445, %v1663
        %1665 = vmatprep.mubr.bf16.mxu0 %v681
        %1666 = vmatmul.mubr.bf16.gmra.mxu0 %v680
        %v1667 = vpop.f32.mrf.mxu0
        %v1668 = vadd.f32 %v441, %v1667
        %v1669 = vpop.f32.mrf.mxu0
        %v1670 = vadd.f32 %v445, %v1669
        %v1671 = vpop.f32.mrf.mxu0
        %v1672 = vadd.f32 %v441, %v1671
        %v1673 = vpop.f32.mrf.mxu0
        %v1674 = vadd.f32 %v445, %v1673
        %1675 = vmatprep.mubr.bf16.mxu0 %v683
        %1676 = vmatmul.mubr.bf16.gmra.mxu0 %v682
        %v1677 = vpop.f32.mrf.mxu0
        %v1678 = vadd.f32 %v441, %v1677
        %v1679 = vpop.f32.mrf.mxu0
        %v1680 = vadd.f32 %v445, %v1679
        %v1681 = vpop.f32.mrf.mxu0
        %v1682 = vadd.f32 %v441, %v1681
        %v1683 = vpop.f32.mrf.mxu0
        %v1684 = vadd.f32 %v445, %v1683
        %1685 = vmatprep.mubr.bf16.mxu0 %v685
        %1686 = vmatmul.mubr.bf16.gmra.mxu0 %v684
        %v1687 = vpop.f32.mrf.mxu0
        %v1688 = vadd.f32 %v441, %v1687
        %v1689 = vpop.f32.mrf.mxu0
        %v1690 = vadd.f32 %v445, %v1689
        %v1691 = vpop.f32.mrf.mxu0
        %v1692 = vadd.f32 %v441, %v1691
        %v1693 = vpop.f32.mrf.mxu0
        %v1694 = vadd.f32 %v445, %v1693
        %1695 = vmatprep.mubr.bf16.mxu0 %v687
        %1696 = vmatmul.mubr.bf16.gmra.mxu0 %v686
        %v1697 = vpop.f32.mrf.mxu0
        %v1698 = vadd.f32 %v441, %v1697
        %v1699 = vpop.f32.mrf.mxu0
        %v1700 = vadd.f32 %v445, %v1699
        %v1701 = vpop.f32.mrf.mxu0
        %v1702 = vadd.f32 %v441, %v1701
        %v1703 = vpop.f32.mrf.mxu0
        %v1704 = vadd.f32 %v445, %v1703
        %1705 = vmatprep.mubr.bf16.mxu0 %v689
        %1706 = vmatmul.mubr.bf16.gmra.mxu0 %v688
        %v1707 = vpop.f32.mrf.mxu0
        %v1708 = vadd.f32 %v441, %v1707
        %v1709 = vpop.f32.mrf.mxu0
        %v1710 = vadd.f32 %v445, %v1709
        %v1711 = vpop.f32.mrf.mxu0
        %v1712 = vadd.f32 %v441, %v1711
        %v1713 = vpop.f32.mrf.mxu0
        %v1714 = vadd.f32 %v445, %v1713
        %1715 = vmatprep.mubr.bf16.mxu0 %v691
        %1716 = vmatmul.mubr.bf16.gmra.mxu0 %v690
        %v1717 = vpop.f32.mrf.mxu0
        %v1718 = vadd.f32 %v441, %v1717
        %v1719 = vpop.f32.mrf.mxu0
        %v1720 = vadd.f32 %v445, %v1719
        %v1721 = vpop.f32.mrf.mxu0
        %v1722 = vadd.f32 %v441, %v1721
        %v1723 = vpop.f32.mrf.mxu0
        %v1724 = vadd.f32 %v445, %v1723
        %1725 = vmatprep.mubr.bf16.mxu0 %v693
        %1726 = vmatmul.mubr.bf16.gmra.mxu0 %v692
        %v1727 = vpop.f32.mrf.mxu0
        %v1728 = vadd.f32 %v441, %v1727
        %v1729 = vpop.f32.mrf.mxu0
        %v1730 = vadd.f32 %v445, %v1729
        %v1731 = vpop.f32.mrf.mxu0
        %v1732 = vadd.f32 %v441, %v1731
        %v1733 = vpop.f32.mrf.mxu0
        %v1734 = vadd.f32 %v445, %v1733
        %1735 = vmatprep.mubr.bf16.mxu0 %v695
        %1736 = vmatmul.mubr.bf16.gmra.mxu0 %v694
        %v1737 = vpop.f32.mrf.mxu0
        %v1738 = vadd.f32 %v441, %v1737
        %v1739 = vpop.f32.mrf.mxu0
        %v1740 = vadd.f32 %v445, %v1739
        %v1741 = vpop.f32.mrf.mxu0
        %v1742 = vadd.f32 %v441, %v1741
        %v1743 = vpop.f32.mrf.mxu0
        %v1744 = vadd.f32 %v445, %v1743
        %1745 = vmatprep.mubr.bf16.mxu0 %v697
        %1746 = vmatmul.mubr.bf16.gmra.mxu0 %v696
        %v1747 = vpop.f32.mrf.mxu0
        %v1748 = vadd.f32 %v441, %v1747
        %v1749 = vpop.f32.mrf.mxu0
        %v1750 = vadd.f32 %v445, %v1749
        %v1751 = vpop.f32.mrf.mxu0
        %v1752 = vadd.f32 %v441, %v1751
        %v1753 = vpop.f32.mrf.mxu0
        %v1754 = vadd.f32 %v445, %v1753
        %1755 = vmatprep.mubr.bf16.mxu0 %v699
        %1756 = vmatmul.mubr.bf16.gmra.mxu0 %v698
        %v1757 = vpop.f32.mrf.mxu0
        %v1758 = vadd.f32 %v441, %v1757
        %v1759 = vpop.f32.mrf.mxu0
        %v1760 = vadd.f32 %v445, %v1759
        %v1761 = vpop.f32.mrf.mxu0
        %v1762 = vadd.f32 %v441, %v1761
        %v1763 = vpop.f32.mrf.mxu0
        %v1764 = vadd.f32 %v445, %v1763
        %1765 = vmatprep.mubr.bf16.mxu0 %v701
        %1766 = vmatmul.mubr.bf16.gmra.mxu0 %v700
        %v1767 = vpop.f32.mrf.mxu0
        %v1768 = vadd.f32 %v441, %v1767
        %v1769 = vpop.f32.mrf.mxu0
        %v1770 = vadd.f32 %v445, %v1769
        %v1771 = vpop.f32.mrf.mxu0
        %v1772 = vadd.f32 %v441, %v1771
        %v1773 = vpop.f32.mrf.mxu0
        %v1774 = vadd.f32 %v445, %v1773
        %1775 = vmatprep.mubr.bf16.mxu0 %v703
        %1776 = vmatmul.mubr.bf16.gmra.mxu0 %v702
        %v1777 = vpop.f32.mrf.mxu0
        %v1778 = vadd.f32 %v441, %v1777
        %v1779 = vpop.f32.mrf.mxu0
        %v1780 = vadd.f32 %v445, %v1779
        %v1781 = vpop.f32.mrf.mxu0
        %v1782 = vadd.f32 %v441, %v1781
        %v1783 = vpop.f32.mrf.mxu0
        %v1784 = vadd.f32 %v445, %v1783
        %1785 = vmatprep.mubr.bf16.mxu0 %v705
        %1786 = vmatmul.mubr.bf16.gmra.mxu0 %v704
        %v1787 = vpop.f32.mrf.mxu0
        %v1788 = vadd.f32 %v441, %v1787
        %v1789 = vpop.f32.mrf.mxu0
        %v1790 = vadd.f32 %v445, %v1789
        %v1791 = vpop.f32.mrf.mxu0
        %v1792 = vadd.f32 %v441, %v1791
        %v1793 = vpop.f32.mrf.mxu0
        %v1794 = vadd.f32 %v445, %v1793
        %1795 = vdwg.mxu0
        %v1796 = vmax.f32 %v1125, 0.0
        %v1797 = vmax.f32 %v1127, 0.0
        %v1798 = vmax.f32 %v1478, 0.0
        %v1799 = vmax.f32 %v1480, 0.0
        %v1800 = vmax.f32 %v1129, 0.0
        %v1801 = vmax.f32 %v1131, 0.0
        %v1802 = vmax.f32 %v1482, 0.0
        %v1803 = vmax.f32 %v1484, 0.0
        %v1804 = vmax.f32 %v1135, 0.0
        %v1805 = vmax.f32 %v1137, 0.0
        %v1806 = vmax.f32 %v1488, 0.0
        %v1807 = vmax.f32 %v1490, 0.0
        %v1808 = vmax.f32 %v1139, 0.0
        %v1809 = vmax.f32 %v1141, 0.0
        %v1810 = vmax.f32 %v1492, 0.0
        %v1811 = vmax.f32 %v1494, 0.0
        %v1812 = vmax.f32 %v1145, 0.0
        %v1813 = vmax.f32 %v1147, 0.0
        %v1814 = vmax.f32 %v1498, 0.0
        %v1815 = vmax.f32 %v1500, 0.0
        %v1816 = vmax.f32 %v1149, 0.0
        %v1817 = vmax.f32 %v1151, 0.0
        %v1818 = vmax.f32 %v1502, 0.0
        %v1819 = vmax.f32 %v1504, 0.0
        %v1820 = vmax.f32 %v1155, 0.0
        %v1821 = vmax.f32 %v1157, 0.0
        %v1822 = vmax.f32 %v1508, 0.0
        %v1823 = vmax.f32 %v1510, 0.0
        %v1824 = vmax.f32 %v1159, 0.0
        %v1825 = vmax.f32 %v1161, 0.0
        %v1826 = vmax.f32 %v1512, 0.0
        %v1827 = vmax.f32 %v1514, 0.0
        %v1828 = vmax.f32 %v1165, 0.0
        %v1829 = vmax.f32 %v1167, 0.0
        %v1830 = vmax.f32 %v1518, 0.0
        %v1831 = vmax.f32 %v1520, 0.0
        %v1832 = vmax.f32 %v1169, 0.0
        %v1833 = vmax.f32 %v1171, 0.0
        %v1834 = vmax.f32 %v1522, 0.0
        %v1835 = vmax.f32 %v1524, 0.0
        %v1836 = vmax.f32 %v1175, 0.0
        %v1837 = vmax.f32 %v1177, 0.0
        %v1838 = vmax.f32 %v1528, 0.0
        %v1839 = vmax.f32 %v1530, 0.0
        %v1840 = vmax.f32 %v1179, 0.0
        %v1841 = vmax.f32 %v1181, 0.0
        %v1842 = vmax.f32 %v1532, 0.0
        %v1843 = vmax.f32 %v1534, 0.0
        %v1844 = vmax.f32 %v1185, 0.0
        %v1845 = vmax.f32 %v1187, 0.0
        %v1846 = vmax.f32 %v1538, 0.0
        %v1847 = vmax.f32 %v1540, 0.0
        %v1848 = vmax.f32 %v1189, 0.0
        %v1849 = vmax.f32 %v1191, 0.0
        %v1850 = vmax.f32 %v1542, 0.0
        %v1851 = vmax.f32 %v1544, 0.0
        %v1852 = vmax.f32 %v1195, 0.0
        %v1853 = vmax.f32 %v1197, 0.0
        %v1854 = vmax.f32 %v1548, 0.0
        %v1855 = vmax.f32 %v1550, 0.0
        %v1856 = vmax.f32 %v1199, 0.0
        %v1857 = vmax.f32 %v1201, 0.0
        %v1858 = vmax.f32 %v1552, 0.0
        %v1859 = vmax.f32 %v1554, 0.0
        %v1860 = vmax.f32 %v1205, 0.0
        %v1861 = vmax.f32 %v1207, 0.0
        %v1862 = vmax.f32 %v1558, 0.0
        %v1863 = vmax.f32 %v1560, 0.0
        %v1864 = vmax.f32 %v1209, 0.0
        %v1865 = vmax.f32 %v1211, 0.0
        %v1866 = vmax.f32 %v1562, 0.0
        %v1867 = vmax.f32 %v1564, 0.0
        %v1868 = vmax.f32 %v1215, 0.0
        %v1869 = vmax.f32 %v1217, 0.0
        %v1870 = vmax.f32 %v1568, 0.0
        %v1871 = vmax.f32 %v1570, 0.0
        %v1872 = vmax.f32 %v1219, 0.0
        %v1873 = vmax.f32 %v1221, 0.0
        %v1874 = vmax.f32 %v1572, 0.0
        %v1875 = vmax.f32 %v1574, 0.0
        %v1876 = vmax.f32 %v1225, 0.0
        %v1877 = vmax.f32 %v1227, 0.0
        %v1878 = vmax.f32 %v1578, 0.0
        %v1879 = vmax.f32 %v1580, 0.0
        %v1880 = vmax.f32 %v1229, 0.0
        %v1881 = vmax.f32 %v1231, 0.0
        %v1882 = vmax.f32 %v1582, 0.0
        %v1883 = vmax.f32 %v1584, 0.0
        %v1884 = vmax.f32 %v1235, 0.0
        %v1885 = vmax.f32 %v1237, 0.0
        %v1886 = vmax.f32 %v1588, 0.0
        %v1887 = vmax.f32 %v1590, 0.0
        %v1888 = vmax.f32 %v1239, 0.0
        %v1889 = vmax.f32 %v1241, 0.0
        %v1890 = vmax.f32 %v1592, 0.0
        %v1891 = vmax.f32 %v1594, 0.0
        %v1892 = vmax.f32 %v1245, 0.0
        %v1893 = vmax.f32 %v1247, 0.0
        %v1894 = vmax.f32 %v1598, 0.0
        %v1895 = vmax.f32 %v1600, 0.0
        %v1896 = vmax.f32 %v1249, 0.0
        %v1897 = vmax.f32 %v1251, 0.0
        %v1898 = vmax.f32 %v1602, 0.0
        %v1899 = vmax.f32 %v1604, 0.0
        %v1900 = vmax.f32 %v1255, 0.0
        %v1901 = vmax.f32 %v1257, 0.0
        %v1902 = vmax.f32 %v1608, 0.0
        %v1903 = vmax.f32 %v1610, 0.0
        %v1904 = vmax.f32 %v1259, 0.0
        %v1905 = vmax.f32 %v1261, 0.0
        %v1906 = vmax.f32 %v1612, 0.0
        %v1907 = vmax.f32 %v1614, 0.0
        %v1908 = vmax.f32 %v1265, 0.0
        %v1909 = vmax.f32 %v1267, 0.0
        %v1910 = vmax.f32 %v1618, 0.0
        %v1911 = vmax.f32 %v1620, 0.0
        %v1912 = vmax.f32 %v1269, 0.0
        %v1913 = vmax.f32 %v1271, 0.0
        %v1914 = vmax.f32 %v1622, 0.0
        %v1915 = vmax.f32 %v1624, 0.0
        %v1916 = vmax.f32 %v1275, 0.0
        %v1917 = vmax.f32 %v1277, 0.0
        %v1918 = vmax.f32 %v1628, 0.0
        %v1919 = vmax.f32 %v1630, 0.0
        %v1920 = vmax.f32 %v1279, 0.0
        %v1921 = vmax.f32 %v1281, 0.0
        %v1922 = vmax.f32 %v1632, 0.0
        %v1923 = vmax.f32 %v1634, 0.0
        %v1924 = vmax.f32 %v1285, 0.0
        %v1925 = vmax.f32 %v1287, 0.0
        %v1926 = vmax.f32 %v1638, 0.0
        %v1927 = vmax.f32 %v1640, 0.0
        %v1928 = vmax.f32 %v1289, 0.0
        %v1929 = vmax.f32 %v1291, 0.0
        %v1930 = vmax.f32 %v1642, 0.0
        %v1931 = vmax.f32 %v1644, 0.0
        %v1932 = vmax.f32 %v1295, 0.0
        %v1933 = vmax.f32 %v1297, 0.0
        %v1934 = vmax.f32 %v1648, 0.0
        %v1935 = vmax.f32 %v1650, 0.0
        %v1936 = vmax.f32 %v1299, 0.0
        %v1937 = vmax.f32 %v1301, 0.0
        %v1938 = vmax.f32 %v1652, 0.0
        %v1939 = vmax.f32 %v1654, 0.0
        %v1940 = vmax.f32 %v1305, 0.0
        %v1941 = vmax.f32 %v1307, 0.0
        %v1942 = vmax.f32 %v1658, 0.0
        %v1943 = vmax.f32 %v1660, 0.0
        %v1944 = vmax.f32 %v1309, 0.0
        %v1945 = vmax.f32 %v1311, 0.0
        %v1946 = vmax.f32 %v1662, 0.0
        %v1947 = vmax.f32 %v1664, 0.0
        %v1948 = vmax.f32 %v1315, 0.0
        %v1949 = vmax.f32 %v1317, 0.0
        %v1950 = vmax.f32 %v1668, 0.0
        %v1951 = vmax.f32 %v1670, 0.0
        %v1952 = vmax.f32 %v1319, 0.0
        %v1953 = vmax.f32 %v1321, 0.0
        %v1954 = vmax.f32 %v1672, 0.0
        %v1955 = vmax.f32 %v1674, 0.0
        %v1956 = vmax.f32 %v1325, 0.0
        %v1957 = vmax.f32 %v1327, 0.0
        %v1958 = vmax.f32 %v1678, 0.0
        %v1959 = vmax.f32 %v1680, 0.0
        %v1960 = vmax.f32 %v1329, 0.0
        %v1961 = vmax.f32 %v1331, 0.0
        %v1962 = vmax.f32 %v1682, 0.0
        %v1963 = vmax.f32 %v1684, 0.0
        %v1964 = vmax.f32 %v1335, 0.0
        %v1965 = vmax.f32 %v1337, 0.0
        %v1966 = vmax.f32 %v1688, 0.0
        %v1967 = vmax.f32 %v1690, 0.0
        %v1968 = vmax.f32 %v1339, 0.0
        %v1969 = vmax.f32 %v1341, 0.0
        %v1970 = vmax.f32 %v1692, 0.0
        %v1971 = vmax.f32 %v1694, 0.0
        %v1972 = vmax.f32 %v1345, 0.0
        %v1973 = vmax.f32 %v1347, 0.0
        %v1974 = vmax.f32 %v1698, 0.0
        %v1975 = vmax.f32 %v1700, 0.0
        %v1976 = vmax.f32 %v1349, 0.0
        %v1977 = vmax.f32 %v1351, 0.0
        %v1978 = vmax.f32 %v1702, 0.0
        %v1979 = vmax.f32 %v1704, 0.0
        %v1980 = vmax.f32 %v1355, 0.0
        %v1981 = vmax.f32 %v1357, 0.0
        %v1982 = vmax.f32 %v1708, 0.0
        %v1983 = vmax.f32 %v1710, 0.0
        %v1984 = vmax.f32 %v1359, 0.0
        %v1985 = vmax.f32 %v1361, 0.0
        %v1986 = vmax.f32 %v1712, 0.0
        %v1987 = vmax.f32 %v1714, 0.0
        %v1988 = vmax.f32 %v1365, 0.0
        %v1989 = vmax.f32 %v1367, 0.0
        %v1990 = vmax.f32 %v1718, 0.0
        %v1991 = vmax.f32 %v1720, 0.0
        %v1992 = vmax.f32 %v1369, 0.0
        %v1993 = vmax.f32 %v1371, 0.0
        %v1994 = vmax.f32 %v1722, 0.0
        %v1995 = vmax.f32 %v1724, 0.0
        %v1996 = vmax.f32 %v1375, 0.0
        %v1997 = vmax.f32 %v1377, 0.0
        %v1998 = vmax.f32 %v1728, 0.0
        %v1999 = vmax.f32 %v1730, 0.0
        %v2000 = vmax.f32 %v1379, 0.0
        %v2001 = vmax.f32 %v1381, 0.0
        %v2002 = vmax.f32 %v1732, 0.0
        %v2003 = vmax.f32 %v1734, 0.0
        %v2004 = vmax.f32 %v1385, 0.0
        %v2005 = vmax.f32 %v1387, 0.0
        %v2006 = vmax.f32 %v1738, 0.0
        %v2007 = vmax.f32 %v1740, 0.0
        %v2008 = vmax.f32 %v1389, 0.0
        %v2009 = vmax.f32 %v1391, 0.0
        %v2010 = vmax.f32 %v1742, 0.0
        %v2011 = vmax.f32 %v1744, 0.0
        %v2012 = vmax.f32 %v1395, 0.0
        %v2013 = vmax.f32 %v1397, 0.0
        %v2014 = vmax.f32 %v1748, 0.0
        %v2015 = vmax.f32 %v1750, 0.0
        %v2016 = vmax.f32 %v1399, 0.0
        %v2017 = vmax.f32 %v1401, 0.0
        %v2018 = vmax.f32 %v1752, 0.0
        %v2019 = vmax.f32 %v1754, 0.0
        %v2020 = vmax.f32 %v1405, 0.0
        %v2021 = vmax.f32 %v1407, 0.0
        %v2022 = vmax.f32 %v1758, 0.0
        %v2023 = vmax.f32 %v1760, 0.0
        %v2024 = vmax.f32 %v1409, 0.0
        %v2025 = vmax.f32 %v1411, 0.0
        %v2026 = vmax.f32 %v1762, 0.0
        %v2027 = vmax.f32 %v1764, 0.0
        %v2028 = vmax.f32 %v1415, 0.0
        %v2029 = vmax.f32 %v1417, 0.0
        %v2030 = vmax.f32 %v1768, 0.0
        %v2031 = vmax.f32 %v1770, 0.0
        %v2032 = vmax.f32 %v1419, 0.0
        %v2033 = vmax.f32 %v1421, 0.0
        %v2034 = vmax.f32 %v1772, 0.0
        %v2035 = vmax.f32 %v1774, 0.0
        %v2036 = vmax.f32 %v1425, 0.0
        %v2037 = vmax.f32 %v1427, 0.0
        %v2038 = vmax.f32 %v1778, 0.0
        %v2039 = vmax.f32 %v1780, 0.0
        %v2040 = vmax.f32 %v1429, 0.0
        %v2041 = vmax.f32 %v1431, 0.0
        %v2042 = vmax.f32 %v1782, 0.0
        %v2043 = vmax.f32 %v1784, 0.0
        %v2044 = vmax.f32 %v1435, 0.0
        %v2045 = vmax.f32 %v1437, 0.0
        %v2046 = vmax.f32 %v1788, 0.0
        %v2047 = vmax.f32 %v1790, 0.0
        %v2048 = vmax.f32 %v1439, 0.0
        %v2049 = vmax.f32 %v1441, 0.0
        %v2050 = vmax.f32 %v1792, 0.0
        %v2051 = vmax.f32 %v1794, 0.0
        %v2052 = vpack.c.bf16 %v1800, %v1796
        %v2053 = vpack.c.bf16 %v1801, %v1797
        %v2054 = vpack.c.bf16 %v1802, %v1798
        %v2055 = vpack.c.bf16 %v1803, %v1799
        %v2056 = vpack.c.bf16 %v1808, %v1804
        %v2057 = vpack.c.bf16 %v1809, %v1805
        %v2058 = vpack.c.bf16 %v1810, %v1806
        %v2059 = vpack.c.bf16 %v1811, %v1807
        %v2060 = vpack.c.bf16 %v1816, %v1812
        %v2061 = vpack.c.bf16 %v1817, %v1813
        %v2062 = vpack.c.bf16 %v1818, %v1814
        %v2063 = vpack.c.bf16 %v1819, %v1815
        %v2064 = vpack.c.bf16 %v1824, %v1820
        %v2065 = vpack.c.bf16 %v1825, %v1821
        %v2066 = vpack.c.bf16 %v1826, %v1822
        %v2067 = vpack.c.bf16 %v1827, %v1823
        %v2068 = vpack.c.bf16 %v1832, %v1828
        %v2069 = vpack.c.bf16 %v1833, %v1829
        %v2070 = vpack.c.bf16 %v1834, %v1830
        %v2071 = vpack.c.bf16 %v1835, %v1831
        %v2072 = vpack.c.bf16 %v1840, %v1836
        %v2073 = vpack.c.bf16 %v1841, %v1837
        %v2074 = vpack.c.bf16 %v1842, %v1838
        %v2075 = vpack.c.bf16 %v1843, %v1839
        %v2076 = vpack.c.bf16 %v1848, %v1844
        %v2077 = vpack.c.bf16 %v1849, %v1845
        %v2078 = vpack.c.bf16 %v1850, %v1846
        %v2079 = vpack.c.bf16 %v1851, %v1847
        %v2080 = vpack.c.bf16 %v1856, %v1852
        %v2081 = vpack.c.bf16 %v1857, %v1853
        %v2082 = vpack.c.bf16 %v1858, %v1854
        %v2083 = vpack.c.bf16 %v1859, %v1855
        %v2084 = vpack.c.bf16 %v1864, %v1860
        %v2085 = vpack.c.bf16 %v1865, %v1861
        %v2086 = vpack.c.bf16 %v1866, %v1862
        %v2087 = vpack.c.bf16 %v1867, %v1863
        %v2088 = vpack.c.bf16 %v1872, %v1868
        %v2089 = vpack.c.bf16 %v1873, %v1869
        %v2090 = vpack.c.bf16 %v1874, %v1870
        %v2091 = vpack.c.bf16 %v1875, %v1871
        %v2092 = vpack.c.bf16 %v1880, %v1876
        %v2093 = vpack.c.bf16 %v1881, %v1877
        %v2094 = vpack.c.bf16 %v1882, %v1878
        %v2095 = vpack.c.bf16 %v1883, %v1879
        %v2096 = vpack.c.bf16 %v1888, %v1884
        %v2097 = vpack.c.bf16 %v1889, %v1885
        %v2098 = vpack.c.bf16 %v1890, %v1886
        %v2099 = vpack.c.bf16 %v1891, %v1887
        %v2100 = vpack.c.bf16 %v1896, %v1892
        %v2101 = vpack.c.bf16 %v1897, %v1893
        %v2102 = vpack.c.bf16 %v1898, %v1894
        %v2103 = vpack.c.bf16 %v1899, %v1895
        %v2104 = vpack.c.bf16 %v1904, %v1900
        %v2105 = vpack.c.bf16 %v1905, %v1901
        %v2106 = vpack.c.bf16 %v1906, %v1902
        %v2107 = vpack.c.bf16 %v1907, %v1903
        %v2108 = vpack.c.bf16 %v1912, %v1908
        %v2109 = vpack.c.bf16 %v1913, %v1909
        %v2110 = vpack.c.bf16 %v1914, %v1910
        %v2111 = vpack.c.bf16 %v1915, %v1911
        %v2112 = vpack.c.bf16 %v1920, %v1916
        %v2113 = vpack.c.bf16 %v1921, %v1917
        %v2114 = vpack.c.bf16 %v1922, %v1918
        %v2115 = vpack.c.bf16 %v1923, %v1919
        %v2116 = vpack.c.bf16 %v1928, %v1924
        %v2117 = vpack.c.bf16 %v1929, %v1925
        %v2118 = vpack.c.bf16 %v1930, %v1926
        %v2119 = vpack.c.bf16 %v1931, %v1927
        %v2120 = vpack.c.bf16 %v1936, %v1932
        %v2121 = vpack.c.bf16 %v1937, %v1933
        %v2122 = vpack.c.bf16 %v1938, %v1934
        %v2123 = vpack.c.bf16 %v1939, %v1935
        %v2124 = vpack.c.bf16 %v1944, %v1940
        %v2125 = vpack.c.bf16 %v1945, %v1941
        %v2126 = vpack.c.bf16 %v1946, %v1942
        %v2127 = vpack.c.bf16 %v1947, %v1943
        %v2128 = vpack.c.bf16 %v1952, %v1948
        %v2129 = vpack.c.bf16 %v1953, %v1949
        %v2130 = vpack.c.bf16 %v1954, %v1950
        %v2131 = vpack.c.bf16 %v1955, %v1951
        %v2132 = vpack.c.bf16 %v1960, %v1956
        %v2133 = vpack.c.bf16 %v1961, %v1957
        %v2134 = vpack.c.bf16 %v1962, %v1958
        %v2135 = vpack.c.bf16 %v1963, %v1959
        %v2136 = vpack.c.bf16 %v1968, %v1964
        %v2137 = vpack.c.bf16 %v1969, %v1965
        %v2138 = vpack.c.bf16 %v1970, %v1966
        %v2139 = vpack.c.bf16 %v1971, %v1967
        %v2140 = vpack.c.bf16 %v1976, %v1972
        %v2141 = vpack.c.bf16 %v1977, %v1973
        %v2142 = vpack.c.bf16 %v1978, %v1974
        %v2143 = vpack.c.bf16 %v1979, %v1975
        %v2144 = vpack.c.bf16 %v1984, %v1980
        %v2145 = vpack.c.bf16 %v1985, %v1981
        %v2146 = vpack.c.bf16 %v1986, %v1982
        %v2147 = vpack.c.bf16 %v1987, %v1983
        %v2148 = vpack.c.bf16 %v1992, %v1988
        %v2149 = vpack.c.bf16 %v1993, %v1989
        %v2150 = vpack.c.bf16 %v1994, %v1990
        %v2151 = vpack.c.bf16 %v1995, %v1991
        %v2152 = vpack.c.bf16 %v2000, %v1996
        %v2153 = vpack.c.bf16 %v2001, %v1997
        %v2154 = vpack.c.bf16 %v2002, %v1998
        %v2155 = vpack.c.bf16 %v2003, %v1999
        %v2156 = vpack.c.bf16 %v2008, %v2004
        %v2157 = vpack.c.bf16 %v2009, %v2005
        %v2158 = vpack.c.bf16 %v2010, %v2006
        %v2159 = vpack.c.bf16 %v2011, %v2007
        %v2160 = vpack.c.bf16 %v2016, %v2012
        %v2161 = vpack.c.bf16 %v2017, %v2013
        %v2162 = vpack.c.bf16 %v2018, %v2014
        %v2163 = vpack.c.bf16 %v2019, %v2015
        %v2164 = vpack.c.bf16 %v2024, %v2020
        %v2165 = vpack.c.bf16 %v2025, %v2021
        %v2166 = vpack.c.bf16 %v2026, %v2022
        %v2167 = vpack.c.bf16 %v2027, %v2023
        %v2168 = vpack.c.bf16 %v2032, %v2028
        %v2169 = vpack.c.bf16 %v2033, %v2029
        %v2170 = vpack.c.bf16 %v2034, %v2030
        %v2171 = vpack.c.bf16 %v2035, %v2031
        %v2172 = vpack.c.bf16 %v2040, %v2036
        %v2173 = vpack.c.bf16 %v2041, %v2037
        %v2174 = vpack.c.bf16 %v2042, %v2038
        %v2175 = vpack.c.bf16 %v2043, %v2039
        %v2176 = vpack.c.bf16 %v2048, %v2044
        %v2177 = vpack.c.bf16 %v2049, %v2045
        %v2178 = vpack.c.bf16 %v2050, %v2046
        %v2179 = vpack.c.bf16 %v2051, %v2047
        %v2180 = vld [vmem:[#allocation8] sm:$0xff]
        %v2181 = vld [vmem:[#allocation8 + $0x8] sm:$0xff]
        %v2182 = vld [vmem:[#allocation8 + $0x10] sm:$0xff]
        %v2183 = vld [vmem:[#allocation8 + $0x18] sm:$0xff]
        %v2184 = vld [vmem:[#allocation8 + $0x20] sm:$0xff]
        %v2185 = vld [vmem:[#allocation8 + $0x28] sm:$0xff]
        %v2186 = vld [vmem:[#allocation8 + $0x30] sm:$0xff]
        %v2187 = vld [vmem:[#allocation8 + $0x38] sm:$0xff]
        %v2188 = vld [vmem:[#allocation8 + $0x40] sm:$0xff]
        %v2189 = vld [vmem:[#allocation8 + $0x48] sm:$0xff]
        %v2190 = vld [vmem:[#allocation8 + $0x50] sm:$0xff]
        %v2191 = vld [vmem:[#allocation8 + $0x58] sm:$0xff]
        %v2192 = vld [vmem:[#allocation8 + $0x60] sm:$0xff]
        %v2193 = vld [vmem:[#allocation8 + $0x68] sm:$0xff]
        %v2194 = vld [vmem:[#allocation8 + $0x70] sm:$0xff]
        %v2195 = vld [vmem:[#allocation8 + $0x78] sm:$0xff]
        %v2196 = vld [vmem:[#allocation8 + $0x80] sm:$0xff]
        %v2197 = vld [vmem:[#allocation8 + $0x88] sm:$0xff]
        %v2198 = vld [vmem:[#allocation8 + $0x90] sm:$0xff]
        %v2199 = vld [vmem:[#allocation8 + $0x98] sm:$0xff]
        %v2200 = vld [vmem:[#allocation8 + $0xa0] sm:$0xff]
        %v2201 = vld [vmem:[#allocation8 + $0xa8] sm:$0xff]
        %v2202 = vld [vmem:[#allocation8 + $0xb0] sm:$0xff]
        %v2203 = vld [vmem:[#allocation8 + $0xb8] sm:$0xff]
        %v2204 = vld [vmem:[#allocation8 + $0xc0] sm:$0xff]
        %v2205 = vld [vmem:[#allocation8 + $0xc8] sm:$0xff]
        %v2206 = vld [vmem:[#allocation8 + $0xd0] sm:$0xff]
        %v2207 = vld [vmem:[#allocation8 + $0xd8] sm:$0xff]
        %v2208 = vld [vmem:[#allocation8 + $0xe0] sm:$0xff]
        %v2209 = vld [vmem:[#allocation8 + $0xe8] sm:$0xff]
        %v2210 = vld [vmem:[#allocation8 + $0xf0] sm:$0xff]
        %v2211 = vld [vmem:[#allocation8 + $0xf8] sm:$0xff]
        %v2212 = vld [vmem:[#allocation8 + $0x100] sm:$0xff]
        %v2213 = vld [vmem:[#allocation8 + $0x108] sm:$0xff]
        %v2214 = vld [vmem:[#allocation8 + $0x110] sm:$0xff]
        %v2215 = vld [vmem:[#allocation8 + $0x118] sm:$0xff]
        %v2216 = vld [vmem:[#allocation8 + $0x120] sm:$0xff]
        %v2217 = vld [vmem:[#allocation8 + $0x128] sm:$0xff]
        %v2218 = vld [vmem:[#allocation8 + $0x130] sm:$0xff]
        %v2219 = vld [vmem:[#allocation8 + $0x138] sm:$0xff]
        %v2220 = vld [vmem:[#allocation8 + $0x140] sm:$0xff]
        %v2221 = vld [vmem:[#allocation8 + $0x148] sm:$0xff]
        %v2222 = vld [vmem:[#allocation8 + $0x150] sm:$0xff]
        %v2223 = vld [vmem:[#allocation8 + $0x158] sm:$0xff]
        %v2224 = vld [vmem:[#allocation8 + $0x160] sm:$0xff]
        %v2225 = vld [vmem:[#allocation8 + $0x168] sm:$0xff]
        %v2226 = vld [vmem:[#allocation8 + $0x170] sm:$0xff]
        %v2227 = vld [vmem:[#allocation8 + $0x178] sm:$0xff]
        %v2228 = vld [vmem:[#allocation8 + $0x180] sm:$0xff]
        %v2229 = vld [vmem:[#allocation8 + $0x188] sm:$0xff]
        %v2230 = vld [vmem:[#allocation8 + $0x190] sm:$0xff]
        %v2231 = vld [vmem:[#allocation8 + $0x198] sm:$0xff]
        %v2232 = vld [vmem:[#allocation8 + $0x1a0] sm:$0xff]
        %v2233 = vld [vmem:[#allocation8 + $0x1a8] sm:$0xff]
        %v2234 = vld [vmem:[#allocation8 + $0x1b0] sm:$0xff]
        %v2235 = vld [vmem:[#allocation8 + $0x1b8] sm:$0xff]
        %v2236 = vld [vmem:[#allocation8 + $0x1c0] sm:$0xff]
        %v2237 = vld [vmem:[#allocation8 + $0x1c8] sm:$0xff]
        %v2238 = vld [vmem:[#allocation8 + $0x1d0] sm:$0xff]
        %v2239 = vld [vmem:[#allocation8 + $0x1d8] sm:$0xff]
        %v2240 = vld [vmem:[#allocation8 + $0x1e0] sm:$0xff]
        %v2241 = vld [vmem:[#allocation8 + $0x1e8] sm:$0xff]
        %v2242 = vld [vmem:[#allocation8 + $0x1f0] sm:$0xff]
        %v2243 = vld [vmem:[#allocation8 + $0x1f8] sm:$0xff]
        %v2244 = vld [vmem:[#allocation10] sm:$0x3]
        %v2246 = vlaneseq
        %v2247 = vshrl.u32 %v2246, 7
        %v2248 = vsub.s32 0, %v2247
        %v2249 = vrot.slane %v2244, %v2248
        %v2250 = vlaneseq
        %v2251 = vshrl.u32 %v2250, 7
        %v2252 = vsub.s32 1, %v2251
        %v2253 = vrot.slane %v2244, %v2252
        %v2320 = vunpack.c.l.b16 %v2180
        %v2321 = vunpack.c.h.b16 %v2180
        %v2322 = vunpack.c.l.b16 %v2181
        %v2323 = vunpack.c.h.b16 %v2181
        %v2324 = vunpack.c.l.b16 %v2182
        %v2325 = vunpack.c.h.b16 %v2182
        %v2326 = vunpack.c.l.b16 %v2183
        %v2327 = vunpack.c.h.b16 %v2183
        %v2328 = vunpack.c.l.b16 %v2184
        %v2329 = vunpack.c.h.b16 %v2184
        %v2330 = vunpack.c.l.b16 %v2185
        %v2331 = vunpack.c.h.b16 %v2185
        %v2332 = vunpack.c.l.b16 %v2186
        %v2333 = vunpack.c.h.b16 %v2186
        %v2334 = vunpack.c.l.b16 %v2187
        %v2335 = vunpack.c.h.b16 %v2187
        %v2336 = vunpack.c.l.b16 %v2188
        %v2337 = vunpack.c.h.b16 %v2188
        %v2338 = vunpack.c.l.b16 %v2189
        %v2339 = vunpack.c.h.b16 %v2189
        %v2340 = vunpack.c.l.b16 %v2190
        %v2341 = vunpack.c.h.b16 %v2190
        %v2342 = vunpack.c.l.b16 %v2191
        %v2343 = vunpack.c.h.b16 %v2191
        %v2344 = vunpack.c.l.b16 %v2192
        %v2345 = vunpack.c.h.b16 %v2192
        %v2346 = vunpack.c.l.b16 %v2193
        %v2347 = vunpack.c.h.b16 %v2193
        %v2348 = vunpack.c.l.b16 %v2194
        %v2349 = vunpack.c.h.b16 %v2194
        %v2350 = vunpack.c.l.b16 %v2195
        %v2351 = vunpack.c.h.b16 %v2195
        %v2352 = vunpack.c.l.b16 %v2196
        %v2353 = vunpack.c.h.b16 %v2196
        %v2354 = vunpack.c.l.b16 %v2197
        %v2355 = vunpack.c.h.b16 %v2197
        %v2356 = vunpack.c.l.b16 %v2198
        %v2357 = vunpack.c.h.b16 %v2198
        %v2358 = vunpack.c.l.b16 %v2199
        %v2359 = vunpack.c.h.b16 %v2199
        %v2360 = vunpack.c.l.b16 %v2200
        %v2361 = vunpack.c.h.b16 %v2200
        %v2362 = vunpack.c.l.b16 %v2201
        %v2363 = vunpack.c.h.b16 %v2201
        %v2364 = vunpack.c.l.b16 %v2202
        %v2365 = vunpack.c.h.b16 %v2202
        %v2366 = vunpack.c.l.b16 %v2203
        %v2367 = vunpack.c.h.b16 %v2203
        %v2368 = vunpack.c.l.b16 %v2204
        %v2369 = vunpack.c.h.b16 %v2204
        %v2370 = vunpack.c.l.b16 %v2205
        %v2371 = vunpack.c.h.b16 %v2205
        %v2372 = vunpack.c.l.b16 %v2206
        %v2373 = vunpack.c.h.b16 %v2206
        %v2374 = vunpack.c.l.b16 %v2207
        %v2375 = vunpack.c.h.b16 %v2207
        %v2376 = vunpack.c.l.b16 %v2208
        %v2377 = vunpack.c.h.b16 %v2208
        %v2378 = vunpack.c.l.b16 %v2209
        %v2379 = vunpack.c.h.b16 %v2209
        %v2380 = vunpack.c.l.b16 %v2210
        %v2381 = vunpack.c.h.b16 %v2210
        %v2382 = vunpack.c.l.b16 %v2211
        %v2383 = vunpack.c.h.b16 %v2211
        %v2384 = vunpack.c.l.b16 %v2212
        %v2385 = vunpack.c.h.b16 %v2212
        %v2386 = vunpack.c.l.b16 %v2213
        %v2387 = vunpack.c.h.b16 %v2213
        %v2388 = vunpack.c.l.b16 %v2214
        %v2389 = vunpack.c.h.b16 %v2214
        %v2390 = vunpack.c.l.b16 %v2215
        %v2391 = vunpack.c.h.b16 %v2215
        %v2392 = vunpack.c.l.b16 %v2216
        %v2393 = vunpack.c.h.b16 %v2216
        %v2394 = vunpack.c.l.b16 %v2217
        %v2395 = vunpack.c.h.b16 %v2217
        %v2396 = vunpack.c.l.b16 %v2218
        %v2397 = vunpack.c.h.b16 %v2218
        %v2398 = vunpack.c.l.b16 %v2219
        %v2399 = vunpack.c.h.b16 %v2219
        %v2400 = vunpack.c.l.b16 %v2220
        %v2401 = vunpack.c.h.b16 %v2220
        %v2402 = vunpack.c.l.b16 %v2221
        %v2403 = vunpack.c.h.b16 %v2221
        %v2404 = vunpack.c.l.b16 %v2222
        %v2405 = vunpack.c.h.b16 %v2222
        %v2406 = vunpack.c.l.b16 %v2223
        %v2407 = vunpack.c.h.b16 %v2223
        %v2408 = vunpack.c.l.b16 %v2224
        %v2409 = vunpack.c.h.b16 %v2224
        %v2410 = vunpack.c.l.b16 %v2225
        %v2411 = vunpack.c.h.b16 %v2225
        %v2412 = vunpack.c.l.b16 %v2226
        %v2413 = vunpack.c.h.b16 %v2226
        %v2414 = vunpack.c.l.b16 %v2227
        %v2415 = vunpack.c.h.b16 %v2227
        %v2416 = vunpack.c.l.b16 %v2228
        %v2417 = vunpack.c.h.b16 %v2228
        %v2418 = vunpack.c.l.b16 %v2229
        %v2419 = vunpack.c.h.b16 %v2229
        %v2420 = vunpack.c.l.b16 %v2230
        %v2421 = vunpack.c.h.b16 %v2230
        %v2422 = vunpack.c.l.b16 %v2231
        %v2423 = vunpack.c.h.b16 %v2231
        %v2424 = vunpack.c.l.b16 %v2232
        %v2425 = vunpack.c.h.b16 %v2232
        %v2426 = vunpack.c.l.b16 %v2233
        %v2427 = vunpack.c.h.b16 %v2233
        %v2428 = vunpack.c.l.b16 %v2234
        %v2429 = vunpack.c.h.b16 %v2234
        %v2430 = vunpack.c.l.b16 %v2235
        %v2431 = vunpack.c.h.b16 %v2235
        %v2432 = vunpack.c.l.b16 %v2236
        %v2433 = vunpack.c.h.b16 %v2236
        %v2434 = vunpack.c.l.b16 %v2237
        %v2435 = vunpack.c.h.b16 %v2237
        %v2436 = vunpack.c.l.b16 %v2238
        %v2437 = vunpack.c.h.b16 %v2238
        %v2438 = vunpack.c.l.b16 %v2239
        %v2439 = vunpack.c.h.b16 %v2239
        %v2440 = vunpack.c.l.b16 %v2240
        %v2441 = vunpack.c.h.b16 %v2240
        %v2442 = vunpack.c.l.b16 %v2241
        %v2443 = vunpack.c.h.b16 %v2241
        %v2444 = vunpack.c.l.b16 %v2242
        %v2445 = vunpack.c.h.b16 %v2242
        %v2446 = vunpack.c.l.b16 %v2243
        %v2447 = vunpack.c.h.b16 %v2243
        %v2448 = vpack.c.b16 %v2322, %v2320
        %v2449 = vpack.c.b16 %v2323, %v2321
        %v2450 = vpack.c.b16 %v2326, %v2324
        %v2451 = vpack.c.b16 %v2327, %v2325
        %v2452 = vpack.c.b16 %v2330, %v2328
        %v2453 = vpack.c.b16 %v2331, %v2329
        %v2454 = vpack.c.b16 %v2334, %v2332
        %v2455 = vpack.c.b16 %v2335, %v2333
        %v2456 = vpack.c.b16 %v2338, %v2336
        %v2457 = vpack.c.b16 %v2339, %v2337
        %v2458 = vpack.c.b16 %v2342, %v2340
        %v2459 = vpack.c.b16 %v2343, %v2341
        %v2460 = vpack.c.b16 %v2346, %v2344
        %v2461 = vpack.c.b16 %v2347, %v2345
        %v2462 = vpack.c.b16 %v2350, %v2348
        %v2463 = vpack.c.b16 %v2351, %v2349
        %v2464 = vpack.c.b16 %v2354, %v2352
        %v2465 = vpack.c.b16 %v2355, %v2353
        %v2466 = vpack.c.b16 %v2358, %v2356
        %v2467 = vpack.c.b16 %v2359, %v2357
        %v2468 = vpack.c.b16 %v2362, %v2360
        %v2469 = vpack.c.b16 %v2363, %v2361
        %v2470 = vpack.c.b16 %v2366, %v2364
        %v2471 = vpack.c.b16 %v2367, %v2365
        %v2472 = vpack.c.b16 %v2370, %v2368
        %v2473 = vpack.c.b16 %v2371, %v2369
        %v2474 = vpack.c.b16 %v2374, %v2372
        %v2475 = vpack.c.b16 %v2375, %v2373
        %v2476 = vpack.c.b16 %v2378, %v2376
        %v2477 = vpack.c.b16 %v2379, %v2377
        %v2478 = vpack.c.b16 %v2382, %v2380
        %v2479 = vpack.c.b16 %v2383, %v2381
        %v2480 = vpack.c.b16 %v2386, %v2384
        %v2481 = vpack.c.b16 %v2387, %v2385
        %v2482 = vpack.c.b16 %v2390, %v2388
        %v2483 = vpack.c.b16 %v2391, %v2389
        %v2484 = vpack.c.b16 %v2394, %v2392
        %v2485 = vpack.c.b16 %v2395, %v2393
        %v2486 = vpack.c.b16 %v2398, %v2396
        %v2487 = vpack.c.b16 %v2399, %v2397
        %v2488 = vpack.c.b16 %v2402, %v2400
        %v2489 = vpack.c.b16 %v2403, %v2401
        %v2490 = vpack.c.b16 %v2406, %v2404
        %v2491 = vpack.c.b16 %v2407, %v2405
        %v2492 = vpack.c.b16 %v2410, %v2408
        %v2493 = vpack.c.b16 %v2411, %v2409
        %v2494 = vpack.c.b16 %v2414, %v2412
        %v2495 = vpack.c.b16 %v2415, %v2413
        %v2496 = vpack.c.b16 %v2418, %v2416
        %v2497 = vpack.c.b16 %v2419, %v2417
        %v2498 = vpack.c.b16 %v2422, %v2420
        %v2499 = vpack.c.b16 %v2423, %v2421
        %v2500 = vpack.c.b16 %v2426, %v2424
        %v2501 = vpack.c.b16 %v2427, %v2425
        %v2502 = vpack.c.b16 %v2430, %v2428
        %v2503 = vpack.c.b16 %v2431, %v2429
        %v2504 = vpack.c.b16 %v2434, %v2432
        %v2505 = vpack.c.b16 %v2435, %v2433
        %v2506 = vpack.c.b16 %v2438, %v2436
        %v2507 = vpack.c.b16 %v2439, %v2437
        %v2508 = vpack.c.b16 %v2442, %v2440
        %v2509 = vpack.c.b16 %v2443, %v2441
        %v2510 = vpack.c.b16 %v2446, %v2444
        %v2511 = vpack.c.b16 %v2447, %v2445
        %2576 = vmatprep.subr.bf16.mxu0 %v2463
        %2577 = vmatpush1.bf16.msra.mxu0 %v2462
        %2578 = vmatprep.subr.bf16.mxu0 %v2461
        %2579 = vmatpush1.bf16.msra.mxu0 %v2460
        %2580 = vmatprep.subr.bf16.mxu0 %v2459
        %2581 = vmatpush1.bf16.msra.mxu0 %v2458
        %2582 = vmatprep.subr.bf16.mxu0 %v2457
        %2583 = vmatpush1.bf16.msra.mxu0 %v2456
        %2584 = vmatprep.subr.bf16.mxu0 %v2455
        %2585 = vmatpush1.bf16.msra.mxu0 %v2454
        %2586 = vmatprep.subr.bf16.mxu0 %v2453
        %2587 = vmatpush1.bf16.msra.mxu0 %v2452
        %2588 = vmatprep.subr.bf16.mxu0 %v2451
        %2589 = vmatpush1.bf16.msra.mxu0 %v2450
        %2590 = vmatprep.subr.bf16.mxu0 %v2449
        %2591 = vmatpush1.bf16.msra.mxu0 %v2448
        %2592 = vmatprep.subr.bf16.mxu0 %v2479
        %2593 = vmatpush2.bf16.msra.mxu0 %v2478
        %2594 = vmatprep.subr.bf16.mxu0 %v2477
        %2595 = vmatpush2.bf16.msra.mxu0 %v2476
        %2596 = vmatprep.subr.bf16.mxu0 %v2475
        %2597 = vmatpush2.bf16.msra.mxu0 %v2474
        %2598 = vmatprep.subr.bf16.mxu0 %v2473
        %2599 = vmatpush2.bf16.msra.mxu0 %v2472
        %2600 = vmatprep.subr.bf16.mxu0 %v2471
        %2601 = vmatpush2.bf16.msra.mxu0 %v2470
        %2602 = vmatprep.subr.bf16.mxu0 %v2469
        %2603 = vmatpush2.bf16.msra.mxu0 %v2468
        %2604 = vmatprep.subr.bf16.mxu0 %v2467
        %2605 = vmatpush2.bf16.msra.mxu0 %v2466
        %2606 = vmatprep.subr.bf16.mxu0 %v2465
        %2607 = vmatpush2.bf16.msra.mxu0 %v2464
        %2608 = vmatprep.mubr.bf16.mxu0 %v2053
        %2609 = vmatmul.mubr.bf16.gmra.mxu0 %v2052
        %v2610 = vpop.f32.mrf.mxu0
        %v2611 = vadd.f32 %v2249, %v2610
        %v2612 = vpop.f32.mrf.mxu0
        %v2613 = vadd.f32 %v2253, %v2612
        %v2614 = vpop.f32.mrf.mxu0
        %v2615 = vadd.f32 %v2249, %v2614
        %v2616 = vpop.f32.mrf.mxu0
        %v2617 = vadd.f32 %v2253, %v2616
        %2618 = vmatprep.mubr.bf16.mxu0 %v2057
        %2619 = vmatmul.mubr.bf16.gmra.mxu0 %v2056
        %v2620 = vpop.f32.mrf.mxu0
        %v2621 = vadd.f32 %v2249, %v2620
        %v2622 = vpop.f32.mrf.mxu0
        %v2623 = vadd.f32 %v2253, %v2622
        %v2624 = vpop.f32.mrf.mxu0
        %v2625 = vadd.f32 %v2249, %v2624
        %v2626 = vpop.f32.mrf.mxu0
        %v2627 = vadd.f32 %v2253, %v2626
        %2628 = vmatprep.mubr.bf16.mxu0 %v2061
        %2629 = vmatmul.mubr.bf16.gmra.mxu0 %v2060
        %v2630 = vpop.f32.mrf.mxu0
        %v2631 = vadd.f32 %v2249, %v2630
        %v2632 = vpop.f32.mrf.mxu0
        %v2633 = vadd.f32 %v2253, %v2632
        %v2634 = vpop.f32.mrf.mxu0
        %v2635 = vadd.f32 %v2249, %v2634
        %v2636 = vpop.f32.mrf.mxu0
        %v2637 = vadd.f32 %v2253, %v2636
        %2638 = vmatprep.mubr.bf16.mxu0 %v2065
        %2639 = vmatmul.mubr.bf16.gmra.mxu0 %v2064
        %v2640 = vpop.f32.mrf.mxu0
        %v2641 = vadd.f32 %v2249, %v2640
        %v2642 = vpop.f32.mrf.mxu0
        %v2643 = vadd.f32 %v2253, %v2642
        %v2644 = vpop.f32.mrf.mxu0
        %v2645 = vadd.f32 %v2249, %v2644
        %v2646 = vpop.f32.mrf.mxu0
        %v2647 = vadd.f32 %v2253, %v2646
        %2648 = vmatprep.mubr.bf16.mxu0 %v2069
        %2649 = vmatmul.mubr.bf16.gmra.mxu0 %v2068
        %v2650 = vpop.f32.mrf.mxu0
        %v2651 = vadd.f32 %v2249, %v2650
        %v2652 = vpop.f32.mrf.mxu0
        %v2653 = vadd.f32 %v2253, %v2652
        %v2654 = vpop.f32.mrf.mxu0
        %v2655 = vadd.f32 %v2249, %v2654
        %v2656 = vpop.f32.mrf.mxu0
        %v2657 = vadd.f32 %v2253, %v2656
        %2658 = vmatprep.mubr.bf16.mxu0 %v2073
        %2659 = vmatmul.mubr.bf16.gmra.mxu0 %v2072
        %v2660 = vpop.f32.mrf.mxu0
        %v2661 = vadd.f32 %v2249, %v2660
        %v2662 = vpop.f32.mrf.mxu0
        %v2663 = vadd.f32 %v2253, %v2662
        %v2664 = vpop.f32.mrf.mxu0
        %v2665 = vadd.f32 %v2249, %v2664
        %v2666 = vpop.f32.mrf.mxu0
        %v2667 = vadd.f32 %v2253, %v2666
        %2668 = vmatprep.mubr.bf16.mxu0 %v2077
        %2669 = vmatmul.mubr.bf16.gmra.mxu0 %v2076
        %v2670 = vpop.f32.mrf.mxu0
        %v2671 = vadd.f32 %v2249, %v2670
        %v2672 = vpop.f32.mrf.mxu0
        %v2673 = vadd.f32 %v2253, %v2672
        %v2674 = vpop.f32.mrf.mxu0
        %v2675 = vadd.f32 %v2249, %v2674
        %v2676 = vpop.f32.mrf.mxu0
        %v2677 = vadd.f32 %v2253, %v2676
        %2678 = vmatprep.mubr.bf16.mxu0 %v2081
        %2679 = vmatmul.mubr.bf16.gmra.mxu0 %v2080
        %v2680 = vpop.f32.mrf.mxu0
        %v2681 = vadd.f32 %v2249, %v2680
        %v2682 = vpop.f32.mrf.mxu0
        %v2683 = vadd.f32 %v2253, %v2682
        %v2684 = vpop.f32.mrf.mxu0
        %v2685 = vadd.f32 %v2249, %v2684
        %v2686 = vpop.f32.mrf.mxu0
        %v2687 = vadd.f32 %v2253, %v2686
        %2688 = vmatprep.mubr.bf16.mxu0 %v2085
        %2689 = vmatmul.mubr.bf16.gmra.mxu0 %v2084
        %v2690 = vpop.f32.mrf.mxu0
        %v2691 = vadd.f32 %v2249, %v2690
        %v2692 = vpop.f32.mrf.mxu0
        %v2693 = vadd.f32 %v2253, %v2692
        %v2694 = vpop.f32.mrf.mxu0
        %v2695 = vadd.f32 %v2249, %v2694
        %v2696 = vpop.f32.mrf.mxu0
        %v2697 = vadd.f32 %v2253, %v2696
        %2698 = vmatprep.mubr.bf16.mxu0 %v2089
        %2699 = vmatmul.mubr.bf16.gmra.mxu0 %v2088
        %v2700 = vpop.f32.mrf.mxu0
        %v2701 = vadd.f32 %v2249, %v2700
        %v2702 = vpop.f32.mrf.mxu0
        %v2703 = vadd.f32 %v2253, %v2702
        %v2704 = vpop.f32.mrf.mxu0
        %v2705 = vadd.f32 %v2249, %v2704
        %v2706 = vpop.f32.mrf.mxu0
        %v2707 = vadd.f32 %v2253, %v2706
        %2708 = vmatprep.mubr.bf16.mxu0 %v2093
        %2709 = vmatmul.mubr.bf16.gmra.mxu0 %v2092
        %v2710 = vpop.f32.mrf.mxu0
        %v2711 = vadd.f32 %v2249, %v2710
        %v2712 = vpop.f32.mrf.mxu0
        %v2713 = vadd.f32 %v2253, %v2712
        %v2714 = vpop.f32.mrf.mxu0
        %v2715 = vadd.f32 %v2249, %v2714
        %v2716 = vpop.f32.mrf.mxu0
        %v2717 = vadd.f32 %v2253, %v2716
        %2718 = vmatprep.mubr.bf16.mxu0 %v2097
        %2719 = vmatmul.mubr.bf16.gmra.mxu0 %v2096
        %v2720 = vpop.f32.mrf.mxu0
        %v2721 = vadd.f32 %v2249, %v2720
        %v2722 = vpop.f32.mrf.mxu0
        %v2723 = vadd.f32 %v2253, %v2722
        %v2724 = vpop.f32.mrf.mxu0
        %v2725 = vadd.f32 %v2249, %v2724
        %v2726 = vpop.f32.mrf.mxu0
        %v2727 = vadd.f32 %v2253, %v2726
        %2728 = vmatprep.mubr.bf16.mxu0 %v2101
        %2729 = vmatmul.mubr.bf16.gmra.mxu0 %v2100
        %v2730 = vpop.f32.mrf.mxu0
        %v2731 = vadd.f32 %v2249, %v2730
        %v2732 = vpop.f32.mrf.mxu0
        %v2733 = vadd.f32 %v2253, %v2732
        %v2734 = vpop.f32.mrf.mxu0
        %v2735 = vadd.f32 %v2249, %v2734
        %v2736 = vpop.f32.mrf.mxu0
        %v2737 = vadd.f32 %v2253, %v2736
        %2738 = vmatprep.mubr.bf16.mxu0 %v2105
        %2739 = vmatmul.mubr.bf16.gmra.mxu0 %v2104
        %v2740 = vpop.f32.mrf.mxu0
        %v2741 = vadd.f32 %v2249, %v2740
        %v2742 = vpop.f32.mrf.mxu0
        %v2743 = vadd.f32 %v2253, %v2742
        %v2744 = vpop.f32.mrf.mxu0
        %v2745 = vadd.f32 %v2249, %v2744
        %v2746 = vpop.f32.mrf.mxu0
        %v2747 = vadd.f32 %v2253, %v2746
        %2748 = vmatprep.mubr.bf16.mxu0 %v2109
        %2749 = vmatmul.mubr.bf16.gmra.mxu0 %v2108
        %v2750 = vpop.f32.mrf.mxu0
        %v2751 = vadd.f32 %v2249, %v2750
        %v2752 = vpop.f32.mrf.mxu0
        %v2753 = vadd.f32 %v2253, %v2752
        %v2754 = vpop.f32.mrf.mxu0
        %v2755 = vadd.f32 %v2249, %v2754
        %v2756 = vpop.f32.mrf.mxu0
        %v2757 = vadd.f32 %v2253, %v2756
        %2758 = vmatprep.mubr.bf16.mxu0 %v2113
        %2759 = vmatmul.mubr.bf16.gmra.mxu0 %v2112
        %v2760 = vpop.f32.mrf.mxu0
        %v2761 = vadd.f32 %v2249, %v2760
        %v2762 = vpop.f32.mrf.mxu0
        %v2763 = vadd.f32 %v2253, %v2762
        %v2764 = vpop.f32.mrf.mxu0
        %v2765 = vadd.f32 %v2249, %v2764
        %v2766 = vpop.f32.mrf.mxu0
        %v2767 = vadd.f32 %v2253, %v2766
        %2768 = vmatprep.mubr.bf16.mxu0 %v2117
        %2769 = vmatmul.mubr.bf16.gmra.mxu0 %v2116
        %v2770 = vpop.f32.mrf.mxu0
        %v2771 = vadd.f32 %v2249, %v2770
        %v2772 = vpop.f32.mrf.mxu0
        %v2773 = vadd.f32 %v2253, %v2772
        %v2774 = vpop.f32.mrf.mxu0
        %v2775 = vadd.f32 %v2249, %v2774
        %v2776 = vpop.f32.mrf.mxu0
        %v2777 = vadd.f32 %v2253, %v2776
        %2778 = vmatprep.mubr.bf16.mxu0 %v2121
        %2779 = vmatmul.mubr.bf16.gmra.mxu0 %v2120
        %v2780 = vpop.f32.mrf.mxu0
        %v2781 = vadd.f32 %v2249, %v2780
        %v2782 = vpop.f32.mrf.mxu0
        %v2783 = vadd.f32 %v2253, %v2782
        %v2784 = vpop.f32.mrf.mxu0
        %v2785 = vadd.f32 %v2249, %v2784
        %v2786 = vpop.f32.mrf.mxu0
        %v2787 = vadd.f32 %v2253, %v2786
        %2788 = vmatprep.mubr.bf16.mxu0 %v2125
        %2789 = vmatmul.mubr.bf16.gmra.mxu0 %v2124
        %v2790 = vpop.f32.mrf.mxu0
        %v2791 = vadd.f32 %v2249, %v2790
        %v2792 = vpop.f32.mrf.mxu0
        %v2793 = vadd.f32 %v2253, %v2792
        %v2794 = vpop.f32.mrf.mxu0
        %v2795 = vadd.f32 %v2249, %v2794
        %v2796 = vpop.f32.mrf.mxu0
        %v2797 = vadd.f32 %v2253, %v2796
        %2798 = vmatprep.mubr.bf16.mxu0 %v2129
        %2799 = vmatmul.mubr.bf16.gmra.mxu0 %v2128
        %v2800 = vpop.f32.mrf.mxu0
        %v2801 = vadd.f32 %v2249, %v2800
        %v2802 = vpop.f32.mrf.mxu0
        %v2803 = vadd.f32 %v2253, %v2802
        %v2804 = vpop.f32.mrf.mxu0
        %v2805 = vadd.f32 %v2249, %v2804
        %v2806 = vpop.f32.mrf.mxu0
        %v2807 = vadd.f32 %v2253, %v2806
        %2808 = vmatprep.mubr.bf16.mxu0 %v2133
        %2809 = vmatmul.mubr.bf16.gmra.mxu0 %v2132
        %v2810 = vpop.f32.mrf.mxu0
        %v2811 = vadd.f32 %v2249, %v2810
        %v2812 = vpop.f32.mrf.mxu0
        %v2813 = vadd.f32 %v2253, %v2812
        %v2814 = vpop.f32.mrf.mxu0
        %v2815 = vadd.f32 %v2249, %v2814
        %v2816 = vpop.f32.mrf.mxu0
        %v2817 = vadd.f32 %v2253, %v2816
        %2818 = vmatprep.mubr.bf16.mxu0 %v2137
        %2819 = vmatmul.mubr.bf16.gmra.mxu0 %v2136
        %v2820 = vpop.f32.mrf.mxu0
        %v2821 = vadd.f32 %v2249, %v2820
        %v2822 = vpop.f32.mrf.mxu0
        %v2823 = vadd.f32 %v2253, %v2822
        %v2824 = vpop.f32.mrf.mxu0
        %v2825 = vadd.f32 %v2249, %v2824
        %v2826 = vpop.f32.mrf.mxu0
        %v2827 = vadd.f32 %v2253, %v2826
        %2828 = vmatprep.mubr.bf16.mxu0 %v2141
        %2829 = vmatmul.mubr.bf16.gmra.mxu0 %v2140
        %v2830 = vpop.f32.mrf.mxu0
        %v2831 = vadd.f32 %v2249, %v2830
        %v2832 = vpop.f32.mrf.mxu0
        %v2833 = vadd.f32 %v2253, %v2832
        %v2834 = vpop.f32.mrf.mxu0
        %v2835 = vadd.f32 %v2249, %v2834
        %v2836 = vpop.f32.mrf.mxu0
        %v2837 = vadd.f32 %v2253, %v2836
        %2838 = vmatprep.mubr.bf16.mxu0 %v2145
        %2839 = vmatmul.mubr.bf16.gmra.mxu0 %v2144
        %v2840 = vpop.f32.mrf.mxu0
        %v2841 = vadd.f32 %v2249, %v2840
        %v2842 = vpop.f32.mrf.mxu0
        %v2843 = vadd.f32 %v2253, %v2842
        %v2844 = vpop.f32.mrf.mxu0
        %v2845 = vadd.f32 %v2249, %v2844
        %v2846 = vpop.f32.mrf.mxu0
        %v2847 = vadd.f32 %v2253, %v2846
        %2848 = vmatprep.mubr.bf16.mxu0 %v2149
        %2849 = vmatmul.mubr.bf16.gmra.mxu0 %v2148
        %v2850 = vpop.f32.mrf.mxu0
        %v2851 = vadd.f32 %v2249, %v2850
        %v2852 = vpop.f32.mrf.mxu0
        %v2853 = vadd.f32 %v2253, %v2852
        %v2854 = vpop.f32.mrf.mxu0
        %v2855 = vadd.f32 %v2249, %v2854
        %v2856 = vpop.f32.mrf.mxu0
        %v2857 = vadd.f32 %v2253, %v2856
        %2858 = vmatprep.mubr.bf16.mxu0 %v2153
        %2859 = vmatmul.mubr.bf16.gmra.mxu0 %v2152
        %v2860 = vpop.f32.mrf.mxu0
        %v2861 = vadd.f32 %v2249, %v2860
        %v2862 = vpop.f32.mrf.mxu0
        %v2863 = vadd.f32 %v2253, %v2862
        %v2864 = vpop.f32.mrf.mxu0
        %v2865 = vadd.f32 %v2249, %v2864
        %v2866 = vpop.f32.mrf.mxu0
        %v2867 = vadd.f32 %v2253, %v2866
        %2868 = vmatprep.mubr.bf16.mxu0 %v2157
        %2869 = vmatmul.mubr.bf16.gmra.mxu0 %v2156
        %v2870 = vpop.f32.mrf.mxu0
        %v2871 = vadd.f32 %v2249, %v2870
        %v2872 = vpop.f32.mrf.mxu0
        %v2873 = vadd.f32 %v2253, %v2872
        %v2874 = vpop.f32.mrf.mxu0
        %v2875 = vadd.f32 %v2249, %v2874
        %v2876 = vpop.f32.mrf.mxu0
        %v2877 = vadd.f32 %v2253, %v2876
        %2878 = vmatprep.mubr.bf16.mxu0 %v2161
        %2879 = vmatmul.mubr.bf16.gmra.mxu0 %v2160
        %v2880 = vpop.f32.mrf.mxu0
        %v2881 = vadd.f32 %v2249, %v2880
        %v2882 = vpop.f32.mrf.mxu0
        %v2883 = vadd.f32 %v2253, %v2882
        %v2884 = vpop.f32.mrf.mxu0
        %v2885 = vadd.f32 %v2249, %v2884
        %v2886 = vpop.f32.mrf.mxu0
        %v2887 = vadd.f32 %v2253, %v2886
        %2888 = vmatprep.mubr.bf16.mxu0 %v2165
        %2889 = vmatmul.mubr.bf16.gmra.mxu0 %v2164
        %v2890 = vpop.f32.mrf.mxu0
        %v2891 = vadd.f32 %v2249, %v2890
        %v2892 = vpop.f32.mrf.mxu0
        %v2893 = vadd.f32 %v2253, %v2892
        %v2894 = vpop.f32.mrf.mxu0
        %v2895 = vadd.f32 %v2249, %v2894
        %v2896 = vpop.f32.mrf.mxu0
        %v2897 = vadd.f32 %v2253, %v2896
        %2898 = vmatprep.mubr.bf16.mxu0 %v2169
        %2899 = vmatmul.mubr.bf16.gmra.mxu0 %v2168
        %v2900 = vpop.f32.mrf.mxu0
        %v2901 = vadd.f32 %v2249, %v2900
        %v2902 = vpop.f32.mrf.mxu0
        %v2903 = vadd.f32 %v2253, %v2902
        %v2904 = vpop.f32.mrf.mxu0
        %v2905 = vadd.f32 %v2249, %v2904
        %v2906 = vpop.f32.mrf.mxu0
        %v2907 = vadd.f32 %v2253, %v2906
        %2908 = vmatprep.mubr.bf16.mxu0 %v2173
        %2909 = vmatmul.mubr.bf16.gmra.mxu0 %v2172
        %v2910 = vpop.f32.mrf.mxu0
        %v2911 = vadd.f32 %v2249, %v2910
        %v2912 = vpop.f32.mrf.mxu0
        %v2913 = vadd.f32 %v2253, %v2912
        %v2914 = vpop.f32.mrf.mxu0
        %v2915 = vadd.f32 %v2249, %v2914
        %v2916 = vpop.f32.mrf.mxu0
        %v2917 = vadd.f32 %v2253, %v2916
        %2918 = vmatprep.mubr.bf16.mxu0 %v2177
        %2919 = vmatmul.mubr.bf16.gmra.mxu0 %v2176
        %v2920 = vpop.f32.mrf.mxu0
        %v2921 = vadd.f32 %v2249, %v2920
        %v2922 = vpop.f32.mrf.mxu0
        %v2923 = vadd.f32 %v2253, %v2922
        %v2924 = vpop.f32.mrf.mxu0
        %v2925 = vadd.f32 %v2249, %v2924
        %v2926 = vpop.f32.mrf.mxu0
        %v2927 = vadd.f32 %v2253, %v2926
        %2928 = vdwg.mxu0
        %2929 = vmatprep.subr.bf16.mxu0 %v2495
        %2930 = vmatpush1.bf16.msra.mxu0 %v2494
        %2931 = vmatprep.subr.bf16.mxu0 %v2493
        %2932 = vmatpush1.bf16.msra.mxu0 %v2492
        %2933 = vmatprep.subr.bf16.mxu0 %v2491
        %2934 = vmatpush1.bf16.msra.mxu0 %v2490
        %2935 = vmatprep.subr.bf16.mxu0 %v2489
        %2936 = vmatpush1.bf16.msra.mxu0 %v2488
        %2937 = vmatprep.subr.bf16.mxu0 %v2487
        %2938 = vmatpush1.bf16.msra.mxu0 %v2486
        %2939 = vmatprep.subr.bf16.mxu0 %v2485
        %2940 = vmatpush1.bf16.msra.mxu0 %v2484
        %2941 = vmatprep.subr.bf16.mxu0 %v2483
        %2942 = vmatpush1.bf16.msra.mxu0 %v2482
        %2943 = vmatprep.subr.bf16.mxu0 %v2481
        %2944 = vmatpush1.bf16.msra.mxu0 %v2480
        %2945 = vmatprep.subr.bf16.mxu0 %v2511
        %2946 = vmatpush2.bf16.msra.mxu0 %v2510
        %2947 = vmatprep.subr.bf16.mxu0 %v2509
        %2948 = vmatpush2.bf16.msra.mxu0 %v2508
        %2949 = vmatprep.subr.bf16.mxu0 %v2507
        %2950 = vmatpush2.bf16.msra.mxu0 %v2506
        %2951 = vmatprep.subr.bf16.mxu0 %v2505
        %2952 = vmatpush2.bf16.msra.mxu0 %v2504
        %2953 = vmatprep.subr.bf16.mxu0 %v2503
        %2954 = vmatpush2.bf16.msra.mxu0 %v2502
        %2955 = vmatprep.subr.bf16.mxu0 %v2501
        %2956 = vmatpush2.bf16.msra.mxu0 %v2500
        %2957 = vmatprep.subr.bf16.mxu0 %v2499
        %2958 = vmatpush2.bf16.msra.mxu0 %v2498
        %2959 = vmatprep.subr.bf16.mxu0 %v2497
        %2960 = vmatpush2.bf16.msra.mxu0 %v2496
        %2961 = vmatprep.mubr.bf16.mxu0 %v2055
        %2962 = vmatmul.mubr.bf16.gmra.mxu0 %v2054
        %v2963 = vpop.f32.mrf.mxu0
        %v2964 = vadd.f32 %v2611, %v2963
        %v2965 = vpop.f32.mrf.mxu0
        %v2966 = vadd.f32 %v2613, %v2965
        %v2967 = vpop.f32.mrf.mxu0
        %v2968 = vadd.f32 %v2615, %v2967
        %v2969 = vpop.f32.mrf.mxu0
        %v2970 = vadd.f32 %v2617, %v2969
        %2971 = vmatprep.mubr.bf16.mxu0 %v2059
        %2972 = vmatmul.mubr.bf16.gmra.mxu0 %v2058
        %v2973 = vpop.f32.mrf.mxu0
        %v2974 = vadd.f32 %v2621, %v2973
        %v2975 = vpop.f32.mrf.mxu0
        %v2976 = vadd.f32 %v2623, %v2975
        %v2977 = vpop.f32.mrf.mxu0
        %v2978 = vadd.f32 %v2625, %v2977
        %v2979 = vpop.f32.mrf.mxu0
        %v2980 = vadd.f32 %v2627, %v2979
        %2981 = vmatprep.mubr.bf16.mxu0 %v2063
        %2982 = vmatmul.mubr.bf16.gmra.mxu0 %v2062
        %v2983 = vpop.f32.mrf.mxu0
        %v2984 = vadd.f32 %v2631, %v2983
        %v2985 = vpop.f32.mrf.mxu0
        %v2986 = vadd.f32 %v2633, %v2985
        %v2987 = vpop.f32.mrf.mxu0
        %v2988 = vadd.f32 %v2635, %v2987
        %v2989 = vpop.f32.mrf.mxu0
        %v2990 = vadd.f32 %v2637, %v2989
        %2991 = vmatprep.mubr.bf16.mxu0 %v2067
        %2992 = vmatmul.mubr.bf16.gmra.mxu0 %v2066
        %v2993 = vpop.f32.mrf.mxu0
        %v2994 = vadd.f32 %v2641, %v2993
        %v2995 = vpop.f32.mrf.mxu0
        %v2996 = vadd.f32 %v2643, %v2995
        %v2997 = vpop.f32.mrf.mxu0
        %v2998 = vadd.f32 %v2645, %v2997
        %v2999 = vpop.f32.mrf.mxu0
        %v3000 = vadd.f32 %v2647, %v2999
        %3001 = vmatprep.mubr.bf16.mxu0 %v2071
        %3002 = vmatmul.mubr.bf16.gmra.mxu0 %v2070
        %v3003 = vpop.f32.mrf.mxu0
        %v3004 = vadd.f32 %v2651, %v3003
        %v3005 = vpop.f32.mrf.mxu0
        %v3006 = vadd.f32 %v2653, %v3005
        %v3007 = vpop.f32.mrf.mxu0
        %v3008 = vadd.f32 %v2655, %v3007
        %v3009 = vpop.f32.mrf.mxu0
        %v3010 = vadd.f32 %v2657, %v3009
        %3011 = vmatprep.mubr.bf16.mxu0 %v2075
        %3012 = vmatmul.mubr.bf16.gmra.mxu0 %v2074
        %v3013 = vpop.f32.mrf.mxu0
        %v3014 = vadd.f32 %v2661, %v3013
        %v3015 = vpop.f32.mrf.mxu0
        %v3016 = vadd.f32 %v2663, %v3015
        %v3017 = vpop.f32.mrf.mxu0
        %v3018 = vadd.f32 %v2665, %v3017
        %v3019 = vpop.f32.mrf.mxu0
        %v3020 = vadd.f32 %v2667, %v3019
        %3021 = vmatprep.mubr.bf16.mxu0 %v2079
        %3022 = vmatmul.mubr.bf16.gmra.mxu0 %v2078
        %v3023 = vpop.f32.mrf.mxu0
        %v3024 = vadd.f32 %v2671, %v3023
        %v3025 = vpop.f32.mrf.mxu0
        %v3026 = vadd.f32 %v2673, %v3025
        %v3027 = vpop.f32.mrf.mxu0
        %v3028 = vadd.f32 %v2675, %v3027
        %v3029 = vpop.f32.mrf.mxu0
        %v3030 = vadd.f32 %v2677, %v3029
        %3031 = vmatprep.mubr.bf16.mxu0 %v2083
        %3032 = vmatmul.mubr.bf16.gmra.mxu0 %v2082
        %v3033 = vpop.f32.mrf.mxu0
        %v3034 = vadd.f32 %v2681, %v3033
        %v3035 = vpop.f32.mrf.mxu0
        %v3036 = vadd.f32 %v2683, %v3035
        %v3037 = vpop.f32.mrf.mxu0
        %v3038 = vadd.f32 %v2685, %v3037
        %v3039 = vpop.f32.mrf.mxu0
        %v3040 = vadd.f32 %v2687, %v3039
        %3041 = vmatprep.mubr.bf16.mxu0 %v2087
        %3042 = vmatmul.mubr.bf16.gmra.mxu0 %v2086
        %v3043 = vpop.f32.mrf.mxu0
        %v3044 = vadd.f32 %v2691, %v3043
        %v3045 = vpop.f32.mrf.mxu0
        %v3046 = vadd.f32 %v2693, %v3045
        %v3047 = vpop.f32.mrf.mxu0
        %v3048 = vadd.f32 %v2695, %v3047
        %v3049 = vpop.f32.mrf.mxu0
        %v3050 = vadd.f32 %v2697, %v3049
        %3051 = vmatprep.mubr.bf16.mxu0 %v2091
        %3052 = vmatmul.mubr.bf16.gmra.mxu0 %v2090
        %v3053 = vpop.f32.mrf.mxu0
        %v3054 = vadd.f32 %v2701, %v3053
        %v3055 = vpop.f32.mrf.mxu0
        %v3056 = vadd.f32 %v2703, %v3055
        %v3057 = vpop.f32.mrf.mxu0
        %v3058 = vadd.f32 %v2705, %v3057
        %v3059 = vpop.f32.mrf.mxu0
        %v3060 = vadd.f32 %v2707, %v3059
        %3061 = vmatprep.mubr.bf16.mxu0 %v2095
        %3062 = vmatmul.mubr.bf16.gmra.mxu0 %v2094
        %v3063 = vpop.f32.mrf.mxu0
        %v3064 = vadd.f32 %v2711, %v3063
        %v3065 = vpop.f32.mrf.mxu0
        %v3066 = vadd.f32 %v2713, %v3065
        %v3067 = vpop.f32.mrf.mxu0
        %v3068 = vadd.f32 %v2715, %v3067
        %v3069 = vpop.f32.mrf.mxu0
        %v3070 = vadd.f32 %v2717, %v3069
        %3071 = vmatprep.mubr.bf16.mxu0 %v2099
        %3072 = vmatmul.mubr.bf16.gmra.mxu0 %v2098
        %v3073 = vpop.f32.mrf.mxu0
        %v3074 = vadd.f32 %v2721, %v3073
        %v3075 = vpop.f32.mrf.mxu0
        %v3076 = vadd.f32 %v2723, %v3075
        %v3077 = vpop.f32.mrf.mxu0
        %v3078 = vadd.f32 %v2725, %v3077
        %v3079 = vpop.f32.mrf.mxu0
        %v3080 = vadd.f32 %v2727, %v3079
        %3081 = vmatprep.mubr.bf16.mxu0 %v2103
        %3082 = vmatmul.mubr.bf16.gmra.mxu0 %v2102
        %v3083 = vpop.f32.mrf.mxu0
        %v3084 = vadd.f32 %v2731, %v3083
        %v3085 = vpop.f32.mrf.mxu0
        %v3086 = vadd.f32 %v2733, %v3085
        %v3087 = vpop.f32.mrf.mxu0
        %v3088 = vadd.f32 %v2735, %v3087
        %v3089 = vpop.f32.mrf.mxu0
        %v3090 = vadd.f32 %v2737, %v3089
        %3091 = vmatprep.mubr.bf16.mxu0 %v2107
        %3092 = vmatmul.mubr.bf16.gmra.mxu0 %v2106
        %v3093 = vpop.f32.mrf.mxu0
        %v3094 = vadd.f32 %v2741, %v3093
        %v3095 = vpop.f32.mrf.mxu0
        %v3096 = vadd.f32 %v2743, %v3095
        %v3097 = vpop.f32.mrf.mxu0
        %v3098 = vadd.f32 %v2745, %v3097
        %v3099 = vpop.f32.mrf.mxu0
        %v3100 = vadd.f32 %v2747, %v3099
        %3101 = vmatprep.mubr.bf16.mxu0 %v2111
        %3102 = vmatmul.mubr.bf16.gmra.mxu0 %v2110
        %v3103 = vpop.f32.mrf.mxu0
        %v3104 = vadd.f32 %v2751, %v3103
        %v3105 = vpop.f32.mrf.mxu0
        %v3106 = vadd.f32 %v2753, %v3105
        %v3107 = vpop.f32.mrf.mxu0
        %v3108 = vadd.f32 %v2755, %v3107
        %v3109 = vpop.f32.mrf.mxu0
        %v3110 = vadd.f32 %v2757, %v3109
        %3111 = vmatprep.mubr.bf16.mxu0 %v2115
        %3112 = vmatmul.mubr.bf16.gmra.mxu0 %v2114
        %v3113 = vpop.f32.mrf.mxu0
        %v3114 = vadd.f32 %v2761, %v3113
        %v3115 = vpop.f32.mrf.mxu0
        %v3116 = vadd.f32 %v2763, %v3115
        %v3117 = vpop.f32.mrf.mxu0
        %v3118 = vadd.f32 %v2765, %v3117
        %v3119 = vpop.f32.mrf.mxu0
        %v3120 = vadd.f32 %v2767, %v3119
        %3121 = vmatprep.mubr.bf16.mxu0 %v2119
        %3122 = vmatmul.mubr.bf16.gmra.mxu0 %v2118
        %v3123 = vpop.f32.mrf.mxu0
        %v3124 = vadd.f32 %v2771, %v3123
        %v3125 = vpop.f32.mrf.mxu0
        %v3126 = vadd.f32 %v2773, %v3125
        %v3127 = vpop.f32.mrf.mxu0
        %v3128 = vadd.f32 %v2775, %v3127
        %v3129 = vpop.f32.mrf.mxu0
        %v3130 = vadd.f32 %v2777, %v3129
        %3131 = vmatprep.mubr.bf16.mxu0 %v2123
        %3132 = vmatmul.mubr.bf16.gmra.mxu0 %v2122
        %v3133 = vpop.f32.mrf.mxu0
        %v3134 = vadd.f32 %v2781, %v3133
        %v3135 = vpop.f32.mrf.mxu0
        %v3136 = vadd.f32 %v2783, %v3135
        %v3137 = vpop.f32.mrf.mxu0
        %v3138 = vadd.f32 %v2785, %v3137
        %v3139 = vpop.f32.mrf.mxu0
        %v3140 = vadd.f32 %v2787, %v3139
        %3141 = vmatprep.mubr.bf16.mxu0 %v2127
        %3142 = vmatmul.mubr.bf16.gmra.mxu0 %v2126
        %v3143 = vpop.f32.mrf.mxu0
        %v3144 = vadd.f32 %v2791, %v3143
        %v3145 = vpop.f32.mrf.mxu0
        %v3146 = vadd.f32 %v2793, %v3145
        %v3147 = vpop.f32.mrf.mxu0
        %v3148 = vadd.f32 %v2795, %v3147
        %v3149 = vpop.f32.mrf.mxu0
        %v3150 = vadd.f32 %v2797, %v3149
        %3151 = vmatprep.mubr.bf16.mxu0 %v2131
        %3152 = vmatmul.mubr.bf16.gmra.mxu0 %v2130
        %v3153 = vpop.f32.mrf.mxu0
        %v3154 = vadd.f32 %v2801, %v3153
        %v3155 = vpop.f32.mrf.mxu0
        %v3156 = vadd.f32 %v2803, %v3155
        %v3157 = vpop.f32.mrf.mxu0
        %v3158 = vadd.f32 %v2805, %v3157
        %v3159 = vpop.f32.mrf.mxu0
        %v3160 = vadd.f32 %v2807, %v3159
        %3161 = vmatprep.mubr.bf16.mxu0 %v2135
        %3162 = vmatmul.mubr.bf16.gmra.mxu0 %v2134
        %v3163 = vpop.f32.mrf.mxu0
        %v3164 = vadd.f32 %v2811, %v3163
        %v3165 = vpop.f32.mrf.mxu0
        %v3166 = vadd.f32 %v2813, %v3165
        %v3167 = vpop.f32.mrf.mxu0
        %v3168 = vadd.f32 %v2815, %v3167
        %v3169 = vpop.f32.mrf.mxu0
        %v3170 = vadd.f32 %v2817, %v3169
        %3171 = vmatprep.mubr.bf16.mxu0 %v2139
        %3172 = vmatmul.mubr.bf16.gmra.mxu0 %v2138
        %v3173 = vpop.f32.mrf.mxu0
        %v3174 = vadd.f32 %v2821, %v3173
        %v3175 = vpop.f32.mrf.mxu0
        %v3176 = vadd.f32 %v2823, %v3175
        %v3177 = vpop.f32.mrf.mxu0
        %v3178 = vadd.f32 %v2825, %v3177
        %v3179 = vpop.f32.mrf.mxu0
        %v3180 = vadd.f32 %v2827, %v3179
        %3181 = vmatprep.mubr.bf16.mxu0 %v2143
        %3182 = vmatmul.mubr.bf16.gmra.mxu0 %v2142
        %v3183 = vpop.f32.mrf.mxu0
        %v3184 = vadd.f32 %v2831, %v3183
        %v3185 = vpop.f32.mrf.mxu0
        %v3186 = vadd.f32 %v2833, %v3185
        %v3187 = vpop.f32.mrf.mxu0
        %v3188 = vadd.f32 %v2835, %v3187
        %v3189 = vpop.f32.mrf.mxu0
        %v3190 = vadd.f32 %v2837, %v3189
        %3191 = vmatprep.mubr.bf16.mxu0 %v2147
        %3192 = vmatmul.mubr.bf16.gmra.mxu0 %v2146
        %v3193 = vpop.f32.mrf.mxu0
        %v3194 = vadd.f32 %v2841, %v3193
        %v3195 = vpop.f32.mrf.mxu0
        %v3196 = vadd.f32 %v2843, %v3195
        %v3197 = vpop.f32.mrf.mxu0
        %v3198 = vadd.f32 %v2845, %v3197
        %v3199 = vpop.f32.mrf.mxu0
        %v3200 = vadd.f32 %v2847, %v3199
        %3201 = vmatprep.mubr.bf16.mxu0 %v2151
        %3202 = vmatmul.mubr.bf16.gmra.mxu0 %v2150
        %v3203 = vpop.f32.mrf.mxu0
        %v3204 = vadd.f32 %v2851, %v3203
        %v3205 = vpop.f32.mrf.mxu0
        %v3206 = vadd.f32 %v2853, %v3205
        %v3207 = vpop.f32.mrf.mxu0
        %v3208 = vadd.f32 %v2855, %v3207
        %v3209 = vpop.f32.mrf.mxu0
        %v3210 = vadd.f32 %v2857, %v3209
        %3211 = vmatprep.mubr.bf16.mxu0 %v2155
        %3212 = vmatmul.mubr.bf16.gmra.mxu0 %v2154
        %v3213 = vpop.f32.mrf.mxu0
        %v3214 = vadd.f32 %v2861, %v3213
        %v3215 = vpop.f32.mrf.mxu0
        %v3216 = vadd.f32 %v2863, %v3215
        %v3217 = vpop.f32.mrf.mxu0
        %v3218 = vadd.f32 %v2865, %v3217
        %v3219 = vpop.f32.mrf.mxu0
        %v3220 = vadd.f32 %v2867, %v3219
        %3221 = vmatprep.mubr.bf16.mxu0 %v2159
        %3222 = vmatmul.mubr.bf16.gmra.mxu0 %v2158
        %v3223 = vpop.f32.mrf.mxu0
        %v3224 = vadd.f32 %v2871, %v3223
        %v3225 = vpop.f32.mrf.mxu0
        %v3226 = vadd.f32 %v2873, %v3225
        %v3227 = vpop.f32.mrf.mxu0
        %v3228 = vadd.f32 %v2875, %v3227
        %v3229 = vpop.f32.mrf.mxu0
        %v3230 = vadd.f32 %v2877, %v3229
        %3231 = vmatprep.mubr.bf16.mxu0 %v2163
        %3232 = vmatmul.mubr.bf16.gmra.mxu0 %v2162
        %v3233 = vpop.f32.mrf.mxu0
        %v3234 = vadd.f32 %v2881, %v3233
        %v3235 = vpop.f32.mrf.mxu0
        %v3236 = vadd.f32 %v2883, %v3235
        %v3237 = vpop.f32.mrf.mxu0
        %v3238 = vadd.f32 %v2885, %v3237
        %v3239 = vpop.f32.mrf.mxu0
        %v3240 = vadd.f32 %v2887, %v3239
        %3241 = vmatprep.mubr.bf16.mxu0 %v2167
        %3242 = vmatmul.mubr.bf16.gmra.mxu0 %v2166
        %v3243 = vpop.f32.mrf.mxu0
        %v3244 = vadd.f32 %v2891, %v3243
        %v3245 = vpop.f32.mrf.mxu0
        %v3246 = vadd.f32 %v2893, %v3245
        %v3247 = vpop.f32.mrf.mxu0
        %v3248 = vadd.f32 %v2895, %v3247
        %v3249 = vpop.f32.mrf.mxu0
        %v3250 = vadd.f32 %v2897, %v3249
        %3251 = vmatprep.mubr.bf16.mxu0 %v2171
        %3252 = vmatmul.mubr.bf16.gmra.mxu0 %v2170
        %v3253 = vpop.f32.mrf.mxu0
        %v3254 = vadd.f32 %v2901, %v3253
        %v3255 = vpop.f32.mrf.mxu0
        %v3256 = vadd.f32 %v2903, %v3255
        %v3257 = vpop.f32.mrf.mxu0
        %v3258 = vadd.f32 %v2905, %v3257
        %v3259 = vpop.f32.mrf.mxu0
        %v3260 = vadd.f32 %v2907, %v3259
        %3261 = vmatprep.mubr.bf16.mxu0 %v2175
        %3262 = vmatmul.mubr.bf16.gmra.mxu0 %v2174
        %v3263 = vpop.f32.mrf.mxu0
        %v3264 = vadd.f32 %v2911, %v3263
        %v3265 = vpop.f32.mrf.mxu0
        %v3266 = vadd.f32 %v2913, %v3265
        %v3267 = vpop.f32.mrf.mxu0
        %v3268 = vadd.f32 %v2915, %v3267
        %v3269 = vpop.f32.mrf.mxu0
        %v3270 = vadd.f32 %v2917, %v3269
        %3271 = vmatprep.mubr.bf16.mxu0 %v2179
        %3272 = vmatmul.mubr.bf16.gmra.mxu0 %v2178
        %v3273 = vpop.f32.mrf.mxu0
        %v3274 = vadd.f32 %v2921, %v3273
        %v3275 = vpop.f32.mrf.mxu0
        %v3276 = vadd.f32 %v2923, %v3275
        %v3277 = vpop.f32.mrf.mxu0
        %v3278 = vadd.f32 %v2925, %v3277
        %v3279 = vpop.f32.mrf.mxu0
        %v3280 = vadd.f32 %v2927, %v3279
        %3281 = vdwg.mxu0
        %v3282 = vpack.c.bf16 %v2968, %v2964
        %v3283 = vpack.c.bf16 %v2970, %v2966
        %v3284 = vpack.c.bf16 %v2978, %v2974
        %v3285 = vpack.c.bf16 %v2980, %v2976
        %v3286 = vpack.c.bf16 %v2988, %v2984
        %v3287 = vpack.c.bf16 %v2990, %v2986
        %v3288 = vpack.c.bf16 %v2998, %v2994
        %v3289 = vpack.c.bf16 %v3000, %v2996
        %v3290 = vpack.c.bf16 %v3008, %v3004
        %v3291 = vpack.c.bf16 %v3010, %v3006
        %v3292 = vpack.c.bf16 %v3018, %v3014
        %v3293 = vpack.c.bf16 %v3020, %v3016
        %v3294 = vpack.c.bf16 %v3028, %v3024
        %v3295 = vpack.c.bf16 %v3030, %v3026
        %v3296 = vpack.c.bf16 %v3038, %v3034
        %v3297 = vpack.c.bf16 %v3040, %v3036
        %v3298 = vpack.c.bf16 %v3048, %v3044
        %v3299 = vpack.c.bf16 %v3050, %v3046
        %v3300 = vpack.c.bf16 %v3058, %v3054
        %v3301 = vpack.c.bf16 %v3060, %v3056
        %v3302 = vpack.c.bf16 %v3068, %v3064
        %v3303 = vpack.c.bf16 %v3070, %v3066
        %v3304 = vpack.c.bf16 %v3078, %v3074
        %v3305 = vpack.c.bf16 %v3080, %v3076
        %v3306 = vpack.c.bf16 %v3088, %v3084
        %v3307 = vpack.c.bf16 %v3090, %v3086
        %v3308 = vpack.c.bf16 %v3098, %v3094
        %v3309 = vpack.c.bf16 %v3100, %v3096
        %v3310 = vpack.c.bf16 %v3108, %v3104
        %v3311 = vpack.c.bf16 %v3110, %v3106
        %v3312 = vpack.c.bf16 %v3118, %v3114
        %v3313 = vpack.c.bf16 %v3120, %v3116
        %v3314 = vpack.c.bf16 %v3128, %v3124
        %v3315 = vpack.c.bf16 %v3130, %v3126
        %v3316 = vpack.c.bf16 %v3138, %v3134
        %v3317 = vpack.c.bf16 %v3140, %v3136
        %v3318 = vpack.c.bf16 %v3148, %v3144
        %v3319 = vpack.c.bf16 %v3150, %v3146
        %v3320 = vpack.c.bf16 %v3158, %v3154
        %v3321 = vpack.c.bf16 %v3160, %v3156
        %v3322 = vpack.c.bf16 %v3168, %v3164
        %v3323 = vpack.c.bf16 %v3170, %v3166
        %v3324 = vpack.c.bf16 %v3178, %v3174
        %v3325 = vpack.c.bf16 %v3180, %v3176
        %v3326 = vpack.c.bf16 %v3188, %v3184
        %v3327 = vpack.c.bf16 %v3190, %v3186
        %v3328 = vpack.c.bf16 %v3198, %v3194
        %v3329 = vpack.c.bf16 %v3200, %v3196
        %v3330 = vpack.c.bf16 %v3208, %v3204
        %v3331 = vpack.c.bf16 %v3210, %v3206
        %v3332 = vpack.c.bf16 %v3218, %v3214
        %v3333 = vpack.c.bf16 %v3220, %v3216
        %v3334 = vpack.c.bf16 %v3228, %v3224
        %v3335 = vpack.c.bf16 %v3230, %v3226
        %v3336 = vpack.c.bf16 %v3238, %v3234
        %v3337 = vpack.c.bf16 %v3240, %v3236
        %v3338 = vpack.c.bf16 %v3248, %v3244
        %v3339 = vpack.c.bf16 %v3250, %v3246
        %v3340 = vpack.c.bf16 %v3258, %v3254
        %v3341 = vpack.c.bf16 %v3260, %v3256
        %v3342 = vpack.c.bf16 %v3268, %v3264
        %v3343 = vpack.c.bf16 %v3270, %v3266
        %v3344 = vpack.c.bf16 %v3278, %v3274
        %v3345 = vpack.c.bf16 %v3280, %v3276
        %v3410 = vunpack.c.l.b16 %v3282
        %v3411 = vunpack.c.l.b16 %v3283
        %v3412 = vunpack.c.h.b16 %v3282
        %v3413 = vunpack.c.h.b16 %v3283
        %v3414 = vunpack.c.l.b16 %v3284
        %v3415 = vunpack.c.l.b16 %v3285
        %v3416 = vunpack.c.h.b16 %v3284
        %v3417 = vunpack.c.h.b16 %v3285
        %v3418 = vunpack.c.l.b16 %v3286
        %v3419 = vunpack.c.l.b16 %v3287
        %v3420 = vunpack.c.h.b16 %v3286
        %v3421 = vunpack.c.h.b16 %v3287
        %v3422 = vunpack.c.l.b16 %v3288
        %v3423 = vunpack.c.l.b16 %v3289
        %v3424 = vunpack.c.h.b16 %v3288
        %v3425 = vunpack.c.h.b16 %v3289
        %v3426 = vunpack.c.l.b16 %v3290
        %v3427 = vunpack.c.l.b16 %v3291
        %v3428 = vunpack.c.h.b16 %v3290
        %v3429 = vunpack.c.h.b16 %v3291
        %v3430 = vunpack.c.l.b16 %v3292
        %v3431 = vunpack.c.l.b16 %v3293
        %v3432 = vunpack.c.h.b16 %v3292
        %v3433 = vunpack.c.h.b16 %v3293
        %v3434 = vunpack.c.l.b16 %v3294
        %v3435 = vunpack.c.l.b16 %v3295
        %v3436 = vunpack.c.h.b16 %v3294
        %v3437 = vunpack.c.h.b16 %v3295
        %v3438 = vunpack.c.l.b16 %v3296
        %v3439 = vunpack.c.l.b16 %v3297
        %v3440 = vunpack.c.h.b16 %v3296
        %v3441 = vunpack.c.h.b16 %v3297
        %v3442 = vunpack.c.l.b16 %v3298
        %v3443 = vunpack.c.l.b16 %v3299
        %v3444 = vunpack.c.h.b16 %v3298
        %v3445 = vunpack.c.h.b16 %v3299
        %v3446 = vunpack.c.l.b16 %v3300
        %v3447 = vunpack.c.l.b16 %v3301
        %v3448 = vunpack.c.h.b16 %v3300
        %v3449 = vunpack.c.h.b16 %v3301
        %v3450 = vunpack.c.l.b16 %v3302
        %v3451 = vunpack.c.l.b16 %v3303
        %v3452 = vunpack.c.h.b16 %v3302
        %v3453 = vunpack.c.h.b16 %v3303
        %v3454 = vunpack.c.l.b16 %v3304
        %v3455 = vunpack.c.l.b16 %v3305
        %v3456 = vunpack.c.h.b16 %v3304
        %v3457 = vunpack.c.h.b16 %v3305
        %v3458 = vunpack.c.l.b16 %v3306
        %v3459 = vunpack.c.l.b16 %v3307
        %v3460 = vunpack.c.h.b16 %v3306
        %v3461 = vunpack.c.h.b16 %v3307
        %v3462 = vunpack.c.l.b16 %v3308
        %v3463 = vunpack.c.l.b16 %v3309
        %v3464 = vunpack.c.h.b16 %v3308
        %v3465 = vunpack.c.h.b16 %v3309
        %v3466 = vunpack.c.l.b16 %v3310
        %v3467 = vunpack.c.l.b16 %v3311
        %v3468 = vunpack.c.h.b16 %v3310
        %v3469 = vunpack.c.h.b16 %v3311
        %v3470 = vunpack.c.l.b16 %v3312
        %v3471 = vunpack.c.l.b16 %v3313
        %v3472 = vunpack.c.h.b16 %v3312
        %v3473 = vunpack.c.h.b16 %v3313
        %v3474 = vunpack.c.l.b16 %v3314
        %v3475 = vunpack.c.l.b16 %v3315
        %v3476 = vunpack.c.h.b16 %v3314
        %v3477 = vunpack.c.h.b16 %v3315
        %v3478 = vunpack.c.l.b16 %v3316
        %v3479 = vunpack.c.l.b16 %v3317
        %v3480 = vunpack.c.h.b16 %v3316
        %v3481 = vunpack.c.h.b16 %v3317
        %v3482 = vunpack.c.l.b16 %v3318
        %v3483 = vunpack.c.l.b16 %v3319
        %v3484 = vunpack.c.h.b16 %v3318
        %v3485 = vunpack.c.h.b16 %v3319
        %v3486 = vunpack.c.l.b16 %v3320
        %v3487 = vunpack.c.l.b16 %v3321
        %v3488 = vunpack.c.h.b16 %v3320
        %v3489 = vunpack.c.h.b16 %v3321
        %v3490 = vunpack.c.l.b16 %v3322
        %v3491 = vunpack.c.l.b16 %v3323
        %v3492 = vunpack.c.h.b16 %v3322
        %v3493 = vunpack.c.h.b16 %v3323
        %v3494 = vunpack.c.l.b16 %v3324
        %v3495 = vunpack.c.l.b16 %v3325
        %v3496 = vunpack.c.h.b16 %v3324
        %v3497 = vunpack.c.h.b16 %v3325
        %v3498 = vunpack.c.l.b16 %v3326
        %v3499 = vunpack.c.l.b16 %v3327
        %v3500 = vunpack.c.h.b16 %v3326
        %v3501 = vunpack.c.h.b16 %v3327
        %v3502 = vunpack.c.l.b16 %v3328
        %v3503 = vunpack.c.l.b16 %v3329
        %v3504 = vunpack.c.h.b16 %v3328
        %v3505 = vunpack.c.h.b16 %v3329
        %v3506 = vunpack.c.l.b16 %v3330
        %v3507 = vunpack.c.l.b16 %v3331
        %v3508 = vunpack.c.h.b16 %v3330
        %v3509 = vunpack.c.h.b16 %v3331
        %v3510 = vunpack.c.l.b16 %v3332
        %v3511 = vunpack.c.l.b16 %v3333
        %v3512 = vunpack.c.h.b16 %v3332
        %v3513 = vunpack.c.h.b16 %v3333
        %v3514 = vunpack.c.l.b16 %v3334
        %v3515 = vunpack.c.l.b16 %v3335
        %v3516 = vunpack.c.h.b16 %v3334
        %v3517 = vunpack.c.h.b16 %v3335
        %v3518 = vunpack.c.l.b16 %v3336
        %v3519 = vunpack.c.l.b16 %v3337
        %v3520 = vunpack.c.h.b16 %v3336
        %v3521 = vunpack.c.h.b16 %v3337
        %v3522 = vunpack.c.l.b16 %v3338
        %v3523 = vunpack.c.l.b16 %v3339
        %v3524 = vunpack.c.h.b16 %v3338
        %v3525 = vunpack.c.h.b16 %v3339
        %v3526 = vunpack.c.l.b16 %v3340
        %v3527 = vunpack.c.l.b16 %v3341
        %v3528 = vunpack.c.h.b16 %v3340
        %v3529 = vunpack.c.h.b16 %v3341
        %v3530 = vunpack.c.l.b16 %v3342
        %v3531 = vunpack.c.l.b16 %v3343
        %v3532 = vunpack.c.h.b16 %v3342
        %v3533 = vunpack.c.h.b16 %v3343
        %v3534 = vunpack.c.l.b16 %v3344
        %v3535 = vunpack.c.l.b16 %v3345
        %v3536 = vunpack.c.h.b16 %v3344
        %v3537 = vunpack.c.h.b16 %v3345
        %v3538 = vpack.c.b16 %v3411, %v3410
        %v3539 = vpack.c.b16 %v3413, %v3412
        %v3540 = vpack.c.b16 %v3415, %v3414
        %v3541 = vpack.c.b16 %v3417, %v3416
        %v3542 = vpack.c.b16 %v3419, %v3418
        %v3543 = vpack.c.b16 %v3421, %v3420
        %v3544 = vpack.c.b16 %v3423, %v3422
        %v3545 = vpack.c.b16 %v3425, %v3424
        %v3546 = vpack.c.b16 %v3427, %v3426
        %v3547 = vpack.c.b16 %v3429, %v3428
        %v3548 = vpack.c.b16 %v3431, %v3430
        %v3549 = vpack.c.b16 %v3433, %v3432
        %v3550 = vpack.c.b16 %v3435, %v3434
        %v3551 = vpack.c.b16 %v3437, %v3436
        %v3552 = vpack.c.b16 %v3439, %v3438
        %v3553 = vpack.c.b16 %v3441, %v3440
        %v3554 = vpack.c.b16 %v3443, %v3442
        %v3555 = vpack.c.b16 %v3445, %v3444
        %v3556 = vpack.c.b16 %v3447, %v3446
        %v3557 = vpack.c.b16 %v3449, %v3448
        %v3558 = vpack.c.b16 %v3451, %v3450
        %v3559 = vpack.c.b16 %v3453, %v3452
        %v3560 = vpack.c.b16 %v3455, %v3454
        %v3561 = vpack.c.b16 %v3457, %v3456
        %v3562 = vpack.c.b16 %v3459, %v3458
        %v3563 = vpack.c.b16 %v3461, %v3460
        %v3564 = vpack.c.b16 %v3463, %v3462
        %v3565 = vpack.c.b16 %v3465, %v3464
        %v3566 = vpack.c.b16 %v3467, %v3466
        %v3567 = vpack.c.b16 %v3469, %v3468
        %v3568 = vpack.c.b16 %v3471, %v3470
        %v3569 = vpack.c.b16 %v3473, %v3472
        %v3570 = vpack.c.b16 %v3475, %v3474
        %v3571 = vpack.c.b16 %v3477, %v3476
        %v3572 = vpack.c.b16 %v3479, %v3478
        %v3573 = vpack.c.b16 %v3481, %v3480
        %v3574 = vpack.c.b16 %v3483, %v3482
        %v3575 = vpack.c.b16 %v3485, %v3484
        %v3576 = vpack.c.b16 %v3487, %v3486
        %v3577 = vpack.c.b16 %v3489, %v3488
        %v3578 = vpack.c.b16 %v3491, %v3490
        %v3579 = vpack.c.b16 %v3493, %v3492
        %v3580 = vpack.c.b16 %v3495, %v3494
        %v3581 = vpack.c.b16 %v3497, %v3496
        %v3582 = vpack.c.b16 %v3499, %v3498
        %v3583 = vpack.c.b16 %v3501, %v3500
        %v3584 = vpack.c.b16 %v3503, %v3502
        %v3585 = vpack.c.b16 %v3505, %v3504
        %v3586 = vpack.c.b16 %v3507, %v3506
        %v3587 = vpack.c.b16 %v3509, %v3508
        %v3588 = vpack.c.b16 %v3511, %v3510
        %v3589 = vpack.c.b16 %v3513, %v3512
        %v3590 = vpack.c.b16 %v3515, %v3514
        %v3591 = vpack.c.b16 %v3517, %v3516
        %v3592 = vpack.c.b16 %v3519, %v3518
        %v3593 = vpack.c.b16 %v3521, %v3520
        %v3594 = vpack.c.b16 %v3523, %v3522
        %v3595 = vpack.c.b16 %v3525, %v3524
        %v3596 = vpack.c.b16 %v3527, %v3526
        %v3597 = vpack.c.b16 %v3529, %v3528
        %v3598 = vpack.c.b16 %v3531, %v3530
        %v3599 = vpack.c.b16 %v3533, %v3532
        %v3600 = vpack.c.b16 %v3535, %v3534
        %v3601 = vpack.c.b16 %v3537, %v3536
        %3666 = vst [vmem:[%s297] sm:$0xff] %v3538
        %3667 = vst [vmem:[%s297 + $0x8] sm:$0xff] %v3539
        %3668 = vst [vmem:[%s297 + $0x10] sm:$0xff] %v3540
        %3669 = vst [vmem:[%s297 + $0x18] sm:$0xff] %v3541
        %3670 = vst [vmem:[%s297 + $0x20] sm:$0xff] %v3542
        %3671 = vst [vmem:[%s297 + $0x28] sm:$0xff] %v3543
        %3672 = vst [vmem:[%s297 + $0x30] sm:$0xff] %v3544
        %3673 = vst [vmem:[%s297 + $0x38] sm:$0xff] %v3545
        %3674 = vst [vmem:[%s297 + $0x40] sm:$0xff] %v3546
        %3675 = vst [vmem:[%s297 + $0x48] sm:$0xff] %v3547
        %3676 = vst [vmem:[%s297 + $0x50] sm:$0xff] %v3548
        %3677 = vst [vmem:[%s297 + $0x58] sm:$0xff] %v3549
        %3678 = vst [vmem:[%s297 + $0x60] sm:$0xff] %v3550
        %3679 = vst [vmem:[%s297 + $0x68] sm:$0xff] %v3551
        %3680 = vst [vmem:[%s297 + $0x70] sm:$0xff] %v3552
        %3681 = vst [vmem:[%s297 + $0x78] sm:$0xff] %v3553
        %3682 = vst [vmem:[%s297 + $0x80] sm:$0xff] %v3554
        %3683 = vst [vmem:[%s297 + $0x88] sm:$0xff] %v3555
        %3684 = vst [vmem:[%s297 + $0x90] sm:$0xff] %v3556
        %3685 = vst [vmem:[%s297 + $0x98] sm:$0xff] %v3557
        %3686 = vst [vmem:[%s297 + $0xa0] sm:$0xff] %v3558
        %3687 = vst [vmem:[%s297 + $0xa8] sm:$0xff] %v3559
        %3688 = vst [vmem:[%s297 + $0xb0] sm:$0xff] %v3560
        %3689 = vst [vmem:[%s297 + $0xb8] sm:$0xff] %v3561
        %3690 = vst [vmem:[%s297 + $0xc0] sm:$0xff] %v3562
        %3691 = vst [vmem:[%s297 + $0xc8] sm:$0xff] %v3563
        %3692 = vst [vmem:[%s297 + $0xd0] sm:$0xff] %v3564
        %3693 = vst [vmem:[%s297 + $0xd8] sm:$0xff] %v3565
        %3694 = vst [vmem:[%s297 + $0xe0] sm:$0xff] %v3566
        %3695 = vst [vmem:[%s297 + $0xe8] sm:$0xff] %v3567
        %3696 = vst [vmem:[%s297 + $0xf0] sm:$0xff] %v3568
        %3697 = vst [vmem:[%s297 + $0xf8] sm:$0xff] %v3569
        %3698 = vst [vmem:[%s297 + $0x100] sm:$0xff] %v3570
        %3699 = vst [vmem:[%s297 + $0x108] sm:$0xff] %v3571
        %3700 = vst [vmem:[%s297 + $0x110] sm:$0xff] %v3572
        %3701 = vst [vmem:[%s297 + $0x118] sm:$0xff] %v3573
        %3702 = vst [vmem:[%s297 + $0x120] sm:$0xff] %v3574
        %3703 = vst [vmem:[%s297 + $0x128] sm:$0xff] %v3575
        %3704 = vst [vmem:[%s297 + $0x130] sm:$0xff] %v3576
        %3705 = vst [vmem:[%s297 + $0x138] sm:$0xff] %v3577
        %3706 = vst [vmem:[%s297 + $0x140] sm:$0xff] %v3578
        %3707 = vst [vmem:[%s297 + $0x148] sm:$0xff] %v3579
        %3708 = vst [vmem:[%s297 + $0x150] sm:$0xff] %v3580
        %3709 = vst [vmem:[%s297 + $0x158] sm:$0xff] %v3581
        %3710 = vst [vmem:[%s297 + $0x160] sm:$0xff] %v3582
        %3711 = vst [vmem:[%s297 + $0x168] sm:$0xff] %v3583
        %3712 = vst [vmem:[%s297 + $0x170] sm:$0xff] %v3584
        %3713 = vst [vmem:[%s297 + $0x178] sm:$0xff] %v3585
        %3714 = vst [vmem:[%s297 + $0x180] sm:$0xff] %v3586
        %3715 = vst [vmem:[%s297 + $0x188] sm:$0xff] %v3587
        %3716 = vst [vmem:[%s297 + $0x190] sm:$0xff] %v3588
        %3717 = vst [vmem:[%s297 + $0x198] sm:$0xff] %v3589
        %3718 = vst [vmem:[%s297 + $0x1a0] sm:$0xff] %v3590
        %3719 = vst [vmem:[%s297 + $0x1a8] sm:$0xff] %v3591
        %3720 = vst [vmem:[%s297 + $0x1b0] sm:$0xff] %v3592
        %3721 = vst [vmem:[%s297 + $0x1b8] sm:$0xff] %v3593
        %3722 = vst [vmem:[%s297 + $0x1c0] sm:$0xff] %v3594
        %3723 = vst [vmem:[%s297 + $0x1c8] sm:$0xff] %v3595
        %3724 = vst [vmem:[%s297 + $0x1d0] sm:$0xff] %v3596
        %3725 = vst [vmem:[%s297 + $0x1d8] sm:$0xff] %v3597
        %3726 = vst [vmem:[%s297 + $0x1e0] sm:$0xff] %v3598
        %3727 = vst [vmem:[%s297 + $0x1e8] sm:$0xff] %v3599
        %3728 = vst [vmem:[%s297 + $0x1f0] sm:$0xff] %v3600
        %3729 = vst [vmem:[%s297 + $0x1f8] sm:$0xff] %v3601
        %s3730 = sand.u32 %s142, 1
        %s3731 = scalar_lea.sflag [#allocation4], %s3730
        %s3732 = sand.u32 %s142, 1
        %s3733 = smul.addr %s3732, 512
        %s3734 = scalar_lea.vmem [#allocation11], %s3733
        // Predicated region
        $region61: #{tpu_custom_call.1} parent=39 // pred_check
          %p3735 = pneg %p152
        $region62: #{tpu_custom_call.1} parent=39 // pred_check_branch
          %3737 = sbr.rel (%p3735) target = $region64
        $region63: #{tpu_custom_call.1} parent=39 // pred_region
          %s3738 = smul.u32 64, %s24
          %s3740 = ssub.s32 8192, 8192
          %3741 = vsyncadd %s3731, %s3740
          %s3742 = smul.addr %s3738, 2
          %s3743 = smul.addr %s3742, 64
          %s3744 = scalar_lea.hbm %s5, %s3743
          %s3745 = sshll.u32 %s3734, 4
          %s3746 = int_to_ptr.vmem [resolvable:$true] %s3745
          %3751 = dma.vmem_to_hbm [thread:$0]  %s3746, 8192, %s3744, %s3731, 128, 128, 8
        $region64: #{tpu_custom_call.1} parent=39 // pred_fallthru
          _
      $region40: #{tpu_custom_call.1} parent=5 // pred_fallthru
        _
      %p3752 = scmp.le.s32.totalorder 2, %s19
      // Predicated region
      $region65: #{tpu_custom_call.1} parent=5 // pred_check
        %p3753 = pneg %p3752
      $region66: #{tpu_custom_call.1} parent=5 // pred_check_branch
        %3755 = sbr.rel (%p3753) target = $region68
      $region67: #{tpu_custom_call.1} parent=5 // pred_region
        %s3756 = ssub.s32 %s19, 2
        // Predicated region
        $region69: #{tpu_custom_call.1} parent=67 // pred_check
          %p3757 = pneg %p158
        $region70: #{tpu_custom_call.1} parent=67 // pred_check_branch
          %3759 = sbr.rel (%p3757) target = $region72
        $region71: #{tpu_custom_call.1} parent=67 // pred_region
          %s3760 = sand.u32 %s143, 1
          %s3761 = scalar_lea.sflag [#allocation4], %s3760
          %s3762 = sand.u32 %s143, 1
          %s3763 = smul.addr %s3762, 512
          %s3764 = scalar_lea.vmem [#allocation11], %s3763
          %3765 = dma.done %s3761, 8192
        $region72: #{tpu_custom_call.1} parent=67 // pred_fallthru
          _
      $region68: #{tpu_custom_call.1} parent=5 // pred_fallthru
        _
    $region6: #{tpu_custom_call.1} parent=1 // loop_footer
      %s23 = sadd.s32 1, %s19
    $region7: #{tpu_custom_call.1} parent=1 // loop_footer_branch
      %18 = sbr.rel target = $region3
    $region8: #{tpu_custom_call.1} parent=1 // loop_exit
      _
    %3766 = vsyncpa [#allocation3], 1
    %s3767 = scalar_lea.sflag [#allocation3], 1
    %3768 = vsyncpa %s3767, 1
    %3769 = vsyncpa [#allocation6], 1
    %3770 = vsyncpa [#allocation9], 1
    %3771 = vsyncpa [#allocation4], 1
    %s3772 = scalar_lea.sflag [#allocation4], 1
    %3773 = vsyncpa %s3772, 1

// kernel: tpu_custom_call.1
$region0: #{tpu_custom_call.1}
  #allocation0 [shape = 'u32[]', space=smem, size = 0x4, offset = 0x4, fixed_abs, tag = 'smem constant byte address 0x4 - core index']
  #allocation1 [shape = 'u32[144,128]{1,0:T(1,128)}', space=vmem, size = 0x12000, scoped, tag = 'internal scratch']
  %s0 = inlined_call_operand.hbm [shape: bf16[4096,256], index: 0, kind: input, shape index: {}]
  %s1 = inlined_call_operand.hbm [shape: bf16[256,512], index: 1, kind: input, shape index: {}]
  %s2 = inlined_call_operand.hbm [shape: f32[1,512], index: 2, kind: input, shape index: {}]
  %s3 = inlined_call_operand.hbm [shape: bf16[512,256], index: 3, kind: input, shape index: {}]
  %s4 = inlined_call_operand.hbm [shape: f32[1,256], index: 4, kind: input, shape index: {}]
  %s5 = inlined_call_operand.hbm [shape: bf16[4096,256], index: 5, kind: output, shape index: {}]
  %s6 = sld [smem:[#allocation0]]
  $region73: #{tpu_custom_call.1} parent=0
    _
  %s8 = ssub.s32 1, %s6
  %s9 = scalar_select 0, %s8, %s6
  $region1: #{tpu_custom_call.1} parent=0
    #allocation2 [shape = 'u8[524288]{0}', space=vmem, size = 0x80000, scoped, tag = 'input window, operand 0']
    #allocation3 [shape = 's32[2]{0}', space=sflag, size = 0x8, scoped, tag = 'scoped memory for tpu_custom_call.1']
    #allocation4 [shape = 's32[2]{0}', space=sflag, size = 0x8, scoped, tag = 'scoped memory for tpu_custom_call.1']
    #allocation5 [shape = 'u8[262144]{0}', space=vmem, size = 0x40000, scoped, tag = 'input window, operand 1, single buffered']
    #allocation6 [shape = 's32[1]{0}', space=sflag, size = 0x4, scoped, tag = 'scoped memory for tpu_custom_call.1']
    #allocation7 [shape = 'u8[2048]{0}', space=vmem, size = 0x800, scoped, tag = 'input window, operand 2, single buffered']
    #allocation8 [shape = 'u8[262144]{0}', space=vmem, size = 0x40000, scoped, tag = 'input window, operand 3, single buffered']
    #allocation9 [shape = 's32[1]{0}', space=sflag, size = 0x4, scoped, tag = 'scoped memory for tpu_custom_call.1']
    #allocation10 [shape = 'u8[1024]{0}', space=vmem, size = 0x400, scoped, tag = 'input window, operand 4, single buffered']
    #allocation11 [shape = 'u8[524288]{0}', space=vmem, size = 0x80000, scoped, tag = 'output window, operand 0']
    %10 = vsyncpa [#allocation3], 0
    %s11 = scalar_lea.sflag [#allocation3], 1
    %12 = vsyncpa %s11, 0
    %13 = vsyncpa [#allocation6], 0
    %14 = vsyncpa [#allocation9], 0
    %15 = vsyncpa [#allocation4], 0
    %s16 = scalar_lea.sflag [#allocation4], 1
    %17 = vsyncpa %s16, 0
    loop: start=0, step=1, limit=10
    $region2: #{tpu_custom_call.1} parent=1 // loop_pre_header
      _
    $region3: #{tpu_custom_call.1} parent=1 // loop_header
      %s19 = sphi 0, %s23
      %p20 = scmp.ge.s32.totalorder %s19, 10
      %s29 = sphi 0, %s31
      %s32 = sphi 0, %s29
      %s33 = sphi 0, %s32
      %s49 = sphi 0, %s33
      %s53 = sphi 0, %s53
      %s55 = sphi 0, %s53
      %s56 = sphi 0, %s55
      %s70 = sphi 0, %s56
      %s74 = sphi 0, %s74
      %s76 = sphi 0, %s74
      %s77 = sphi 0, %s76
      %s91 = sphi 0, %s77
      %s95 = sphi 0, %s95
      %s97 = sphi 0, %s95
      %s98 = sphi 0, %s97
      %s112 = sphi 0, %s98
      %s116 = sphi 0, %s116
      %s118 = sphi 0, %s116
      %s119 = sphi 0, %s118
      %s133 = sphi 0, %s119
      %s139 = sphi 0, %s141
      %s142 = sphi 0, %s139
      %s143 = sphi 0, %s142
      %s159 = sphi 0, %s143
    $region4: #{tpu_custom_call.1} parent=1 // loop_header_branch
      %22 = sbr.rel (%p20) target = $region8
    $region5: #{tpu_custom_call.1} parent=1 // loop_body
      %s24 = ssub.s32 %s19, 1
      %s25 = ssub.s32 %s19, 2
      %s26 = sadd.s32 %s19, 1
      %s27 = ssub.s32 %s19, %s26
      %p28 = scmp.eq.s32.totalorder %s27, 0
      %s30 = sadd.s32 %s29, 1
      %s31 = scalar_select %p28, %s29, %s30
      %p34 = pneg %p28
      %p35 = scmp.eq.s32.totalorder %s19, 7
      %p36 = por %p34, %p35
      %p37 = scmp.ne.s32.totalorder %s29, %s32
      %p38 = scmp.eq.s32.totalorder %s19, 0
      %p39 = por %p37, %p38
      %p40 = scmp.ne.s32.totalorder %s29, %s32
      %p41 = scmp.eq.s32.totalorder %s24, 7
      %p42 = por %p40, %p41
      %p43 = scmp.ne.s32.totalorder %s32, %s33
      %p44 = scmp.eq.s32.totalorder %s24, 0
      %p45 = por %p43, %p44
      %p46 = scmp.ne.s32.totalorder %s32, %s33
      %p47 = scmp.eq.s32.totalorder %s25, 7
      %p48 = por %p46, %p47
      %p50 = scmp.ne.s32.totalorder %s33, %s49
      %p51 = scmp.eq.s32.totalorder %s25, 0
      %p52 = por %p50, %p51
      %s54 = sadd.s32 %s53, 1
      %p57 = scmp.eq.s32.totalorder %s19, 7
      %p58 = scmp.ne.s32.totalorder %s53, %s55
      %p59 = scmp.eq.s32.totalorder %s19, 0
      %p60 = por %p58, %p59
      %p61 = scmp.ne.s32.totalorder %s53, %s55
      %p62 = scmp.eq.s32.totalorder %s24, 7
      %p63 = por %p61, %p62
      %p64 = scmp.ne.s32.totalorder %s55, %s56
      %p65 = scmp.eq.s32.totalorder %s24, 0
      %p66 = por %p64, %p65
      %p67 = scmp.ne.s32.totalorder %s55, %s56
      %p68 = scmp.eq.s32.totalorder %s25, 7
      %p69 = por %p67, %p68
      %p71 = scmp.ne.s32.totalorder %s56, %s70
      %p72 = scmp.eq.s32.totalorder %s25, 0
      %p73 = por %p71, %p72
      %s75 = sadd.s32 %s74, 1
      %p78 = scmp.eq.s32.totalorder %s19, 7
      %p79 = scmp.ne.s32.totalorder %s74, %s76
      %p80 = scmp.eq.s32.totalorder %s19, 0
      %p81 = por %p79, %p80
      %p82 = scmp.ne.s32.totalorder %s74, %s76
      %p83 = scmp.eq.s32.totalorder %s24, 7
      %p84 = por %p82, %p83
      %p85 = scmp.ne.s32.totalorder %s76, %s77
      %p86 = scmp.eq.s32.totalorder %s24, 0
      %p87 = por %p85, %p86
      %p88 = scmp.ne.s32.totalorder %s76, %s77
      %p89 = scmp.eq.s32.totalorder %s25, 7
      %p90 = por %p88, %p89
      %p92 = scmp.ne.s32.totalorder %s77, %s91
      %p93 = scmp.eq.s32.totalorder %s25, 0
      %p94 = por %p92, %p93
      %s96 = sadd.s32 %s95, 1
      %p99 = scmp.eq.s32.totalorder %s19, 7
      %p100 = scmp.ne.s32.totalorder %s95, %s97
      %p101 = scmp.eq.s32.totalorder %s19, 0
      %p102 = por %p100, %p101
      %p103 = scmp.ne.s32.totalorder %s95, %s97
      %p104 = scmp.eq.s32.totalorder %s24, 7
      %p105 = por %p103, %p104
      %p106 = scmp.ne.s32.totalorder %s97, %s98
      %p107 = scmp.eq.s32.totalorder %s24, 0
      %p108 = por %p106, %p107
      %p109 = scmp.ne.s32.totalorder %s97, %s98
      %p110 = scmp.eq.s32.totalorder %s25, 7
      %p111 = por %p109, %p110
      %p113 = scmp.ne.s32.totalorder %s98, %s112
      %p114 = scmp.eq.s32.totalorder %s25, 0
      %p115 = por %p113, %p114
      %s117 = sadd.s32 %s116, 1
      %p120 = scmp.eq.s32.totalorder %s19, 7
      %p121 = scmp.ne.s32.totalorder %s116, %s118
      %p122 = scmp.eq.s32.totalorder %s19, 0
      %p123 = por %p121, %p122
      %p124 = scmp.ne.s32.totalorder %s116, %s118
      %p125 = scmp.eq.s32.totalorder %s24, 7
      %p126 = por %p124, %p125
      %p127 = scmp.ne.s32.totalorder %s118, %s119
      %p128 = scmp.eq.s32.totalorder %s24, 0
      %p129 = por %p127, %p128
      %p130 = scmp.ne.s32.totalorder %s118, %s119
      %p131 = scmp.eq.s32.totalorder %s25, 7
      %p132 = por %p130, %p131
      %p134 = scmp.ne.s32.totalorder %s119, %s133
      %p135 = scmp.eq.s32.totalorder %s25, 0
      %p136 = por %p134, %p135
      %s137 = ssub.s32 %s19, %s26
      %p138 = scmp.eq.s32.totalorder %s137, 0
      %s140 = sadd.s32 %s139, 1
      %s141 = scalar_select %p138, %s139, %s140
      %p144 = pneg %p138
      %p145 = scmp.eq.s32.totalorder %s19, 7
      %p146 = por %p144, %p145
      %p147 = scmp.ne.s32.totalorder %s139, %s142
      %p148 = scmp.eq.s32.totalorder %s19, 0
      %p149 = por %p147, %p148
      %p150 = scmp.ne.s32.totalorder %s139, %s142
      %p151 = scmp.eq.s32.totalorder %s24, 7
      %p152 = por %p150, %p151
      %p153 = scmp.ne.s32.totalorder %s142, %s143
      %p154 = scmp.eq.s32.totalorder %s24, 0
      %p155 = por %p153, %p154
      %p156 = scmp.ne.s32.totalorder %s142, %s143
      %p157 = scmp.eq.s32.totalorder %s25, 7
      %p158 = por %p156, %p157
      %p160 = scmp.ne.s32.totalorder %s143, %s159
      %p161 = scmp.eq.s32.totalorder %s25, 0
      %p162 = por %p160, %p161
      %p163 = scmp.le.s32.totalorder 1, %s19
      %p164 = scmp.lt.s32.totalorder %s19, 9
      %p165 = pnand %p163, %p164
      %p166 = pneg %p165
      // Predicated region
      $region9: #{tpu_custom_call.1} parent=5 // pred_check
        _
      $region10: #{tpu_custom_call.1} parent=5 // pred_check_branch
        %168 = sbr.rel (%p165) target = $region12
      $region11: #{tpu_custom_call.1} parent=5 // pred_region
        %s169 = ssub.s32 %s19, 1
        // Predicated region
        $region13: #{tpu_custom_call.1} parent=11 // pred_check
          %p170 = pneg %p66
        $region14: #{tpu_custom_call.1} parent=11 // pred_check_branch
          %172 = sbr.rel (%p170) target = $region16
        $region15: #{tpu_custom_call.1} parent=11 // pred_region
          %s174 = ssub.s32 8192, 8192
          %175 = vsyncadd [#allocation6], %s174
          %s176 = sshll.u32 [#allocation5], 4
          %s177 = int_to_ptr.vmem [resolvable:$true] %s176
          %182 = dma.hbm_to_vmem [thread:$0]  %s1, 8192, %s177, [#allocation6], 256, 256, 16
        $region16: #{tpu_custom_call.1} parent=11 // pred_fallthru
          _
        // Predicated region
        $region17: #{tpu_custom_call.1} parent=11 // pred_check
          %p183 = pneg %p87
        $region18: #{tpu_custom_call.1} parent=11 // pred_check_branch
          %185 = sbr.rel (%p183) target = $region20
        $region19: #{tpu_custom_call.1} parent=11 // pred_region
          %s187 = ssub.s32 64, 64
          %188 = vsyncadd [#allocation6], %s187
          %s190 = sshll.u32 [#allocation7], 4
          %s191 = int_to_ptr.vmem [resolvable:$true] %s190
          %193 = dma.hbm_to_vmem [thread:$0]  %s2, 64, %s191, [#allocation6]
        $region20: #{tpu_custom_call.1} parent=11 // pred_fallthru
          _
        // Predicated region
        $region21: #{tpu_custom_call.1} parent=11 // pred_check
          %p194 = pneg %p108
        $region22: #{tpu_custom_call.1} parent=11 // pred_check_branch
          %196 = sbr.rel (%p194) target = $region24
        $region23: #{tpu_custom_call.1} parent=11 // pred_region
          %s198 = ssub.s32 8192, 8192
          %199 = vsyncadd [#allocation9], %s198
          %s200 = sshll.u32 [#allocation8], 4
          %s201 = int_to_ptr.vmem [resolvable:$true] %s200
          %206 = dma.hbm_to_vmem [thread:$0]  %s3, 8192, %s201, [#allocation9], 128, 128, 8
        $region24: #{tpu_custom_call.1} parent=11 // pred_fallthru
          _
        // Predicated region
        $region25: #{tpu_custom_call.1} parent=11 // pred_check
          %p207 = pneg %p129
        $region26: #{tpu_custom_call.1} parent=11 // pred_check_branch
          %209 = sbr.rel (%p207) target = $region28
        $region27: #{tpu_custom_call.1} parent=11 // pred_region
          %s211 = ssub.s32 32, 32
          %212 = vsyncadd [#allocation9], %s211
          %s214 = sshll.u32 [#allocation10], 4
          %s215 = int_to_ptr.vmem [resolvable:$true] %s214
          %217 = dma.hbm_to_vmem [thread:$0]  %s4, 32, %s215, [#allocation9]
        $region28: #{tpu_custom_call.1} parent=11 // pred_fallthru
          _
      $region12: #{tpu_custom_call.1} parent=5 // pred_fallthru
        _
      %p218 = scmp.lt.s32.totalorder %s19, 8
      // Predicated region
      $region29: #{tpu_custom_call.1} parent=5 // pred_check
        %p219 = pneg %p218
      $region30: #{tpu_custom_call.1} parent=5 // pred_check_branch
        %221 = sbr.rel (%p219) target = $region32
      $region31: #{tpu_custom_call.1} parent=5 // pred_region
        // Predicated region
        $region33: #{tpu_custom_call.1} parent=31 // pred_check
          %p222 = pneg %p39
        $region34: #{tpu_custom_call.1} parent=31 // pred_check_branch
          %224 = sbr.rel (%p222) target = $region36
        $region35: #{tpu_custom_call.1} parent=31 // pred_region
          %s225 = sand.u32 %s29, 1
          %s226 = scalar_lea.sflag [#allocation3], %s225
          %s227 = sand.u32 %s29, 1
          %s228 = smul.addr %s227, 512
          %s229 = scalar_lea.vmem [#allocation2], %s228
          %s230 = smul.u32 64, %s19
          %s232 = ssub.s32 8192, 8192
          %233 = vsyncadd %s226, %s232
          %s234 = smul.addr %s230, 2
          %s235 = smul.addr %s234, 64
          %s236 = scalar_lea.hbm %s0, %s235
          %s237 = sshll.u32 %s229, 4
          %s238 = int_to_ptr.vmem [resolvable:$true] %s237
          %243 = dma.hbm_to_vmem [thread:$0]  %s236, 8192, %s238, %s226, 128, 128, 8
        $region36: #{tpu_custom_call.1} parent=31 // pred_fallthru
          _
      $region32: #{tpu_custom_call.1} parent=5 // pred_fallthru
        _
      %p244 = scmp.le.s32.totalorder 1, %s19
      %p245 = scmp.lt.s32.totalorder %s19, 9
      %p246 = pnand %p244, %p245
      %p247 = pneg %p246
      // Predicated region
      $region37: #{tpu_custom_call.1} parent=5 // pred_check
        _
      $region38: #{tpu_custom_call.1} parent=5 // pred_check_branch
        %249 = sbr.rel (%p246) target = $region40
      $region39: #{tpu_custom_call.1} parent=5 // pred_region
        %s250 = ssub.s32 %s19, 1
        %s251 = sand.u32 %s32, 1
        %s252 = scalar_lea.sflag [#allocation3], %s251
        %s253 = sand.u32 %s32, 1
        %s254 = smul.addr %s253, 512
        %s255 = scalar_lea.vmem [#allocation2], %s254
        // Predicated region
        $region41: #{tpu_custom_call.1} parent=39 // pred_check
          %p256 = pneg %p45
        $region42: #{tpu_custom_call.1} parent=39 // pred_check_branch
          %258 = sbr.rel (%p256) target = $region44
        $region43: #{tpu_custom_call.1} parent=39 // pred_region
          %259 = dma.done %s252, 8192
        $region44: #{tpu_custom_call.1} parent=39 // pred_fallthru
          _
        // Predicated region
        $region45: #{tpu_custom_call.1} parent=39 // pred_check
          %p260 = pneg %p66
        $region46: #{tpu_custom_call.1} parent=39 // pred_check_branch
          %262 = sbr.rel (%p260) target = $region48
        $region47: #{tpu_custom_call.1} parent=39 // pred_region
          %263 = dma.done [#allocation6], 8192
        $region48: #{tpu_custom_call.1} parent=39 // pred_fallthru
          _
        // Predicated region
        $region49: #{tpu_custom_call.1} parent=39 // pred_check
          %p264 = pneg %p87
        $region50: #{tpu_custom_call.1} parent=39 // pred_check_branch
          %266 = sbr.rel (%p264) target = $region52
        $region51: #{tpu_custom_call.1} parent=39 // pred_region
          %267 = dma.done [#allocation6], 64
        $region52: #{tpu_custom_call.1} parent=39 // pred_fallthru
          _
        // Predicated region
        $region53: #{tpu_custom_call.1} parent=39 // pred_check
          %p268 = pneg %p108
        $region54: #{tpu_custom_call.1} parent=39 // pred_check_branch
          %270 = sbr.rel (%p268) target = $region56
        $region55: #{tpu_custom_call.1} parent=39 // pred_region
          %271 = dma.done [#allocation9], 8192
        $region56: #{tpu_custom_call.1} parent=39 // pred_fallthru
          _
        // Predicated region
        $region57: #{tpu_custom_call.1} parent=39 // pred_check
          %p272 = pneg %p129
        $region58: #{tpu_custom_call.1} parent=39 // pred_check_branch
          %274 = sbr.rel (%p272) target = $region60
        $region59: #{tpu_custom_call.1} parent=39 // pred_region
          %275 = dma.done [#allocation9], 32
        $region60: #{tpu_custom_call.1} parent=39 // pred_fallthru
          _
        %s276 = sand.u32 %s32, 1
        %s277 = scalar_lea.sflag [#allocation3], %s276
        %s278 = sand.u32 %s32, 1
        %s279 = smul.addr %s278, 512
        %s280 = scalar_lea.vmem [#allocation2], %s279
        %p281 = pneg %p45
        %p282 = pneg %p42
        %p283 = pneg %p66
        %p284 = pneg %p63
        %p285 = pneg %p87
        %p286 = pneg %p84
        %p287 = pneg %p108
        %p288 = pneg %p105
        %p289 = pneg %p129
        %p290 = pneg %p126
        %p291 = pneg %p155
        %p292 = pneg %p152
        %s293 = sand.u32 %s142, 1
        %s294 = scalar_lea.sflag [#allocation4], %s293
        %s295 = sand.u32 %s142, 1
        %s296 = smul.addr %s295, 512
        %s297 = scalar_lea.vmem [#allocation11], %s296
        %s298 = smul.u32 64, %s24
        %s299 = smul.u32 64, %s24
        %v300 = vld [vmem:[%s255] sm:$0xff]
        %v301 = vld [vmem:[%s255 + $0x8] sm:$0xff]
        %v302 = vld [vmem:[%s255 + $0x10] sm:$0xff]
        %v303 = vld [vmem:[%s255 + $0x18] sm:$0xff]
        %v304 = vld [vmem:[%s255 + $0x20] sm:$0xff]
        %v305 = vld [vmem:[%s255 + $0x28] sm:$0xff]
        %v306 = vld [vmem:[%s255 + $0x30] sm:$0xff]
        %v307 = vld [vmem:[%s255 + $0x38] sm:$0xff]
        %v308 = vld [vmem:[%s255 + $0x40] sm:$0xff]
        %v309 = vld [vmem:[%s255 + $0x48] sm:$0xff]
        %v310 = vld [vmem:[%s255 + $0x50] sm:$0xff]
        %v311 = vld [vmem:[%s255 + $0x58] sm:$0xff]
        %v312 = vld [vmem:[%s255 + $0x60] sm:$0xff]
        %v313 = vld [vmem:[%s255 + $0x68] sm:$0xff]
        %v314 = vld [vmem:[%s255 + $0x70] sm:$0xff]
        %v315 = vld [vmem:[%s255 + $0x78] sm:$0xff]
        %v316 = vld [vmem:[%s255 + $0x80] sm:$0xff]
        %v317 = vld [vmem:[%s255 + $0x88] sm:$0xff]
        %v318 = vld [vmem:[%s255 + $0x90] sm:$0xff]
        %v319 = vld [vmem:[%s255 + $0x98] sm:$0xff]
        %v320 = vld [vmem:[%s255 + $0xa0] sm:$0xff]
        %v321 = vld [vmem:[%s255 + $0xa8] sm:$0xff]
        %v322 = vld [vmem:[%s255 + $0xb0] sm:$0xff]
        %v323 = vld [vmem:[%s255 + $0xb8] sm:$0xff]
        %v324 = vld [vmem:[%s255 + $0xc0] sm:$0xff]
        %v325 = vld [vmem:[%s255 + $0xc8] sm:$0xff]
        %v326 = vld [vmem:[%s255 + $0xd0] sm:$0xff]
        %v327 = vld [vmem:[%s255 + $0xd8] sm:$0xff]
        %v328 = vld [vmem:[%s255 + $0xe0] sm:$0xff]
        %v329 = vld [vmem:[%s255 + $0xe8] sm:$0xff]
        %v330 = vld [vmem:[%s255 + $0xf0] sm:$0xff]
        %v331 = vld [vmem:[%s255 + $0xf8] sm:$0xff]
        %v332 = vld [vmem:[%s255 + $0x100] sm:$0xff]
        %v333 = vld [vmem:[%s255 + $0x108] sm:$0xff]
        %v334 = vld [vmem:[%s255 + $0x110] sm:$0xff]
        %v335 = vld [vmem:[%s255 + $0x118] sm:$0xff]
        %v336 = vld [vmem:[%s255 + $0x120] sm:$0xff]
        %v337 = vld [vmem:[%s255 + $0x128] sm:$0xff]
        %v338 = vld [vmem:[%s255 + $0x130] sm:$0xff]
        %v339 = vld [vmem:[%s255 + $0x138] sm:$0xff]
        %v340 = vld [vmem:[%s255 + $0x140] sm:$0xff]
        %v341 = vld [vmem:[%s255 + $0x148] sm:$0xff]
        %v342 = vld [vmem:[%s255 + $0x150] sm:$0xff]
        %v343 = vld [vmem:[%s255 + $0x158] sm:$0xff]
        %v344 = vld [vmem:[%s255 + $0x160] sm:$0xff]
        %v345 = vld [vmem:[%s255 + $0x168] sm:$0xff]
        %v346 = vld [vmem:[%s255 + $0x170] sm:$0xff]
        %v347 = vld [vmem:[%s255 + $0x178] sm:$0xff]
        %v348 = vld [vmem:[%s255 + $0x180] sm:$0xff]
        %v349 = vld [vmem:[%s255 + $0x188] sm:$0xff]
        %v350 = vld [vmem:[%s255 + $0x190] sm:$0xff]
        %v351 = vld [vmem:[%s255 + $0x198] sm:$0xff]
        %v352 = vld [vmem:[%s255 + $0x1a0] sm:$0xff]
        %v353 = vld [vmem:[%s255 + $0x1a8] sm:$0xff]
        %v354 = vld [vmem:[%s255 + $0x1b0] sm:$0xff]
        %v355 = vld [vmem:[%s255 + $0x1b8] sm:$0xff]
        %v356 = vld [vmem:[%s255 + $0x1c0] sm:$0xff]
        %v357 = vld [vmem:[%s255 + $0x1c8] sm:$0xff]
        %v358 = vld [vmem:[%s255 + $0x1d0] sm:$0xff]
        %v359 = vld [vmem:[%s255 + $0x1d8] sm:$0xff]
        %v360 = vld [vmem:[%s255 + $0x1e0] sm:$0xff]
        %v361 = vld [vmem:[%s255 + $0x1e8] sm:$0xff]
        %v362 = vld [vmem:[%s255 + $0x1f0] sm:$0xff]
        %v363 = vld [vmem:[%s255 + $0x1f8] sm:$0xff]
        %v364 = vld [vmem:[#allocation5] sm:$0xff]
        %v365 = vld [vmem:[#allocation5 + $0x8] sm:$0xff]
        %v366 = vld [vmem:[#allocation5 + $0x10] sm:$0xff]
        %v367 = vld [vmem:[#allocation5 + $0x18] sm:$0xff]
        %v368 = vld [vmem:[#allocation5 + $0x20] sm:$0xff]
        %v369 = vld [vmem:[#allocation5 + $0x28] sm:$0xff]
        %v370 = vld [vmem:[#allocation5 + $0x30] sm:$0xff]
        %v371 = vld [vmem:[#allocation5 + $0x38] sm:$0xff]
        %v372 = vld [vmem:[#allocation5 + $0x40] sm:$0xff]
        %v373 = vld [vmem:[#allocation5 + $0x48] sm:$0xff]
        %v374 = vld [vmem:[#allocation5 + $0x50] sm:$0xff]
        %v375 = vld [vmem:[#allocation5 + $0x58] sm:$0xff]
        %v376 = vld [vmem:[#allocation5 + $0x60] sm:$0xff]
        %v377 = vld [vmem:[#allocation5 + $0x68] sm:$0xff]
        %v378 = vld [vmem:[#allocation5 + $0x70] sm:$0xff]
        %v379 = vld [vmem:[#allocation5 + $0x78] sm:$0xff]
        %v380 = vld [vmem:[#allocation5 + $0x80] sm:$0xff]
        %v381 = vld [vmem:[#allocation5 + $0x88] sm:$0xff]
        %v382 = vld [vmem:[#allocation5 + $0x90] sm:$0xff]
        %v383 = vld [vmem:[#allocation5 + $0x98] sm:$0xff]
        %v384 = vld [vmem:[#allocation5 + $0xa0] sm:$0xff]
        %v385 = vld [vmem:[#allocation5 + $0xa8] sm:$0xff]
        %v386 = vld [vmem:[#allocation5 + $0xb0] sm:$0xff]
        %v387 = vld [vmem:[#allocation5 + $0xb8] sm:$0xff]
        %v388 = vld [vmem:[#allocation5 + $0xc0] sm:$0xff]
        %v389 = vld [vmem:[#allocation5 + $0xc8] sm:$0xff]
        %v390 = vld [vmem:[#allocation5 + $0xd0] sm:$0xff]
        %v391 = vld [vmem:[#allocation5 + $0xd8] sm:$0xff]
        %v392 = vld [vmem:[#allocation5 + $0xe0] sm:$0xff]
        %v393 = vld [vmem:[#allocation5 + $0xe8] sm:$0xff]
        %v394 = vld [vmem:[#allocation5 + $0xf0] sm:$0xff]
        %v395 = vld [vmem:[#allocation5 + $0xf8] sm:$0xff]
        %v396 = vld [vmem:[#allocation5 + $0x100] sm:$0xff]
        %v397 = vld [vmem:[#allocation5 + $0x108] sm:$0xff]
        %v398 = vld [vmem:[#allocation5 + $0x110] sm:$0xff]
        %v399 = vld [vmem:[#allocation5 + $0x118] sm:$0xff]
        %v400 = vld [vmem:[#allocation5 + $0x120] sm:$0xff]
        %v401 = vld [vmem:[#allocation5 + $0x128] sm:$0xff]
        %v402 = vld [vmem:[#allocation5 + $0x130] sm:$0xff]
        %v403 = vld [vmem:[#allocation5 + $0x138] sm:$0xff]
        %v404 = vld [vmem:[#allocation5 + $0x140] sm:$0xff]
        %v405 = vld [vmem:[#allocation5 + $0x148] sm:$0xff]
        %v406 = vld [vmem:[#allocation5 + $0x150] sm:$0xff]
        %v407 = vld [vmem:[#allocation5 + $0x158] sm:$0xff]
        %v408 = vld [vmem:[#allocation5 + $0x160] sm:$0xff]
        %v409 = vld [vmem:[#allocation5 + $0x168] sm:$0xff]
        %v410 = vld [vmem:[#allocation5 + $0x170] sm:$0xff]
        %v411 = vld [vmem:[#allocation5 + $0x178] sm:$0xff]
        %v412 = vld [vmem:[#allocation5 + $0x180] sm:$0xff]
        %v413 = vld [vmem:[#allocation5 + $0x188] sm:$0xff]
        %v414 = vld [vmem:[#allocation5 + $0x190] sm:$0xff]
        %v415 = vld [vmem:[#allocation5 + $0x198] sm:$0xff]
        %v416 = vld [vmem:[#allocation5 + $0x1a0] sm:$0xff]
        %v417 = vld [vmem:[#allocation5 + $0x1a8] sm:$0xff]
        %v418 = vld [vmem:[#allocation5 + $0x1b0] sm:$0xff]
        %v419 = vld [vmem:[#allocation5 + $0x1b8] sm:$0xff]
        %v420 = vld [vmem:[#allocation5 + $0x1c0] sm:$0xff]
        %v421 = vld [vmem:[#allocation5 + $0x1c8] sm:$0xff]
        %v422 = vld [vmem:[#allocation5 + $0x1d0] sm:$0xff]
        %v423 = vld [vmem:[#allocation5 + $0x1d8] sm:$0xff]
        %v424 = vld [vmem:[#allocation5 + $0x1e0] sm:$0xff]
        %v425 = vld [vmem:[#allocation5 + $0x1e8] sm:$0xff]
        %v426 = vld [vmem:[#allocation5 + $0x1f0] sm:$0xff]
        %v427 = vld [vmem:[#allocation5 + $0x1f8] sm:$0xff]
        %v428 = vld [vmem:[#allocation7] sm:$0xf]
        %v430 = vlaneseq
        %v431 = vshrl.u32 %v430, 7
        %v432 = vsub.s32 0, %v431
        %v433 = vrot.slane %v428, %v432
        %v434 = vlaneseq
        %v435 = vshrl.u32 %v434, 7
        %v436 = vsub.s32 1, %v435
        %v437 = vrot.slane %v428, %v436
        %v438 = vlaneseq
        %v439 = vshrl.u32 %v438, 7
        %v440 = vsub.s32 2, %v439
        %v441 = vrot.slane %v428, %v440
        %v442 = vlaneseq
        %v443 = vshrl.u32 %v442, 7
        %v444 = vsub.s32 3, %v443
        %v445 = vrot.slane %v428, %v444
        %v514 = vunpack.c.l.b16 %v300
        %v515 = vunpack.c.h.b16 %v300
        %v516 = vunpack.c.l.b16 %v301
        %v517 = vunpack.c.h.b16 %v301
        %v518 = vunpack.c.l.b16 %v302
        %v519 = vunpack.c.h.b16 %v302
        %v520 = vunpack.c.l.b16 %v303
        %v521 = vunpack.c.h.b16 %v303
        %v522 = vunpack.c.l.b16 %v304
        %v523 = vunpack.c.h.b16 %v304
        %v524 = vunpack.c.l.b16 %v305
        %v525 = vunpack.c.h.b16 %v305
        %v526 = vunpack.c.l.b16 %v306
        %v527 = vunpack.c.h.b16 %v306
        %v528 = vunpack.c.l.b16 %v307
        %v529 = vunpack.c.h.b16 %v307
        %v530 = vunpack.c.l.b16 %v308
        %v531 = vunpack.c.h.b16 %v308
        %v532 = vunpack.c.l.b16 %v309
        %v533 = vunpack.c.h.b16 %v309
        %v534 = vunpack.c.l.b16 %v310
        %v535 = vunpack.c.h.b16 %v310
        %v536 = vunpack.c.l.b16 %v311
        %v537 = vunpack.c.h.b16 %v311
        %v538 = vunpack.c.l.b16 %v312
        %v539 = vunpack.c.h.b16 %v312
        %v540 = vunpack.c.l.b16 %v313
        %v541 = vunpack.c.h.b16 %v313
        %v542 = vunpack.c.l.b16 %v314
        %v543 = vunpack.c.h.b16 %v314
        %v544 = vunpack.c.l.b16 %v315
        %v545 = vunpack.c.h.b16 %v315
        %v546 = vunpack.c.l.b16 %v316
        %v547 = vunpack.c.h.b16 %v316
        %v548 = vunpack.c.l.b16 %v317
        %v549 = vunpack.c.h.b16 %v317
        %v550 = vunpack.c.l.b16 %v318
        %v551 = vunpack.c.h.b16 %v318
        %v552 = vunpack.c.l.b16 %v319
        %v553 = vunpack.c.h.b16 %v319
        %v554 = vunpack.c.l.b16 %v320
        %v555 = vunpack.c.h.b16 %v320
        %v556 = vunpack.c.l.b16 %v321
        %v557 = vunpack.c.h.b16 %v321
        %v558 = vunpack.c.l.b16 %v322
        %v559 = vunpack.c.h.b16 %v322
        %v560 = vunpack.c.l.b16 %v323
        %v561 = vunpack.c.h.b16 %v323
        %v562 = vunpack.c.l.b16 %v324
        %v563 = vunpack.c.h.b16 %v324
        %v564 = vunpack.c.l.b16 %v325
        %v565 = vunpack.c.h.b16 %v325
        %v566 = vunpack.c.l.b16 %v326
        %v567 = vunpack.c.h.b16 %v326
        %v568 = vunpack.c.l.b16 %v327
        %v569 = vunpack.c.h.b16 %v327
        %v570 = vunpack.c.l.b16 %v328
        %v571 = vunpack.c.h.b16 %v328
        %v572 = vunpack.c.l.b16 %v329
        %v573 = vunpack.c.h.b16 %v329
        %v574 = vunpack.c.l.b16 %v330
        %v575 = vunpack.c.h.b16 %v330
        %v576 = vunpack.c.l.b16 %v331
        %v577 = vunpack.c.h.b16 %v331
        %v578 = vunpack.c.l.b16 %v332
        %v579 = vunpack.c.h.b16 %v332
        %v580 = vunpack.c.l.b16 %v333
        %v581 = vunpack.c.h.b16 %v333
        %v582 = vunpack.c.l.b16 %v334
        %v583 = vunpack.c.h.b16 %v334
        %v584 = vunpack.c.l.b16 %v335
        %v585 = vunpack.c.h.b16 %v335
        %v586 = vunpack.c.l.b16 %v336
        %v587 = vunpack.c.h.b16 %v336
        %v588 = vunpack.c.l.b16 %v337
        %v589 = vunpack.c.h.b16 %v337
        %v590 = vunpack.c.l.b16 %v338
        %v591 = vunpack.c.h.b16 %v338
        %v592 = vunpack.c.l.b16 %v339
        %v593 = vunpack.c.h.b16 %v339
        %v594 = vunpack.c.l.b16 %v340
        %v595 = vunpack.c.h.b16 %v340
        %v596 = vunpack.c.l.b16 %v341
        %v597 = vunpack.c.h.b16 %v341
        %v598 = vunpack.c.l.b16 %v342
        %v599 = vunpack.c.h.b16 %v342
        %v600 = vunpack.c.l.b16 %v343
        %v601 = vunpack.c.h.b16 %v343
        %v602 = vunpack.c.l.b16 %v344
        %v603 = vunpack.c.h.b16 %v344
        %v604 = vunpack.c.l.b16 %v345
        %v605 = vunpack.c.h.b16 %v345
        %v606 = vunpack.c.l.b16 %v346
        %v607 = vunpack.c.h.b16 %v346
        %v608 = vunpack.c.l.b16 %v347
        %v609 = vunpack.c.h.b16 %v347
        %v610 = vunpack.c.l.b16 %v348
        %v611 = vunpack.c.h.b16 %v348
        %v612 = vunpack.c.l.b16 %v349
        %v613 = vunpack.c.h.b16 %v349
        %v614 = vunpack.c.l.b16 %v350
        %v615 = vunpack.c.h.b16 %v350
        %v616 = vunpack.c.l.b16 %v351
        %v617 = vunpack.c.h.b16 %v351
        %v618 = vunpack.c.l.b16 %v352
        %v619 = vunpack.c.h.b16 %v352
        %v620 = vunpack.c.l.b16 %v353
        %v621 = vunpack.c.h.b16 %v353
        %v622 = vunpack.c.l.b16 %v354
        %v623 = vunpack.c.h.b16 %v354
        %v624 = vunpack.c.l.b16 %v355
        %v625 = vunpack.c.h.b16 %v355
        %v626 = vunpack.c.l.b16 %v356
        %v627 = vunpack.c.h.b16 %v356
        %v628 = vunpack.c.l.b16 %v357
        %v629 = vunpack.c.h.b16 %v357
        %v630 = vunpack.c.l.b16 %v358
        %v631 = vunpack.c.h.b16 %v358
        %v632 = vunpack.c.l.b16 %v359
        %v633 = vunpack.c.h.b16 %v359
        %v634 = vunpack.c.l.b16 %v360
        %v635 = vunpack.c.h.b16 %v360
        %v636 = vunpack.c.l.b16 %v361
        %v637 = vunpack.c.h.b16 %v361
        %v638 = vunpack.c.l.b16 %v362
        %v639 = vunpack.c.h.b16 %v362
        %v640 = vunpack.c.l.b16 %v363
        %v641 = vunpack.c.h.b16 %v363
        %v642 = vpack.c.b16 %v516, %v514
        %v643 = vpack.c.b16 %v517, %v515
        %v644 = vpack.c.b16 %v520, %v518
        %v645 = vpack.c.b16 %v521, %v519
        %v646 = vpack.c.b16 %v524, %v522
        %v647 = vpack.c.b16 %v525, %v523
        %v648 = vpack.c.b16 %v528, %v526
        %v649 = vpack.c.b16 %v529, %v527
        %v650 = vpack.c.b16 %v532, %v530
        %v651 = vpack.c.b16 %v533, %v531
        %v652 = vpack.c.b16 %v536, %v534
        %v653 = vpack.c.b16 %v537, %v535
        %v654 = vpack.c.b16 %v540, %v538
        %v655 = vpack.c.b16 %v541, %v539
        %v656 = vpack.c.b16 %v544, %v542
        %v657 = vpack.c.b16 %v545, %v543
        %v658 = vpack.c.b16 %v548, %v546
        %v659 = vpack.c.b16 %v549, %v547
        %v660 = vpack.c.b16 %v552, %v550
        %v661 = vpack.c.b16 %v553, %v551
        %v662 = vpack.c.b16 %v556, %v554
        %v663 = vpack.c.b16 %v557, %v555
        %v664 = vpack.c.b16 %v560, %v558
        %v665 = vpack.c.b16 %v561, %v559
        %v666 = vpack.c.b16 %v564, %v562
        %v667 = vpack.c.b16 %v565, %v563
        %v668 = vpack.c.b16 %v568, %v566
        %v669 = vpack.c.b16 %v569, %v567
        %v670 = vpack.c.b16 %v572, %v570
        %v671 = vpack.c.b16 %v573, %v571
        %v672 = vpack.c.b16 %v576, %v574
        %v673 = vpack.c.b16 %v577, %v575
        %v674 = vpack.c.b16 %v580, %v578
        %v675 = vpack.c.b16 %v581, %v579
        %v676 = vpack.c.b16 %v584, %v582
        %v677 = vpack.c.b16 %v585, %v583
        %v678 = vpack.c.b16 %v588, %v586
        %v679 = vpack.c.b16 %v589, %v587
        %v680 = vpack.c.b16 %v592, %v590
        %v681 = vpack.c.b16 %v593, %v591
        %v682 = vpack.c.b16 %v596, %v594
        %v683 = vpack.c.b16 %v597, %v595
        %v684 = vpack.c.b16 %v600, %v598
        %v685 = vpack.c.b16 %v601, %v599
        %v686 = vpack.c.b16 %v604, %v602
        %v687 = vpack.c.b16 %v605, %v603
        %v688 = vpack.c.b16 %v608, %v606
        %v689 = vpack.c.b16 %v609, %v607
        %v690 = vpack.c.b16 %v612, %v610
        %v691 = vpack.c.b16 %v613, %v611
        %v692 = vpack.c.b16 %v616, %v614
        %v693 = vpack.c.b16 %v617, %v615
        %v694 = vpack.c.b16 %v620, %v618
        %v695 = vpack.c.b16 %v621, %v619
        %v696 = vpack.c.b16 %v624, %v622
        %v697 = vpack.c.b16 %v625, %v623
        %v698 = vpack.c.b16 %v628, %v626
        %v699 = vpack.c.b16 %v629, %v627
        %v700 = vpack.c.b16 %v632, %v630
        %v701 = vpack.c.b16 %v633, %v631
        %v702 = vpack.c.b16 %v636, %v634
        %v703 = vpack.c.b16 %v637, %v635
        %v704 = vpack.c.b16 %v640, %v638
        %v705 = vpack.c.b16 %v641, %v639
        %v834 = vunpack.c.l.b16 %v364
        %v835 = vunpack.c.h.b16 %v364
        %v836 = vunpack.c.l.b16 %v365
        %v837 = vunpack.c.h.b16 %v365
        %v838 = vunpack.c.l.b16 %v366
        %v839 = vunpack.c.h.b16 %v366
        %v840 = vunpack.c.l.b16 %v367
        %v841 = vunpack.c.h.b16 %v367
        %v842 = vunpack.c.l.b16 %v368
        %v843 = vunpack.c.h.b16 %v368
        %v844 = vunpack.c.l.b16 %v369
        %v845 = vunpack.c.h.b16 %v369
        %v846 = vunpack.c.l.b16 %v370
        %v847 = vunpack.c.h.b16 %v370
        %v848 = vunpack.c.l.b16 %v371
        %v849 = vunpack.c.h.b16 %v371
        %v850 = vunpack.c.l.b16 %v372
        %v851 = vunpack.c.h.b16 %v372
        %v852 = vunpack.c.l.b16 %v373
        %v853 = vunpack.c.h.b16 %v373
        %v854 = vunpack.c.l.b16 %v374
        %v855 = vunpack.c.h.b16 %v374
        %v856 = vunpack.c.l.b16 %v375
        %v857 = vunpack.c.h.b16 %v375
        %v858 = vunpack.c.l.b16 %v376
        %v859 = vunpack.c.h.b16 %v376
        %v860 = vunpack.c.l.b16 %v377
        %v861 = vunpack.c.h.b16 %v377
        %v862 = vunpack.c.l.b16 %v378
        %v863 = vunpack.c.h.b16 %v378
        %v864 = vunpack.c.l.b16 %v379
        %v865 = vunpack.c.h.b16 %v379
        %v866 = vunpack.c.l.b16 %v380
        %v867 = vunpack.c.h.b16 %v380
        %v868 = vunpack.c.l.b16 %v381
        %v869 = vunpack.c.h.b16 %v381
        %v870 = vunpack.c.l.b16 %v382
        %v871 = vunpack.c.h.b16 %v382
        %v872 = vunpack.c.l.b16 %v383
        %v873 = vunpack.c.h.b16 %v383
        %v874 = vunpack.c.l.b16 %v384
        %v875 = vunpack.c.h.b16 %v384
        %v876 = vunpack.c.l.b16 %v385
        %v877 = vunpack.c.h.b16 %v385
        %v878 = vunpack.c.l.b16 %v386
        %v879 = vunpack.c.h.b16 %v386
        %v880 = vunpack.c.l.b16 %v387
        %v881 = vunpack.c.h.b16 %v387
        %v882 = vunpack.c.l.b16 %v388
        %v883 = vunpack.c.h.b16 %v388
        %v884 = vunpack.c.l.b16 %v389
        %v885 = vunpack.c.h.b16 %v389
        %v886 = vunpack.c.l.b16 %v390
        %v887 = vunpack.c.h.b16 %v390
        %v888 = vunpack.c.l.b16 %v391
        %v889 = vunpack.c.h.b16 %v391
        %v890 = vunpack.c.l.b16 %v392
        %v891 = vunpack.c.h.b16 %v392
        %v892 = vunpack.c.l.b16 %v393
        %v893 = vunpack.c.h.b16 %v393
        %v894 = vunpack.c.l.b16 %v394
        %v895 = vunpack.c.h.b16 %v394
        %v896 = vunpack.c.l.b16 %v395
        %v897 = vunpack.c.h.b16 %v395
        %v898 = vunpack.c.l.b16 %v396
        %v899 = vunpack.c.h.b16 %v396
        %v900 = vunpack.c.l.b16 %v397
        %v901 = vunpack.c.h.b16 %v397
        %v902 = vunpack.c.l.b16 %v398
        %v903 = vunpack.c.h.b16 %v398
        %v904 = vunpack.c.l.b16 %v399
        %v905 = vunpack.c.h.b16 %v399
        %v906 = vunpack.c.l.b16 %v400
        %v907 = vunpack.c.h.b16 %v400
        %v908 = vunpack.c.l.b16 %v401
        %v909 = vunpack.c.h.b16 %v401
        %v910 = vunpack.c.l.b16 %v402
        %v911 = vunpack.c.h.b16 %v402
        %v912 = vunpack.c.l.b16 %v403
        %v913 = vunpack.c.h.b16 %v403
        %v914 = vunpack.c.l.b16 %v404
        %v915 = vunpack.c.h.b16 %v404
        %v916 = vunpack.c.l.b16 %v405
        %v917 = vunpack.c.h.b16 %v405
        %v918 = vunpack.c.l.b16 %v406
        %v919 = vunpack.c.h.b16 %v406
        %v920 = vunpack.c.l.b16 %v407
        %v921 = vunpack.c.h.b16 %v407
        %v922 = vunpack.c.l.b16 %v408
        %v923 = vunpack.c.h.b16 %v408
        %v924 = vunpack.c.l.b16 %v409
        %v925 = vunpack.c.h.b16 %v409
        %v926 = vunpack.c.l.b16 %v410
        %v927 = vunpack.c.h.b16 %v410
        %v928 = vunpack.c.l.b16 %v411
        %v929 = vunpack.c.h.b16 %v411
        %v930 = vunpack.c.l.b16 %v412
        %v931 = vunpack.c.h.b16 %v412
        %v932 = vunpack.c.l.b16 %v413
        %v933 = vunpack.c.h.b16 %v413
        %v934 = vunpack.c.l.b16 %v414
        %v935 = vunpack.c.h.b16 %v414
        %v936 = vunpack.c.l.b16 %v415
        %v937 = vunpack.c.h.b16 %v415
        %v938 = vunpack.c.l.b16 %v416
        %v939 = vunpack.c.h.b16 %v416
        %v940 = vunpack.c.l.b16 %v417
        %v941 = vunpack.c.h.b16 %v417
        %v942 = vunpack.c.l.b16 %v418
        %v943 = vunpack.c.h.b16 %v418
        %v944 = vunpack.c.l.b16 %v419
        %v945 = vunpack.c.h.b16 %v419
        %v946 = vunpack.c.l.b16 %v420
        %v947 = vunpack.c.h.b16 %v420
        %v948 = vunpack.c.l.b16 %v421
        %v949 = vunpack.c.h.b16 %v421
        %v950 = vunpack.c.l.b16 %v422
        %v951 = vunpack.c.h.b16 %v422
        %v952 = vunpack.c.l.b16 %v423
        %v953 = vunpack.c.h.b16 %v423
        %v954 = vunpack.c.l.b16 %v424
        %v955 = vunpack.c.h.b16 %v424
        %v956 = vunpack.c.l.b16 %v425
        %v957 = vunpack.c.h.b16 %v425
        %v958 = vunpack.c.l.b16 %v426
        %v959 = vunpack.c.h.b16 %v426
        %v960 = vunpack.c.l.b16 %v427
        %v961 = vunpack.c.h.b16 %v427
        %v962 = vpack.c.b16 %v838, %v834
        %v963 = vpack.c.b16 %v839, %v835
        %v964 = vpack.c.b16 %v840, %v836
        %v965 = vpack.c.b16 %v841, %v837
        %v966 = vpack.c.b16 %v846, %v842
        %v967 = vpack.c.b16 %v847, %v843
        %v968 = vpack.c.b16 %v848, %v844
        %v969 = vpack.c.b16 %v849, %v845
        %v970 = vpack.c.b16 %v854, %v850
        %v971 = vpack.c.b16 %v855, %v851
        %v972 = vpack.c.b16 %v856, %v852
        %v973 = vpack.c.b16 %v857, %v853
        %v974 = vpack.c.b16 %v862, %v858
        %v975 = vpack.c.b16 %v863, %v859
        %v976 = vpack.c.b16 %v864, %v860
        %v977 = vpack.c.b16 %v865, %v861
        %v978 = vpack.c.b16 %v870, %v866
        %v979 = vpack.c.b16 %v871, %v867
        %v980 = vpack.c.b16 %v872, %v868
        %v981 = vpack.c.b16 %v873, %v869
        %v982 = vpack.c.b16 %v878, %v874
        %v983 = vpack.c.b16 %v879, %v875
        %v984 = vpack.c.b16 %v880, %v876
        %v985 = vpack.c.b16 %v881, %v877
        %v986 = vpack.c.b16 %v886, %v882
        %v987 = vpack.c.b16 %v887, %v883
        %v988 = vpack.c.b16 %v888, %v884
        %v989 = vpack.c.b16 %v889, %v885
        %v990 = vpack.c.b16 %v894, %v890
        %v991 = vpack.c.b16 %v895, %v891
        %v992 = vpack.c.b16 %v896, %v892
        %v993 = vpack.c.b16 %v897, %v893
        %v994 = vpack.c.b16 %v902, %v898
        %v995 = vpack.c.b16 %v903, %v899
        %v996 = vpack.c.b16 %v904, %v900
        %v997 = vpack.c.b16 %v905, %v901
        %v998 = vpack.c.b16 %v910, %v906
        %v999 = vpack.c.b16 %v911, %v907
        %v1000 = vpack.c.b16 %v912, %v908
        %v1001 = vpack.c.b16 %v913, %v909
        %v1002 = vpack.c.b16 %v918, %v914
        %v1003 = vpack.c.b16 %v919, %v915
        %v1004 = vpack.c.b16 %v920, %v916
        %v1005 = vpack.c.b16 %v921, %v917
        %v1006 = vpack.c.b16 %v926, %v922
        %v1007 = vpack.c.b16 %v927, %v923
        %v1008 = vpack.c.b16 %v928, %v924
        %v1009 = vpack.c.b16 %v929, %v925
        %v1010 = vpack.c.b16 %v934, %v930
        %v1011 = vpack.c.b16 %v935, %v931
        %v1012 = vpack.c.b16 %v936, %v932
        %v1013 = vpack.c.b16 %v937, %v933
        %v1014 = vpack.c.b16 %v942, %v938
        %v1015 = vpack.c.b16 %v943, %v939
        %v1016 = vpack.c.b16 %v944, %v940
        %v1017 = vpack.c.b16 %v945, %v941
        %v1018 = vpack.c.b16 %v950, %v946
        %v1019 = vpack.c.b16 %v951, %v947
        %v1020 = vpack.c.b16 %v952, %v948
        %v1021 = vpack.c.b16 %v953, %v949
        %v1022 = vpack.c.b16 %v958, %v954
        %v1023 = vpack.c.b16 %v959, %v955
        %v1024 = vpack.c.b16 %v960, %v956
        %v1025 = vpack.c.b16 %v961, %v957
        %1090 = vmatprep.subr.bf16.mxu0 %v991
        %1091 = vmatpush1.bf16.msra.mxu0 %v990
        %1092 = vmatprep.subr.bf16.mxu0 %v987
        %1093 = vmatpush1.bf16.msra.mxu0 %v986
        %1094 = vmatprep.subr.bf16.mxu0 %v983
        %1095 = vmatpush1.bf16.msra.mxu0 %v982
        %1096 = vmatprep.subr.bf16.mxu0 %v979
        %1097 = vmatpush1.bf16.msra.mxu0 %v978
        %1098 = vmatprep.subr.bf16.mxu0 %v975
        %1099 = vmatpush1.bf16.msra.mxu0 %v974
        %1100 = vmatprep.subr.bf16.mxu0 %v971
        %1101 = vmatpush1.bf16.msra.mxu0 %v970
        %1102 = vmatprep.subr.bf16.mxu0 %v967
        %1103 = vmatpush1.bf16.msra.mxu0 %v966
        %1104 = vmatprep.subr.bf16.mxu0 %v963
        %1105 = vmatpush1.bf16.msra.mxu0 %v962
        %1106 = vmatprep.subr.bf16.mxu0 %v1023
        %1107 = vmatpush2.bf16.msra.mxu0 %v1022
        %1108 = vmatprep.subr.bf16.mxu0 %v1019
        %1109 = vmatpush2.bf16.msra.mxu0 %v1018
        %1110 = vmatprep.subr.bf16.mxu0 %v1015
        %1111 = vmatpush2.bf16.msra.mxu0 %v1014
        %1112 = vmatprep.subr.bf16.mxu0 %v1011
        %1113 = vmatpush2.bf16.msra.mxu0 %v1010
        %1114 = vmatprep.subr.bf16.mxu0 %v1007
        %1115 = vmatpush2.bf16.msra.mxu0 %v1006
        %1116 = vmatprep.subr.bf16.mxu0 %v1003
        %1117 = vmatpush2.bf16.msra.mxu0 %v1002
        %1118 = vmatprep.subr.bf16.mxu0 %v999
        %1119 = vmatpush2.bf16.msra.mxu0 %v998
        %1120 = vmatprep.subr.bf16.mxu0 %v995
        %1121 = vmatpush2.bf16.msra.mxu0 %v994
        %1122 = vmatprep.mubr.bf16.mxu0 %v643
        %1123 = vmatmul.mubr.bf16.gmra.mxu0 %v642
        %v1124 = vpop.f32.mrf.mxu0
        %v1125 = vadd.f32 %v433, %v1124
        %v1126 = vpop.f32.mrf.mxu0
        %v1127 = vadd.f32 %v437, %v1126
        %v1128 = vpop.f32.mrf.mxu0
        %v1129 = vadd.f32 %v433, %v1128
        %v1130 = vpop.f32.mrf.mxu0
        %v1131 = vadd.f32 %v437, %v1130
        %1132 = vmatprep.mubr.bf16.mxu0 %v645
        %1133 = vmatmul.mubr.bf16.gmra.mxu0 %v644
        %v1134 = vpop.f32.mrf.mxu0
        %v1135 = vadd.f32 %v433, %v1134
        %v1136 = vpop.f32.mrf.mxu0
        %v1137 = vadd.f32 %v437, %v1136
        %v1138 = vpop.f32.mrf.mxu0
        %v1139 = vadd.f32 %v433, %v1138
        %v1140 = vpop.f32.mrf.mxu0
        %v1141 = vadd.f32 %v437, %v1140
        %1142 = vmatprep.mubr.bf16.mxu0 %v647
        %1143 = vmatmul.mubr.bf16.gmra.mxu0 %v646
        %v1144 = vpop.f32.mrf.mxu0
        %v1145 = vadd.f32 %v433, %v1144
        %v1146 = vpop.f32.mrf.mxu0
        %v1147 = vadd.f32 %v437, %v1146
        %v1148 = vpop.f32.mrf.mxu0
        %v1149 = vadd.f32 %v433, %v1148
        %v1150 = vpop.f32.mrf.mxu0
        %v1151 = vadd.f32 %v437, %v1150
        %1152 = vmatprep.mubr.bf16.mxu0 %v649
        %1153 = vmatmul.mubr.bf16.gmra.mxu0 %v648
        %v1154 = vpop.f32.mrf.mxu0
        %v1155 = vadd.f32 %v433, %v1154
        %v1156 = vpop.f32.mrf.mxu0
        %v1157 = vadd.f32 %v437, %v1156
        %v1158 = vpop.f32.mrf.mxu0
        %v1159 = vadd.f32 %v433, %v1158
        %v1160 = vpop.f32.mrf.mxu0
        %v1161 = vadd.f32 %v437, %v1160
        %1162 = vmatprep.mubr.bf16.mxu0 %v651
        %1163 = vmatmul.mubr.bf16.gmra.mxu0 %v650
        %v1164 = vpop.f32.mrf.mxu0
        %v1165 = vadd.f32 %v433, %v1164
        %v1166 = vpop.f32.mrf.mxu0
        %v1167 = vadd.f32 %v437, %v1166
        %v1168 = vpop.f32.mrf.mxu0
        %v1169 = vadd.f32 %v433, %v1168
        %v1170 = vpop.f32.mrf.mxu0
        %v1171 = vadd.f32 %v437, %v1170
        %1172 = vmatprep.mubr.bf16.mxu0 %v653
        %1173 = vmatmul.mubr.bf16.gmra.mxu0 %v652
        %v1174 = vpop.f32.mrf.mxu0
        %v1175 = vadd.f32 %v433, %v1174
        %v1176 = vpop.f32.mrf.mxu0
        %v1177 = vadd.f32 %v437, %v1176
        %v1178 = vpop.f32.mrf.mxu0
        %v1179 = vadd.f32 %v433, %v1178
        %v1180 = vpop.f32.mrf.mxu0
        %v1181 = vadd.f32 %v437, %v1180
        %1182 = vmatprep.mubr.bf16.mxu0 %v655
        %1183 = vmatmul.mubr.bf16.gmra.mxu0 %v654
        %v1184 = vpop.f32.mrf.mxu0
        %v1185 = vadd.f32 %v433, %v1184
        %v1186 = vpop.f32.mrf.mxu0
        %v1187 = vadd.f32 %v437, %v1186
        %v1188 = vpop.f32.mrf.mxu0
        %v1189 = vadd.f32 %v433, %v1188
        %v1190 = vpop.f32.mrf.mxu0
        %v1191 = vadd.f32 %v437, %v1190
        %1192 = vmatprep.mubr.bf16.mxu0 %v657
        %1193 = vmatmul.mubr.bf16.gmra.mxu0 %v656
        %v1194 = vpop.f32.mrf.mxu0
        %v1195 = vadd.f32 %v433, %v1194
        %v1196 = vpop.f32.mrf.mxu0
        %v1197 = vadd.f32 %v437, %v1196
        %v1198 = vpop.f32.mrf.mxu0
        %v1199 = vadd.f32 %v433, %v1198
        %v1200 = vpop.f32.mrf.mxu0
        %v1201 = vadd.f32 %v437, %v1200
        %1202 = vmatprep.mubr.bf16.mxu0 %v659
        %1203 = vmatmul.mubr.bf16.gmra.mxu0 %v658
        %v1204 = vpop.f32.mrf.mxu0
        %v1205 = vadd.f32 %v433, %v1204
        %v1206 = vpop.f32.mrf.mxu0
        %v1207 = vadd.f32 %v437, %v1206
        %v1208 = vpop.f32.mrf.mxu0
        %v1209 = vadd.f32 %v433, %v1208
        %v1210 = vpop.f32.mrf.mxu0
        %v1211 = vadd.f32 %v437, %v1210
        %1212 = vmatprep.mubr.bf16.mxu0 %v661
        %1213 = vmatmul.mubr.bf16.gmra.mxu0 %v660
        %v1214 = vpop.f32.mrf.mxu0
        %v1215 = vadd.f32 %v433, %v1214
        %v1216 = vpop.f32.mrf.mxu0
        %v1217 = vadd.f32 %v437, %v1216
        %v1218 = vpop.f32.mrf.mxu0
        %v1219 = vadd.f32 %v433, %v1218
        %v1220 = vpop.f32.mrf.mxu0
        %v1221 = vadd.f32 %v437, %v1220
        %1222 = vmatprep.mubr.bf16.mxu0 %v663
        %1223 = vmatmul.mubr.bf16.gmra.mxu0 %v662
        %v1224 = vpop.f32.mrf.mxu0
        %v1225 = vadd.f32 %v433, %v1224
        %v1226 = vpop.f32.mrf.mxu0
        %v1227 = vadd.f32 %v437, %v1226
        %v1228 = vpop.f32.mrf.mxu0
        %v1229 = vadd.f32 %v433, %v1228
        %v1230 = vpop.f32.mrf.mxu0
        %v1231 = vadd.f32 %v437, %v1230
        %1232 = vmatprep.mubr.bf16.mxu0 %v665
        %1233 = vmatmul.mubr.bf16.gmra.mxu0 %v664
        %v1234 = vpop.f32.mrf.mxu0
        %v1235 = vadd.f32 %v433, %v1234
        %v1236 = vpop.f32.mrf.mxu0
        %v1237 = vadd.f32 %v437, %v1236
        %v1238 = vpop.f32.mrf.mxu0
        %v1239 = vadd.f32 %v433, %v1238
        %v1240 = vpop.f32.mrf.mxu0
        %v1241 = vadd.f32 %v437, %v1240
        %1242 = vmatprep.mubr.bf16.mxu0 %v667
        %1243 = vmatmul.mubr.bf16.gmra.mxu0 %v666
        %v1244 = vpop.f32.mrf.mxu0
        %v1245 = vadd.f32 %v433, %v1244
        %v1246 = vpop.f32.mrf.mxu0
        %v1247 = vadd.f32 %v437, %v1246
        %v1248 = vpop.f32.mrf.mxu0
        %v1249 = vadd.f32 %v433, %v1248
        %v1250 = vpop.f32.mrf.mxu0
        %v1251 = vadd.f32 %v437, %v1250
        %1252 = vmatprep.mubr.bf16.mxu0 %v669
        %1253 = vmatmul.mubr.bf16.gmra.mxu0 %v668
        %v1254 = vpop.f32.mrf.mxu0
        %v1255 = vadd.f32 %v433, %v1254
        %v1256 = vpop.f32.mrf.mxu0
        %v1257 = vadd.f32 %v437, %v1256
        %v1258 = vpop.f32.mrf.mxu0
        %v1259 = vadd.f32 %v433, %v1258
        %v1260 = vpop.f32.mrf.mxu0
        %v1261 = vadd.f32 %v437, %v1260
        %1262 = vmatprep.mubr.bf16.mxu0 %v671
        %1263 = vmatmul.mubr.bf16.gmra.mxu0 %v670
        %v1264 = vpop.f32.mrf.mxu0
        %v1265 = vadd.f32 %v433, %v1264
        %v1266 = vpop.f32.mrf.mxu0
        %v1267 = vadd.f32 %v437, %v1266
        %v1268 = vpop.f32.mrf.mxu0
        %v1269 = vadd.f32 %v433, %v1268
        %v1270 = vpop.f32.mrf.mxu0
        %v1271 = vadd.f32 %v437, %v1270
        %1272 = vmatprep.mubr.bf16.mxu0 %v673
        %1273 = vmatmul.mubr.bf16.gmra.mxu0 %v672
        %v1274 = vpop.f32.mrf.mxu0
        %v1275 = vadd.f32 %v433, %v1274
        %v1276 = vpop.f32.mrf.mxu0
        %v1277 = vadd.f32 %v437, %v1276
        %v1278 = vpop.f32.mrf.mxu0
        %v1279 = vadd.f32 %v433, %v1278
        %v1280 = vpop.f32.mrf.mxu0
        %v1281 = vadd.f32 %v437, %v1280
        %1282 = vmatprep.mubr.bf16.mxu0 %v675
        %1283 = vmatmul.mubr.bf16.gmra.mxu0 %v674
        %v1284 = vpop.f32.mrf.mxu0
        %v1285 = vadd.f32 %v433, %v1284
        %v1286 = vpop.f32.mrf.mxu0
        %v1287 = vadd.f32 %v437, %v1286
        %v1288 = vpop.f32.mrf.mxu0
        %v1289 = vadd.f32 %v433, %v1288
        %v1290 = vpop.f32.mrf.mxu0
        %v1291 = vadd.f32 %v437, %v1290
        %1292 = vmatprep.mubr.bf16.mxu0 %v677
        %1293 = vmatmul.mubr.bf16.gmra.mxu0 %v676
        %v1294 = vpop.f32.mrf.mxu0
        %v1295 = vadd.f32 %v433, %v1294
        %v1296 = vpop.f32.mrf.mxu0
        %v1297 = vadd.f32 %v437, %v1296
        %v1298 = vpop.f32.mrf.mxu0
        %v1299 = vadd.f32 %v433, %v1298
        %v1300 = vpop.f32.mrf.mxu0
        %v1301 = vadd.f32 %v437, %v1300
        %1302 = vmatprep.mubr.bf16.mxu0 %v679
        %1303 = vmatmul.mubr.bf16.gmra.mxu0 %v678
        %v1304 = vpop.f32.mrf.mxu0
        %v1305 = vadd.f32 %v433, %v1304
        %v1306 = vpop.f32.mrf.mxu0
        %v1307 = vadd.f32 %v437, %v1306
        %v1308 = vpop.f32.mrf.mxu0
        %v1309 = vadd.f32 %v433, %v1308
        %v1310 = vpop.f32.mrf.mxu0
        %v1311 = vadd.f32 %v437, %v1310
        %1312 = vmatprep.mubr.bf16.mxu0 %v681
        %1313 = vmatmul.mubr.bf16.gmra.mxu0 %v680
        %v1314 = vpop.f32.mrf.mxu0
        %v1315 = vadd.f32 %v433, %v1314
        %v1316 = vpop.f32.mrf.mxu0
        %v1317 = vadd.f32 %v437, %v1316
        %v1318 = vpop.f32.mrf.mxu0
        %v1319 = vadd.f32 %v433, %v1318
        %v1320 = vpop.f32.mrf.mxu0
        %v1321 = vadd.f32 %v437, %v1320
        %1322 = vmatprep.mubr.bf16.mxu0 %v683
        %1323 = vmatmul.mubr.bf16.gmra.mxu0 %v682
        %v1324 = vpop.f32.mrf.mxu0
        %v1325 = vadd.f32 %v433, %v1324
        %v1326 = vpop.f32.mrf.mxu0
        %v1327 = vadd.f32 %v437, %v1326
        %v1328 = vpop.f32.mrf.mxu0
        %v1329 = vadd.f32 %v433, %v1328
        %v1330 = vpop.f32.mrf.mxu0
        %v1331 = vadd.f32 %v437, %v1330
        %1332 = vmatprep.mubr.bf16.mxu0 %v685
        %1333 = vmatmul.mubr.bf16.gmra.mxu0 %v684
        %v1334 = vpop.f32.mrf.mxu0
        %v1335 = vadd.f32 %v433, %v1334
        %v1336 = vpop.f32.mrf.mxu0
        %v1337 = vadd.f32 %v437, %v1336
        %v1338 = vpop.f32.mrf.mxu0
        %v1339 = vadd.f32 %v433, %v1338
        %v1340 = vpop.f32.mrf.mxu0
        %v1341 = vadd.f32 %v437, %v1340
        %1342 = vmatprep.mubr.bf16.mxu0 %v687
        %1343 = vmatmul.mubr.bf16.gmra.mxu0 %v686
        %v1344 = vpop.f32.mrf.mxu0
        %v1345 = vadd.f32 %v433, %v1344
        %v1346 = vpop.f32.mrf.mxu0
        %v1347 = vadd.f32 %v437, %v1346
        %v1348 = vpop.f32.mrf.mxu0
        %v1349 = vadd.f32 %v433, %v1348
        %v1350 = vpop.f32.mrf.mxu0
        %v1351 = vadd.f32 %v437, %v1350
        %1352 = vmatprep.mubr.bf16.mxu0 %v689
        %1353 = vmatmul.mubr.bf16.gmra.mxu0 %v688
        %v1354 = vpop.f32.mrf.mxu0
        %v1355 = vadd.f32 %v433, %v1354
        %v1356 = vpop.f32.mrf.mxu0
        %v1357 = vadd.f32 %v437, %v1356
        %v1358 = vpop.f32.mrf.mxu0
        %v1359 = vadd.f32 %v433, %v1358
        %v1360 = vpop.f32.mrf.mxu0
        %v1361 = vadd.f32 %v437, %v1360
        %1362 = vmatprep.mubr.bf16.mxu0 %v691
        %1363 = vmatmul.mubr.bf16.gmra.mxu0 %v690
        %v1364 = vpop.f32.mrf.mxu0
        %v1365 = vadd.f32 %v433, %v1364
        %v1366 = vpop.f32.mrf.mxu0
        %v1367 = vadd.f32 %v437, %v1366
        %v1368 = vpop.f32.mrf.mxu0
        %v1369 = vadd.f32 %v433, %v1368
        %v1370 = vpop.f32.mrf.mxu0
        %v1371 = vadd.f32 %v437, %v1370
        %1372 = vmatprep.mubr.bf16.mxu0 %v693
        %1373 = vmatmul.mubr.bf16.gmra.mxu0 %v692
        %v1374 = vpop.f32.mrf.mxu0
        %v1375 = vadd.f32 %v433, %v1374
        %v1376 = vpop.f32.mrf.mxu0
        %v1377 = vadd.f32 %v437, %v1376
        %v1378 = vpop.f32.mrf.mxu0
        %v1379 = vadd.f32 %v433, %v1378
        %v1380 = vpop.f32.mrf.mxu0
        %v1381 = vadd.f32 %v437, %v1380
        %1382 = vmatprep.mubr.bf16.mxu0 %v695
        %1383 = vmatmul.mubr.bf16.gmra.mxu0 %v694
        %v1384 = vpop.f32.mrf.mxu0
        %v1385 = vadd.f32 %v433, %v1384
        %v1386 = vpop.f32.mrf.mxu0
        %v1387 = vadd.f32 %v437, %v1386
        %v1388 = vpop.f32.mrf.mxu0
        %v1389 = vadd.f32 %v433, %v1388
        %v1390 = vpop.f32.mrf.mxu0
        %v1391 = vadd.f32 %v437, %v1390
        %1392 = vmatprep.mubr.bf16.mxu0 %v697
        %1393 = vmatmul.mubr.bf16.gmra.mxu0 %v696
        %v1394 = vpop.f32.mrf.mxu0
        %v1395 = vadd.f32 %v433, %v1394
        %v1396 = vpop.f32.mrf.mxu0
        %v1397 = vadd.f32 %v437, %v1396
        %v1398 = vpop.f32.mrf.mxu0
        %v1399 = vadd.f32 %v433, %v1398
        %v1400 = vpop.f32.mrf.mxu0
        %v1401 = vadd.f32 %v437, %v1400
        %1402 = vmatprep.mubr.bf16.mxu0 %v699
        %1403 = vmatmul.mubr.bf16.gmra.mxu0 %v698
        %v1404 = vpop.f32.mrf.mxu0
        %v1405 = vadd.f32 %v433, %v1404
        %v1406 = vpop.f32.mrf.mxu0
        %v1407 = vadd.f32 %v437, %v1406
        %v1408 = vpop.f32.mrf.mxu0
        %v1409 = vadd.f32 %v433, %v1408
        %v1410 = vpop.f32.mrf.mxu0
        %v1411 = vadd.f32 %v437, %v1410
        %1412 = vmatprep.mubr.bf16.mxu0 %v701
        %1413 = vmatmul.mubr.bf16.gmra.mxu0 %v700
        %v1414 = vpop.f32.mrf.mxu0
        %v1415 = vadd.f32 %v433, %v1414
        %v1416 = vpop.f32.mrf.mxu0
        %v1417 = vadd.f32 %v437, %v1416
        %v1418 = vpop.f32.mrf.mxu0
        %v1419 = vadd.f32 %v433, %v1418
        %v1420 = vpop.f32.mrf.mxu0
        %v1421 = vadd.f32 %v437, %v1420
        %1422 = vmatprep.mubr.bf16.mxu0 %v703
        %1423 = vmatmul.mubr.bf16.gmra.mxu0 %v702
        %v1424 = vpop.f32.mrf.mxu0
        %v1425 = vadd.f32 %v433, %v1424
        %v1426 = vpop.f32.mrf.mxu0
        %v1427 = vadd.f32 %v437, %v1426
        %v1428 = vpop.f32.mrf.mxu0
        %v1429 = vadd.f32 %v433, %v1428
        %v1430 = vpop.f32.mrf.mxu0
        %v1431 = vadd.f32 %v437, %v1430
        %1432 = vmatprep.mubr.bf16.mxu0 %v705
        %1433 = vmatmul.mubr.bf16.gmra.mxu0 %v704
        %v1434 = vpop.f32.mrf.mxu0
        %v1435 = vadd.f32 %v433, %v1434
        %v1436 = vpop.f32.mrf.mxu0
        %v1437 = vadd.f32 %v437, %v1436
        %v1438 = vpop.f32.mrf.mxu0
        %v1439 = vadd.f32 %v433, %v1438
        %v1440 = vpop.f32.mrf.mxu0
        %v1441 = vadd.f32 %v437, %v1440
        %1442 = vdwg.mxu0
        %1443 = vmatprep.subr.bf16.mxu0 %v993
        %1444 = vmatpush1.bf16.msra.mxu0 %v992
        %1445 = vmatprep.subr.bf16.mxu0 %v989
        %1446 = vmatpush1.bf16.msra.mxu0 %v988
        %1447 = vmatprep.subr.bf16.mxu0 %v985
        %1448 = vmatpush1.bf16.msra.mxu0 %v984
        %1449 = vmatprep.subr.bf16.mxu0 %v981
        %1450 = vmatpush1.bf16.msra.mxu0 %v980
        %1451 = vmatprep.subr.bf16.mxu0 %v977
        %1452 = vmatpush1.bf16.msra.mxu0 %v976
        %1453 = vmatprep.subr.bf16.mxu0 %v973
        %1454 = vmatpush1.bf16.msra.mxu0 %v972
        %1455 = vmatprep.subr.bf16.mxu0 %v969
        %1456 = vmatpush1.bf16.msra.mxu0 %v968
        %1457 = vmatprep.subr.bf16.mxu0 %v965
        %1458 = vmatpush1.bf16.msra.mxu0 %v964
        %1459 = vmatprep.subr.bf16.mxu0 %v1025
        %1460 = vmatpush2.bf16.msra.mxu0 %v1024
        %1461 = vmatprep.subr.bf16.mxu0 %v1021
        %1462 = vmatpush2.bf16.msra.mxu0 %v1020
        %1463 = vmatprep.subr.bf16.mxu0 %v1017
        %1464 = vmatpush2.bf16.msra.mxu0 %v1016
        %1465 = vmatprep.subr.bf16.mxu0 %v1013
        %1466 = vmatpush2.bf16.msra.mxu0 %v1012
        %1467 = vmatprep.subr.bf16.mxu0 %v1009
        %1468 = vmatpush2.bf16.msra.mxu0 %v1008
        %1469 = vmatprep.subr.bf16.mxu0 %v1005
        %1470 = vmatpush2.bf16.msra.mxu0 %v1004
        %1471 = vmatprep.subr.bf16.mxu0 %v1001
        %1472 = vmatpush2.bf16.msra.mxu0 %v1000
        %1473 = vmatprep.subr.bf16.mxu0 %v997
        %1474 = vmatpush2.bf16.msra.mxu0 %v996
        %1475 = vmatprep.mubr.bf16.mxu0 %v643
        %1476 = vmatmul.mubr.bf16.gmra.mxu0 %v642
        %v1477 = vpop.f32.mrf.mxu0
        %v1478 = vadd.f32 %v441, %v1477
        %v1479 = vpop.f32.mrf.mxu0
        %v1480 = vadd.f32 %v445, %v1479
        %v1481 = vpop.f32.mrf.mxu0
        %v1482 = vadd.f32 %v441, %v1481
        %v1483 = vpop.f32.mrf.mxu0
        %v1484 = vadd.f32 %v445, %v1483
        %1485 = vmatprep.mubr.bf16.mxu0 %v645
        %1486 = vmatmul.mubr.bf16.gmra.mxu0 %v644
        %v1487 = vpop.f32.mrf.mxu0
        %v1488 = vadd.f32 %v441, %v1487
        %v1489 = vpop.f32.mrf.mxu0
        %v1490 = vadd.f32 %v445, %v1489
        %v1491 = vpop.f32.mrf.mxu0
        %v1492 = vadd.f32 %v441, %v1491
        %v1493 = vpop.f32.mrf.mxu0
        %v1494 = vadd.f32 %v445, %v1493
        %1495 = vmatprep.mubr.bf16.mxu0 %v647
        %1496 = vmatmul.mubr.bf16.gmra.mxu0 %v646
        %v1497 = vpop.f32.mrf.mxu0
        %v1498 = vadd.f32 %v441, %v1497
        %v1499 = vpop.f32.mrf.mxu0
        %v1500 = vadd.f32 %v445, %v1499
        %v1501 = vpop.f32.mrf.mxu0
        %v1502 = vadd.f32 %v441, %v1501
        %v1503 = vpop.f32.mrf.mxu0
        %v1504 = vadd.f32 %v445, %v1503
        %1505 = vmatprep.mubr.bf16.mxu0 %v649
        %1506 = vmatmul.mubr.bf16.gmra.mxu0 %v648
        %v1507 = vpop.f32.mrf.mxu0
        %v1508 = vadd.f32 %v441, %v1507
        %v1509 = vpop.f32.mrf.mxu0
        %v1510 = vadd.f32 %v445, %v1509
        %v1511 = vpop.f32.mrf.mxu0
        %v1512 = vadd.f32 %v441, %v1511
        %v1513 = vpop.f32.mrf.mxu0
        %v1514 = vadd.f32 %v445, %v1513
        %1515 = vmatprep.mubr.bf16.mxu0 %v651
        %1516 = vmatmul.mubr.bf16.gmra.mxu0 %v650
        %v1517 = vpop.f32.mrf.mxu0
        %v1518 = vadd.f32 %v441, %v1517
        %v1519 = vpop.f32.mrf.mxu0
        %v1520 = vadd.f32 %v445, %v1519
        %v1521 = vpop.f32.mrf.mxu0
        %v1522 = vadd.f32 %v441, %v1521
        %v1523 = vpop.f32.mrf.mxu0
        %v1524 = vadd.f32 %v445, %v1523
        %1525 = vmatprep.mubr.bf16.mxu0 %v653
        %1526 = vmatmul.mubr.bf16.gmra.mxu0 %v652
        %v1527 = vpop.f32.mrf.mxu0
        %v1528 = vadd.f32 %v441, %v1527
        %v1529 = vpop.f32.mrf.mxu0
        %v1530 = vadd.f32 %v445, %v1529
        %v1531 = vpop.f32.mrf.mxu0
        %v1532 = vadd.f32 %v441, %v1531
        %v1533 = vpop.f32.mrf.mxu0
        %v1534 = vadd.f32 %v445, %v1533
        %1535 = vmatprep.mubr.bf16.mxu0 %v655
        %1536 = vmatmul.mubr.bf16.gmra.mxu0 %v654
        %v1537 = vpop.f32.mrf.mxu0
        %v1538 = vadd.f32 %v441, %v1537
        %v1539 = vpop.f32.mrf.mxu0
        %v1540 = vadd.f32 %v445, %v1539
        %v1541 = vpop.f32.mrf.mxu0
        %v1542 = vadd.f32 %v441, %v1541
        %v1543 = vpop.f32.mrf.mxu0
        %v1544 = vadd.f32 %v445, %v1543
        %1545 = vmatprep.mubr.bf16.mxu0 %v657
        %1546 = vmatmul.mubr.bf16.gmra.mxu0 %v656
        %v1547 = vpop.f32.mrf.mxu0
        %v1548 = vadd.f32 %v441, %v1547
        %v1549 = vpop.f32.mrf.mxu0
        %v1550 = vadd.f32 %v445, %v1549
        %v1551 = vpop.f32.mrf.mxu0
        %v1552 = vadd.f32 %v441, %v1551
        %v1553 = vpop.f32.mrf.mxu0
        %v1554 = vadd.f32 %v445, %v1553
        %1555 = vmatprep.mubr.bf16.mxu0 %v659
        %1556 = vmatmul.mubr.bf16.gmra.mxu0 %v658
        %v1557 = vpop.f32.mrf.mxu0
        %v1558 = vadd.f32 %v441, %v1557
        %v1559 = vpop.f32.mrf.mxu0
        %v1560 = vadd.f32 %v445, %v1559
        %v1561 = vpop.f32.mrf.mxu0
        %v1562 = vadd.f32 %v441, %v1561
        %v1563 = vpop.f32.mrf.mxu0
        %v1564 = vadd.f32 %v445, %v1563
        %1565 = vmatprep.mubr.bf16.mxu0 %v661
        %1566 = vmatmul.mubr.bf16.gmra.mxu0 %v660
        %v1567 = vpop.f32.mrf.mxu0
        %v1568 = vadd.f32 %v441, %v1567
        %v1569 = vpop.f32.mrf.mxu0
        %v1570 = vadd.f32 %v445, %v1569
        %v1571 = vpop.f32.mrf.mxu0
        %v1572 = vadd.f32 %v441, %v1571
        %v1573 = vpop.f32.mrf.mxu0
        %v1574 = vadd.f32 %v445, %v1573
        %1575 = vmatprep.mubr.bf16.mxu0 %v663
        %1576 = vmatmul.mubr.bf16.gmra.mxu0 %v662
        %v1577 = vpop.f32.mrf.mxu0
        %v1578 = vadd.f32 %v441, %v1577
        %v1579 = vpop.f32.mrf.mxu0
        %v1580 = vadd.f32 %v445, %v1579
        %v1581 = vpop.f32.mrf.mxu0
        %v1582 = vadd.f32 %v441, %v1581
        %v1583 = vpop.f32.mrf.mxu0
        %v1584 = vadd.f32 %v445, %v1583
        %1585 = vmatprep.mubr.bf16.mxu0 %v665
        %1586 = vmatmul.mubr.bf16.gmra.mxu0 %v664
        %v1587 = vpop.f32.mrf.mxu0
        %v1588 = vadd.f32 %v441, %v1587
        %v1589 = vpop.f32.mrf.mxu0
        %v1590 = vadd.f32 %v445, %v1589
        %v1591 = vpop.f32.mrf.mxu0
        %v1592 = vadd.f32 %v441, %v1591
        %v1593 = vpop.f32.mrf.mxu0
        %v1594 = vadd.f32 %v445, %v1593
        %1595 = vmatprep.mubr.bf16.mxu0 %v667
        %1596 = vmatmul.mubr.bf16.gmra.mxu0 %v666
        %v1597 = vpop.f32.mrf.mxu0
        %v1598 = vadd.f32 %v441, %v1597
        %v1599 = vpop.f32.mrf.mxu0
        %v1600 = vadd.f32 %v445, %v1599
        %v1601 = vpop.f32.mrf.mxu0
        %v1602 = vadd.f32 %v441, %v1601
        %v1603 = vpop.f32.mrf.mxu0
        %v1604 = vadd.f32 %v445, %v1603
        %1605 = vmatprep.mubr.bf16.mxu0 %v669
        %1606 = vmatmul.mubr.bf16.gmra.mxu0 %v668
        %v1607 = vpop.f32.mrf.mxu0
        %v1608 = vadd.f32 %v441, %v1607
        %v1609 = vpop.f32.mrf.mxu0
        %v1610 = vadd.f32 %v445, %v1609
        %v1611 = vpop.f32.mrf.mxu0
        %v1612 = vadd.f32 %v441, %v1611
        %v1613 = vpop.f32.mrf.mxu0
        %v1614 = vadd.f32 %v445, %v1613
        %1615 = vmatprep.mubr.bf16.mxu0 %v671
        %1616 = vmatmul.mubr.bf16.gmra.mxu0 %v670
        %v1617 = vpop.f32.mrf.mxu0
        %v1618 = vadd.f32 %v441, %v1617
        %v1619 = vpop.f32.mrf.mxu0
        %v1620 = vadd.f32 %v445, %v1619
        %v1621 = vpop.f32.mrf.mxu0
        %v1622 = vadd.f32 %v441, %v1621
        %v1623 = vpop.f32.mrf.mxu0
        %v1624 = vadd.f32 %v445, %v1623
        %1625 = vmatprep.mubr.bf16.mxu0 %v673
        %1626 = vmatmul.mubr.bf16.gmra.mxu0 %v672
        %v1627 = vpop.f32.mrf.mxu0
        %v1628 = vadd.f32 %v441, %v1627
        %v1629 = vpop.f32.mrf.mxu0
        %v1630 = vadd.f32 %v445, %v1629
        %v1631 = vpop.f32.mrf.mxu0
        %v1632 = vadd.f32 %v441, %v1631
        %v1633 = vpop.f32.mrf.mxu0
        %v1634 = vadd.f32 %v445, %v1633
        %1635 = vmatprep.mubr.bf16.mxu0 %v675
        %1636 = vmatmul.mubr.bf16.gmra.mxu0 %v674
        %v1637 = vpop.f32.mrf.mxu0
        %v1638 = vadd.f32 %v441, %v1637
        %v1639 = vpop.f32.mrf.mxu0
        %v1640 = vadd.f32 %v445, %v1639
        %v1641 = vpop.f32.mrf.mxu0
        %v1642 = vadd.f32 %v441, %v1641
        %v1643 = vpop.f32.mrf.mxu0
        %v1644 = vadd.f32 %v445, %v1643
        %1645 = vmatprep.mubr.bf16.mxu0 %v677
        %1646 = vmatmul.mubr.bf16.gmra.mxu0 %v676
        %v1647 = vpop.f32.mrf.mxu0
        %v1648 = vadd.f32 %v441, %v1647
        %v1649 = vpop.f32.mrf.mxu0
        %v1650 = vadd.f32 %v445, %v1649
        %v1651 = vpop.f32.mrf.mxu0
        %v1652 = vadd.f32 %v441, %v1651
        %v1653 = vpop.f32.mrf.mxu0
        %v1654 = vadd.f32 %v445, %v1653
        %1655 = vmatprep.mubr.bf16.mxu0 %v679
        %1656 = vmatmul.mubr.bf16.gmra.mxu0 %v678
        %v1657 = vpop.f32.mrf.mxu0
        %v1658 = vadd.f32 %v441, %v1657
        %v1659 = vpop.f32.mrf.mxu0
        %v1660 = vadd.f32 %v445, %v1659
        %v1661 = vpop.f32.mrf.mxu0
        %v1662 = vadd.f32 %v441, %v1661
        %v1663 = vpop.f32.mrf.mxu0
        %v1664 = vadd.f32 %v445, %v1663
        %1665 = vmatprep.mubr.bf16.mxu0 %v681
        %1666 = vmatmul.mubr.bf16.gmra.mxu0 %v680
        %v1667 = vpop.f32.mrf.mxu0
        %v1668 = vadd.f32 %v441, %v1667
        %v1669 = vpop.f32.mrf.mxu0
        %v1670 = vadd.f32 %v445, %v1669
        %v1671 = vpop.f32.mrf.mxu0
        %v1672 = vadd.f32 %v441, %v1671
        %v1673 = vpop.f32.mrf.mxu0
        %v1674 = vadd.f32 %v445, %v1673
        %1675 = vmatprep.mubr.bf16.mxu0 %v683
        %1676 = vmatmul.mubr.bf16.gmra.mxu0 %v682
        %v1677 = vpop.f32.mrf.mxu0
        %v1678 = vadd.f32 %v441, %v1677
        %v1679 = vpop.f32.mrf.mxu0
        %v1680 = vadd.f32 %v445, %v1679
        %v1681 = vpop.f32.mrf.mxu0
        %v1682 = vadd.f32 %v441, %v1681
        %v1683 = vpop.f32.mrf.mxu0
        %v1684 = vadd.f32 %v445, %v1683
        %1685 = vmatprep.mubr.bf16.mxu0 %v685
        %1686 = vmatmul.mubr.bf16.gmra.mxu0 %v684
        %v1687 = vpop.f32.mrf.mxu0
        %v1688 = vadd.f32 %v441, %v1687
        %v1689 = vpop.f32.mrf.mxu0
        %v1690 = vadd.f32 %v445, %v1689
        %v1691 = vpop.f32.mrf.mxu0
        %v1692 = vadd.f32 %v441, %v1691
        %v1693 = vpop.f32.mrf.mxu0
        %v1694 = vadd.f32 %v445, %v1693
        %1695 = vmatprep.mubr.bf16.mxu0 %v687
        %1696 = vmatmul.mubr.bf16.gmra.mxu0 %v686
        %v1697 = vpop.f32.mrf.mxu0
        %v1698 = vadd.f32 %v441, %v1697
        %v1699 = vpop.f32.mrf.mxu0
        %v1700 = vadd.f32 %v445, %v1699
        %v1701 = vpop.f32.mrf.mxu0
        %v1702 = vadd.f32 %v441, %v1701
        %v1703 = vpop.f32.mrf.mxu0
        %v1704 = vadd.f32 %v445, %v1703
        %1705 = vmatprep.mubr.bf16.mxu0 %v689
        %1706 = vmatmul.mubr.bf16.gmra.mxu0 %v688
        %v1707 = vpop.f32.mrf.mxu0
        %v1708 = vadd.f32 %v441, %v1707
        %v1709 = vpop.f32.mrf.mxu0
        %v1710 = vadd.f32 %v445, %v1709
        %v1711 = vpop.f32.mrf.mxu0
        %v1712 = vadd.f32 %v441, %v1711
        %v1713 = vpop.f32.mrf.mxu0
        %v1714 = vadd.f32 %v445, %v1713
        %1715 = vmatprep.mubr.bf16.mxu0 %v691
        %1716 = vmatmul.mubr.bf16.gmra.mxu0 %v690
        %v1717 = vpop.f32.mrf.mxu0
        %v1718 = vadd.f32 %v441, %v1717
        %v1719 = vpop.f32.mrf.mxu0
        %v1720 = vadd.f32 %v445, %v1719
        %v1721 = vpop.f32.mrf.mxu0
        %v1722 = vadd.f32 %v441, %v1721
        %v1723 = vpop.f32.mrf.mxu0
        %v1724 = vadd.f32 %v445, %v1723
        %1725 = vmatprep.mubr.bf16.mxu0 %v693
        %1726 = vmatmul.mubr.bf16.gmra.mxu0 %v692
        %v1727 = vpop.f32.mrf.mxu0
        %v1728 = vadd.f32 %v441, %v1727
        %v1729 = vpop.f32.mrf.mxu0
        %v1730 = vadd.f32 %v445, %v1729
        %v1731 = vpop.f32.mrf.mxu0
        %v1732 = vadd.f32 %v441, %v1731
        %v1733 = vpop.f32.mrf.mxu0
        %v1734 = vadd.f32 %v445, %v1733
        %1735 = vmatprep.mubr.bf16.mxu0 %v695
        %1736 = vmatmul.mubr.bf16.gmra.mxu0 %v694
        %v1737 = vpop.f32.mrf.mxu0
        %v1738 = vadd.f32 %v441, %v1737
        %v1739 = vpop.f32.mrf.mxu0
        %v1740 = vadd.f32 %v445, %v1739
        %v1741 = vpop.f32.mrf.mxu0
        %v1742 = vadd.f32 %v441, %v1741
        %v1743 = vpop.f32.mrf.mxu0
        %v1744 = vadd.f32 %v445, %v1743
        %1745 = vmatprep.mubr.bf16.mxu0 %v697
        %1746 = vmatmul.mubr.bf16.gmra.mxu0 %v696
        %v1747 = vpop.f32.mrf.mxu0
        %v1748 = vadd.f32 %v441, %v1747
        %v1749 = vpop.f32.mrf.mxu0
        %v1750 = vadd.f32 %v445, %v1749
        %v1751 = vpop.f32.mrf.mxu0
        %v1752 = vadd.f32 %v441, %v1751
        %v1753 = vpop.f32.mrf.mxu0
        %v1754 = vadd.f32 %v445, %v1753
        %1755 = vmatprep.mubr.bf16.mxu0 %v699
        %1756 = vmatmul.mubr.bf16.gmra.mxu0 %v698
        %v1757 = vpop.f32.mrf.mxu0
        %v1758 = vadd.f32 %v441, %v1757
        %v1759 = vpop.f32.mrf.mxu0
        %v1760 = vadd.f32 %v445, %v1759
        %v1761 = vpop.f32.mrf.mxu0
        %v1762 = vadd.f32 %v441, %v1761
        %v1763 = vpop.f32.mrf.mxu0
        %v1764 = vadd.f32 %v445, %v1763
        %1765 = vmatprep.mubr.bf16.mxu0 %v701
        %1766 = vmatmul.mubr.bf16.gmra.mxu0 %v700
        %v1767 = vpop.f32.mrf.mxu0
        %v1768 = vadd.f32 %v441, %v1767
        %v1769 = vpop.f32.mrf.mxu0
        %v1770 = vadd.f32 %v445, %v1769
        %v1771 = vpop.f32.mrf.mxu0
        %v1772 = vadd.f32 %v441, %v1771
        %v1773 = vpop.f32.mrf.mxu0
        %v1774 = vadd.f32 %v445, %v1773
        %1775 = vmatprep.mubr.bf16.mxu0 %v703
        %1776 = vmatmul.mubr.bf16.gmra.mxu0 %v702
        %v1777 = vpop.f32.mrf.mxu0
        %v1778 = vadd.f32 %v441, %v1777
        %v1779 = vpop.f32.mrf.mxu0
        %v1780 = vadd.f32 %v445, %v1779
        %v1781 = vpop.f32.mrf.mxu0
        %v1782 = vadd.f32 %v441, %v1781
        %v1783 = vpop.f32.mrf.mxu0
        %v1784 = vadd.f32 %v445, %v1783
        %1785 = vmatprep.mubr.bf16.mxu0 %v705
        %1786 = vmatmul.mubr.bf16.gmra.mxu0 %v704
        %v1787 = vpop.f32.mrf.mxu0
        %v1788 = vadd.f32 %v441, %v1787
        %v1789 = vpop.f32.mrf.mxu0
        %v1790 = vadd.f32 %v445, %v1789
        %v1791 = vpop.f32.mrf.mxu0
        %v1792 = vadd.f32 %v441, %v1791
        %v1793 = vpop.f32.mrf.mxu0
        %v1794 = vadd.f32 %v445, %v1793
        %1795 = vdwg.mxu0
        %v1796 = vmax.f32 %v1125, 0.0
        %v1797 = vmax.f32 %v1127, 0.0
        %v1798 = vmax.f32 %v1478, 0.0
        %v1799 = vmax.f32 %v1480, 0.0
        %v1800 = vmax.f32 %v1129, 0.0
        %v1801 = vmax.f32 %v1131, 0.0
        %v1802 = vmax.f32 %v1482, 0.0
        %v1803 = vmax.f32 %v1484, 0.0
        %v1804 = vmax.f32 %v1135, 0.0
        %v1805 = vmax.f32 %v1137, 0.0
        %v1806 = vmax.f32 %v1488, 0.0
        %v1807 = vmax.f32 %v1490, 0.0
        %v1808 = vmax.f32 %v1139, 0.0
        %v1809 = vmax.f32 %v1141, 0.0
        %v1810 = vmax.f32 %v1492, 0.0
        %v1811 = vmax.f32 %v1494, 0.0
        %v1812 = vmax.f32 %v1145, 0.0
        %v1813 = vmax.f32 %v1147, 0.0
        %v1814 = vmax.f32 %v1498, 0.0
        %v1815 = vmax.f32 %v1500, 0.0
        %v1816 = vmax.f32 %v1149, 0.0
        %v1817 = vmax.f32 %v1151, 0.0
        %v1818 = vmax.f32 %v1502, 0.0
        %v1819 = vmax.f32 %v1504, 0.0
        %v1820 = vmax.f32 %v1155, 0.0
        %v1821 = vmax.f32 %v1157, 0.0
        %v1822 = vmax.f32 %v1508, 0.0
        %v1823 = vmax.f32 %v1510, 0.0
        %v1824 = vmax.f32 %v1159, 0.0
        %v1825 = vmax.f32 %v1161, 0.0
        %v1826 = vmax.f32 %v1512, 0.0
        %v1827 = vmax.f32 %v1514, 0.0
        %v1828 = vmax.f32 %v1165, 0.0
        %v1829 = vmax.f32 %v1167, 0.0
        %v1830 = vmax.f32 %v1518, 0.0
        %v1831 = vmax.f32 %v1520, 0.0
        %v1832 = vmax.f32 %v1169, 0.0
        %v1833 = vmax.f32 %v1171, 0.0
        %v1834 = vmax.f32 %v1522, 0.0
        %v1835 = vmax.f32 %v1524, 0.0
        %v1836 = vmax.f32 %v1175, 0.0
        %v1837 = vmax.f32 %v1177, 0.0
        %v1838 = vmax.f32 %v1528, 0.0
        %v1839 = vmax.f32 %v1530, 0.0
        %v1840 = vmax.f32 %v1179, 0.0
        %v1841 = vmax.f32 %v1181, 0.0
        %v1842 = vmax.f32 %v1532, 0.0
        %v1843 = vmax.f32 %v1534, 0.0
        %v1844 = vmax.f32 %v1185, 0.0
        %v1845 = vmax.f32 %v1187, 0.0
        %v1846 = vmax.f32 %v1538, 0.0
        %v1847 = vmax.f32 %v1540, 0.0
        %v1848 = vmax.f32 %v1189, 0.0
        %v1849 = vmax.f32 %v1191, 0.0
        %v1850 = vmax.f32 %v1542, 0.0
        %v1851 = vmax.f32 %v1544, 0.0
        %v1852 = vmax.f32 %v1195, 0.0
        %v1853 = vmax.f32 %v1197, 0.0
        %v1854 = vmax.f32 %v1548, 0.0
        %v1855 = vmax.f32 %v1550, 0.0
        %v1856 = vmax.f32 %v1199, 0.0
        %v1857 = vmax.f32 %v1201, 0.0
        %v1858 = vmax.f32 %v1552, 0.0
        %v1859 = vmax.f32 %v1554, 0.0
        %v1860 = vmax.f32 %v1205, 0.0
        %v1861 = vmax.f32 %v1207, 0.0
        %v1862 = vmax.f32 %v1558, 0.0
        %v1863 = vmax.f32 %v1560, 0.0
        %v1864 = vmax.f32 %v1209, 0.0
        %v1865 = vmax.f32 %v1211, 0.0
        %v1866 = vmax.f32 %v1562, 0.0
        %v1867 = vmax.f32 %v1564, 0.0
        %v1868 = vmax.f32 %v1215, 0.0
        %v1869 = vmax.f32 %v1217, 0.0
        %v1870 = vmax.f32 %v1568, 0.0
        %v1871 = vmax.f32 %v1570, 0.0
        %v1872 = vmax.f32 %v1219, 0.0
        %v1873 = vmax.f32 %v1221, 0.0
        %v1874 = vmax.f32 %v1572, 0.0
        %v1875 = vmax.f32 %v1574, 0.0
        %v1876 = vmax.f32 %v1225, 0.0
        %v1877 = vmax.f32 %v1227, 0.0
        %v1878 = vmax.f32 %v1578, 0.0
        %v1879 = vmax.f32 %v1580, 0.0
        %v1880 = vmax.f32 %v1229, 0.0
        %v1881 = vmax.f32 %v1231, 0.0
        %v1882 = vmax.f32 %v1582, 0.0
        %v1883 = vmax.f32 %v1584, 0.0
        %v1884 = vmax.f32 %v1235, 0.0
        %v1885 = vmax.f32 %v1237, 0.0
        %v1886 = vmax.f32 %v1588, 0.0
        %v1887 = vmax.f32 %v1590, 0.0
        %v1888 = vmax.f32 %v1239, 0.0
        %v1889 = vmax.f32 %v1241, 0.0
        %v1890 = vmax.f32 %v1592, 0.0
        %v1891 = vmax.f32 %v1594, 0.0
        %v1892 = vmax.f32 %v1245, 0.0
        %v1893 = vmax.f32 %v1247, 0.0
        %v1894 = vmax.f32 %v1598, 0.0
        %v1895 = vmax.f32 %v1600, 0.0
        %v1896 = vmax.f32 %v1249, 0.0
        %v1897 = vmax.f32 %v1251, 0.0
        %v1898 = vmax.f32 %v1602, 0.0
        %v1899 = vmax.f32 %v1604, 0.0
        %v1900 = vmax.f32 %v1255, 0.0
        %v1901 = vmax.f32 %v1257, 0.0
        %v1902 = vmax.f32 %v1608, 0.0
        %v1903 = vmax.f32 %v1610, 0.0
        %v1904 = vmax.f32 %v1259, 0.0
        %v1905 = vmax.f32 %v1261, 0.0
        %v1906 = vmax.f32 %v1612, 0.0
        %v1907 = vmax.f32 %v1614, 0.0
        %v1908 = vmax.f32 %v1265, 0.0
        %v1909 = vmax.f32 %v1267, 0.0
        %v1910 = vmax.f32 %v1618, 0.0
        %v1911 = vmax.f32 %v1620, 0.0
        %v1912 = vmax.f32 %v1269, 0.0
        %v1913 = vmax.f32 %v1271, 0.0
        %v1914 = vmax.f32 %v1622, 0.0
        %v1915 = vmax.f32 %v1624, 0.0
        %v1916 = vmax.f32 %v1275, 0.0
        %v1917 = vmax.f32 %v1277, 0.0
        %v1918 = vmax.f32 %v1628, 0.0
        %v1919 = vmax.f32 %v1630, 0.0
        %v1920 = vmax.f32 %v1279, 0.0
        %v1921 = vmax.f32 %v1281, 0.0
        %v1922 = vmax.f32 %v1632, 0.0
        %v1923 = vmax.f32 %v1634, 0.0
        %v1924 = vmax.f32 %v1285, 0.0
        %v1925 = vmax.f32 %v1287, 0.0
        %v1926 = vmax.f32 %v1638, 0.0
        %v1927 = vmax.f32 %v1640, 0.0
        %v1928 = vmax.f32 %v1289, 0.0
        %v1929 = vmax.f32 %v1291, 0.0
        %v1930 = vmax.f32 %v1642, 0.0
        %v1931 = vmax.f32 %v1644, 0.0
        %v1932 = vmax.f32 %v1295, 0.0
        %v1933 = vmax.f32 %v1297, 0.0
        %v1934 = vmax.f32 %v1648, 0.0
        %v1935 = vmax.f32 %v1650, 0.0
        %v1936 = vmax.f32 %v1299, 0.0
        %v1937 = vmax.f32 %v1301, 0.0
        %v1938 = vmax.f32 %v1652, 0.0
        %v1939 = vmax.f32 %v1654, 0.0
        %v1940 = vmax.f32 %v1305, 0.0
        %v1941 = vmax.f32 %v1307, 0.0
        %v1942 = vmax.f32 %v1658, 0.0
        %v1943 = vmax.f32 %v1660, 0.0
        %v1944 = vmax.f32 %v1309, 0.0
        %v1945 = vmax.f32 %v1311, 0.0
        %v1946 = vmax.f32 %v1662, 0.0
        %v1947 = vmax.f32 %v1664, 0.0
        %v1948 = vmax.f32 %v1315, 0.0
        %v1949 = vmax.f32 %v1317, 0.0
        %v1950 = vmax.f32 %v1668, 0.0
        %v1951 = vmax.f32 %v1670, 0.0
        %v1952 = vmax.f32 %v1319, 0.0
        %v1953 = vmax.f32 %v1321, 0.0
        %v1954 = vmax.f32 %v1672, 0.0
        %v1955 = vmax.f32 %v1674, 0.0
        %v1956 = vmax.f32 %v1325, 0.0
        %v1957 = vmax.f32 %v1327, 0.0
        %v1958 = vmax.f32 %v1678, 0.0
        %v1959 = vmax.f32 %v1680, 0.0
        %v1960 = vmax.f32 %v1329, 0.0
        %v1961 = vmax.f32 %v1331, 0.0
        %v1962 = vmax.f32 %v1682, 0.0
        %v1963 = vmax.f32 %v1684, 0.0
        %v1964 = vmax.f32 %v1335, 0.0
        %v1965 = vmax.f32 %v1337, 0.0
        %v1966 = vmax.f32 %v1688, 0.0
        %v1967 = vmax.f32 %v1690, 0.0
        %v1968 = vmax.f32 %v1339, 0.0
        %v1969 = vmax.f32 %v1341, 0.0
        %v1970 = vmax.f32 %v1692, 0.0
        %v1971 = vmax.f32 %v1694, 0.0
        %v1972 = vmax.f32 %v1345, 0.0
        %v1973 = vmax.f32 %v1347, 0.0
        %v1974 = vmax.f32 %v1698, 0.0
        %v1975 = vmax.f32 %v1700, 0.0
        %v1976 = vmax.f32 %v1349, 0.0
        %v1977 = vmax.f32 %v1351, 0.0
        %v1978 = vmax.f32 %v1702, 0.0
        %v1979 = vmax.f32 %v1704, 0.0
        %v1980 = vmax.f32 %v1355, 0.0
        %v1981 = vmax.f32 %v1357, 0.0
        %v1982 = vmax.f32 %v1708, 0.0
        %v1983 = vmax.f32 %v1710, 0.0
        %v1984 = vmax.f32 %v1359, 0.0
        %v1985 = vmax.f32 %v1361, 0.0
        %v1986 = vmax.f32 %v1712, 0.0
        %v1987 = vmax.f32 %v1714, 0.0
        %v1988 = vmax.f32 %v1365, 0.0
        %v1989 = vmax.f32 %v1367, 0.0
        %v1990 = vmax.f32 %v1718, 0.0
        %v1991 = vmax.f32 %v1720, 0.0
        %v1992 = vmax.f32 %v1369, 0.0
        %v1993 = vmax.f32 %v1371, 0.0
        %v1994 = vmax.f32 %v1722, 0.0
        %v1995 = vmax.f32 %v1724, 0.0
        %v1996 = vmax.f32 %v1375, 0.0
        %v1997 = vmax.f32 %v1377, 0.0
        %v1998 = vmax.f32 %v1728, 0.0
        %v1999 = vmax.f32 %v1730, 0.0
        %v2000 = vmax.f32 %v1379, 0.0
        %v2001 = vmax.f32 %v1381, 0.0
        %v2002 = vmax.f32 %v1732, 0.0
        %v2003 = vmax.f32 %v1734, 0.0
        %v2004 = vmax.f32 %v1385, 0.0
        %v2005 = vmax.f32 %v1387, 0.0
        %v2006 = vmax.f32 %v1738, 0.0
        %v2007 = vmax.f32 %v1740, 0.0
        %v2008 = vmax.f32 %v1389, 0.0
        %v2009 = vmax.f32 %v1391, 0.0
        %v2010 = vmax.f32 %v1742, 0.0
        %v2011 = vmax.f32 %v1744, 0.0
        %v2012 = vmax.f32 %v1395, 0.0
        %v2013 = vmax.f32 %v1397, 0.0
        %v2014 = vmax.f32 %v1748, 0.0
        %v2015 = vmax.f32 %v1750, 0.0
        %v2016 = vmax.f32 %v1399, 0.0
        %v2017 = vmax.f32 %v1401, 0.0
        %v2018 = vmax.f32 %v1752, 0.0
        %v2019 = vmax.f32 %v1754, 0.0
        %v2020 = vmax.f32 %v1405, 0.0
        %v2021 = vmax.f32 %v1407, 0.0
        %v2022 = vmax.f32 %v1758, 0.0
        %v2023 = vmax.f32 %v1760, 0.0
        %v2024 = vmax.f32 %v1409, 0.0
        %v2025 = vmax.f32 %v1411, 0.0
        %v2026 = vmax.f32 %v1762, 0.0
        %v2027 = vmax.f32 %v1764, 0.0
        %v2028 = vmax.f32 %v1415, 0.0
        %v2029 = vmax.f32 %v1417, 0.0
        %v2030 = vmax.f32 %v1768, 0.0
        %v2031 = vmax.f32 %v1770, 0.0
        %v2032 = vmax.f32 %v1419, 0.0
        %v2033 = vmax.f32 %v1421, 0.0
        %v2034 = vmax.f32 %v1772, 0.0
        %v2035 = vmax.f32 %v1774, 0.0
        %v2036 = vmax.f32 %v1425, 0.0
        %v2037 = vmax.f32 %v1427, 0.0
        %v2038 = vmax.f32 %v1778, 0.0
        %v2039 = vmax.f32 %v1780, 0.0
        %v2040 = vmax.f32 %v1429, 0.0
        %v2041 = vmax.f32 %v1431, 0.0
        %v2042 = vmax.f32 %v1782, 0.0
        %v2043 = vmax.f32 %v1784, 0.0
        %v2044 = vmax.f32 %v1435, 0.0
        %v2045 = vmax.f32 %v1437, 0.0
        %v2046 = vmax.f32 %v1788, 0.0
        %v2047 = vmax.f32 %v1790, 0.0
        %v2048 = vmax.f32 %v1439, 0.0
        %v2049 = vmax.f32 %v1441, 0.0
        %v2050 = vmax.f32 %v1792, 0.0
        %v2051 = vmax.f32 %v1794, 0.0
        %v2052 = vpack.c.bf16 %v1800, %v1796
        %v2053 = vpack.c.bf16 %v1801, %v1797
        %v2054 = vpack.c.bf16 %v1802, %v1798
        %v2055 = vpack.c.bf16 %v1803, %v1799
        %v2056 = vpack.c.bf16 %v1808, %v1804
        %v2057 = vpack.c.bf16 %v1809, %v1805
        %v2058 = vpack.c.bf16 %v1810, %v1806
        %v2059 = vpack.c.bf16 %v1811, %v1807
        %v2060 = vpack.c.bf16 %v1816, %v1812
        %v2061 = vpack.c.bf16 %v1817, %v1813
        %v2062 = vpack.c.bf16 %v1818, %v1814
        %v2063 = vpack.c.bf16 %v1819, %v1815
        %v2064 = vpack.c.bf16 %v1824, %v1820
        %v2065 = vpack.c.bf16 %v1825, %v1821
        %v2066 = vpack.c.bf16 %v1826, %v1822
        %v2067 = vpack.c.bf16 %v1827, %v1823
        %v2068 = vpack.c.bf16 %v1832, %v1828
        %v2069 = vpack.c.bf16 %v1833, %v1829
        %v2070 = vpack.c.bf16 %v1834, %v1830
        %v2071 = vpack.c.bf16 %v1835, %v1831
        %v2072 = vpack.c.bf16 %v1840, %v1836
        %v2073 = vpack.c.bf16 %v1841, %v1837
        %v2074 = vpack.c.bf16 %v1842, %v1838
        %v2075 = vpack.c.bf16 %v1843, %v1839
        %v2076 = vpack.c.bf16 %v1848, %v1844
        %v2077 = vpack.c.bf16 %v1849, %v1845
        %v2078 = vpack.c.bf16 %v1850, %v1846
        %v2079 = vpack.c.bf16 %v1851, %v1847
        %v2080 = vpack.c.bf16 %v1856, %v1852
        %v2081 = vpack.c.bf16 %v1857, %v1853
        %v2082 = vpack.c.bf16 %v1858, %v1854
        %v2083 = vpack.c.bf16 %v1859, %v1855
        %v2084 = vpack.c.bf16 %v1864, %v1860
        %v2085 = vpack.c.bf16 %v1865, %v1861
        %v2086 = vpack.c.bf16 %v1866, %v1862
        %v2087 = vpack.c.bf16 %v1867, %v1863
        %v2088 = vpack.c.bf16 %v1872, %v1868
        %v2089 = vpack.c.bf16 %v1873, %v1869
        %v2090 = vpack.c.bf16 %v1874, %v1870
        %v2091 = vpack.c.bf16 %v1875, %v1871
        %v2092 = vpack.c.bf16 %v1880, %v1876
        %v2093 = vpack.c.bf16 %v1881, %v1877
        %v2094 = vpack.c.bf16 %v1882, %v1878
        %v2095 = vpack.c.bf16 %v1883, %v1879
        %v2096 = vpack.c.bf16 %v1888, %v1884
        %v2097 = vpack.c.bf16 %v1889, %v1885
        %v2098 = vpack.c.bf16 %v1890, %v1886
        %v2099 = vpack.c.bf16 %v1891, %v1887
        %v2100 = vpack.c.bf16 %v1896, %v1892
        %v2101 = vpack.c.bf16 %v1897, %v1893
        %v2102 = vpack.c.bf16 %v1898, %v1894
        %v2103 = vpack.c.bf16 %v1899, %v1895
        %v2104 = vpack.c.bf16 %v1904, %v1900
        %v2105 = vpack.c.bf16 %v1905, %v1901
        %v2106 = vpack.c.bf16 %v1906, %v1902
        %v2107 = vpack.c.bf16 %v1907, %v1903
        %v2108 = vpack.c.bf16 %v1912, %v1908
        %v2109 = vpack.c.bf16 %v1913, %v1909
        %v2110 = vpack.c.bf16 %v1914, %v1910
        %v2111 = vpack.c.bf16 %v1915, %v1911
        %v2112 = vpack.c.bf16 %v1920, %v1916
        %v2113 = vpack.c.bf16 %v1921, %v1917
        %v2114 = vpack.c.bf16 %v1922, %v1918
        %v2115 = vpack.c.bf16 %v1923, %v1919
        %v2116 = vpack.c.bf16 %v1928, %v1924
        %v2117 = vpack.c.bf16 %v1929, %v1925
        %v2118 = vpack.c.bf16 %v1930, %v1926
        %v2119 = vpack.c.bf16 %v1931, %v1927
        %v2120 = vpack.c.bf16 %v1936, %v1932
        %v2121 = vpack.c.bf16 %v1937, %v1933
        %v2122 = vpack.c.bf16 %v1938, %v1934
        %v2123 = vpack.c.bf16 %v1939, %v1935
        %v2124 = vpack.c.bf16 %v1944, %v1940
        %v2125 = vpack.c.bf16 %v1945, %v1941
        %v2126 = vpack.c.bf16 %v1946, %v1942
        %v2127 = vpack.c.bf16 %v1947, %v1943
        %v2128 = vpack.c.bf16 %v1952, %v1948
        %v2129 = vpack.c.bf16 %v1953, %v1949
        %v2130 = vpack.c.bf16 %v1954, %v1950
        %v2131 = vpack.c.bf16 %v1955, %v1951
        %v2132 = vpack.c.bf16 %v1960, %v1956
        %v2133 = vpack.c.bf16 %v1961, %v1957
        %v2134 = vpack.c.bf16 %v1962, %v1958
        %v2135 = vpack.c.bf16 %v1963, %v1959
        %v2136 = vpack.c.bf16 %v1968, %v1964
        %v2137 = vpack.c.bf16 %v1969, %v1965
        %v2138 = vpack.c.bf16 %v1970, %v1966
        %v2139 = vpack.c.bf16 %v1971, %v1967
        %v2140 = vpack.c.bf16 %v1976, %v1972
        %v2141 = vpack.c.bf16 %v1977, %v1973
        %v2142 = vpack.c.bf16 %v1978, %v1974
        %v2143 = vpack.c.bf16 %v1979, %v1975
        %v2144 = vpack.c.bf16 %v1984, %v1980
        %v2145 = vpack.c.bf16 %v1985, %v1981
        %v2146 = vpack.c.bf16 %v1986, %v1982
        %v2147 = vpack.c.bf16 %v1987, %v1983
        %v2148 = vpack.c.bf16 %v1992, %v1988
        %v2149 = vpack.c.bf16 %v1993, %v1989
        %v2150 = vpack.c.bf16 %v1994, %v1990
        %v2151 = vpack.c.bf16 %v1995, %v1991
        %v2152 = vpack.c.bf16 %v2000, %v1996
        %v2153 = vpack.c.bf16 %v2001, %v1997
        %v2154 = vpack.c.bf16 %v2002, %v1998
        %v2155 = vpack.c.bf16 %v2003, %v1999
        %v2156 = vpack.c.bf16 %v2008, %v2004
        %v2157 = vpack.c.bf16 %v2009, %v2005
        %v2158 = vpack.c.bf16 %v2010, %v2006
        %v2159 = vpack.c.bf16 %v2011, %v2007
        %v2160 = vpack.c.bf16 %v2016, %v2012
        %v2161 = vpack.c.bf16 %v2017, %v2013
        %v2162 = vpack.c.bf16 %v2018, %v2014
        %v2163 = vpack.c.bf16 %v2019, %v2015
        %v2164 = vpack.c.bf16 %v2024, %v2020
        %v2165 = vpack.c.bf16 %v2025, %v2021
        %v2166 = vpack.c.bf16 %v2026, %v2022
        %v2167 = vpack.c.bf16 %v2027, %v2023
        %v2168 = vpack.c.bf16 %v2032, %v2028
        %v2169 = vpack.c.bf16 %v2033, %v2029
        %v2170 = vpack.c.bf16 %v2034, %v2030
        %v2171 = vpack.c.bf16 %v2035, %v2031
        %v2172 = vpack.c.bf16 %v2040, %v2036
        %v2173 = vpack.c.bf16 %v2041, %v2037
        %v2174 = vpack.c.bf16 %v2042, %v2038
        %v2175 = vpack.c.bf16 %v2043, %v2039
        %v2176 = vpack.c.bf16 %v2048, %v2044
        %v2177 = vpack.c.bf16 %v2049, %v2045
        %v2178 = vpack.c.bf16 %v2050, %v2046
        %v2179 = vpack.c.bf16 %v2051, %v2047
        %v2180 = vld [vmem:[#allocation8] sm:$0xff]
        %v2181 = vld [vmem:[#allocation8 + $0x8] sm:$0xff]
        %v2182 = vld [vmem:[#allocation8 + $0x10] sm:$0xff]
        %v2183 = vld [vmem:[#allocation8 + $0x18] sm:$0xff]
        %v2184 = vld [vmem:[#allocation8 + $0x20] sm:$0xff]
        %v2185 = vld [vmem:[#allocation8 + $0x28] sm:$0xff]
        %v2186 = vld [vmem:[#allocation8 + $0x30] sm:$0xff]
        %v2187 = vld [vmem:[#allocation8 + $0x38] sm:$0xff]
        %v2188 = vld [vmem:[#allocation8 + $0x40] sm:$0xff]
        %v2189 = vld [vmem:[#allocation8 + $0x48] sm:$0xff]
        %v2190 = vld [vmem:[#allocation8 + $0x50] sm:$0xff]
        %v2191 = vld [vmem:[#allocation8 + $0x58] sm:$0xff]
        %v2192 = vld [vmem:[#allocation8 + $0x60] sm:$0xff]
        %v2193 = vld [vmem:[#allocation8 + $0x68] sm:$0xff]
        %v2194 = vld [vmem:[#allocation8 + $0x70] sm:$0xff]
        %v2195 = vld [vmem:[#allocation8 + $0x78] sm:$0xff]
        %v2196 = vld [vmem:[#allocation8 + $0x80] sm:$0xff]
        %v2197 = vld [vmem:[#allocation8 + $0x88] sm:$0xff]
        %v2198 = vld [vmem:[#allocation8 + $0x90] sm:$0xff]
        %v2199 = vld [vmem:[#allocation8 + $0x98] sm:$0xff]
        %v2200 = vld [vmem:[#allocation8 + $0xa0] sm:$0xff]
        %v2201 = vld [vmem:[#allocation8 + $0xa8] sm:$0xff]
        %v2202 = vld [vmem:[#allocation8 + $0xb0] sm:$0xff]
        %v2203 = vld [vmem:[#allocation8 + $0xb8] sm:$0xff]
        %v2204 = vld [vmem:[#allocation8 + $0xc0] sm:$0xff]
        %v2205 = vld [vmem:[#allocation8 + $0xc8] sm:$0xff]
        %v2206 = vld [vmem:[#allocation8 + $0xd0] sm:$0xff]
        %v2207 = vld [vmem:[#allocation8 + $0xd8] sm:$0xff]
        %v2208 = vld [vmem:[#allocation8 + $0xe0] sm:$0xff]
        %v2209 = vld [vmem:[#allocation8 + $0xe8] sm:$0xff]
        %v2210 = vld [vmem:[#allocation8 + $0xf0] sm:$0xff]
        %v2211 = vld [vmem:[#allocation8 + $0xf8] sm:$0xff]
        %v2212 = vld [vmem:[#allocation8 + $0x100] sm:$0xff]
        %v2213 = vld [vmem:[#allocation8 + $0x108] sm:$0xff]
        %v2214 = vld [vmem:[#allocation8 + $0x110] sm:$0xff]
        %v2215 = vld [vmem:[#allocation8 + $0x118] sm:$0xff]
        %v2216 = vld [vmem:[#allocation8 + $0x120] sm:$0xff]
        %v2217 = vld [vmem:[#allocation8 + $0x128] sm:$0xff]
        %v2218 = vld [vmem:[#allocation8 + $0x130] sm:$0xff]
        %v2219 = vld [vmem:[#allocation8 + $0x138] sm:$0xff]
        %v2220 = vld [vmem:[#allocation8 + $0x140] sm:$0xff]
        %v2221 = vld [vmem:[#allocation8 + $0x148] sm:$0xff]
        %v2222 = vld [vmem:[#allocation8 + $0x150] sm:$0xff]
        %v2223 = vld [vmem:[#allocation8 + $0x158] sm:$0xff]
        %v2224 = vld [vmem:[#allocation8 + $0x160] sm:$0xff]
        %v2225 = vld [vmem:[#allocation8 + $0x168] sm:$0xff]
        %v2226 = vld [vmem:[#allocation8 + $0x170] sm:$0xff]
        %v2227 = vld [vmem:[#allocation8 + $0x178] sm:$0xff]
        %v2228 = vld [vmem:[#allocation8 + $0x180] sm:$0xff]
        %v2229 = vld [vmem:[#allocation8 + $0x188] sm:$0xff]
        %v2230 = vld [vmem:[#allocation8 + $0x190] sm:$0xff]
        %v2231 = vld [vmem:[#allocation8 + $0x198] sm:$0xff]
        %v2232 = vld [vmem:[#allocation8 + $0x1a0] sm:$0xff]
        %v2233 = vld [vmem:[#allocation8 + $0x1a8] sm:$0xff]
        %v2234 = vld [vmem:[#allocation8 + $0x1b0] sm:$0xff]
        %v2235 = vld [vmem:[#allocation8 + $0x1b8] sm:$0xff]
        %v2236 = vld [vmem:[#allocation8 + $0x1c0] sm:$0xff]
        %v2237 = vld [vmem:[#allocation8 + $0x1c8] sm:$0xff]
        %v2238 = vld [vmem:[#allocation8 + $0x1d0] sm:$0xff]
        %v2239 = vld [vmem:[#allocation8 + $0x1d8] sm:$0xff]
        %v2240 = vld [vmem:[#allocation8 + $0x1e0] sm:$0xff]
        %v2241 = vld [vmem:[#allocation8 + $0x1e8] sm:$0xff]
        %v2242 = vld [vmem:[#allocation8 + $0x1f0] sm:$0xff]
        %v2243 = vld [vmem:[#allocation8 + $0x1f8] sm:$0xff]
        %v2244 = vld [vmem:[#allocation10] sm:$0x3]
        %v2246 = vlaneseq
        %v2247 = vshrl.u32 %v2246, 7
        %v2248 = vsub.s32 0, %v2247
        %v2249 = vrot.slane %v2244, %v2248
        %v2250 = vlaneseq
        %v2251 = vshrl.u32 %v2250, 7
        %v2252 = vsub.s32 1, %v2251
        %v2253 = vrot.slane %v2244, %v2252
        %v2320 = vunpack.c.l.b16 %v2180
        %v2321 = vunpack.c.h.b16 %v2180
        %v2322 = vunpack.c.l.b16 %v2181
        %v2323 = vunpack.c.h.b16 %v2181
        %v2324 = vunpack.c.l.b16 %v2182
        %v2325 = vunpack.c.h.b16 %v2182
        %v2326 = vunpack.c.l.b16 %v2183
        %v2327 = vunpack.c.h.b16 %v2183
        %v2328 = vunpack.c.l.b16 %v2184
        %v2329 = vunpack.c.h.b16 %v2184
        %v2330 = vunpack.c.l.b16 %v2185
        %v2331 = vunpack.c.h.b16 %v2185
        %v2332 = vunpack.c.l.b16 %v2186
        %v2333 = vunpack.c.h.b16 %v2186
        %v2334 = vunpack.c.l.b16 %v2187
        %v2335 = vunpack.c.h.b16 %v2187
        %v2336 = vunpack.c.l.b16 %v2188
        %v2337 = vunpack.c.h.b16 %v2188
        %v2338 = vunpack.c.l.b16 %v2189
        %v2339 = vunpack.c.h.b16 %v2189
        %v2340 = vunpack.c.l.b16 %v2190
        %v2341 = vunpack.c.h.b16 %v2190
        %v2342 = vunpack.c.l.b16 %v2191
        %v2343 = vunpack.c.h.b16 %v2191
        %v2344 = vunpack.c.l.b16 %v2192
        %v2345 = vunpack.c.h.b16 %v2192
        %v2346 = vunpack.c.l.b16 %v2193
        %v2347 = vunpack.c.h.b16 %v2193
        %v2348 = vunpack.c.l.b16 %v2194
        %v2349 = vunpack.c.h.b16 %v2194
        %v2350 = vunpack.c.l.b16 %v2195
        %v2351 = vunpack.c.h.b16 %v2195
        %v2352 = vunpack.c.l.b16 %v2196
        %v2353 = vunpack.c.h.b16 %v2196
        %v2354 = vunpack.c.l.b16 %v2197
        %v2355 = vunpack.c.h.b16 %v2197
        %v2356 = vunpack.c.l.b16 %v2198
        %v2357 = vunpack.c.h.b16 %v2198
        %v2358 = vunpack.c.l.b16 %v2199
        %v2359 = vunpack.c.h.b16 %v2199
        %v2360 = vunpack.c.l.b16 %v2200
        %v2361 = vunpack.c.h.b16 %v2200
        %v2362 = vunpack.c.l.b16 %v2201
        %v2363 = vunpack.c.h.b16 %v2201
        %v2364 = vunpack.c.l.b16 %v2202
        %v2365 = vunpack.c.h.b16 %v2202
        %v2366 = vunpack.c.l.b16 %v2203
        %v2367 = vunpack.c.h.b16 %v2203
        %v2368 = vunpack.c.l.b16 %v2204
        %v2369 = vunpack.c.h.b16 %v2204
        %v2370 = vunpack.c.l.b16 %v2205
        %v2371 = vunpack.c.h.b16 %v2205
        %v2372 = vunpack.c.l.b16 %v2206
        %v2373 = vunpack.c.h.b16 %v2206
        %v2374 = vunpack.c.l.b16 %v2207
        %v2375 = vunpack.c.h.b16 %v2207
        %v2376 = vunpack.c.l.b16 %v2208
        %v2377 = vunpack.c.h.b16 %v2208
        %v2378 = vunpack.c.l.b16 %v2209
        %v2379 = vunpack.c.h.b16 %v2209
        %v2380 = vunpack.c.l.b16 %v2210
        %v2381 = vunpack.c.h.b16 %v2210
        %v2382 = vunpack.c.l.b16 %v2211
        %v2383 = vunpack.c.h.b16 %v2211
        %v2384 = vunpack.c.l.b16 %v2212
        %v2385 = vunpack.c.h.b16 %v2212
        %v2386 = vunpack.c.l.b16 %v2213
        %v2387 = vunpack.c.h.b16 %v2213
        %v2388 = vunpack.c.l.b16 %v2214
        %v2389 = vunpack.c.h.b16 %v2214
        %v2390 = vunpack.c.l.b16 %v2215
        %v2391 = vunpack.c.h.b16 %v2215
        %v2392 = vunpack.c.l.b16 %v2216
        %v2393 = vunpack.c.h.b16 %v2216
        %v2394 = vunpack.c.l.b16 %v2217
        %v2395 = vunpack.c.h.b16 %v2217
        %v2396 = vunpack.c.l.b16 %v2218
        %v2397 = vunpack.c.h.b16 %v2218
        %v2398 = vunpack.c.l.b16 %v2219
        %v2399 = vunpack.c.h.b16 %v2219
        %v2400 = vunpack.c.l.b16 %v2220
        %v2401 = vunpack.c.h.b16 %v2220
        %v2402 = vunpack.c.l.b16 %v2221
        %v2403 = vunpack.c.h.b16 %v2221
        %v2404 = vunpack.c.l.b16 %v2222
        %v2405 = vunpack.c.h.b16 %v2222
        %v2406 = vunpack.c.l.b16 %v2223
        %v2407 = vunpack.c.h.b16 %v2223
        %v2408 = vunpack.c.l.b16 %v2224
        %v2409 = vunpack.c.h.b16 %v2224
        %v2410 = vunpack.c.l.b16 %v2225
        %v2411 = vunpack.c.h.b16 %v2225
        %v2412 = vunpack.c.l.b16 %v2226
        %v2413 = vunpack.c.h.b16 %v2226
        %v2414 = vunpack.c.l.b16 %v2227
        %v2415 = vunpack.c.h.b16 %v2227
        %v2416 = vunpack.c.l.b16 %v2228
        %v2417 = vunpack.c.h.b16 %v2228
        %v2418 = vunpack.c.l.b16 %v2229
        %v2419 = vunpack.c.h.b16 %v2229
        %v2420 = vunpack.c.l.b16 %v2230
        %v2421 = vunpack.c.h.b16 %v2230
        %v2422 = vunpack.c.l.b16 %v2231
        %v2423 = vunpack.c.h.b16 %v2231
        %v2424 = vunpack.c.l.b16 %v2232
        %v2425 = vunpack.c.h.b16 %v2232
        %v2426 = vunpack.c.l.b16 %v2233
        %v2427 = vunpack.c.h.b16 %v2233
        %v2428 = vunpack.c.l.b16 %v2234
        %v2429 = vunpack.c.h.b16 %v2234
        %v2430 = vunpack.c.l.b16 %v2235
        %v2431 = vunpack.c.h.b16 %v2235
        %v2432 = vunpack.c.l.b16 %v2236
        %v2433 = vunpack.c.h.b16 %v2236
        %v2434 = vunpack.c.l.b16 %v2237
        %v2435 = vunpack.c.h.b16 %v2237
        %v2436 = vunpack.c.l.b16 %v2238
        %v2437 = vunpack.c.h.b16 %v2238
        %v2438 = vunpack.c.l.b16 %v2239
        %v2439 = vunpack.c.h.b16 %v2239
        %v2440 = vunpack.c.l.b16 %v2240
        %v2441 = vunpack.c.h.b16 %v2240
        %v2442 = vunpack.c.l.b16 %v2241
        %v2443 = vunpack.c.h.b16 %v2241
        %v2444 = vunpack.c.l.b16 %v2242
        %v2445 = vunpack.c.h.b16 %v2242
        %v2446 = vunpack.c.l.b16 %v2243
        %v2447 = vunpack.c.h.b16 %v2243
        %v2448 = vpack.c.b16 %v2322, %v2320
        %v2449 = vpack.c.b16 %v2323, %v2321
        %v2450 = vpack.c.b16 %v2326, %v2324
        %v2451 = vpack.c.b16 %v2327, %v2325
        %v2452 = vpack.c.b16 %v2330, %v2328
        %v2453 = vpack.c.b16 %v2331, %v2329
        %v2454 = vpack.c.b16 %v2334, %v2332
        %v2455 = vpack.c.b16 %v2335, %v2333
        %v2456 = vpack.c.b16 %v2338, %v2336
        %v2457 = vpack.c.b16 %v2339, %v2337
        %v2458 = vpack.c.b16 %v2342, %v2340
        %v2459 = vpack.c.b16 %v2343, %v2341
        %v2460 = vpack.c.b16 %v2346, %v2344
        %v2461 = vpack.c.b16 %v2347, %v2345
        %v2462 = vpack.c.b16 %v2350, %v2348
        %v2463 = vpack.c.b16 %v2351, %v2349
        %v2464 = vpack.c.b16 %v2354, %v2352
        %v2465 = vpack.c.b16 %v2355, %v2353
        %v2466 = vpack.c.b16 %v2358, %v2356
        %v2467 = vpack.c.b16 %v2359, %v2357
        %v2468 = vpack.c.b16 %v2362, %v2360
        %v2469 = vpack.c.b16 %v2363, %v2361
        %v2470 = vpack.c.b16 %v2366, %v2364
        %v2471 = vpack.c.b16 %v2367, %v2365
        %v2472 = vpack.c.b16 %v2370, %v2368
        %v2473 = vpack.c.b16 %v2371, %v2369
        %v2474 = vpack.c.b16 %v2374, %v2372
        %v2475 = vpack.c.b16 %v2375, %v2373
        %v2476 = vpack.c.b16 %v2378, %v2376
        %v2477 = vpack.c.b16 %v2379, %v2377
        %v2478 = vpack.c.b16 %v2382, %v2380
        %v2479 = vpack.c.b16 %v2383, %v2381
        %v2480 = vpack.c.b16 %v2386, %v2384
        %v2481 = vpack.c.b16 %v2387, %v2385
        %v2482 = vpack.c.b16 %v2390, %v2388
        %v2483 = vpack.c.b16 %v2391, %v2389
        %v2484 = vpack.c.b16 %v2394, %v2392
        %v2485 = vpack.c.b16 %v2395, %v2393
        %v2486 = vpack.c.b16 %v2398, %v2396
        %v2487 = vpack.c.b16 %v2399, %v2397
        %v2488 = vpack.c.b16 %v2402, %v2400
        %v2489 = vpack.c.b16 %v2403, %v2401
        %v2490 = vpack.c.b16 %v2406, %v2404
        %v2491 = vpack.c.b16 %v2407, %v2405
        %v2492 = vpack.c.b16 %v2410, %v2408
        %v2493 = vpack.c.b16 %v2411, %v2409
        %v2494 = vpack.c.b16 %v2414, %v2412
        %v2495 = vpack.c.b16 %v2415, %v2413
        %v2496 = vpack.c.b16 %v2418, %v2416
        %v2497 = vpack.c.b16 %v2419, %v2417
        %v2498 = vpack.c.b16 %v2422, %v2420
        %v2499 = vpack.c.b16 %v2423, %v2421
        %v2500 = vpack.c.b16 %v2426, %v2424
        %v2501 = vpack.c.b16 %v2427, %v2425
        %v2502 = vpack.c.b16 %v2430, %v2428
        %v2503 = vpack.c.b16 %v2431, %v2429
        %v2504 = vpack.c.b16 %v2434, %v2432
        %v2505 = vpack.c.b16 %v2435, %v2433
        %v2506 = vpack.c.b16 %v2438, %v2436
        %v2507 = vpack.c.b16 %v2439, %v2437
        %v2508 = vpack.c.b16 %v2442, %v2440
        %v2509 = vpack.c.b16 %v2443, %v2441
        %v2510 = vpack.c.b16 %v2446, %v2444
        %v2511 = vpack.c.b16 %v2447, %v2445
        %2576 = vmatprep.subr.bf16.mxu0 %v2463
        %2577 = vmatpush1.bf16.msra.mxu0 %v2462
        %2578 = vmatprep.subr.bf16.mxu0 %v2461
        %2579 = vmatpush1.bf16.msra.mxu0 %v2460
        %2580 = vmatprep.subr.bf16.mxu0 %v2459
        %2581 = vmatpush1.bf16.msra.mxu0 %v2458
        %2582 = vmatprep.subr.bf16.mxu0 %v2457
        %2583 = vmatpush1.bf16.msra.mxu0 %v2456
        %2584 = vmatprep.subr.bf16.mxu0 %v2455
        %2585 = vmatpush1.bf16.msra.mxu0 %v2454
        %2586 = vmatprep.subr.bf16.mxu0 %v2453
        %2587 = vmatpush1.bf16.msra.mxu0 %v2452
        %2588 = vmatprep.subr.bf16.mxu0 %v2451
        %2589 = vmatpush1.bf16.msra.mxu0 %v2450
        %2590 = vmatprep.subr.bf16.mxu0 %v2449
        %2591 = vmatpush1.bf16.msra.mxu0 %v2448
        %2592 = vmatprep.subr.bf16.mxu0 %v2479
        %2593 = vmatpush2.bf16.msra.mxu0 %v2478
        %2594 = vmatprep.subr.bf16.mxu0 %v2477
        %2595 = vmatpush2.bf16.msra.mxu0 %v2476
        %2596 = vmatprep.subr.bf16.mxu0 %v2475
        %2597 = vmatpush2.bf16.msra.mxu0 %v2474
        %2598 = vmatprep.subr.bf16.mxu0 %v2473
        %2599 = vmatpush2.bf16.msra.mxu0 %v2472
        %2600 = vmatprep.subr.bf16.mxu0 %v2471
        %2601 = vmatpush2.bf16.msra.mxu0 %v2470
        %2602 = vmatprep.subr.bf16.mxu0 %v2469
        %2603 = vmatpush2.bf16.msra.mxu0 %v2468
        %2604 = vmatprep.subr.bf16.mxu0 %v2467
        %2605 = vmatpush2.bf16.msra.mxu0 %v2466
        %2606 = vmatprep.subr.bf16.mxu0 %v2465
        %2607 = vmatpush2.bf16.msra.mxu0 %v2464
        %2608 = vmatprep.mubr.bf16.mxu0 %v2053
        %2609 = vmatmul.mubr.bf16.gmra.mxu0 %v2052
        %v2610 = vpop.f32.mrf.mxu0
        %v2611 = vadd.f32 %v2249, %v2610
        %v2612 = vpop.f32.mrf.mxu0
        %v2613 = vadd.f32 %v2253, %v2612
        %v2614 = vpop.f32.mrf.mxu0
        %v2615 = vadd.f32 %v2249, %v2614
        %v2616 = vpop.f32.mrf.mxu0
        %v2617 = vadd.f32 %v2253, %v2616
        %2618 = vmatprep.mubr.bf16.mxu0 %v2057
        %2619 = vmatmul.mubr.bf16.gmra.mxu0 %v2056
        %v2620 = vpop.f32.mrf.mxu0
        %v2621 = vadd.f32 %v2249, %v2620
        %v2622 = vpop.f32.mrf.mxu0
        %v2623 = vadd.f32 %v2253, %v2622
        %v2624 = vpop.f32.mrf.mxu0
        %v2625 = vadd.f32 %v2249, %v2624
        %v2626 = vpop.f32.mrf.mxu0
        %v2627 = vadd.f32 %v2253, %v2626
        %2628 = vmatprep.mubr.bf16.mxu0 %v2061
        %2629 = vmatmul.mubr.bf16.gmra.mxu0 %v2060
        %v2630 = vpop.f32.mrf.mxu0
        %v2631 = vadd.f32 %v2249, %v2630
        %v2632 = vpop.f32.mrf.mxu0
        %v2633 = vadd.f32 %v2253, %v2632
        %v2634 = vpop.f32.mrf.mxu0
        %v2635 = vadd.f32 %v2249, %v2634
        %v2636 = vpop.f32.mrf.mxu0
        %v2637 = vadd.f32 %v2253, %v2636
        %2638 = vmatprep.mubr.bf16.mxu0 %v2065
        %2639 = vmatmul.mubr.bf16.gmra.mxu0 %v2064
        %v2640 = vpop.f32.mrf.mxu0
        %v2641 = vadd.f32 %v2249, %v2640
        %v2642 = vpop.f32.mrf.mxu0
        %v2643 = vadd.f32 %v2253, %v2642
        %v2644 = vpop.f32.mrf.mxu0
        %v2645 = vadd.f32 %v2249, %v2644
        %v2646 = vpop.f32.mrf.mxu0
        %v2647 = vadd.f32 %v2253, %v2646
        %2648 = vmatprep.mubr.bf16.mxu0 %v2069
        %2649 = vmatmul.mubr.bf16.gmra.mxu0 %v2068
        %v2650 = vpop.f32.mrf.mxu0
        %v2651 = vadd.f32 %v2249, %v2650
        %v2652 = vpop.f32.mrf.mxu0
        %v2653 = vadd.f32 %v2253, %v2652
        %v2654 = vpop.f32.mrf.mxu0
        %v2655 = vadd.f32 %v2249, %v2654
        %v2656 = vpop.f32.mrf.mxu0
        %v2657 = vadd.f32 %v2253, %v2656
        %2658 = vmatprep.mubr.bf16.mxu0 %v2073
        %2659 = vmatmul.mubr.bf16.gmra.mxu0 %v2072
        %v2660 = vpop.f32.mrf.mxu0
        %v2661 = vadd.f32 %v2249, %v2660
        %v2662 = vpop.f32.mrf.mxu0
        %v2663 = vadd.f32 %v2253, %v2662
        %v2664 = vpop.f32.mrf.mxu0
        %v2665 = vadd.f32 %v2249, %v2664
        %v2666 = vpop.f32.mrf.mxu0
        %v2667 = vadd.f32 %v2253, %v2666
        %2668 = vmatprep.mubr.bf16.mxu0 %v2077
        %2669 = vmatmul.mubr.bf16.gmra.mxu0 %v2076
        %v2670 = vpop.f32.mrf.mxu0
        %v2671 = vadd.f32 %v2249, %v2670
        %v2672 = vpop.f32.mrf.mxu0
        %v2673 = vadd.f32 %v2253, %v2672
        %v2674 = vpop.f32.mrf.mxu0
        %v2675 = vadd.f32 %v2249, %v2674
        %v2676 = vpop.f32.mrf.mxu0
        %v2677 = vadd.f32 %v2253, %v2676
        %2678 = vmatprep.mubr.bf16.mxu0 %v2081
        %2679 = vmatmul.mubr.bf16.gmra.mxu0 %v2080
        %v2680 = vpop.f32.mrf.mxu0
        %v2681 = vadd.f32 %v2249, %v2680
        %v2682 = vpop.f32.mrf.mxu0
        %v2683 = vadd.f32 %v2253, %v2682
        %v2684 = vpop.f32.mrf.mxu0
        %v2685 = vadd.f32 %v2249, %v2684
        %v2686 = vpop.f32.mrf.mxu0
        %v2687 = vadd.f32 %v2253, %v2686
        %2688 = vmatprep.mubr.bf16.mxu0 %v2085
        %2689 = vmatmul.mubr.bf16.gmra.mxu0 %v2084
        %v2690 = vpop.f32.mrf.mxu0
        %v2691 = vadd.f32 %v2249, %v2690
        %v2692 = vpop.f32.mrf.mxu0
        %v2693 = vadd.f32 %v2253, %v2692
        %v2694 = vpop.f32.mrf.mxu0
        %v2695 = vadd.f32 %v2249, %v2694
        %v2696 = vpop.f32.mrf.mxu0
        %v2697 = vadd.f32 %v2253, %v2696
        %2698 = vmatprep.mubr.bf16.mxu0 %v2089
        %2699 = vmatmul.mubr.bf16.gmra.mxu0 %v2088
        %v2700 = vpop.f32.mrf.mxu0
        %v2701 = vadd.f32 %v2249, %v2700
        %v2702 = vpop.f32.mrf.mxu0
        %v2703 = vadd.f32 %v2253, %v2702
        %v2704 = vpop.f32.mrf.mxu0
        %v2705 = vadd.f32 %v2249, %v2704
        %v2706 = vpop.f32.mrf.mxu0
        %v2707 = vadd.f32 %v2253, %v2706
        %2708 = vmatprep.mubr.bf16.mxu0 %v2093
        %2709 = vmatmul.mubr.bf16.gmra.mxu0 %v2092
        %v2710 = vpop.f32.mrf.mxu0
        %v2711 = vadd.f32 %v2249, %v2710
        %v2712 = vpop.f32.mrf.mxu0
        %v2713 = vadd.f32 %v2253, %v2712
        %v2714 = vpop.f32.mrf.mxu0
        %v2715 = vadd.f32 %v2249, %v2714
        %v2716 = vpop.f32.mrf.mxu0
        %v2717 = vadd.f32 %v2253, %v2716
        %2718 = vmatprep.mubr.bf16.mxu0 %v2097
        %2719 = vmatmul.mubr.bf16.gmra.mxu0 %v2096
        %v2720 = vpop.f32.mrf.mxu0
        %v2721 = vadd.f32 %v2249, %v2720
        %v2722 = vpop.f32.mrf.mxu0
        %v2723 = vadd.f32 %v2253, %v2722
        %v2724 = vpop.f32.mrf.mxu0
        %v2725 = vadd.f32 %v2249, %v2724
        %v2726 = vpop.f32.mrf.mxu0
        %v2727 = vadd.f32 %v2253, %v2726
        %2728 = vmatprep.mubr.bf16.mxu0 %v2101
        %2729 = vmatmul.mubr.bf16.gmra.mxu0 %v2100
        %v2730 = vpop.f32.mrf.mxu0
        %v2731 = vadd.f32 %v2249, %v2730
        %v2732 = vpop.f32.mrf.mxu0
        %v2733 = vadd.f32 %v2253, %v2732
        %v2734 = vpop.f32.mrf.mxu0
        %v2735 = vadd.f32 %v2249, %v2734
        %v2736 = vpop.f32.mrf.mxu0
        %v2737 = vadd.f32 %v2253, %v2736
        %2738 = vmatprep.mubr.bf16.mxu0 %v2105
        %2739 = vmatmul.mubr.bf16.gmra.mxu0 %v2104
        %v2740 = vpop.f32.mrf.mxu0
        %v2741 = vadd.f32 %v2249, %v2740
        %v2742 = vpop.f32.mrf.mxu0
        %v2743 = vadd.f32 %v2253, %v2742
        %v2744 = vpop.f32.mrf.mxu0
        %v2745 = vadd.f32 %v2249, %v2744
        %v2746 = vpop.f32.mrf.mxu0
        %v2747 = vadd.f32 %v2253, %v2746
        %2748 = vmatprep.mubr.bf16.mxu0 %v2109
        %2749 = vmatmul.mubr.bf16.gmra.mxu0 %v2108
        %v2750 = vpop.f32.mrf.mxu0
        %v2751 = vadd.f32 %v2249, %v2750
        %v2752 = vpop.f32.mrf.mxu0
        %v2753 = vadd.f32 %v2253, %v2752
        %v2754 = vpop.f32.mrf.mxu0
        %v2755 = vadd.f32 %v2249, %v2754
        %v2756 = vpop.f32.mrf.mxu0
        %v2757 = vadd.f32 %v2253, %v2756
        %2758 = vmatprep.mubr.bf16.mxu0 %v2113
        %2759 = vmatmul.mubr.bf16.gmra.mxu0 %v2112
        %v2760 = vpop.f32.mrf.mxu0
        %v2761 = vadd.f32 %v2249, %v2760
        %v2762 = vpop.f32.mrf.mxu0
        %v2763 = vadd.f32 %v2253, %v2762
        %v2764 = vpop.f32.mrf.mxu0
        %v2765 = vadd.f32 %v2249, %v2764
        %v2766 = vpop.f32.mrf.mxu0
        %v2767 = vadd.f32 %v2253, %v2766
        %2768 = vmatprep.mubr.bf16.mxu0 %v2117
        %2769 = vmatmul.mubr.bf16.gmra.mxu0 %v2116
        %v2770 = vpop.f32.mrf.mxu0
        %v2771 = vadd.f32 %v2249, %v2770
        %v2772 = vpop.f32.mrf.mxu0
        %v2773 = vadd.f32 %v2253, %v2772
        %v2774 = vpop.f32.mrf.mxu0
        %v2775 = vadd.f32 %v2249, %v2774
        %v2776 = vpop.f32.mrf.mxu0
        %v2777 = vadd.f32 %v2253, %v2776
        %2778 = vmatprep.mubr.bf16.mxu0 %v2121
        %2779 = vmatmul.mubr.bf16.gmra.mxu0 %v2120
        %v2780 = vpop.f32.mrf.mxu0
        %v2781 = vadd.f32 %v2249, %v2780
        %v2782 = vpop.f32.mrf.mxu0
        %v2783 = vadd.f32 %v2253, %v2782
        %v2784 = vpop.f32.mrf.mxu0
        %v2785 = vadd.f32 %v2249, %v2784
        %v2786 = vpop.f32.mrf.mxu0
        %v2787 = vadd.f32 %v2253, %v2786
        %2788 = vmatprep.mubr.bf16.mxu0 %v2125
        %2789 = vmatmul.mubr.bf16.gmra.mxu0 %v2124
        %v2790 = vpop.f32.mrf.mxu0
        %v2791 = vadd.f32 %v2249, %v2790
        %v2792 = vpop.f32.mrf.mxu0
        %v2793 = vadd.f32 %v2253, %v2792
        %v2794 = vpop.f32.mrf.mxu0
        %v2795 = vadd.f32 %v2249, %v2794
        %v2796 = vpop.f32.mrf.mxu0
        %v2797 = vadd.f32 %v2253, %v2796
        %2798 = vmatprep.mubr.bf16.mxu0 %v2129
        %2799 = vmatmul.mubr.bf16.gmra.mxu0 %v2128
        %v2800 = vpop.f32.mrf.mxu0
        %v2801 = vadd.f32 %v2249, %v2800
        %v2802 = vpop.f32.mrf.mxu0
        %v2803 = vadd.f32 %v2253, %v2802
        %v2804 = vpop.f32.mrf.mxu0
        %v2805 = vadd.f32 %v2249, %v2804
        %v2806 = vpop.f32.mrf.mxu0
        %v2807 = vadd.f32 %v2253, %v2806
        %2808 = vmatprep.mubr.bf16.mxu0 %v2133
        %2809 = vmatmul.mubr.bf16.gmra.mxu0 %v2132
        %v2810 = vpop.f32.mrf.mxu0
        %v2811 = vadd.f32 %v2249, %v2810
        %v2812 = vpop.f32.mrf.mxu0
        %v2813 = vadd.f32 %v2253, %v2812
        %v2814 = vpop.f32.mrf.mxu0
        %v2815 = vadd.f32 %v2249, %v2814
        %v2816 = vpop.f32.mrf.mxu0
        %v2817 = vadd.f32 %v2253, %v2816
        %2818 = vmatprep.mubr.bf16.mxu0 %v2137
        %2819 = vmatmul.mubr.bf16.gmra.mxu0 %v2136
        %v2820 = vpop.f32.mrf.mxu0
        %v2821 = vadd.f32 %v2249, %v2820
        %v2822 = vpop.f32.mrf.mxu0
        %v2823 = vadd.f32 %v2253, %v2822
        %v2824 = vpop.f32.mrf.mxu0
        %v2825 = vadd.f32 %v2249, %v2824
        %v2826 = vpop.f32.mrf.mxu0
        %v2827 = vadd.f32 %v2253, %v2826
        %2828 = vmatprep.mubr.bf16.mxu0 %v2141
        %2829 = vmatmul.mubr.bf16.gmra.mxu0 %v2140
        %v2830 = vpop.f32.mrf.mxu0
        %v2831 = vadd.f32 %v2249, %v2830
        %v2832 = vpop.f32.mrf.mxu0
        %v2833 = vadd.f32 %v2253, %v2832
        %v2834 = vpop.f32.mrf.mxu0
        %v2835 = vadd.f32 %v2249, %v2834
        %v2836 = vpop.f32.mrf.mxu0
        %v2837 = vadd.f32 %v2253, %v2836
        %2838 = vmatprep.mubr.bf16.mxu0 %v2145
        %2839 = vmatmul.mubr.bf16.gmra.mxu0 %v2144
        %v2840 = vpop.f32.mrf.mxu0
        %v2841 = vadd.f32 %v2249, %v2840
        %v2842 = vpop.f32.mrf.mxu0
        %v2843 = vadd.f32 %v2253, %v2842
        %v2844 = vpop.f32.mrf.mxu0
        %v2845 = vadd.f32 %v2249, %v2844
        %v2846 = vpop.f32.mrf.mxu0
        %v2847 = vadd.f32 %v2253, %v2846
        %2848 = vmatprep.mubr.bf16.mxu0 %v2149
        %2849 = vmatmul.mubr.bf16.gmra.mxu0 %v2148
        %v2850 = vpop.f32.mrf.mxu0
        %v2851 = vadd.f32 %v2249, %v2850
        %v2852 = vpop.f32.mrf.mxu0
        %v2853 = vadd.f32 %v2253, %v2852
        %v2854 = vpop.f32.mrf.mxu0
        %v2855 = vadd.f32 %v2249, %v2854
        %v2856 = vpop.f32.mrf.mxu0
        %v2857 = vadd.f32 %v2253, %v2856
        %2858 = vmatprep.mubr.bf16.mxu0 %v2153
        %2859 = vmatmul.mubr.bf16.gmra.mxu0 %v2152
        %v2860 = vpop.f32.mrf.mxu0
        %v2861 = vadd.f32 %v2249, %v2860
        %v2862 = vpop.f32.mrf.mxu0
        %v2863 = vadd.f32 %v2253, %v2862
        %v2864 = vpop.f32.mrf.mxu0
        %v2865 = vadd.f32 %v2249, %v2864
        %v2866 = vpop.f32.mrf.mxu0
        %v2867 = vadd.f32 %v2253, %v2866
        %2868 = vmatprep.mubr.bf16.mxu0 %v2157
        %2869 = vmatmul.mubr.bf16.gmra.mxu0 %v2156
        %v2870 = vpop.f32.mrf.mxu0
        %v2871 = vadd.f32 %v2249, %v2870
        %v2872 = vpop.f32.mrf.mxu0
        %v2873 = vadd.f32 %v2253, %v2872
        %v2874 = vpop.f32.mrf.mxu0
        %v2875 = vadd.f32 %v2249, %v2874
        %v2876 = vpop.f32.mrf.mxu0
        %v2877 = vadd.f32 %v2253, %v2876
        %2878 = vmatprep.mubr.bf16.mxu0 %v2161
        %2879 = vmatmul.mubr.bf16.gmra.mxu0 %v2160
        %v2880 = vpop.f32.mrf.mxu0
        %v2881 = vadd.f32 %v2249, %v2880
        %v2882 = vpop.f32.mrf.mxu0
        %v2883 = vadd.f32 %v2253, %v2882
        %v2884 = vpop.f32.mrf.mxu0
        %v2885 = vadd.f32 %v2249, %v2884
        %v2886 = vpop.f32.mrf.mxu0
        %v2887 = vadd.f32 %v2253, %v2886
        %2888 = vmatprep.mubr.bf16.mxu0 %v2165
        %2889 = vmatmul.mubr.bf16.gmra.mxu0 %v2164
        %v2890 = vpop.f32.mrf.mxu0
        %v2891 = vadd.f32 %v2249, %v2890
        %v2892 = vpop.f32.mrf.mxu0
        %v2893 = vadd.f32 %v2253, %v2892
        %v2894 = vpop.f32.mrf.mxu0
        %v2895 = vadd.f32 %v2249, %v2894
        %v2896 = vpop.f32.mrf.mxu0
        %v2897 = vadd.f32 %v2253, %v2896
        %2898 = vmatprep.mubr.bf16.mxu0 %v2169
        %2899 = vmatmul.mubr.bf16.gmra.mxu0 %v2168
        %v2900 = vpop.f32.mrf.mxu0
        %v2901 = vadd.f32 %v2249, %v2900
        %v2902 = vpop.f32.mrf.mxu0
        %v2903 = vadd.f32 %v2253, %v2902
        %v2904 = vpop.f32.mrf.mxu0
        %v2905 = vadd.f32 %v2249, %v2904
        %v2906 = vpop.f32.mrf.mxu0
        %v2907 = vadd.f32 %v2253, %v2906
        %2908 = vmatprep.mubr.bf16.mxu0 %v2173
        %2909 = vmatmul.mubr.bf16.gmra.mxu0 %v2172
        %v2910 = vpop.f32.mrf.mxu0
        %v2911 = vadd.f32 %v2249, %v2910
        %v2912 = vpop.f32.mrf.mxu0
        %v2913 = vadd.f32 %v2253, %v2912
        %v2914 = vpop.f32.mrf.mxu0
        %v2915 = vadd.f32 %v2249, %v2914
        %v2916 = vpop.f32.mrf.mxu0
        %v2917 = vadd.f32 %v2253, %v2916
        %2918 = vmatprep.mubr.bf16.mxu0 %v2177
        %2919 = vmatmul.mubr.bf16.gmra.mxu0 %v2176
        %v2920 = vpop.f32.mrf.mxu0
        %v2921 = vadd.f32 %v2249, %v2920
        %v2922 = vpop.f32.mrf.mxu0
        %v2923 = vadd.f32 %v2253, %v2922
        %v2924 = vpop.f32.mrf.mxu0
        %v2925 = vadd.f32 %v2249, %v2924
        %v2926 = vpop.f32.mrf.mxu0
        %v2927 = vadd.f32 %v2253, %v2926
        %2928 = vdwg.mxu0
        %2929 = vmatprep.subr.bf16.mxu0 %v2495
        %2930 = vmatpush1.bf16.msra.mxu0 %v2494
        %2931 = vmatprep.subr.bf16.mxu0 %v2493
        %2932 = vmatpush1.bf16.msra.mxu0 %v2492
        %2933 = vmatprep.subr.bf16.mxu0 %v2491
        %2934 = vmatpush1.bf16.msra.mxu0 %v2490
        %2935 = vmatprep.subr.bf16.mxu0 %v2489
        %2936 = vmatpush1.bf16.msra.mxu0 %v2488
        %2937 = vmatprep.subr.bf16.mxu0 %v2487
        %2938 = vmatpush1.bf16.msra.mxu0 %v2486
        %2939 = vmatprep.subr.bf16.mxu0 %v2485
        %2940 = vmatpush1.bf16.msra.mxu0 %v2484
        %2941 = vmatprep.subr.bf16.mxu0 %v2483
        %2942 = vmatpush1.bf16.msra.mxu0 %v2482
        %2943 = vmatprep.subr.bf16.mxu0 %v2481
        %2944 = vmatpush1.bf16.msra.mxu0 %v2480
        %2945 = vmatprep.subr.bf16.mxu0 %v2511
        %2946 = vmatpush2.bf16.msra.mxu0 %v2510
        %2947 = vmatprep.subr.bf16.mxu0 %v2509
        %2948 = vmatpush2.bf16.msra.mxu0 %v2508
        %2949 = vmatprep.subr.bf16.mxu0 %v2507
        %2950 = vmatpush2.bf16.msra.mxu0 %v2506
        %2951 = vmatprep.subr.bf16.mxu0 %v2505
        %2952 = vmatpush2.bf16.msra.mxu0 %v2504
        %2953 = vmatprep.subr.bf16.mxu0 %v2503
        %2954 = vmatpush2.bf16.msra.mxu0 %v2502
        %2955 = vmatprep.subr.bf16.mxu0 %v2501
        %2956 = vmatpush2.bf16.msra.mxu0 %v2500
        %2957 = vmatprep.subr.bf16.mxu0 %v2499
        %2958 = vmatpush2.bf16.msra.mxu0 %v2498
        %2959 = vmatprep.subr.bf16.mxu0 %v2497
        %2960 = vmatpush2.bf16.msra.mxu0 %v2496
        %2961 = vmatprep.mubr.bf16.mxu0 %v2055
        %2962 = vmatmul.mubr.bf16.gmra.mxu0 %v2054
        %v2963 = vpop.f32.mrf.mxu0
        %v2964 = vadd.f32 %v2611, %v2963
        %v2965 = vpop.f32.mrf.mxu0
        %v2966 = vadd.f32 %v2613, %v2965
        %v2967 = vpop.f32.mrf.mxu0
        %v2968 = vadd.f32 %v2615, %v2967
        %v2969 = vpop.f32.mrf.mxu0
        %v2970 = vadd.f32 %v2617, %v2969
        %2971 = vmatprep.mubr.bf16.mxu0 %v2059
        %2972 = vmatmul.mubr.bf16.gmra.mxu0 %v2058
        %v2973 = vpop.f32.mrf.mxu0
        %v2974 = vadd.f32 %v2621, %v2973
        %v2975 = vpop.f32.mrf.mxu0
        %v2976 = vadd.f32 %v2623, %v2975
        %v2977 = vpop.f32.mrf.mxu0
        %v2978 = vadd.f32 %v2625, %v2977
        %v2979 = vpop.f32.mrf.mxu0
        %v2980 = vadd.f32 %v2627, %v2979
        %2981 = vmatprep.mubr.bf16.mxu0 %v2063
        %2982 = vmatmul.mubr.bf16.gmra.mxu0 %v2062
        %v2983 = vpop.f32.mrf.mxu0
        %v2984 = vadd.f32 %v2631, %v2983
        %v2985 = vpop.f32.mrf.mxu0
        %v2986 = vadd.f32 %v2633, %v2985
        %v2987 = vpop.f32.mrf.mxu0
        %v2988 = vadd.f32 %v2635, %v2987
        %v2989 = vpop.f32.mrf.mxu0
        %v2990 = vadd.f32 %v2637, %v2989
        %2991 = vmatprep.mubr.bf16.mxu0 %v2067
        %2992 = vmatmul.mubr.bf16.gmra.mxu0 %v2066
        %v2993 = vpop.f32.mrf.mxu0
        %v2994 = vadd.f32 %v2641, %v2993
        %v2995 = vpop.f32.mrf.mxu0
        %v2996 = vadd.f32 %v2643, %v2995
        %v2997 = vpop.f32.mrf.mxu0
        %v2998 = vadd.f32 %v2645, %v2997
        %v2999 = vpop.f32.mrf.mxu0
        %v3000 = vadd.f32 %v2647, %v2999
        %3001 = vmatprep.mubr.bf16.mxu0 %v2071
        %3002 = vmatmul.mubr.bf16.gmra.mxu0 %v2070
        %v3003 = vpop.f32.mrf.mxu0
        %v3004 = vadd.f32 %v2651, %v3003
        %v3005 = vpop.f32.mrf.mxu0
        %v3006 = vadd.f32 %v2653, %v3005
        %v3007 = vpop.f32.mrf.mxu0
        %v3008 = vadd.f32 %v2655, %v3007
        %v3009 = vpop.f32.mrf.mxu0
        %v3010 = vadd.f32 %v2657, %v3009
        %3011 = vmatprep.mubr.bf16.mxu0 %v2075
        %3012 = vmatmul.mubr.bf16.gmra.mxu0 %v2074
        %v3013 = vpop.f32.mrf.mxu0
        %v3014 = vadd.f32 %v2661, %v3013
        %v3015 = vpop.f32.mrf.mxu0
        %v3016 = vadd.f32 %v2663, %v3015
        %v3017 = vpop.f32.mrf.mxu0
        %v3018 = vadd.f32 %v2665, %v3017
        %v3019 = vpop.f32.mrf.mxu0
        %v3020 = vadd.f32 %v2667, %v3019
        %3021 = vmatprep.mubr.bf16.mxu0 %v2079
        %3022 = vmatmul.mubr.bf16.gmra.mxu0 %v2078
        %v3023 = vpop.f32.mrf.mxu0
        %v3024 = vadd.f32 %v2671, %v3023
        %v3025 = vpop.f32.mrf.mxu0
        %v3026 = vadd.f32 %v2673, %v3025
        %v3027 = vpop.f32.mrf.mxu0
        %v3028 = vadd.f32 %v2675, %v3027
        %v3029 = vpop.f32.mrf.mxu0
        %v3030 = vadd.f32 %v2677, %v3029
        %3031 = vmatprep.mubr.bf16.mxu0 %v2083
        %3032 = vmatmul.mubr.bf16.gmra.mxu0 %v2082
        %v3033 = vpop.f32.mrf.mxu0
        %v3034 = vadd.f32 %v2681, %v3033
        %v3035 = vpop.f32.mrf.mxu0
        %v3036 = vadd.f32 %v2683, %v3035
        %v3037 = vpop.f32.mrf.mxu0
        %v3038 = vadd.f32 %v2685, %v3037
        %v3039 = vpop.f32.mrf.mxu0
        %v3040 = vadd.f32 %v2687, %v3039
        %3041 = vmatprep.mubr.bf16.mxu0 %v2087
        %3042 = vmatmul.mubr.bf16.gmra.mxu0 %v2086
        %v3043 = vpop.f32.mrf.mxu0
        %v3044 = vadd.f32 %v2691, %v3043
        %v3045 = vpop.f32.mrf.mxu0
        %v3046 = vadd.f32 %v2693, %v3045
        %v3047 = vpop.f32.mrf.mxu0
        %v3048 = vadd.f32 %v2695, %v3047
        %v3049 = vpop.f32.mrf.mxu0
        %v3050 = vadd.f32 %v2697, %v3049
        %3051 = vmatprep.mubr.bf16.mxu0 %v2091
        %3052 = vmatmul.mubr.bf16.gmra.mxu0 %v2090
        %v3053 = vpop.f32.mrf.mxu0
        %v3054 = vadd.f32 %v2701, %v3053
        %v3055 = vpop.f32.mrf.mxu0
        %v3056 = vadd.f32 %v2703, %v3055
        %v3057 = vpop.f32.mrf.mxu0
        %v3058 = vadd.f32 %v2705, %v3057
        %v3059 = vpop.f32.mrf.mxu0
        %v3060 = vadd.f32 %v2707, %v3059
        %3061 = vmatprep.mubr.bf16.mxu0 %v2095
        %3062 = vmatmul.mubr.bf16.gmra.mxu0 %v2094
        %v3063 = vpop.f32.mrf.mxu0
        %v3064 = vadd.f32 %v2711, %v3063
        %v3065 = vpop.f32.mrf.mxu0
        %v3066 = vadd.f32 %v2713, %v3065
        %v3067 = vpop.f32.mrf.mxu0
        %v3068 = vadd.f32 %v2715, %v3067
        %v3069 = vpop.f32.mrf.mxu0
        %v3070 = vadd.f32 %v2717, %v3069
        %3071 = vmatprep.mubr.bf16.mxu0 %v2099
        %3072 = vmatmul.mubr.bf16.gmra.mxu0 %v2098
        %v3073 = vpop.f32.mrf.mxu0
        %v3074 = vadd.f32 %v2721, %v3073
        %v3075 = vpop.f32.mrf.mxu0
        %v3076 = vadd.f32 %v2723, %v3075
        %v3077 = vpop.f32.mrf.mxu0
        %v3078 = vadd.f32 %v2725, %v3077
        %v3079 = vpop.f32.mrf.mxu0
        %v3080 = vadd.f32 %v2727, %v3079
        %3081 = vmatprep.mubr.bf16.mxu0 %v2103
        %3082 = vmatmul.mubr.bf16.gmra.mxu0 %v2102
        %v3083 = vpop.f32.mrf.mxu0
        %v3084 = vadd.f32 %v2731, %v3083
        %v3085 = vpop.f32.mrf.mxu0
        %v3086 = vadd.f32 %v2733, %v3085
        %v3087 = vpop.f32.mrf.mxu0
        %v3088 = vadd.f32 %v2735, %v3087
        %v3089 = vpop.f32.mrf.mxu0
        %v3090 = vadd.f32 %v2737, %v3089
        %3091 = vmatprep.mubr.bf16.mxu0 %v2107
        %3092 = vmatmul.mubr.bf16.gmra.mxu0 %v2106
        %v3093 = vpop.f32.mrf.mxu0
        %v3094 = vadd.f32 %v2741, %v3093
        %v3095 = vpop.f32.mrf.mxu0
        %v3096 = vadd.f32 %v2743, %v3095
        %v3097 = vpop.f32.mrf.mxu0
        %v3098 = vadd.f32 %v2745, %v3097
        %v3099 = vpop.f32.mrf.mxu0
        %v3100 = vadd.f32 %v2747, %v3099
        %3101 = vmatprep.mubr.bf16.mxu0 %v2111
        %3102 = vmatmul.mubr.bf16.gmra.mxu0 %v2110
        %v3103 = vpop.f32.mrf.mxu0
        %v3104 = vadd.f32 %v2751, %v3103
        %v3105 = vpop.f32.mrf.mxu0
        %v3106 = vadd.f32 %v2753, %v3105
        %v3107 = vpop.f32.mrf.mxu0
        %v3108 = vadd.f32 %v2755, %v3107
        %v3109 = vpop.f32.mrf.mxu0
        %v3110 = vadd.f32 %v2757, %v3109
        %3111 = vmatprep.mubr.bf16.mxu0 %v2115
        %3112 = vmatmul.mubr.bf16.gmra.mxu0 %v2114
        %v3113 = vpop.f32.mrf.mxu0
        %v3114 = vadd.f32 %v2761, %v3113
        %v3115 = vpop.f32.mrf.mxu0
        %v3116 = vadd.f32 %v2763, %v3115
        %v3117 = vpop.f32.mrf.mxu0
        %v3118 = vadd.f32 %v2765, %v3117
        %v3119 = vpop.f32.mrf.mxu0
        %v3120 = vadd.f32 %v2767, %v3119
        %3121 = vmatprep.mubr.bf16.mxu0 %v2119
        %3122 = vmatmul.mubr.bf16.gmra.mxu0 %v2118
        %v3123 = vpop.f32.mrf.mxu0
        %v3124 = vadd.f32 %v2771, %v3123
        %v3125 = vpop.f32.mrf.mxu0
        %v3126 = vadd.f32 %v2773, %v3125
        %v3127 = vpop.f32.mrf.mxu0
        %v3128 = vadd.f32 %v2775, %v3127
        %v3129 = vpop.f32.mrf.mxu0
        %v3130 = vadd.f32 %v2777, %v3129
        %3131 = vmatprep.mubr.bf16.mxu0 %v2123
        %3132 = vmatmul.mubr.bf16.gmra.mxu0 %v2122
        %v3133 = vpop.f32.mrf.mxu0
        %v3134 = vadd.f32 %v2781, %v3133
        %v3135 = vpop.f32.mrf.mxu0
        %v3136 = vadd.f32 %v2783, %v3135
        %v3137 = vpop.f32.mrf.mxu0
        %v3138 = vadd.f32 %v2785, %v3137
        %v3139 = vpop.f32.mrf.mxu0
        %v3140 = vadd.f32 %v2787, %v3139
        %3141 = vmatprep.mubr.bf16.mxu0 %v2127
        %3142 = vmatmul.mubr.bf16.gmra.mxu0 %v2126
        %v3143 = vpop.f32.mrf.mxu0
        %v3144 = vadd.f32 %v2791, %v3143
        %v3145 = vpop.f32.mrf.mxu0
        %v3146 = vadd.f32 %v2793, %v3145
        %v3147 = vpop.f32.mrf.mxu0
        %v3148 = vadd.f32 %v2795, %v3147
        %v3149 = vpop.f32.mrf.mxu0
        %v3150 = vadd.f32 %v2797, %v3149
        %3151 = vmatprep.mubr.bf16.mxu0 %v2131
        %3152 = vmatmul.mubr.bf16.gmra.mxu0 %v2130
        %v3153 = vpop.f32.mrf.mxu0
        %v3154 = vadd.f32 %v2801, %v3153
        %v3155 = vpop.f32.mrf.mxu0
        %v3156 = vadd.f32 %v2803, %v3155
        %v3157 = vpop.f32.mrf.mxu0
        %v3158 = vadd.f32 %v2805, %v3157
        %v3159 = vpop.f32.mrf.mxu0
        %v3160 = vadd.f32 %v2807, %v3159
        %3161 = vmatprep.mubr.bf16.mxu0 %v2135
        %3162 = vmatmul.mubr.bf16.gmra.mxu0 %v2134
        %v3163 = vpop.f32.mrf.mxu0
        %v3164 = vadd.f32 %v2811, %v3163
        %v3165 = vpop.f32.mrf.mxu0
        %v3166 = vadd.f32 %v2813, %v3165
        %v3167 = vpop.f32.mrf.mxu0
        %v3168 = vadd.f32 %v2815, %v3167
        %v3169 = vpop.f32.mrf.mxu0
        %v3170 = vadd.f32 %v2817, %v3169
        %3171 = vmatprep.mubr.bf16.mxu0 %v2139
        %3172 = vmatmul.mubr.bf16.gmra.mxu0 %v2138
        %v3173 = vpop.f32.mrf.mxu0
        %v3174 = vadd.f32 %v2821, %v3173
        %v3175 = vpop.f32.mrf.mxu0
        %v3176 = vadd.f32 %v2823, %v3175
        %v3177 = vpop.f32.mrf.mxu0
        %v3178 = vadd.f32 %v2825, %v3177
        %v3179 = vpop.f32.mrf.mxu0
        %v3180 = vadd.f32 %v2827, %v3179
        %3181 = vmatprep.mubr.bf16.mxu0 %v2143
        %3182 = vmatmul.mubr.bf16.gmra.mxu0 %v2142
        %v3183 = vpop.f32.mrf.mxu0
        %v3184 = vadd.f32 %v2831, %v3183
        %v3185 = vpop.f32.mrf.mxu0
        %v3186 = vadd.f32 %v2833, %v3185
        %v3187 = vpop.f32.mrf.mxu0
        %v3188 = vadd.f32 %v2835, %v3187
        %v3189 = vpop.f32.mrf.mxu0
        %v3190 = vadd.f32 %v2837, %v3189
        %3191 = vmatprep.mubr.bf16.mxu0 %v2147
        %3192 = vmatmul.mubr.bf16.gmra.mxu0 %v2146
        %v3193 = vpop.f32.mrf.mxu0
        %v3194 = vadd.f32 %v2841, %v3193
        %v3195 = vpop.f32.mrf.mxu0
        %v3196 = vadd.f32 %v2843, %v3195
        %v3197 = vpop.f32.mrf.mxu0
        %v3198 = vadd.f32 %v2845, %v3197
        %v3199 = vpop.f32.mrf.mxu0
        %v3200 = vadd.f32 %v2847, %v3199
        %3201 = vmatprep.mubr.bf16.mxu0 %v2151
        %3202 = vmatmul.mubr.bf16.gmra.mxu0 %v2150
        %v3203 = vpop.f32.mrf.mxu0
        %v3204 = vadd.f32 %v2851, %v3203
        %v3205 = vpop.f32.mrf.mxu0
        %v3206 = vadd.f32 %v2853, %v3205
        %v3207 = vpop.f32.mrf.mxu0
        %v3208 = vadd.f32 %v2855, %v3207
        %v3209 = vpop.f32.mrf.mxu0
        %v3210 = vadd.f32 %v2857, %v3209
        %3211 = vmatprep.mubr.bf16.mxu0 %v2155
        %3212 = vmatmul.mubr.bf16.gmra.mxu0 %v2154
        %v3213 = vpop.f32.mrf.mxu0
        %v3214 = vadd.f32 %v2861, %v3213
        %v3215 = vpop.f32.mrf.mxu0
        %v3216 = vadd.f32 %v2863, %v3215
        %v3217 = vpop.f32.mrf.mxu0
        %v3218 = vadd.f32 %v2865, %v3217
        %v3219 = vpop.f32.mrf.mxu0
        %v3220 = vadd.f32 %v2867, %v3219
        %3221 = vmatprep.mubr.bf16.mxu0 %v2159
        %3222 = vmatmul.mubr.bf16.gmra.mxu0 %v2158
        %v3223 = vpop.f32.mrf.mxu0
        %v3224 = vadd.f32 %v2871, %v3223
        %v3225 = vpop.f32.mrf.mxu0
        %v3226 = vadd.f32 %v2873, %v3225
        %v3227 = vpop.f32.mrf.mxu0
        %v3228 = vadd.f32 %v2875, %v3227
        %v3229 = vpop.f32.mrf.mxu0
        %v3230 = vadd.f32 %v2877, %v3229
        %3231 = vmatprep.mubr.bf16.mxu0 %v2163
        %3232 = vmatmul.mubr.bf16.gmra.mxu0 %v2162
        %v3233 = vpop.f32.mrf.mxu0
        %v3234 = vadd.f32 %v2881, %v3233
        %v3235 = vpop.f32.mrf.mxu0
        %v3236 = vadd.f32 %v2883, %v3235
        %v3237 = vpop.f32.mrf.mxu0
        %v3238 = vadd.f32 %v2885, %v3237
        %v3239 = vpop.f32.mrf.mxu0
        %v3240 = vadd.f32 %v2887, %v3239
        %3241 = vmatprep.mubr.bf16.mxu0 %v2167
        %3242 = vmatmul.mubr.bf16.gmra.mxu0 %v2166
        %v3243 = vpop.f32.mrf.mxu0
        %v3244 = vadd.f32 %v2891, %v3243
        %v3245 = vpop.f32.mrf.mxu0
        %v3246 = vadd.f32 %v2893, %v3245
        %v3247 = vpop.f32.mrf.mxu0
        %v3248 = vadd.f32 %v2895, %v3247
        %v3249 = vpop.f32.mrf.mxu0
        %v3250 = vadd.f32 %v2897, %v3249
        %3251 = vmatprep.mubr.bf16.mxu0 %v2171
        %3252 = vmatmul.mubr.bf16.gmra.mxu0 %v2170
        %v3253 = vpop.f32.mrf.mxu0
        %v3254 = vadd.f32 %v2901, %v3253
        %v3255 = vpop.f32.mrf.mxu0
        %v3256 = vadd.f32 %v2903, %v3255
        %v3257 = vpop.f32.mrf.mxu0
        %v3258 = vadd.f32 %v2905, %v3257
        %v3259 = vpop.f32.mrf.mxu0
        %v3260 = vadd.f32 %v2907, %v3259
        %3261 = vmatprep.mubr.bf16.mxu0 %v2175
        %3262 = vmatmul.mubr.bf16.gmra.mxu0 %v2174
        %v3263 = vpop.f32.mrf.mxu0
        %v3264 = vadd.f32 %v2911, %v3263
        %v3265 = vpop.f32.mrf.mxu0
        %v3266 = vadd.f32 %v2913, %v3265
        %v3267 = vpop.f32.mrf.mxu0
        %v3268 = vadd.f32 %v2915, %v3267
        %v3269 = vpop.f32.mrf.mxu0
        %v3270 = vadd.f32 %v2917, %v3269
        %3271 = vmatprep.mubr.bf16.mxu0 %v2179
        %3272 = vmatmul.mubr.bf16.gmra.mxu0 %v2178
        %v3273 = vpop.f32.mrf.mxu0
        %v3274 = vadd.f32 %v2921, %v3273
        %v3275 = vpop.f32.mrf.mxu0
        %v3276 = vadd.f32 %v2923, %v3275
        %v3277 = vpop.f32.mrf.mxu0
        %v3278 = vadd.f32 %v2925, %v3277
        %v3279 = vpop.f32.mrf.mxu0
        %v3280 = vadd.f32 %v2927, %v3279
        %3281 = vdwg.mxu0
        %v3282 = vpack.c.bf16 %v2968, %v2964
        %v3283 = vpack.c.bf16 %v2970, %v2966
        %v3284 = vpack.c.bf16 %v2978, %v2974
        %v3285 = vpack.c.bf16 %v2980, %v2976
        %v3286 = vpack.c.bf16 %v2988, %v2984
        %v3287 = vpack.c.bf16 %v2990, %v2986
        %v3288 = vpack.c.bf16 %v2998, %v2994
        %v3289 = vpack.c.bf16 %v3000, %v2996
        %v3290 = vpack.c.bf16 %v3008, %v3004
        %v3291 = vpack.c.bf16 %v3010, %v3006
        %v3292 = vpack.c.bf16 %v3018, %v3014
        %v3293 = vpack.c.bf16 %v3020, %v3016
        %v3294 = vpack.c.bf16 %v3028, %v3024
        %v3295 = vpack.c.bf16 %v3030, %v3026
        %v3296 = vpack.c.bf16 %v3038, %v3034
        %v3297 = vpack.c.bf16 %v3040, %v3036
        %v3298 = vpack.c.bf16 %v3048, %v3044
        %v3299 = vpack.c.bf16 %v3050, %v3046
        %v3300 = vpack.c.bf16 %v3058, %v3054
        %v3301 = vpack.c.bf16 %v3060, %v3056
        %v3302 = vpack.c.bf16 %v3068, %v3064
        %v3303 = vpack.c.bf16 %v3070, %v3066
        %v3304 = vpack.c.bf16 %v3078, %v3074
        %v3305 = vpack.c.bf16 %v3080, %v3076
        %v3306 = vpack.c.bf16 %v3088, %v3084
        %v3307 = vpack.c.bf16 %v3090, %v3086
        %v3308 = vpack.c.bf16 %v3098, %v3094
        %v3309 = vpack.c.bf16 %v3100, %v3096
        %v3310 = vpack.c.bf16 %v3108, %v3104
        %v3311 = vpack.c.bf16 %v3110, %v3106
        %v3312 = vpack.c.bf16 %v3118, %v3114
        %v3313 = vpack.c.bf16 %v3120, %v3116
        %v3314 = vpack.c.bf16 %v3128, %v3124
        %v3315 = vpack.c.bf16 %v3130, %v3126
        %v3316 = vpack.c.bf16 %v3138, %v3134
        %v3317 = vpack.c.bf16 %v3140, %v3136
        %v3318 = vpack.c.bf16 %v3148, %v3144
        %v3319 = vpack.c.bf16 %v3150, %v3146
        %v3320 = vpack.c.bf16 %v3158, %v3154
        %v3321 = vpack.c.bf16 %v3160, %v3156
        %v3322 = vpack.c.bf16 %v3168, %v3164
        %v3323 = vpack.c.bf16 %v3170, %v3166
        %v3324 = vpack.c.bf16 %v3178, %v3174
        %v3325 = vpack.c.bf16 %v3180, %v3176
        %v3326 = vpack.c.bf16 %v3188, %v3184
        %v3327 = vpack.c.bf16 %v3190, %v3186
        %v3328 = vpack.c.bf16 %v3198, %v3194
        %v3329 = vpack.c.bf16 %v3200, %v3196
        %v3330 = vpack.c.bf16 %v3208, %v3204
        %v3331 = vpack.c.bf16 %v3210, %v3206
        %v3332 = vpack.c.bf16 %v3218, %v3214
        %v3333 = vpack.c.bf16 %v3220, %v3216
        %v3334 = vpack.c.bf16 %v3228, %v3224
        %v3335 = vpack.c.bf16 %v3230, %v3226
        %v3336 = vpack.c.bf16 %v3238, %v3234
        %v3337 = vpack.c.bf16 %v3240, %v3236
        %v3338 = vpack.c.bf16 %v3248, %v3244
        %v3339 = vpack.c.bf16 %v3250, %v3246
        %v3340 = vpack.c.bf16 %v3258, %v3254
        %v3341 = vpack.c.bf16 %v3260, %v3256
        %v3342 = vpack.c.bf16 %v3268, %v3264
        %v3343 = vpack.c.bf16 %v3270, %v3266
        %v3344 = vpack.c.bf16 %v3278, %v3274
        %v3345 = vpack.c.bf16 %v3280, %v3276
        %v3410 = vunpack.c.l.b16 %v3282
        %v3411 = vunpack.c.l.b16 %v3283
        %v3412 = vunpack.c.h.b16 %v3282
        %v3413 = vunpack.c.h.b16 %v3283
        %v3414 = vunpack.c.l.b16 %v3284
        %v3415 = vunpack.c.l.b16 %v3285
        %v3416 = vunpack.c.h.b16 %v3284
        %v3417 = vunpack.c.h.b16 %v3285
        %v3418 = vunpack.c.l.b16 %v3286
        %v3419 = vunpack.c.l.b16 %v3287
        %v3420 = vunpack.c.h.b16 %v3286
        %v3421 = vunpack.c.h.b16 %v3287
        %v3422 = vunpack.c.l.b16 %v3288
        %v3423 = vunpack.c.l.b16 %v3289
        %v3424 = vunpack.c.h.b16 %v3288
        %v3425 = vunpack.c.h.b16 %v3289
        %v3426 = vunpack.c.l.b16 %v3290
        %v3427 = vunpack.c.l.b16 %v3291
        %v3428 = vunpack.c.h.b16 %v3290
        %v3429 = vunpack.c.h.b16 %v3291
        %v3430 = vunpack.c.l.b16 %v3292
        %v3431 = vunpack.c.l.b16 %v3293
        %v3432 = vunpack.c.h.b16 %v3292
        %v3433 = vunpack.c.h.b16 %v3293
        %v3434 = vunpack.c.l.b16 %v3294
        %v3435 = vunpack.c.l.b16 %v3295
        %v3436 = vunpack.c.h.b16 %v3294
        %v3437 = vunpack.c.h.b16 %v3295
        %v3438 = vunpack.c.l.b16 %v3296
        %v3439 = vunpack.c.l.b16 %v3297
        %v3440 = vunpack.c.h.b16 %v3296
        %v3441 = vunpack.c.h.b16 %v3297
        %v3442 = vunpack.c.l.b16 %v3298
        %v3443 = vunpack.c.l.b16 %v3299
        %v3444 = vunpack.c.h.b16 %v3298
        %v3445 = vunpack.c.h.b16 %v3299
        %v3446 = vunpack.c.l.b16 %v3300
        %v3447 = vunpack.c.l.b16 %v3301
        %v3448 = vunpack.c.h.b16 %v3300
        %v3449 = vunpack.c.h.b16 %v3301
        %v3450 = vunpack.c.l.b16 %v3302
        %v3451 = vunpack.c.l.b16 %v3303
        %v3452 = vunpack.c.h.b16 %v3302
        %v3453 = vunpack.c.h.b16 %v3303
        %v3454 = vunpack.c.l.b16 %v3304
        %v3455 = vunpack.c.l.b16 %v3305
        %v3456 = vunpack.c.h.b16 %v3304
        %v3457 = vunpack.c.h.b16 %v3305
        %v3458 = vunpack.c.l.b16 %v3306
        %v3459 = vunpack.c.l.b16 %v3307
        %v3460 = vunpack.c.h.b16 %v3306
        %v3461 = vunpack.c.h.b16 %v3307
        %v3462 = vunpack.c.l.b16 %v3308
        %v3463 = vunpack.c.l.b16 %v3309
        %v3464 = vunpack.c.h.b16 %v3308
        %v3465 = vunpack.c.h.b16 %v3309
        %v3466 = vunpack.c.l.b16 %v3310
        %v3467 = vunpack.c.l.b16 %v3311
        %v3468 = vunpack.c.h.b16 %v3310
        %v3469 = vunpack.c.h.b16 %v3311
        %v3470 = vunpack.c.l.b16 %v3312
        %v3471 = vunpack.c.l.b16 %v3313
        %v3472 = vunpack.c.h.b16 %v3312
        %v3473 = vunpack.c.h.b16 %v3313
        %v3474 = vunpack.c.l.b16 %v3314
        %v3475 = vunpack.c.l.b16 %v3315
        %v3476 = vunpack.c.h.b16 %v3314
        %v3477 = vunpack.c.h.b16 %v3315
        %v3478 = vunpack.c.l.b16 %v3316
        %v3479 = vunpack.c.l.b16 %v3317
        %v3480 = vunpack.c.h.b16 %v3316
        %v3481 = vunpack.c.h.b16 %v3317
        %v3482 = vunpack.c.l.b16 %v3318
        %v3483 = vunpack.c.l.b16 %v3319
        %v3484 = vunpack.c.h.b16 %v3318
        %v3485 = vunpack.c.h.b16 %v3319
        %v3486 = vunpack.c.l.b16 %v3320
        %v3487 = vunpack.c.l.b16 %v3321
        %v3488 = vunpack.c.h.b16 %v3320
        %v3489 = vunpack.c.h.b16 %v3321
        %v3490 = vunpack.c.l.b16 %v3322
        %v3491 = vunpack.c.l.b16 %v3323
        %v3492 = vunpack.c.h.b16 %v3322
        %v3493 = vunpack.c.h.b16 %v3323
        %v3494 = vunpack.c.l.b16 %v3324
        %v3495 = vunpack.c.l.b16 %v3325
        %v3496 = vunpack.c.h.b16 %v3324
        %v3497 = vunpack.c.h.b16 %v3325
        %v3498 = vunpack.c.l.b16 %v3326
        %v3499 = vunpack.c.l.b16 %v3327
        %v3500 = vunpack.c.h.b16 %v3326
        %v3501 = vunpack.c.h.b16 %v3327
        %v3502 = vunpack.c.l.b16 %v3328
        %v3503 = vunpack.c.l.b16 %v3329
        %v3504 = vunpack.c.h.b16 %v3328
        %v3505 = vunpack.c.h.b16 %v3329
        %v3506 = vunpack.c.l.b16 %v3330
        %v3507 = vunpack.c.l.b16 %v3331
        %v3508 = vunpack.c.h.b16 %v3330
        %v3509 = vunpack.c.h.b16 %v3331
        %v3510 = vunpack.c.l.b16 %v3332
        %v3511 = vunpack.c.l.b16 %v3333
        %v3512 = vunpack.c.h.b16 %v3332
        %v3513 = vunpack.c.h.b16 %v3333
        %v3514 = vunpack.c.l.b16 %v3334
        %v3515 = vunpack.c.l.b16 %v3335
        %v3516 = vunpack.c.h.b16 %v3334
        %v3517 = vunpack.c.h.b16 %v3335
        %v3518 = vunpack.c.l.b16 %v3336
        %v3519 = vunpack.c.l.b16 %v3337
        %v3520 = vunpack.c.h.b16 %v3336
        %v3521 = vunpack.c.h.b16 %v3337
        %v3522 = vunpack.c.l.b16 %v3338
        %v3523 = vunpack.c.l.b16 %v3339
        %v3524 = vunpack.c.h.b16 %v3338
        %v3525 = vunpack.c.h.b16 %v3339
        %v3526 = vunpack.c.l.b16 %v3340
        %v3527 = vunpack.c.l.b16 %v3341
        %v3528 = vunpack.c.h.b16 %v3340
        %v3529 = vunpack.c.h.b16 %v3341
        %v3530 = vunpack.c.l.b16 %v3342
        %v3531 = vunpack.c.l.b16 %v3343
        %v3532 = vunpack.c.h.b16 %v3342
        %v3533 = vunpack.c.h.b16 %v3343
        %v3534 = vunpack.c.l.b16 %v3344
        %v3535 = vunpack.c.l.b16 %v3345
        %v3536 = vunpack.c.h.b16 %v3344
        %v3537 = vunpack.c.h.b16 %v3345
        %v3538 = vpack.c.b16 %v3411, %v3410
        %v3539 = vpack.c.b16 %v3413, %v3412
        %v3540 = vpack.c.b16 %v3415, %v3414
        %v3541 = vpack.c.b16 %v3417, %v3416
        %v3542 = vpack.c.b16 %v3419, %v3418
        %v3543 = vpack.c.b16 %v3421, %v3420
        %v3544 = vpack.c.b16 %v3423, %v3422
        %v3545 = vpack.c.b16 %v3425, %v3424
        %v3546 = vpack.c.b16 %v3427, %v3426
        %v3547 = vpack.c.b16 %v3429, %v3428
        %v3548 = vpack.c.b16 %v3431, %v3430
        %v3549 = vpack.c.b16 %v3433, %v3432
        %v3550 = vpack.c.b16 %v3435, %v3434
        %v3551 = vpack.c.b16 %v3437, %v3436
        %v3552 = vpack.c.b16 %v3439, %v3438
        %v3553 = vpack.c.b16 %v3441, %v3440
        %v3554 = vpack.c.b16 %v3443, %v3442
        %v3555 = vpack.c.b16 %v3445, %v3444
        %v3556 = vpack.c.b16 %v3447, %v3446
        %v3557 = vpack.c.b16 %v3449, %v3448
        %v3558 = vpack.c.b16 %v3451, %v3450
        %v3559 = vpack.c.b16 %v3453, %v3452
        %v3560 = vpack.c.b16 %v3455, %v3454
        %v3561 = vpack.c.b16 %v3457, %v3456
        %v3562 = vpack.c.b16 %v3459, %v3458
        %v3563 = vpack.c.b16 %v3461, %v3460
        %v3564 = vpack.c.b16 %v3463, %v3462
        %v3565 = vpack.c.b16 %v3465, %v3464
        %v3566 = vpack.c.b16 %v3467, %v3466
        %v3567 = vpack.c.b16 %v3469, %v3468
        %v3568 = vpack.c.b16 %v3471, %v3470
        %v3569 = vpack.c.b16 %v3473, %v3472
        %v3570 = vpack.c.b16 %v3475, %v3474
        %v3571 = vpack.c.b16 %v3477, %v3476
        %v3572 = vpack.c.b16 %v3479, %v3478
        %v3573 = vpack.c.b16 %v3481, %v3480
        %v3574 = vpack.c.b16 %v3483, %v3482
        %v3575 = vpack.c.b16 %v3485, %v3484
        %v3576 = vpack.c.b16 %v3487, %v3486
        %v3577 = vpack.c.b16 %v3489, %v3488
        %v3578 = vpack.c.b16 %v3491, %v3490
        %v3579 = vpack.c.b16 %v3493, %v3492
        %v3580 = vpack.c.b16 %v3495, %v3494
        %v3581 = vpack.c.b16 %v3497, %v3496
        %v3582 = vpack.c.b16 %v3499, %v3498
        %v3583 = vpack.c.b16 %v3501, %v3500
        %v3584 = vpack.c.b16 %v3503, %v3502
        %v3585 = vpack.c.b16 %v3505, %v3504
        %v3586 = vpack.c.b16 %v3507, %v3506
        %v3587 = vpack.c.b16 %v3509, %v3508
        %v3588 = vpack.c.b16 %v3511, %v3510
        %v3589 = vpack.c.b16 %v3513, %v3512
        %v3590 = vpack.c.b16 %v3515, %v3514
        %v3591 = vpack.c.b16 %v3517, %v3516
        %v3592 = vpack.c.b16 %v3519, %v3518
        %v3593 = vpack.c.b16 %v3521, %v3520
        %v3594 = vpack.c.b16 %v3523, %v3522
        %v3595 = vpack.c.b16 %v3525, %v3524
        %v3596 = vpack.c.b16 %v3527, %v3526
        %v3597 = vpack.c.b16 %v3529, %v3528
        %v3598 = vpack.c.b16 %v3531, %v3530
        %v3599 = vpack.c.b16 %v3533, %v3532
        %v3600 = vpack.c.b16 %v3535, %v3534
        %v3601 = vpack.c.b16 %v3537, %v3536
        %3666 = vst [vmem:[%s297] sm:$0xff] %v3538
        %3667 = vst [vmem:[%s297 + $0x8] sm:$0xff] %v3539
        %3668 = vst [vmem:[%s297 + $0x10] sm:$0xff] %v3540
        %3669 = vst [vmem:[%s297 + $0x18] sm:$0xff] %v3541
        %3670 = vst [vmem:[%s297 + $0x20] sm:$0xff] %v3542
        %3671 = vst [vmem:[%s297 + $0x28] sm:$0xff] %v3543
        %3672 = vst [vmem:[%s297 + $0x30] sm:$0xff] %v3544
        %3673 = vst [vmem:[%s297 + $0x38] sm:$0xff] %v3545
        %3674 = vst [vmem:[%s297 + $0x40] sm:$0xff] %v3546
        %3675 = vst [vmem:[%s297 + $0x48] sm:$0xff] %v3547
        %3676 = vst [vmem:[%s297 + $0x50] sm:$0xff] %v3548
        %3677 = vst [vmem:[%s297 + $0x58] sm:$0xff] %v3549
        %3678 = vst [vmem:[%s297 + $0x60] sm:$0xff] %v3550
        %3679 = vst [vmem:[%s297 + $0x68] sm:$0xff] %v3551
        %3680 = vst [vmem:[%s297 + $0x70] sm:$0xff] %v3552
        %3681 = vst [vmem:[%s297 + $0x78] sm:$0xff] %v3553
        %3682 = vst [vmem:[%s297 + $0x80] sm:$0xff] %v3554
        %3683 = vst [vmem:[%s297 + $0x88] sm:$0xff] %v3555
        %3684 = vst [vmem:[%s297 + $0x90] sm:$0xff] %v3556
        %3685 = vst [vmem:[%s297 + $0x98] sm:$0xff] %v3557
        %3686 = vst [vmem:[%s297 + $0xa0] sm:$0xff] %v3558
        %3687 = vst [vmem:[%s297 + $0xa8] sm:$0xff] %v3559
        %3688 = vst [vmem:[%s297 + $0xb0] sm:$0xff] %v3560
        %3689 = vst [vmem:[%s297 + $0xb8] sm:$0xff] %v3561
        %3690 = vst [vmem:[%s297 + $0xc0] sm:$0xff] %v3562
        %3691 = vst [vmem:[%s297 + $0xc8] sm:$0xff] %v3563
        %3692 = vst [vmem:[%s297 + $0xd0] sm:$0xff] %v3564
        %3693 = vst [vmem:[%s297 + $0xd8] sm:$0xff] %v3565
        %3694 = vst [vmem:[%s297 + $0xe0] sm:$0xff] %v3566
        %3695 = vst [vmem:[%s297 + $0xe8] sm:$0xff] %v3567
        %3696 = vst [vmem:[%s297 + $0xf0] sm:$0xff] %v3568
        %3697 = vst [vmem:[%s297 + $0xf8] sm:$0xff] %v3569
        %3698 = vst [vmem:[%s297 + $0x100] sm:$0xff] %v3570
        %3699 = vst [vmem:[%s297 + $0x108] sm:$0xff] %v3571
        %3700 = vst [vmem:[%s297 + $0x110] sm:$0xff] %v3572
        %3701 = vst [vmem:[%s297 + $0x118] sm:$0xff] %v3573
        %3702 = vst [vmem:[%s297 + $0x120] sm:$0xff] %v3574
        %3703 = vst [vmem:[%s297 + $0x128] sm:$0xff] %v3575
        %3704 = vst [vmem:[%s297 + $0x130] sm:$0xff] %v3576
        %3705 = vst [vmem:[%s297 + $0x138] sm:$0xff] %v3577
        %3706 = vst [vmem:[%s297 + $0x140] sm:$0xff] %v3578
        %3707 = vst [vmem:[%s297 + $0x148] sm:$0xff] %v3579
        %3708 = vst [vmem:[%s297 + $0x150] sm:$0xff] %v3580
        %3709 = vst [vmem:[%s297 + $0x158] sm:$0xff] %v3581
        %3710 = vst [vmem:[%s297 + $0x160] sm:$0xff] %v3582
        %3711 = vst [vmem:[%s297 + $0x168] sm:$0xff] %v3583
        %3712 = vst [vmem:[%s297 + $0x170] sm:$0xff] %v3584
        %3713 = vst [vmem:[%s297 + $0x178] sm:$0xff] %v3585
        %3714 = vst [vmem:[%s297 + $0x180] sm:$0xff] %v3586
        %3715 = vst [vmem:[%s297 + $0x188] sm:$0xff] %v3587
        %3716 = vst [vmem:[%s297 + $0x190] sm:$0xff] %v3588
        %3717 = vst [vmem:[%s297 + $0x198] sm:$0xff] %v3589
        %3718 = vst [vmem:[%s297 + $0x1a0] sm:$0xff] %v3590
        %3719 = vst [vmem:[%s297 + $0x1a8] sm:$0xff] %v3591
        %3720 = vst [vmem:[%s297 + $0x1b0] sm:$0xff] %v3592
        %3721 = vst [vmem:[%s297 + $0x1b8] sm:$0xff] %v3593
        %3722 = vst [vmem:[%s297 + $0x1c0] sm:$0xff] %v3594
        %3723 = vst [vmem:[%s297 + $0x1c8] sm:$0xff] %v3595
        %3724 = vst [vmem:[%s297 + $0x1d0] sm:$0xff] %v3596
        %3725 = vst [vmem:[%s297 + $0x1d8] sm:$0xff] %v3597
        %3726 = vst [vmem:[%s297 + $0x1e0] sm:$0xff] %v3598
        %3727 = vst [vmem:[%s297 + $0x1e8] sm:$0xff] %v3599
        %3728 = vst [vmem:[%s297 + $0x1f0] sm:$0xff] %v3600
        %3729 = vst [vmem:[%s297 + $0x1f8] sm:$0xff] %v3601
        %s3730 = sand.u32 %s142, 1
        %s3731 = scalar_lea.sflag [#allocation4], %s3730
        %s3732 = sand.u32 %s142, 1
        %s3733 = smul.addr %s3732, 512
        %s3734 = scalar_lea.vmem [#allocation11], %s3733
        // Predicated region
        $region61: #{tpu_custom_call.1} parent=39 // pred_check
          %p3735 = pneg %p152
        $region62: #{tpu_custom_call.1} parent=39 // pred_check_branch
          %3737 = sbr.rel (%p3735) target = $region64
        $region63: #{tpu_custom_call.1} parent=39 // pred_region
          %s3738 = smul.u32 64, %s24
          %s3740 = ssub.s32 8192, 8192
          %3741 = vsyncadd %s3731, %s3740
          %s3742 = smul.addr %s3738, 2
          %s3743 = smul.addr %s3742, 64
          %s3744 = scalar_lea.hbm %s5, %s3743
          %s3745 = sshll.u32 %s3734, 4
          %s3746 = int_to_ptr.vmem [resolvable:$true] %s3745
          %3751 = dma.vmem_to_hbm [thread:$0]  %s3746, 8192, %s3744, %s3731, 128, 128, 8
        $region64: #{tpu_custom_call.1} parent=39 // pred_fallthru
          _
      $region40: #{tpu_custom_call.1} parent=5 // pred_fallthru
        _
      %p3752 = scmp.le.s32.totalorder 2, %s19
      // Predicated region
      $region65: #{tpu_custom_call.1} parent=5 // pred_check
        %p3753 = pneg %p3752
      $region66: #{tpu_custom_call.1} parent=5 // pred_check_branch
        %3755 = sbr.rel (%p3753) target = $region68
      $region67: #{tpu_custom_call.1} parent=5 // pred_region
        %s3756 = ssub.s32 %s19, 2
        // Predicated region
        $region69: #{tpu_custom_call.1} parent=67 // pred_check
          %p3757 = pneg %p158
        $region70: #{tpu_custom_call.1} parent=67 // pred_check_branch
          %3759 = sbr.rel (%p3757) target = $region72
        $region71: #{tpu_custom_call.1} parent=67 // pred_region
          %s3760 = sand.u32 %s143, 1
          %s3761 = scalar_lea.sflag [#allocation4], %s3760
          %s3762 = sand.u32 %s143, 1
          %s3763 = smul.addr %s3762, 512
          %s3764 = scalar_lea.vmem [#allocation11], %s3763
          %3765 = dma.done %s3761, 8192
        $region72: #{tpu_custom_call.1} parent=67 // pred_fallthru
          _
      $region68: #{tpu_custom_call.1} parent=5 // pred_fallthru
        _
    $region6: #{tpu_custom_call.1} parent=1 // loop_footer
      %s23 = sadd.s32 1, %s19
    $region7: #{tpu_custom_call.1} parent=1 // loop_footer_branch
      %18 = sbr.rel target = $region3
    $region8: #{tpu_custom_call.1} parent=1 // loop_exit
      _
    %3766 = vsyncpa [#allocation3], 1
    %s3767 = scalar_lea.sflag [#allocation3], 1
    %3768 = vsyncpa %s3767, 1
    %3769 = vsyncpa [#allocation6], 1
    %3770 = vsyncpa [#allocation9], 1
    %3771 = vsyncpa [#allocation4], 1
    %s3772 = scalar_lea.sflag [#allocation4], 1
    %3773 = vsyncpa %s3772, 1

</llo_original>
